<compile_context>
chip_gen: v6e
topology: v6e:2x2x1
jax: 0.10.0
libtpu: 0.0.40
codegen_flags: <defaults>
</compile_context>

<pallas_src>
import functools

import jax
import jax.numpy as jnp
from jax import lax
from jax.experimental import pallas as pl
from jax.experimental.pallas import tpu as pltpu

LANE = 128


def _round_up(x, m):
    return ((x + m - 1) // m) * m


# ---------------------------------------------------------------------------
# Generation-aware VMEM budgets
# ---------------------------------------------------------------------------
def _vmem_capacity_bytes():
    try:
        info = pltpu.get_tpu_info()
        for attr in ("vmem_capacity_bytes", "vmem_size_bytes", "vmem_bytes"):
            v = getattr(info, attr, None)
            if v:
                return int(v)
    except Exception:
        pass
    return 64 * 1024 * 1024  # conservative default (v7x per-TensorCore)


_VMEM_CAP = max(32 << 20, min(_vmem_capacity_bytes(), 128 << 20))
_VMEM_BUDGET = int(_VMEM_CAP * 0.55)   # what the tile planner may fill
_VMEM_LIMIT = int(_VMEM_CAP * 0.75)    # scoped limit handed to Mosaic (~25% headroom)


# ---------------------------------------------------------------------------
# Compile-time probe: does unaligned minor-dim concatenation lower here?
# ---------------------------------------------------------------------------
_CONCAT_OK = None


def _probe_kernel(x_ref, w_ref, o_ref):
    acc = None
    for ki in range(2):
        a = jnp.concatenate(
            [x_ref[0, pl.ds(ki, 8), pl.ds(kj, 8), :] for kj in range(3)], axis=-1)
        a = a.reshape(64, 15)
        part = jnp.dot(a, w_ref[ki], preferred_element_type=jnp.float32)
        acc = part if acc is None else acc + part
    o_ref[0] = acc.astype(o_ref.dtype)


def _use_concat():
    """Probe once whether lane-unaligned minor-dim concat + deep GEMM lowers on
    this Mosaic build; fall back to per-tap matmuls otherwise."""
    global _CONCAT_OK
    if _CONCAT_OK is None:
        try:
            with jax.ensure_compile_time_eval():
                f = pl.pallas_call(
                    _probe_kernel,
                    out_shape=jax.ShapeDtypeStruct((1, 64, 128), jnp.bfloat16),
                    grid=(1, 1),
                    in_specs=[
                        pl.BlockSpec((1, 10, 12, 5), lambda g, r: (g, 0, 0, 0)),
                        pl.BlockSpec((2, 15, 128), lambda g, r: (0, 0, 0)),
                    ],
                    out_specs=pl.BlockSpec((1, 64, 128), lambda g, r: (g, r, 0)),
                )
                jax.block_until_ready(
                    f(jnp.ones((1, 10, 12, 5), jnp.bfloat16),
                      jnp.ones((2, 15, 128), jnp.bfloat16)))
            _CONCAT_OK = True
        except Exception:
            _CONCAT_OK = False
    return _CONCAT_OK


# ---------------------------------------------------------------------------
# Pallas kernel: fused conv (deep per-row GEMMs) + bias + activation + mask
# ---------------------------------------------------------------------------
def _conv_kernel(x_ref, w_ref, b_ref, o_ref, *, kh, kw, dil, th, wo, cin,
                 activation, nb, tpb, ho_real, wo_real, ho_k, use_concat):
    # x_ref : (1, Hband, Wp, cin)   bf16 (resident padded band, real channels only)
    # w_ref : (kh, kw*cin, Cp)      bf16
    # b_ref : (1, Cp)               f32
    # o_ref : (1, th*wo, Cp)        bf16
    row0 = pl.program_id(1) * th

    def tap(ki, kj):
        return x_ref[0, pl.ds(row0 + ki * dil, th), pl.ds(kj * dil, wo), :]

    acc = None
    if use_concat and kw > 1:
        for ki in range(kh):
            a = jnp.concatenate([tap(ki, kj) for kj in range(kw)], axis=-1)
            a = a.reshape(th * wo, kw * cin)          # layout-preserving (wo % 8 == 0)
            part = jnp.dot(a, w_ref[ki], preferred_element_type=jnp.float32)
            acc = part if acc is None else acc + part
    else:
        for ki in range(kh):
            wki = w_ref[ki]
            for kj in range(kw):
                a = tap(ki, kj).reshape(th * wo, cin)
                wk = lax.slice_in_dim(wki, kj * cin, (kj + 1) * cin, axis=0)
                part = jnp.dot(a, wk, preferred_element_type=jnp.float32)
                acc = part if acc is None else acc + part

    y = acc + b_ref[...]
    if activation == "elu":
        # TODO(synk): jnp.expm1 would be marginally more accurate near 0; exp-1
        # is kept for guaranteed Mosaic lowering support (difference ~1e-7 abs).
        y = jnp.where(y > 0, y, jnp.exp(y) - 1.0)
    elif activation == "relu":
        y = jnp.maximum(y, 0.0)
    elif activation == "clamp":                        # conv (no act) + clamp(-1, 1)
        y = jnp.clip(y, -1.0, 1.0)
    elif activation != "none":
        raise ValueError(f"unsupported activation {activation}")

    # Force the padded rows / columns to exact zeros so they can be carried to
    # the next layer as implicit zero padding (no post-kernel HBM slice).
    if ho_k > ho_real or wo > wo_real:
        base = row0
        if nb > 1:
            base = base + (pl.program_id(0) % nb) * (tpb * th)
        ri = lax.broadcasted_iota(jnp.int32, (th, wo, 1), 0) + base
        ci = lax.broadcasted_iota(jnp.int32, (th, wo, 1), 1)
        keep = (ri < ho_real) & (ci < wo_real)
        y = jnp.where(keep, y.reshape(th, wo, -1), 0.0).reshape(th * wo, -1)

    o_ref[0] = y.astype(o_ref.dtype)


# ---------------------------------------------------------------------------
# Tile planning (generation-aware VMEM budget)
# ---------------------------------------------------------------------------
def _prefer_divisor(n, t):
    t = max(1, min(n, t))
    lo = max(1, (3 * t) // 4)
    for c in range(t, lo - 1, -1):
        if n % c == 0:
            return c
    return t


def _plan_rows(Ho, Wp, wo_k, kh, kw, dil, cin_k, cp):
    """Return (tile rows th, row-tiles per band tpb, bands per image nb)."""
    halo = (kh - 1) * dil
    cin_v = _round_up(cin_k, LANE)                      # VMEM lane padding (cons.)
    row_band = Wp * cin_v * 2 * 2                       # 2x-buffered bf16 input rows
    row_tile = wo_k * (cp * 2 * 2                       # 2x-buffered bf16 out tile
                       + cp * 4 * 2                     # f32 acc + matmul partial
                       + kw * cin_v * 2 * 2)            # patch temporaries
    fixed = 2 * kh * kw * cin_k * cp * 2 + 2 * cp * 4 + (1 << 20)
    avail = _VMEM_BUDGET - fixed

    # Preferred: whole padded image resident in VMEM (nb == 1).
    if avail > row_band * (Ho + halo) + row_tile:
        th = max(1, min(Ho, (avail - row_band * (Ho + halo)) // row_tile))
        if Ho >= 64:        # keep >=2 row tiles for pipelining / multi-TC parts
            th = min(th, pl.cdiv(Ho, 2))
        while th > 1:
            ho_k = pl.cdiv(Ho, th) * th
            if row_band * (ho_k + halo) + row_tile * th <= avail:
                break
            th -= 1
        th = _prefer_divisor(Ho, int(th))
        return th, pl.cdiv(Ho, th), 1

    # Otherwise stream one row tile (plus halo) per grid step.
    th = max(1, min(Ho, (avail - halo * row_band) // (row_band + row_tile)))
    th = _prefer_divisor(Ho, int(th))
    return th, 1, pl.cdiv(Ho, th)


# ---------------------------------------------------------------------------
# pallas_call wrapper
# ---------------------------------------------------------------------------
def _pallas_conv(xk, w_k, b_p, kh, kw, dil, th, tpb, nb, Ho, Wo, wo_k,
                 activation, flops, transcendentals):
    N, Hp, Wp, cin_k = xk.shape
    cp = w_k.shape[-1]
    halo = (kh - 1) * dil
    ho_k = nb * tpb * th
    hband = tpb * th + halo
    assert Hp == ho_k + halo, (Hp, ho_k, halo)

    if nb == 1:
        xb = xk
    else:
        xb = jnp.stack([xk[:, b * th: b * th + hband] for b in range(nb)], axis=1)
        xb = xb.reshape(N * nb, hband, Wp, cin_k)

    kern = functools.partial(
        _conv_kernel, kh=kh, kw=kw, dil=dil, th=th, wo=wo_k, cin=cin_k,
        activation=activation, nb=nb, tpb=tpb, ho_real=Ho, wo_real=Wo,
        ho_k=ho_k, use_concat=_use_concat())

    if nb == 1:
        o_map = lambda g, r: (g, r, 0)
    else:
        o_map = lambda g, r: (g // nb, (g % nb) * tpb + r, 0)

    bytes_accessed = (xb.size * 2 + w_k.size * 2 + b_p.size * 4
                      + N * ho_k * wo_k * cp * 2)

    out = pl.pallas_call(
        kern,
        out_shape=jax.ShapeDtypeStruct((N, ho_k * wo_k, cp), jnp.bfloat16),
        grid=(N * nb, tpb),
        in_specs=[
            pl.BlockSpec((1, hband, Wp, cin_k), lambda g, r: (g, 0, 0, 0)),
            pl.BlockSpec(w_k.shape, lambda g, r: (0, 0, 0)),
            pl.BlockSpec(b_p.shape, lambda g, r: (0, 0)),
        ],
        out_specs=pl.BlockSpec((1, th * wo_k, cp), o_map),
        compiler_params=pltpu.CompilerParams(
            dimension_semantics=("parallel", "parallel"),
            vmem_limit_bytes=_VMEM_LIMIT),
        cost_estimate=pl.CostEstimate(flops=flops,
                                      transcendentals=transcendentals,
                                      bytes_accessed=bytes_accessed),
    )(xb, w_k, b_p)
    return out.reshape(N, ho_k, wo_k, cp)


# ---------------------------------------------------------------------------
# Conv2dBlock wrapper (padding, channel slicing, stride-2 space-to-depth)
# ---------------------------------------------------------------------------
def conv_block(x, real_hw, w, b, stride=1, padding=0, dilation=1,
               activation="elu"):
    """x: (N, Hphys, Wphys, Cphys) with real data in [:Hr, :Wr, :] and exact zeros
    in carried rows/cols beyond.  w: (kh, kw, cin, cout) with cin <= Cphys.
    Returns (y, (Ho, Wo)): y is (N, Ho_phys, Wo_phys, cout_pad) bf16 with real
    data in [:Ho, :Wo, :cout] and exact zeros elsewhere."""
    N, Hx, Wx, Cx = x.shape
    Hr, Wr = real_hw
    kh, kw, cin, cout = w.shape
    assert cin <= Cx
    cp = _round_up(cout, LANE)
    b_p = jnp.pad(b.astype(jnp.float32), (0, cp - cout)).reshape(1, cp)
    w_f = jnp.pad(w.astype(jnp.float32), ((0, 0), (0, 0), (0, 0), (0, cp - cout)))

    flops = 2 * N * cout * kh * kw * cin   # multiplied by Ho*Wo below (real dims)

    if stride == 1:
        Ho = Hr + 2 * padding - dilation * (kh - 1)
        Wo = Wr + 2 * padding - dilation * (kw - 1)
        wo_k = _round_up(Wo, 8)
        wneed = (kw - 1) * dilation + wo_k
        th, tpb, nb = _plan_rows(Ho, wneed, wo_k, kh, kw, dilation, cin, cp)
        ho_k = nb * tpb * th
        hneed = (kh - 1) * dilation + ho_k
        take_h = min(Hx, hneed - padding)
        take_w = min(Wx, wneed - padding)
        xk = jnp.pad(x[:, :take_h, :take_w, :cin],
                     ((0, 0), (padding, hneed - padding - take_h),
                      (padding, wneed - padding - take_w),
                      (0, 0))).astype(jnp.bfloat16)
        w_k = w_f.reshape(kh, kw * cin, cp).astype(jnp.bfloat16)
        y = _pallas_conv(xk, w_k, b_p, kh, kw, dilation, th, tpb, nb,
                         Ho, Wo, wo_k, activation, flops * Ho * Wo,
                         N * Ho * Wo * cout if activation == "elu" else 0)
    elif stride == 2:
        assert dilation == 1, "stride-2 convs in FineGenerator are not dilated"
        Ho = (Hr + 2 * padding - kh) // 2 + 1
        Wo = (Wr + 2 * padding - kw) // 2 + 1
        tkh, tkw = (kh + 1) // 2, (kw + 1) // 2
        cin4 = 4 * cin
        wo_k = _round_up(Wo, 8)
        wneed_h = (tkw - 1) + wo_k
        th, tpb, nb = _plan_rows(Ho, wneed_h, wo_k, tkh, tkw, 1, cin4, cp)
        ho_k = nb * tpb * th
        hneed_h = (tkh - 1) + ho_k
        hfull, wfull = 2 * hneed_h, 2 * wneed_h
        take_h = min(Hx, hfull - padding)
        take_w = min(Wx, wfull - padding)
        xp = jnp.pad(x[:, :take_h, :take_w, :cin],
                     ((0, 0), (padding, hfull - padding - take_h),
                      (padding, wfull - padding - take_w),
                      (0, 0))).astype(jnp.bfloat16)
        # space-to-depth: stride-2 kxk conv == stride-1 ceil(k/2)-tap conv on 4x ch
        xp = xp.reshape(N, hneed_h, 2, wneed_h, 2, cin)
        xp = xp.transpose(0, 1, 3, 2, 4, 5).reshape(N, hneed_h, wneed_h, cin4)
        w_eff = jnp.zeros((tkh, tkw, cin4, cp), jnp.float32)
        for qi in range(tkh):
            for qj in range(tkw):
                for ph in range(2):
                    for pw in range(2):
                        ki, kj = 2 * qi + ph, 2 * qj + pw
                        if ki < kh and kj < kw:
                            off = (ph * 2 + pw) * cin
                            w_eff = w_eff.at[qi, qj, off:off + cin, :].set(w_f[ki, kj])
        w_k = w_eff.reshape(tkh, tkw * cin4, cp).astype(jnp.bfloat16)
        y = _pallas_conv(xp, w_k, b_p, tkh, tkw, 1, th, tpb, nb,
                         Ho, Wo, wo_k, activation, flops * Ho * Wo,
                         N * Ho * Wo * cout if activation == "elu" else 0)
    else:
        raise NotImplementedError("FineGenerator only uses stride 1 and 2")
    return y, (Ho, Wo)


def upsample_nearest_2x(x):
    """NHWC nearest-neighbor x2 (matches F.interpolate(scale_factor=2, 'nearest'))."""
    # TODO(synk): fuse the nearest-2x upsample into the following conv (4-phase
    # decomposition) so the 4x-larger tensor is never materialized in HBM.
    return jnp.repeat(jnp.repeat(x, 2, axis=1), 2, axis=2)


# ---------------------------------------------------------------------------
# Parameters (deterministic synthetic init; shapes from FineGenerator.__init__)
# ---------------------------------------------------------------------------
def init_params(key, input_dim, cnum):
    cfg = {
        "conv1": (5, input_dim, cnum),
        "conv2_downsample": (3, cnum, cnum),
        "conv3": (3, cnum, cnum * 2),
        "conv4_downsample": (3, cnum * 2, cnum * 2),
        "conv5": (3, cnum * 2, cnum * 4),
        "conv6": (3, cnum * 4, cnum * 4),
        "conv7_atrous": (3, cnum * 4, cnum * 4),
        "conv8_atrous": (3, cnum * 4, cnum * 4),
        "conv9_atrous": (3, cnum * 4, cnum * 4),
        "conv10_atrous": (3, cnum * 4, cnum * 4),
        "pmconv1": (5, input_dim, cnum),
        "pmconv2_downsample": (3, cnum, cnum),
        "pmconv3": (3, cnum, cnum * 2),
        "pmconv4_downsample": (3, cnum * 2, cnum * 4),
        "pmconv5": (3, cnum * 4, cnum * 4),
        "pmconv6": (3, cnum * 4, cnum * 4),
        "pmconv9": (3, cnum * 4, cnum * 4),
        "pmconv10": (3, cnum * 4, cnum * 4),
        "allconv11": (3, cnum * 8, cnum * 4),
        "allconv12": (3, cnum * 4, cnum * 4),
        "allconv13": (3, cnum * 4, cnum * 2),
        "allconv14": (3, cnum * 2, cnum * 2),
        "allconv15": (3, cnum * 2, cnum),
        "allconv16": (3, cnum, cnum // 2),
        "allconv17": (3, cnum // 2, 3),
    }
    params = {}
    for idx, name in enumerate(sorted(cfg)):
        k, cin, cout = cfg[name]
        kw_key, kb_key = jax.random.split(jax.random.fold_in(key, idx))
        fan_in = k * k * cin
        params[name] = {
            "w": jax.random.normal(kw_key, (k, k, cin, cout), jnp.float32)
            * (1.0 / jnp.sqrt(fan_in)),
            "b": jax.random.normal(kb_key, (cout,), jnp.float32) * 0.01,
        }
    return params


# ---------------------------------------------------------------------------
# FineGenerator forward
# ---------------------------------------------------------------------------
def fine_generator_forward(params, xin, x_stage1, mask):
    """xin, x_stage1: (N, C, H, W) NCHW; mask: (N, 1, H, W). Returns NCHW float32."""
    x1_inpaint = x_stage1 * mask + xin * (1.0 - mask)
    Nb, _, H, W = xin.shape
    ones = jnp.ones((Nb, 1, H, W), jnp.float32)
    xnow = jnp.concatenate([x1_inpaint, ones, mask], axis=1)      # (N, C+2, H, W)
    x = jnp.transpose(xnow, (0, 2, 3, 1)).astype(jnp.bfloat16)    # -> NHWC
    hw = (H, W)

    def cb(name, t, s, stride=1, padding=0, dilation=1, activation="elu"):
        p = params[name]
        return conv_block(t, s, p["w"], p["b"], stride, padding, dilation,
                          activation)

    # --- dilated (hallucination) branch ---
    h, s = cb("conv1", x, hw, 1, 2)
    h, s = cb("conv2_downsample", h, s, 2, 1)
    h, s = cb("conv3", h, s, 1, 1)
    h, s = cb("conv4_downsample", h, s, 2, 1)
    h, s = cb("conv5", h, s, 1, 1)
    h, s = cb("conv6", h, s, 1, 1)
    h, s = cb("conv7_atrous", h, s, 1, 2, 2)
    h, s = cb("conv8_atrous", h, s, 1, 4, 4)
    h, s = cb("conv9_atrous", h, s, 1, 8, 8)
    h, s = cb("conv10_atrous", h, s, 1, 16, 16)
    x_hallu, s_h = h, s

    # --- attention branch ---
    p2, s = cb("pmconv1", x, hw, 1, 2)
    p2, s = cb("pmconv2_downsample", p2, s, 2, 1)
    p2, s = cb("pmconv3", p2, s, 1, 1)
    p2, s = cb("pmconv4_downsample", p2, s, 2, 1)
    p2, s = cb("pmconv5", p2, s, 1, 1)
    p2, s = cb("pmconv6", p2, s, 1, 1, activation="relu")
    # TODO(synk): GlobalLocalAttention is not defined in the reference source;
    # features pass through unchanged here instead of faking its semantics.
    p2, s = cb("pmconv9", p2, s, 1, 1)
    p2, s = cb("pmconv10", p2, s, 1, 1)
    pm, s_p = p2, s
    assert s_h == s_p

    # --- fusion / decoder (concatenate only the real channels of each branch) ---
    c4 = params["allconv11"]["w"].shape[2] // 2
    Hq, Wq = s_h
    y = jnp.concatenate([x_hallu[:, :Hq, :Wq, :c4], pm[:, :Hq, :Wq, :c4]], axis=-1)
    s = (Hq, Wq)
    y, s = cb("allconv11", y, s, 1, 1)
    y, s = cb("allconv12", y, s, 1, 1)
    c = params["allconv13"]["w"].shape[2]
    y = upsample_nearest_2x(y[:, :s[0], :s[1], :c])
    s = (2 * s[0], 2 * s[1])
    y, s = cb("allconv13", y, s, 1, 1)
    y, s = cb("allconv14", y, s, 1, 1)
    c = params["allconv15"]["w"].shape[2]
    y = upsample_nearest_2x(y[:, :s[0], :s[1], :c])
    s = (2 * s[0], 2 * s[1])
    y, s = cb("allconv15", y, s, 1, 1)
    y, s = cb("allconv16", y, s, 1, 1)
    y, s = cb("allconv17", y, s, 1, 1, activation="clamp")   # no act + clamp(-1, 1)
    y = y[:, :s[0], :s[1], :3].astype(jnp.float32)
    return jnp.transpose(y, (0, 3, 1, 2))                    # back to NCHW


# ---------------------------------------------------------------------------
# Self-check of the fused conv kernel against lax.conv (same bf16-rounded inputs)
# ---------------------------------------------------------------------------
def _conv_reference(x, w, b, stride, padding, dilation, activation):
    y = lax.conv_general_dilated(
        x.astype(jnp.float32), w.astype(jnp.float32),
        window_strides=(stride, stride),
        padding=((padding, padding), (padding, padding)),
        rhs_dilation=(dilation, dilation),
        dimension_numbers=("NHWC", "HWIO", "NHWC"))
    y = y + b.astype(jnp.float32)
    if activation == "elu":
        y = jnp.where(y > 0, y, jnp.exp(y) - 1.0)
    elif activation == "relu":
        y = jnp.maximum(y, 0.0)
    elif activation == "clamp":
        y = jnp.clip(y, -1.0, 1.0)
    return y


def _self_check(key):
    cases = [
        dict(H=16, W=16, cin=5, cout=7, k=5, stride=1, pad=2, dil=1, act="elu"),
        dict(H=11, W=9, cin=6, cout=5, k=3, stride=2, pad=1, dil=1, act="relu"),
        dict(H=9, W=12, cin=4, cout=6, k=3, stride=1, pad=4, dil=4, act="none"),
        dict(H=8, W=5, cin=3, cout=4, k=3, stride=1, pad=1, dil=1, act="elu"),
    ]
    for i, c in enumerate(cases):
        kx, kw_, kb = jax.random.split(jax.random.fold_in(key, i), 3)
        x = jax.random.normal(kx, (1, c["H"], c["W"], c["cin"]), jnp.float32)
        w = jax.random.normal(kw_, (c["k"], c["k"], c["cin"], c["cout"]), jnp.float32)
        w = w / jnp.sqrt(float(c["k"] * c["k"] * c["cin"]))
        b = jax.random.normal(kb, (c["cout"],), jnp.float32) * 0.1
        xb = x.astype(jnp.bfloat16)
        wb = w.astype(jnp.bfloat16).astype(jnp.float32)
        got, (Ho, Wo) = conv_block(xb, (c["H"], c["W"]), wb, b,
                                   c["stride"], c["pad"], c["dil"], c["act"])
        got = got[:, :Ho, :Wo, :c["cout"]].astype(jnp.float32)
        want = _conv_reference(xb, wb, b, c["stride"], c["pad"], c["dil"], c["act"])
        err = float(jnp.max(jnp.abs(got - want)))
        assert err < 5e-2, (i, err)


# ---------------------------------------------------------------------------
if __name__ == "__main__":
    key = jax.random.PRNGKey(0)
    kx, ks, km, kp, kc = jax.random.split(key, 5)

    _self_check(kc)

    Nb, C, H, W = 2, 3, 16, 16        # xin has 3 channels; input_dim = C + 2
    cnum = 8

    xin = jax.random.normal(kx, (Nb, C, H, W), jnp.float32)
    x_stage1 = jax.random.normal(ks, (Nb, C, H, W), jnp.float32)
    mask = (jax.random.uniform(km, (Nb, 1, H, W)) > 0.5).astype(jnp.float32)

    params = init_params(kp, input_dim=C + 2, cnum=cnum)

    out = jax.jit(fine_generator_forward)(params, xin, x_stage1, mask)
    out = jax.block_until_ready(out)

    assert out.shape == (Nb, 3, H, W), out.shape
    assert bool(jnp.all(jnp.isfinite(out)))
    assert bool(jnp.all(out <= 1.0)) and bool(jnp.all(out >= -1.0))
    print("KERNEL_OK")
</pallas_src>

<mosaic_0001>
module attributes {stable_mosaic.version = 11 : i64} {
  func.func @_conv_kernel(%arg0: i32, %arg1: i32, %arg2: memref<1x20x20x5xbf16, #tpu.memory_space<vmem>>, %arg3: memref<5x25x128xbf16, #tpu.memory_space<vmem>>, %arg4: memref<1x128xf32, #tpu.memory_space<vmem>>, %arg5: memref<1x256x128xbf16, #tpu.memory_space<vmem>>) attributes {dimension_semantics = [#tpu.dimension_semantics<parallel>, #tpu.dimension_semantics<parallel>], iteration_bounds = array<i64: 1, 1>, scalar_prefetch = 0 : i64, scratch_operands = 0 : i64, tpu.core_type = #tpu.core_type<tc>, window_params = [{transform_indices = @transform_0, window_bounds = array<i64: 1, 20, 20, 5>}, {pipeline_mode = #tpu.pipeline_mode<synchronous>, transform_indices = @transform_1, window_bounds = array<i64: 5, 25, 128>}, {pipeline_mode = #tpu.pipeline_mode<synchronous>, transform_indices = @transform_2, window_bounds = array<i64: 1, 128>}, {transform_indices = @transform_3, window_bounds = array<i64: 1, 256, 128>}]} {
    %c16_i32 = arith.constant 16 : i32
    %0 = arith.muli %arg1, %c16_i32 : i32
    %c0 = arith.constant 0 : index
    %c0_0 = arith.constant 0 : index
    %c0_1 = arith.constant 0 : index
    %1 = vector.load %arg3[%c0, %c0_0, %c0_1] : memref<5x25x128xbf16, #tpu.memory_space<vmem>>, vector<1x25x128xbf16>
    %2 = vector.shape_cast %1 : vector<1x25x128xbf16> to vector<25x128xbf16>
    %c0_i32 = arith.constant 0 : i32
    %3 = arith.addi %0, %c0_i32 : i32
    %c0_2 = arith.constant 0 : index
    %4 = arith.index_cast %3 : i32 to index
    %c0_3 = arith.constant 0 : index
    %c0_4 = arith.constant 0 : index
    %5 = vector.load %arg2[%c0_2, %4, %c0_3, %c0_4] : memref<1x20x20x5xbf16, #tpu.memory_space<vmem>>, vector<1x16x16x5xbf16>
    %6 = vector.shape_cast %5 : vector<1x16x16x5xbf16> to vector<16x16x5xbf16>
    %7 = vector.shape_cast %6 : vector<16x16x5xbf16> to vector<256x5xbf16>
    %8 = vector.extract_strided_slice %2 {offsets = [0, 0], sizes = [5, 128], strides = [1, 1]} : vector<25x128xbf16> to vector<5x128xbf16>
    %cst = arith.constant dense<0.000000e+00> : vector<256x128xf32>
    %9 = tpu.matmul %7, %8, %cst {dimension_numbers = #tpu.dot_dimension_numbers<[1], [0], [0], [1], [0, 0, 1, 1], [], []>} : vector<256x5xbf16>, vector<5x128xbf16>, vector<256x128xf32> -> vector<256x128xf32>
    %c0_i32_5 = arith.constant 0 : i32
    %10 = arith.addi %0, %c0_i32_5 : i32
    %c0_6 = arith.constant 0 : index
    %11 = arith.index_cast %10 : i32 to index
    %c1 = arith.constant 1 : index
    %c0_7 = arith.constant 0 : index
    %12 = vector.load %arg2[%c0_6, %11, %c1, %c0_7] : memref<1x20x20x5xbf16, #tpu.memory_space<vmem>>, vector<1x16x16x5xbf16>
    %13 = vector.shape_cast %12 : vector<1x16x16x5xbf16> to vector<16x16x5xbf16>
    %14 = vector.shape_cast %13 : vector<16x16x5xbf16> to vector<256x5xbf16>
    %15 = vector.extract_strided_slice %2 {offsets = [5, 0], sizes = [5, 128], strides = [1, 1]} : vector<25x128xbf16> to vector<5x128xbf16>
    %cst_8 = arith.constant dense<0.000000e+00> : vector<256x128xf32>
    %16 = tpu.matmul %14, %15, %cst_8 {dimension_numbers = #tpu.dot_dimension_numbers<[1], [0], [0], [1], [0, 0, 1, 1], [], []>} : vector<256x5xbf16>, vector<5x128xbf16>, vector<256x128xf32> -> vector<256x128xf32>
    %17 = arith.addf %9, %16 : vector<256x128xf32>
    %c0_i32_9 = arith.constant 0 : i32
    %18 = arith.addi %0, %c0_i32_9 : i32
    %c0_10 = arith.constant 0 : index
    %19 = arith.index_cast %18 : i32 to index
    %c2 = arith.constant 2 : index
    %c0_11 = arith.constant 0 : index
    %20 = vector.load %arg2[%c0_10, %19, %c2, %c0_11] : memref<1x20x20x5xbf16, #tpu.memory_space<vmem>>, vector<1x16x16x5xbf16>
    %21 = vector.shape_cast %20 : vector<1x16x16x5xbf16> to vector<16x16x5xbf16>
    %22 = vector.shape_cast %21 : vector<16x16x5xbf16> to vector<256x5xbf16>
    %23 = vector.extract_strided_slice %2 {offsets = [10, 0], sizes = [5, 128], strides = [1, 1]} : vector<25x128xbf16> to vector<5x128xbf16>
    %cst_12 = arith.constant dense<0.000000e+00> : vector<256x128xf32>
    %24 = tpu.matmul %22, %23, %cst_12 {dimension_numbers = #tpu.dot_dimension_numbers<[1], [0], [0], [1], [0, 0, 1, 1], [], []>} : vector<256x5xbf16>, vector<5x128xbf16>, vector<256x128xf32> -> vector<256x128xf32>
    %25 = arith.addf %17, %24 : vector<256x128xf32>
    %c0_i32_13 = arith.constant 0 : i32
    %26 = arith.addi %0, %c0_i32_13 : i32
    %c0_14 = arith.constant 0 : index
    %27 = arith.index_cast %26 : i32 to index
    %c3 = arith.constant 3 : index
    %c0_15 = arith.constant 0 : index
    %28 = vector.load %arg2[%c0_14, %27, %c3, %c0_15] : memref<1x20x20x5xbf16, #tpu.memory_space<vmem>>, vector<1x16x16x5xbf16>
    %29 = vector.shape_cast %28 : vector<1x16x16x5xbf16> to vector<16x16x5xbf16>
    %30 = vector.shape_cast %29 : vector<16x16x5xbf16> to vector<256x5xbf16>
    %31 = vector.extract_strided_slice %2 {offsets = [15, 0], sizes = [5, 128], strides = [1, 1]} : vector<25x128xbf16> to vector<5x128xbf16>
    %cst_16 = arith.constant dense<0.000000e+00> : vector<256x128xf32>
    %32 = tpu.matmul %30, %31, %cst_16 {dimension_numbers = #tpu.dot_dimension_numbers<[1], [0], [0], [1], [0, 0, 1, 1], [], []>} : vector<256x5xbf16>, vector<5x128xbf16>, vector<256x128xf32> -> vector<256x128xf32>
    %33 = arith.addf %25, %32 : vector<256x128xf32>
    %c0_i32_17 = arith.constant 0 : i32
    %34 = arith.addi %0, %c0_i32_17 : i32
    %c0_18 = arith.constant 0 : index
    %35 = arith.index_cast %34 : i32 to index
    %c4 = arith.constant 4 : index
    %c0_19 = arith.constant 0 : index
    %36 = vector.load %arg2[%c0_18, %35, %c4, %c0_19] : memref<1x20x20x5xbf16, #tpu.memory_space<vmem>>, vector<1x16x16x5xbf16>
    %37 = vector.shape_cast %36 : vector<1x16x16x5xbf16> to vector<16x16x5xbf16>
    %38 = vector.shape_cast %37 : vector<16x16x5xbf16> to vector<256x5xbf16>
    %39 = vector.extract_strided_slice %2 {offsets = [20, 0], sizes = [5, 128], strides = [1, 1]} : vector<25x128xbf16> to vector<5x128xbf16>
    %cst_20 = arith.constant dense<0.000000e+00> : vector<256x128xf32>
    %40 = tpu.matmul %38, %39, %cst_20 {dimension_numbers = #tpu.dot_dimension_numbers<[1], [0], [0], [1], [0, 0, 1, 1], [], []>} : vector<256x5xbf16>, vector<5x128xbf16>, vector<256x128xf32> -> vector<256x128xf32>
    %41 = arith.addf %33, %40 : vector<256x128xf32>
    %c1_21 = arith.constant 1 : index
    %c0_22 = arith.constant 0 : index
    %c0_23 = arith.constant 0 : index
    %42 = vector.load %arg3[%c1_21, %c0_22, %c0_23] : memref<5x25x128xbf16, #tpu.memory_space<vmem>>, vector<1x25x128xbf16>
    %43 = vector.shape_cast %42 : vector<1x25x128xbf16> to vector<25x128xbf16>
    %c1_i32 = arith.constant 1 : i32
    %44 = arith.addi %0, %c1_i32 : i32
    %c0_24 = arith.constant 0 : index
    %45 = arith.index_cast %44 : i32 to index
    %c0_25 = arith.constant 0 : index
    %c0_26 = arith.constant 0 : index
    %46 = vector.load %arg2[%c0_24, %45, %c0_25, %c0_26] : memref<1x20x20x5xbf16, #tpu.memory_space<vmem>>, vector<1x16x16x5xbf16>
    %47 = vector.shape_cast %46 : vector<1x16x16x5xbf16> to vector<16x16x5xbf16>
    %48 = vector.shape_cast %47 : vector<16x16x5xbf16> to vector<256x5xbf16>
    %49 = vector.extract_strided_slice %43 {offsets = [0, 0], sizes = [5, 128], strides = [1, 1]} : vector<25x128xbf16> to vector<5x128xbf16>
    %cst_27 = arith.constant dense<0.000000e+00> : vector<256x128xf32>
    %50 = tpu.matmul %48, %49, %cst_27 {dimension_numbers = #tpu.dot_dimension_numbers<[1], [0], [0], [1], [0, 0, 1, 1], [], []>} : vector<256x5xbf16>, vector<5x128xbf16>, vector<256x128xf32> -> vector<256x128xf32>
    %51 = arith.addf %41, %50 : vector<256x128xf32>
    %c1_i32_28 = arith.constant 1 : i32
    %52 = arith.addi %0, %c1_i32_28 : i32
    %c0_29 = arith.constant 0 : index
    %53 = arith.index_cast %52 : i32 to index
    %c1_30 = arith.constant 1 : index
    %c0_31 = arith.constant 0 : index
    %54 = vector.load %arg2[%c0_29, %53, %c1_30, %c0_31] : memref<1x20x20x5xbf16, #tpu.memory_space<vmem>>, vector<1x16x16x5xbf16>
    %55 = vector.shape_cast %54 : vector<1x16x16x5xbf16> to vector<16x16x5xbf16>
    %56 = vector.shape_cast %55 : vector<16x16x5xbf16> to vector<256x5xbf16>
    %57 = vector.extract_strided_slice %43 {offsets = [5, 0], sizes = [5, 128], strides = [1, 1]} : vector<25x128xbf16> to vector<5x128xbf16>
    %cst_32 = arith.constant dense<0.000000e+00> : vector<256x128xf32>
    %58 = tpu.matmul %56, %57, %cst_32 {dimension_numbers = #tpu.dot_dimension_numbers<[1], [0], [0], [1], [0, 0, 1, 1], [], []>} : vector<256x5xbf16>, vector<5x128xbf16>, vector<256x128xf32> -> vector<256x128xf32>
    %59 = arith.addf %51, %58 : vector<256x128xf32>
    %c1_i32_33 = arith.constant 1 : i32
    %60 = arith.addi %0, %c1_i32_33 : i32
    %c0_34 = arith.constant 0 : index
    %61 = arith.index_cast %60 : i32 to index
    %c2_35 = arith.constant 2 : index
    %c0_36 = arith.constant 0 : index
    %62 = vector.load %arg2[%c0_34, %61, %c2_35, %c0_36] : memref<1x20x20x5xbf16, #tpu.memory_space<vmem>>, vector<1x16x16x5xbf16>
    %63 = vector.shape_cast %62 : vector<1x16x16x5xbf16> to vector<16x16x5xbf16>
    %64 = vector.shape_cast %63 : vector<16x16x5xbf16> to vector<256x5xbf16>
    %65 = vector.extract_strided_slice %43 {offsets = [10, 0], sizes = [5, 128], strides = [1, 1]} : vector<25x128xbf16> to vector<5x128xbf16>
    %cst_37 = arith.constant dense<0.000000e+00> : vector<256x128xf32>
    %66 = tpu.matmul %64, %65, %cst_37 {dimension_numbers = #tpu.dot_dimension_numbers<[1], [0], [0], [1], [0, 0, 1, 1], [], []>} : vector<256x5xbf16>, vector<5x128xbf16>, vector<256x128xf32> -> vector<256x128xf32>
    %67 = arith.addf %59, %66 : vector<256x128xf32>
    %c1_i32_38 = arith.constant 1 : i32
    %68 = arith.addi %0, %c1_i32_38 : i32
    %c0_39 = arith.constant 0 : index
    %69 = arith.index_cast %68 : i32 to index
    %c3_40 = arith.constant 3 : index
    %c0_41 = arith.constant 0 : index
    %70 = vector.load %arg2[%c0_39, %69, %c3_40, %c0_41] : memref<1x20x20x5xbf16, #tpu.memory_space<vmem>>, vector<1x16x16x5xbf16>
    %71 = vector.shape_cast %70 : vector<1x16x16x5xbf16> to vector<16x16x5xbf16>
    %72 = vector.shape_cast %71 : vector<16x16x5xbf16> to vector<256x5xbf16>
    %73 = vector.extract_strided_slice %43 {offsets = [15, 0], sizes = [5, 128], strides = [1, 1]} : vector<25x128xbf16> to vector<5x128xbf16>
    %cst_42 = arith.constant dense<0.000000e+00> : vector<256x128xf32>
    %74 = tpu.matmul %72, %73, %cst_42 {dimension_numbers = #tpu.dot_dimension_numbers<[1], [0], [0], [1], [0, 0, 1, 1], [], []>} : vector<256x5xbf16>, vector<5x128xbf16>, vector<256x128xf32> -> vector<256x128xf32>
    %75 = arith.addf %67, %74 : vector<256x128xf32>
    %c1_i32_43 = arith.constant 1 : i32
    %76 = arith.addi %0, %c1_i32_43 : i32
    %c0_44 = arith.constant 0 : index
    %77 = arith.index_cast %76 : i32 to index
    %c4_45 = arith.constant 4 : index
    %c0_46 = arith.constant 0 : index
    %78 = vector.load %arg2[%c0_44, %77, %c4_45, %c0_46] : memref<1x20x20x5xbf16, #tpu.memory_space<vmem>>, vector<1x16x16x5xbf16>
    %79 = vector.shape_cast %78 : vector<1x16x16x5xbf16> to vector<16x16x5xbf16>
    %80 = vector.shape_cast %79 : vector<16x16x5xbf16> to vector<256x5xbf16>
    %81 = vector.extract_strided_slice %43 {offsets = [20, 0], sizes = [5, 128], strides = [1, 1]} : vector<25x128xbf16> to vector<5x128xbf16>
    %cst_47 = arith.constant dense<0.000000e+00> : vector<256x128xf32>
    %82 = tpu.matmul %80, %81, %cst_47 {dimension_numbers = #tpu.dot_dimension_numbers<[1], [0], [0], [1], [0, 0, 1, 1], [], []>} : vector<256x5xbf16>, vector<5x128xbf16>, vector<256x128xf32> -> vector<256x128xf32>
    %83 = arith.addf %75, %82 : vector<256x128xf32>
    %c2_48 = arith.constant 2 : index
    %c0_49 = arith.constant 0 : index
    %c0_50 = arith.constant 0 : index
    %84 = vector.load %arg3[%c2_48, %c0_49, %c0_50] : memref<5x25x128xbf16, #tpu.memory_space<vmem>>, vector<1x25x128xbf16>
    %85 = vector.shape_cast %84 : vector<1x25x128xbf16> to vector<25x128xbf16>
    %c2_i32 = arith.constant 2 : i32
    %86 = arith.addi %0, %c2_i32 : i32
    %c0_51 = arith.constant 0 : index
    %87 = arith.index_cast %86 : i32 to index
    %c0_52 = arith.constant 0 : index
    %c0_53 = arith.constant 0 : index
    %88 = vector.load %arg2[%c0_51, %87, %c0_52, %c0_53] : memref<1x20x20x5xbf16, #tpu.memory_space<vmem>>, vector<1x16x16x5xbf16>
    %89 = vector.shape_cast %88 : vector<1x16x16x5xbf16> to vector<16x16x5xbf16>
    %90 = vector.shape_cast %89 : vector<16x16x5xbf16> to vector<256x5xbf16>
    %91 = vector.extract_strided_slice %85 {offsets = [0, 0], sizes = [5, 128], strides = [1, 1]} : vector<25x128xbf16> to vector<5x128xbf16>
    %cst_54 = arith.constant dense<0.000000e+00> : vector<256x128xf32>
    %92 = tpu.matmul %90, %91, %cst_54 {dimension_numbers = #tpu.dot_dimension_numbers<[1], [0], [0], [1], [0, 0, 1, 1], [], []>} : vector<256x5xbf16>, vector<5x128xbf16>, vector<256x128xf32> -> vector<256x128xf32>
    %93 = arith.addf %83, %92 : vector<256x128xf32>
    %c2_i32_55 = arith.constant 2 : i32
    %94 = arith.addi %0, %c2_i32_55 : i32
    %c0_56 = arith.constant 0 : index
    %95 = arith.index_cast %94 : i32 to index
    %c1_57 = arith.constant 1 : index
    %c0_58 = arith.constant 0 : index
    %96 = vector.load %arg2[%c0_56, %95, %c1_57, %c0_58] : memref<1x20x20x5xbf16, #tpu.memory_space<vmem>>, vector<1x16x16x5xbf16>
    %97 = vector.shape_cast %96 : vector<1x16x16x5xbf16> to vector<16x16x5xbf16>
    %98 = vector.shape_cast %97 : vector<16x16x5xbf16> to vector<256x5xbf16>
    %99 = vector.extract_strided_slice %85 {offsets = [5, 0], sizes = [5, 128], strides = [1, 1]} : vector<25x128xbf16> to vector<5x128xbf16>
    %cst_59 = arith.constant dense<0.000000e+00> : vector<256x128xf32>
    %100 = tpu.matmul %98, %99, %cst_59 {dimension_numbers = #tpu.dot_dimension_numbers<[1], [0], [0], [1], [0, 0, 1, 1], [], []>} : vector<256x5xbf16>, vector<5x128xbf16>, vector<256x128xf32> -> vector<256x128xf32>
    %101 = arith.addf %93, %100 : vector<256x128xf32>
    %c2_i32_60 = arith.constant 2 : i32
    %102 = arith.addi %0, %c2_i32_60 : i32
    %c0_61 = arith.constant 0 : index
    %103 = arith.index_cast %102 : i32 to index
    %c2_62 = arith.constant 2 : index
    %c0_63 = arith.constant 0 : index
    %104 = vector.load %arg2[%c0_61, %103, %c2_62, %c0_63] : memref<1x20x20x5xbf16, #tpu.memory_space<vmem>>, vector<1x16x16x5xbf16>
    %105 = vector.shape_cast %104 : vector<1x16x16x5xbf16> to vector<16x16x5xbf16>
    %106 = vector.shape_cast %105 : vector<16x16x5xbf16> to vector<256x5xbf16>
    %107 = vector.extract_strided_slice %85 {offsets = [10, 0], sizes = [5, 128], strides = [1, 1]} : vector<25x128xbf16> to vector<5x128xbf16>
    %cst_64 = arith.constant dense<0.000000e+00> : vector<256x128xf32>
    %108 = tpu.matmul %106, %107, %cst_64 {dimension_numbers = #tpu.dot_dimension_numbers<[1], [0], [0], [1], [0, 0, 1, 1], [], []>} : vector<256x5xbf16>, vector<5x128xbf16>, vector<256x128xf32> -> vector<256x128xf32>
    %109 = arith.addf %101, %108 : vector<256x128xf32>
    %c2_i32_65 = arith.constant 2 : i32
    %110 = arith.addi %0, %c2_i32_65 : i32
    %c0_66 = arith.constant 0 : index
    %111 = arith.index_cast %110 : i32 to index
    %c3_67 = arith.constant 3 : index
    %c0_68 = arith.constant 0 : index
    %112 = vector.load %arg2[%c0_66, %111, %c3_67, %c0_68] : memref<1x20x20x5xbf16, #tpu.memory_space<vmem>>, vector<1x16x16x5xbf16>
    %113 = vector.shape_cast %112 : vector<1x16x16x5xbf16> to vector<16x16x5xbf16>
    %114 = vector.shape_cast %113 : vector<16x16x5xbf16> to vector<256x5xbf16>
    %115 = vector.extract_strided_slice %85 {offsets = [15, 0], sizes = [5, 128], strides = [1, 1]} : vector<25x128xbf16> to vector<5x128xbf16>
    %cst_69 = arith.constant dense<0.000000e+00> : vector<256x128xf32>
    %116 = tpu.matmul %114, %115, %cst_69 {dimension_numbers = #tpu.dot_dimension_numbers<[1], [0], [0], [1], [0, 0, 1, 1], [], []>} : vector<256x5xbf16>, vector<5x128xbf16>, vector<256x128xf32> -> vector<256x128xf32>
    %117 = arith.addf %109, %116 : vector<256x128xf32>
    %c2_i32_70 = arith.constant 2 : i32
    %118 = arith.addi %0, %c2_i32_70 : i32
    %c0_71 = arith.constant 0 : index
    %119 = arith.index_cast %118 : i32 to index
    %c4_72 = arith.constant 4 : index
    %c0_73 = arith.constant 0 : index
    %120 = vector.load %arg2[%c0_71, %119, %c4_72, %c0_73] : memref<1x20x20x5xbf16, #tpu.memory_space<vmem>>, vector<1x16x16x5xbf16>
    %121 = vector.shape_cast %120 : vector<1x16x16x5xbf16> to vector<16x16x5xbf16>
    %122 = vector.shape_cast %121 : vector<16x16x5xbf16> to vector<256x5xbf16>
    %123 = vector.extract_strided_slice %85 {offsets = [20, 0], sizes = [5, 128], strides = [1, 1]} : vector<25x128xbf16> to vector<5x128xbf16>
    %cst_74 = arith.constant dense<0.000000e+00> : vector<256x128xf32>
    %124 = tpu.matmul %122, %123, %cst_74 {dimension_numbers = #tpu.dot_dimension_numbers<[1], [0], [0], [1], [0, 0, 1, 1], [], []>} : vector<256x5xbf16>, vector<5x128xbf16>, vector<256x128xf32> -> vector<256x128xf32>
    %125 = arith.addf %117, %124 : vector<256x128xf32>
    %c3_75 = arith.constant 3 : index
    %c0_76 = arith.constant 0 : index
    %c0_77 = arith.constant 0 : index
    %126 = vector.load %arg3[%c3_75, %c0_76, %c0_77] : memref<5x25x128xbf16, #tpu.memory_space<vmem>>, vector<1x25x128xbf16>
    %127 = vector.shape_cast %126 : vector<1x25x128xbf16> to vector<25x128xbf16>
    %c3_i32 = arith.constant 3 : i32
    %128 = arith.addi %0, %c3_i32 : i32
    %c0_78 = arith.constant 0 : index
    %129 = arith.index_cast %128 : i32 to index
    %c0_79 = arith.constant 0 : index
    %c0_80 = arith.constant 0 : index
    %130 = vector.load %arg2[%c0_78, %129, %c0_79, %c0_80] : memref<1x20x20x5xbf16, #tpu.memory_space<vmem>>, vector<1x16x16x5xbf16>
    %131 = vector.shape_cast %130 : vector<1x16x16x5xbf16> to vector<16x16x5xbf16>
    %132 = vector.shape_cast %131 : vector<16x16x5xbf16> to vector<256x5xbf16>
    %133 = vector.extract_strided_slice %127 {offsets = [0, 0], sizes = [5, 128], strides = [1, 1]} : vector<25x128xbf16> to vector<5x128xbf16>
    %cst_81 = arith.constant dense<0.000000e+00> : vector<256x128xf32>
    %134 = tpu.matmul %132, %133, %cst_81 {dimension_numbers = #tpu.dot_dimension_numbers<[1], [0], [0], [1], [0, 0, 1, 1], [], []>} : vector<256x5xbf16>, vector<5x128xbf16>, vector<256x128xf32> -> vector<256x128xf32>
    %135 = arith.addf %125, %134 : vector<256x128xf32>
    %c3_i32_82 = arith.constant 3 : i32
    %136 = arith.addi %0, %c3_i32_82 : i32
    %c0_83 = arith.constant 0 : index
    %137 = arith.index_cast %136 : i32 to index
    %c1_84 = arith.constant 1 : index
    %c0_85 = arith.constant 0 : index
    %138 = vector.load %arg2[%c0_83, %137, %c1_84, %c0_85] : memref<1x20x20x5xbf16, #tpu.memory_space<vmem>>, vector<1x16x16x5xbf16>
    %139 = vector.shape_cast %138 : vector<1x16x16x5xbf16> to vector<16x16x5xbf16>
    %140 = vector.shape_cast %139 : vector<16x16x5xbf16> to vector<256x5xbf16>
    %141 = vector.extract_strided_slice %127 {offsets = [5, 0], sizes = [5, 128], strides = [1, 1]} : vector<25x128xbf16> to vector<5x128xbf16>
    %cst_86 = arith.constant dense<0.000000e+00> : vector<256x128xf32>
    %142 = tpu.matmul %140, %141, %cst_86 {dimension_numbers = #tpu.dot_dimension_numbers<[1], [0], [0], [1], [0, 0, 1, 1], [], []>} : vector<256x5xbf16>, vector<5x128xbf16>, vector<256x128xf32> -> vector<256x128xf32>
    %143 = arith.addf %135, %142 : vector<256x128xf32>
    %c3_i32_87 = arith.constant 3 : i32
    %144 = arith.addi %0, %c3_i32_87 : i32
    %c0_88 = arith.constant 0 : index
    %145 = arith.index_cast %144 : i32 to index
    %c2_89 = arith.constant 2 : index
    %c0_90 = arith.constant 0 : index
    %146 = vector.load %arg2[%c0_88, %145, %c2_89, %c0_90] : memref<1x20x20x5xbf16, #tpu.memory_space<vmem>>, vector<1x16x16x5xbf16>
    %147 = vector.shape_cast %146 : vector<1x16x16x5xbf16> to vector<16x16x5xbf16>
    %148 = vector.shape_cast %147 : vector<16x16x5xbf16> to vector<256x5xbf16>
    %149 = vector.extract_strided_slice %127 {offsets = [10, 0], sizes = [5, 128], strides = [1, 1]} : vector<25x128xbf16> to vector<5x128xbf16>
    %cst_91 = arith.constant dense<0.000000e+00> : vector<256x128xf32>
    %150 = tpu.matmul %148, %149, %cst_91 {dimension_numbers = #tpu.dot_dimension_numbers<[1], [0], [0], [1], [0, 0, 1, 1], [], []>} : vector<256x5xbf16>, vector<5x128xbf16>, vector<256x128xf32> -> vector<256x128xf32>
    %151 = arith.addf %143, %150 : vector<256x128xf32>
    %c3_i32_92 = arith.constant 3 : i32
    %152 = arith.addi %0, %c3_i32_92 : i32
    %c0_93 = arith.constant 0 : index
    %153 = arith.index_cast %152 : i32 to index
    %c3_94 = arith.constant 3 : index
    %c0_95 = arith.constant 0 : index
    %154 = vector.load %arg2[%c0_93, %153, %c3_94, %c0_95] : memref<1x20x20x5xbf16, #tpu.memory_space<vmem>>, vector<1x16x16x5xbf16>
    %155 = vector.shape_cast %154 : vector<1x16x16x5xbf16> to vector<16x16x5xbf16>
    %156 = vector.shape_cast %155 : vector<16x16x5xbf16> to vector<256x5xbf16>
    %157 = vector.extract_strided_slice %127 {offsets = [15, 0], sizes = [5, 128], strides = [1, 1]} : vector<25x128xbf16> to vector<5x128xbf16>
    %cst_96 = arith.constant dense<0.000000e+00> : vector<256x128xf32>
    %158 = tpu.matmul %156, %157, %cst_96 {dimension_numbers = #tpu.dot_dimension_numbers<[1], [0], [0], [1], [0, 0, 1, 1], [], []>} : vector<256x5xbf16>, vector<5x128xbf16>, vector<256x128xf32> -> vector<256x128xf32>
    %159 = arith.addf %151, %158 : vector<256x128xf32>
    %c3_i32_97 = arith.constant 3 : i32
    %160 = arith.addi %0, %c3_i32_97 : i32
    %c0_98 = arith.constant 0 : index
    %161 = arith.index_cast %160 : i32 to index
    %c4_99 = arith.constant 4 : index
    %c0_100 = arith.constant 0 : index
    %162 = vector.load %arg2[%c0_98, %161, %c4_99, %c0_100] : memref<1x20x20x5xbf16, #tpu.memory_space<vmem>>, vector<1x16x16x5xbf16>
    %163 = vector.shape_cast %162 : vector<1x16x16x5xbf16> to vector<16x16x5xbf16>
    %164 = vector.shape_cast %163 : vector<16x16x5xbf16> to vector<256x5xbf16>
    %165 = vector.extract_strided_slice %127 {offsets = [20, 0], sizes = [5, 128], strides = [1, 1]} : vector<25x128xbf16> to vector<5x128xbf16>
    %cst_101 = arith.constant dense<0.000000e+00> : vector<256x128xf32>
    %166 = tpu.matmul %164, %165, %cst_101 {dimension_numbers = #tpu.dot_dimension_numbers<[1], [0], [0], [1], [0, 0, 1, 1], [], []>} : vector<256x5xbf16>, vector<5x128xbf16>, vector<256x128xf32> -> vector<256x128xf32>
    %167 = arith.addf %159, %166 : vector<256x128xf32>
    %c4_102 = arith.constant 4 : index
    %c0_103 = arith.constant 0 : index
    %c0_104 = arith.constant 0 : index
    %168 = vector.load %arg3[%c4_102, %c0_103, %c0_104] : memref<5x25x128xbf16, #tpu.memory_space<vmem>>, vector<1x25x128xbf16>
    %169 = vector.shape_cast %168 : vector<1x25x128xbf16> to vector<25x128xbf16>
    %c4_i32 = arith.constant 4 : i32
    %170 = arith.addi %0, %c4_i32 : i32
    %c0_105 = arith.constant 0 : index
    %171 = arith.index_cast %170 : i32 to index
    %c0_106 = arith.constant 0 : index
    %c0_107 = arith.constant 0 : index
    %172 = vector.load %arg2[%c0_105, %171, %c0_106, %c0_107] : memref<1x20x20x5xbf16, #tpu.memory_space<vmem>>, vector<1x16x16x5xbf16>
    %173 = vector.shape_cast %172 : vector<1x16x16x5xbf16> to vector<16x16x5xbf16>
    %174 = vector.shape_cast %173 : vector<16x16x5xbf16> to vector<256x5xbf16>
    %175 = vector.extract_strided_slice %169 {offsets = [0, 0], sizes = [5, 128], strides = [1, 1]} : vector<25x128xbf16> to vector<5x128xbf16>
    %cst_108 = arith.constant dense<0.000000e+00> : vector<256x128xf32>
    %176 = tpu.matmul %174, %175, %cst_108 {dimension_numbers = #tpu.dot_dimension_numbers<[1], [0], [0], [1], [0, 0, 1, 1], [], []>} : vector<256x5xbf16>, vector<5x128xbf16>, vector<256x128xf32> -> vector<256x128xf32>
    %177 = arith.addf %167, %176 : vector<256x128xf32>
    %c4_i32_109 = arith.constant 4 : i32
    %178 = arith.addi %0, %c4_i32_109 : i32
    %c0_110 = arith.constant 0 : index
    %179 = arith.index_cast %178 : i32 to index
    %c1_111 = arith.constant 1 : index
    %c0_112 = arith.constant 0 : index
    %180 = vector.load %arg2[%c0_110, %179, %c1_111, %c0_112] : memref<1x20x20x5xbf16, #tpu.memory_space<vmem>>, vector<1x16x16x5xbf16>
    %181 = vector.shape_cast %180 : vector<1x16x16x5xbf16> to vector<16x16x5xbf16>
    %182 = vector.shape_cast %181 : vector<16x16x5xbf16> to vector<256x5xbf16>
    %183 = vector.extract_strided_slice %169 {offsets = [5, 0], sizes = [5, 128], strides = [1, 1]} : vector<25x128xbf16> to vector<5x128xbf16>
    %cst_113 = arith.constant dense<0.000000e+00> : vector<256x128xf32>
    %184 = tpu.matmul %182, %183, %cst_113 {dimension_numbers = #tpu.dot_dimension_numbers<[1], [0], [0], [1], [0, 0, 1, 1], [], []>} : vector<256x5xbf16>, vector<5x128xbf16>, vector<256x128xf32> -> vector<256x128xf32>
    %185 = arith.addf %177, %184 : vector<256x128xf32>
    %c4_i32_114 = arith.constant 4 : i32
    %186 = arith.addi %0, %c4_i32_114 : i32
    %c0_115 = arith.constant 0 : index
    %187 = arith.index_cast %186 : i32 to index
    %c2_116 = arith.constant 2 : index
    %c0_117 = arith.constant 0 : index
    %188 = vector.load %arg2[%c0_115, %187, %c2_116, %c0_117] : memref<1x20x20x5xbf16, #tpu.memory_space<vmem>>, vector<1x16x16x5xbf16>
    %189 = vector.shape_cast %188 : vector<1x16x16x5xbf16> to vector<16x16x5xbf16>
    %190 = vector.shape_cast %189 : vector<16x16x5xbf16> to vector<256x5xbf16>
    %191 = vector.extract_strided_slice %169 {offsets = [10, 0], sizes = [5, 128], strides = [1, 1]} : vector<25x128xbf16> to vector<5x128xbf16>
    %cst_118 = arith.constant dense<0.000000e+00> : vector<256x128xf32>
    %192 = tpu.matmul %190, %191, %cst_118 {dimension_numbers = #tpu.dot_dimension_numbers<[1], [0], [0], [1], [0, 0, 1, 1], [], []>} : vector<256x5xbf16>, vector<5x128xbf16>, vector<256x128xf32> -> vector<256x128xf32>
    %193 = arith.addf %185, %192 : vector<256x128xf32>
    %c4_i32_119 = arith.constant 4 : i32
    %194 = arith.addi %0, %c4_i32_119 : i32
    %c0_120 = arith.constant 0 : index
    %195 = arith.index_cast %194 : i32 to index
    %c3_121 = arith.constant 3 : index
    %c0_122 = arith.constant 0 : index
    %196 = vector.load %arg2[%c0_120, %195, %c3_121, %c0_122] : memref<1x20x20x5xbf16, #tpu.memory_space<vmem>>, vector<1x16x16x5xbf16>
    %197 = vector.shape_cast %196 : vector<1x16x16x5xbf16> to vector<16x16x5xbf16>
    %198 = vector.shape_cast %197 : vector<16x16x5xbf16> to vector<256x5xbf16>
    %199 = vector.extract_strided_slice %169 {offsets = [15, 0], sizes = [5, 128], strides = [1, 1]} : vector<25x128xbf16> to vector<5x128xbf16>
    %cst_123 = arith.constant dense<0.000000e+00> : vector<256x128xf32>
    %200 = tpu.matmul %198, %199, %cst_123 {dimension_numbers = #tpu.dot_dimension_numbers<[1], [0], [0], [1], [0, 0, 1, 1], [], []>} : vector<256x5xbf16>, vector<5x128xbf16>, vector<256x128xf32> -> vector<256x128xf32>
    %201 = arith.addf %193, %200 : vector<256x128xf32>
    %c4_i32_124 = arith.constant 4 : i32
    %202 = arith.addi %0, %c4_i32_124 : i32
    %c0_125 = arith.constant 0 : index
    %203 = arith.index_cast %202 : i32 to index
    %c4_126 = arith.constant 4 : index
    %c0_127 = arith.constant 0 : index
    %204 = vector.load %arg2[%c0_125, %203, %c4_126, %c0_127] : memref<1x20x20x5xbf16, #tpu.memory_space<vmem>>, vector<1x16x16x5xbf16>
    %205 = vector.shape_cast %204 : vector<1x16x16x5xbf16> to vector<16x16x5xbf16>
    %206 = vector.shape_cast %205 : vector<16x16x5xbf16> to vector<256x5xbf16>
    %207 = vector.extract_strided_slice %169 {offsets = [20, 0], sizes = [5, 128], strides = [1, 1]} : vector<25x128xbf16> to vector<5x128xbf16>
    %cst_128 = arith.constant dense<0.000000e+00> : vector<256x128xf32>
    %208 = tpu.matmul %206, %207, %cst_128 {dimension_numbers = #tpu.dot_dimension_numbers<[1], [0], [0], [1], [0, 0, 1, 1], [], []>} : vector<256x5xbf16>, vector<5x128xbf16>, vector<256x128xf32> -> vector<256x128xf32>
    %209 = arith.addf %201, %208 : vector<256x128xf32>
    %c0_129 = arith.constant 0 : index
    %c0_130 = arith.constant 0 : index
    %210 = vector.load %arg4[%c0_129, %c0_130] : memref<1x128xf32, #tpu.memory_space<vmem>>, vector<1x128xf32>
    %211 = vector.broadcast %210 : vector<1x128xf32> to vector<256x128xf32>
    %212 = arith.addf %209, %211 : vector<256x128xf32>
    %cst_131 = arith.constant 0.000000e+00 : f32
    %213 = vector.broadcast %cst_131 : f32 to vector<256x128xf32>
    %214 = arith.cmpf ogt, %212, %213 : vector<256x128xf32>
    %215 = math.exp %212 : vector<256x128xf32>
    %cst_132 = arith.constant 1.000000e+00 : f32
    %216 = vector.broadcast %cst_132 : f32 to vector<256x128xf32>
    %217 = arith.subf %215, %216 : vector<256x128xf32>
    %218 = arith.select %214, %212, %217 : vector<256x128xi1>, vector<256x128xf32>
    %219 = arith.truncf %218 : vector<256x128xf32> to vector<256x128xbf16>
    %c0_133 = arith.constant 0 : index
    %c0_134 = arith.constant 0 : index
    %c0_135 = arith.constant 0 : index
    %220 = vector.load %arg5[%c0_133, %c0_134, %c0_135] : memref<1x256x128xbf16, #tpu.memory_space<vmem>>, vector<1x256x128xbf16>
    %221 = vector.shape_cast %220 : vector<1x256x128xbf16> to vector<256x128xbf16>
    %222 = vector.shape_cast %219 : vector<256x128xbf16> to vector<1x256x128xbf16>
    tpu.vector_store %arg5[%c0_133, %c0_134, %c0_135], %222 {strides = array<i32>} : memref<1x256x128xbf16, #tpu.memory_space<vmem>>, vector<1x256x128xbf16>,
    return
  }
  func.func @transform_0(%arg0: i32, %arg1: i32) -> (i32, i32, i32, i32) {
    %c0_i32 = arith.constant 0 : i32
    %c0_i32_0 = arith.constant 0 : i32
    %c0_i32_1 = arith.constant 0 : i32
    %c0_i32_2 = arith.constant 0 : i32
    return %arg0, %c0_i32, %c0_i32_0, %c0_i32_1 : i32, i32, i32, i32
  }
  func.func @transform_1(%arg0: i32, %arg1: i32) -> (i32, i32, i32) {
    %c0_i32 = arith.constant 0 : i32
    %c0_i32_0 = arith.constant 0 : i32
    %c0_i32_1 = arith.constant 0 : i32
    %c0_i32_2 = arith.constant 0 : i32
    return %c0_i32, %c0_i32_0, %c0_i32_1 : i32, i32, i32
  }
  func.func @transform_2(%arg0: i32, %arg1: i32) -> (i32, i32) {
    %c0_i32 = arith.constant 0 : i32
    %c0_i32_0 = arith.constant 0 : i32
    %c0_i32_1 = arith.constant 0 : i32
    return %c0_i32, %c0_i32_0 : i32, i32
  }
  func.func @transform_3(%arg0: i32, %arg1: i32) -> (i32, i32, i32) {
    %c0_i32 = arith.constant 0 : i32
    %c0_i32_0 = arith.constant 0 : i32
    return %arg0, %arg1, %c0_i32 : i32, i32, i32
  }
}

</mosaic_0001>

<llo_original>
// kernel: tpu_custom_call.1
$region0: #{tpu_custom_call.1}
  #allocation0 [shape = 'u32[]', space=smem, size = 0x4, offset = 0x4, fixed_abs, tag = 'smem constant byte address 0x4 - core index']
  #allocation1 [shape = 'u32[144,128]{1,0:T(1,128)}', space=vmem, size = 0x12000, scoped, tag = 'internal scratch']
  %s0 = inlined_call_operand.vmem [shape: bf16[1,20,20,5], index: 0, kind: input, shape index: {}]
  %s1 = inlined_call_operand.vmem [shape: bf16[5,25,128], index: 1, kind: input, shape index: {}]
  %s2 = inlined_call_operand.vmem [shape: f32[1,128], index: 2, kind: input, shape index: {}]
  %s3 = inlined_call_operand.hbm [shape: bf16[1,256,128], index: 3, kind: output, shape index: {}]
  %s4 = sld [smem:[#allocation0]]
  $region22: #{tpu_custom_call.1} parent=0
    _
  %s6 = ssub.s32 1, %s4
  %s7 = scalar_select 0, %s6, %s4
  $region1: #{tpu_custom_call.1} parent=0
    #allocation2 [shape = 'u8[65536]{0}', space=vmem, size = 0x10000, scoped, tag = 'output window, operand 0, single buffered']
    #allocation3 [shape = 's32[1]{0}', space=sflag, size = 0x4, scoped, tag = 'scoped memory for tpu_custom_call.1']
    %8 = vsyncpa [#allocation3], 0
    // Predicated region
    $region2: #{tpu_custom_call.1} parent=1 // pred_check
      _
    $region3: #{tpu_custom_call.1} parent=1 // pred_check_branch
      %10 = sbr.rel (0) target = $region5
    $region4: #{tpu_custom_call.1} parent=1 // pred_region
      _
    $region5: #{tpu_custom_call.1} parent=1 // pred_fallthru
      _
    // Predicated region
    $region6: #{tpu_custom_call.1} parent=1 // pred_check
      _
    $region7: #{tpu_custom_call.1} parent=1 // pred_check_branch
      %12 = sbr.rel (0) target = $region9
    $region8: #{tpu_custom_call.1} parent=1 // pred_region
      _
    $region9: #{tpu_custom_call.1} parent=1 // pred_fallthru
      _
    // Predicated region
    $region10: #{tpu_custom_call.1} parent=1 // pred_check
      _
    $region11: #{tpu_custom_call.1} parent=1 // pred_check_branch
      %14 = sbr.rel (0) target = $region13
    $region12: #{tpu_custom_call.1} parent=1 // pred_region
      _
    $region13: #{tpu_custom_call.1} parent=1 // pred_fallthru
      _
    %s16 = smul.u32 0, 16
    %v17 = vld [vmem:[%s1] sm:$0xf]
    %v18 = vld [vmem:[%s1 + $0x4] sm:$0xf]
    %v19 = vld [vmem:[%s1 + $0x8] sm:$0xf]
    %v20 = vld [vmem:[%s1 + $0xc] sm:$0x1]
    %s21 = smul.u32 %s16, 3
    %s22 = smul.addr %s21, 4
    %s23 = scalar_lea.vmem %s0, %s22
    %v24 = vld [vmem:[%s23] sm:$0xf]
    %v25 = vld [vmem:[%s23 + $0x4] sm:$0xf]
    %v26 = vld [vmem:[%s23 + $0xc] sm:$0xf]
    %v27 = vld [vmem:[%s23 + $0x10] sm:$0xf]
    %v28 = vld [vmem:[%s23 + $0x18] sm:$0xf]
    %v29 = vld [vmem:[%s23 + $0x1c] sm:$0xf]
    %v30 = vld [vmem:[%s23 + $0x24] sm:$0xf]
    %v31 = vld [vmem:[%s23 + $0x28] sm:$0xf]
    %v32 = vld [vmem:[%s23 + $0x30] sm:$0xf]
    %v33 = vld [vmem:[%s23 + $0x34] sm:$0xf]
    %v34 = vld [vmem:[%s23 + $0x3c] sm:$0xf]
    %v35 = vld [vmem:[%s23 + $0x40] sm:$0xf]
    %v36 = vld [vmem:[%s23 + $0x48] sm:$0xf]
    %v37 = vld [vmem:[%s23 + $0x4c] sm:$0xf]
    %v38 = vld [vmem:[%s23 + $0x54] sm:$0xf]
    %v39 = vld [vmem:[%s23 + $0x58] sm:$0xf]
    %v40 = vld [vmem:[%s23 + $0x60] sm:$0xf]
    %v41 = vld [vmem:[%s23 + $0x64] sm:$0xf]
    %v42 = vld [vmem:[%s23 + $0x6c] sm:$0xf]
    %v43 = vld [vmem:[%s23 + $0x70] sm:$0xf]
    %v44 = vld [vmem:[%s23 + $0x78] sm:$0xf]
    %v45 = vld [vmem:[%s23 + $0x7c] sm:$0xf]
    %v46 = vld [vmem:[%s23 + $0x84] sm:$0xf]
    %v47 = vld [vmem:[%s23 + $0x88] sm:$0xf]
    %v48 = vld [vmem:[%s23 + $0x90] sm:$0xf]
    %v49 = vld [vmem:[%s23 + $0x94] sm:$0xf]
    %v50 = vld [vmem:[%s23 + $0x9c] sm:$0xf]
    %v51 = vld [vmem:[%s23 + $0xa0] sm:$0xf]
    %v52 = vld [vmem:[%s23 + $0xa8] sm:$0xf]
    %v53 = vld [vmem:[%s23 + $0xac] sm:$0xf]
    %v54 = vld [vmem:[%s23 + $0xb4] sm:$0xf]
    %v55 = vld [vmem:[%s23 + $0xb8] sm:$0xf]
    %v56 = vld [vmem:[%s23 + $0x8] sm:$0x1]
    %v57 = vld [vmem:[%s23 + $0x14] sm:$0x1]
    %v58 = vld [vmem:[%s23 + $0x20] sm:$0x1]
    %v59 = vld [vmem:[%s23 + $0x2c] sm:$0x1]
    %v60 = vld [vmem:[%s23 + $0x38] sm:$0x1]
    %v61 = vld [vmem:[%s23 + $0x44] sm:$0x1]
    %v62 = vld [vmem:[%s23 + $0x50] sm:$0x1]
    %v63 = vld [vmem:[%s23 + $0x5c] sm:$0x1]
    %v64 = vld [vmem:[%s23 + $0x68] sm:$0x1]
    %v65 = vld [vmem:[%s23 + $0x74] sm:$0x1]
    %v66 = vld [vmem:[%s23 + $0x80] sm:$0x1]
    %v67 = vld [vmem:[%s23 + $0x8c] sm:$0x1]
    %v68 = vld [vmem:[%s23 + $0x98] sm:$0x1]
    %v69 = vld [vmem:[%s23 + $0xa4] sm:$0x1]
    %v70 = vld [vmem:[%s23 + $0xb0] sm:$0x1]
    %v71 = vld [vmem:[%s23 + $0xbc] sm:$0x1]
    %vm72 = vsmask.f32 3328
    %vm73 = vsmask.f32 7440
    %vm74 = vmor %vm72, %vm73
    %v76 = vshrl.u32 %v24, 16
    %v78 = vrot.slane %v76, 4
    %v79 = vshll.u32 %v24, 16
    %v81 = vrot.slane %v79, 5
    %v82 = vor.u32 %v78, %v81
    %v83 = vrot.slane %v82, 4
    %v85 = vshll.u32 %v25, 16
    %v87 = vrot.slane %v85, 5
    %v88 = vsel %vm74, %v83, %v87
    %v89 = vshrl.u32 %v25, 16
    %v91 = vrot.slane %v89, 4
    %v92 = vor.u32 %v91, %v87
    %v93 = vrot.slane %v92, 4
    %v95 = vshll.u32 %v56, 16
    %v97 = vrot.slane %v95, 5
    %v98 = vsel %vm74, %v93, %v97
    %v100 = vshrl.u32 %v26, 16
    %v102 = vrot.slane %v100, 4
    %v103 = vshll.u32 %v26, 16
    %v105 = vrot.slane %v103, 5
    %v106 = vor.u32 %v102, %v105
    %v107 = vrot.slane %v106, 4
    %v109 = vshll.u32 %v27, 16
    %v111 = vrot.slane %v109, 5
    %v112 = vsel %vm74, %v107, %v111
    %v113 = vshrl.u32 %v27, 16
    %v115 = vrot.slane %v113, 4
    %v116 = vor.u32 %v115, %v111
    %v117 = vrot.slane %v116, 4
    %v119 = vshll.u32 %v57, 16
    %v121 = vrot.slane %v119, 5
    %v122 = vsel %vm74, %v117, %v121
    %v124 = vshrl.u32 %v28, 16
    %v126 = vrot.slane %v124, 4
    %v127 = vshll.u32 %v28, 16
    %v129 = vrot.slane %v127, 5
    %v130 = vor.u32 %v126, %v129
    %v131 = vrot.slane %v130, 4
    %v133 = vshll.u32 %v29, 16
    %v135 = vrot.slane %v133, 5
    %v136 = vsel %vm74, %v131, %v135
    %v137 = vshrl.u32 %v29, 16
    %v139 = vrot.slane %v137, 4
    %v140 = vor.u32 %v139, %v135
    %v141 = vrot.slane %v140, 4
    %v143 = vshll.u32 %v58, 16
    %v145 = vrot.slane %v143, 5
    %v146 = vsel %vm74, %v141, %v145
    %v148 = vshrl.u32 %v30, 16
    %v150 = vrot.slane %v148, 4
    %v151 = vshll.u32 %v30, 16
    %v153 = vrot.slane %v151, 5
    %v154 = vor.u32 %v150, %v153
    %v155 = vrot.slane %v154, 4
    %v157 = vshll.u32 %v31, 16
    %v159 = vrot.slane %v157, 5
    %v160 = vsel %vm74, %v155, %v159
    %v161 = vshrl.u32 %v31, 16
    %v163 = vrot.slane %v161, 4
    %v164 = vor.u32 %v163, %v159
    %v165 = vrot.slane %v164, 4
    %v167 = vshll.u32 %v59, 16
    %v169 = vrot.slane %v167, 5
    %v170 = vsel %vm74, %v165, %v169
    %v172 = vshrl.u32 %v32, 16
    %v174 = vrot.slane %v172, 4
    %v175 = vshll.u32 %v32, 16
    %v177 = vrot.slane %v175, 5
    %v178 = vor.u32 %v174, %v177
    %v179 = vrot.slane %v178, 4
    %v181 = vshll.u32 %v33, 16
    %v183 = vrot.slane %v181, 5
    %v184 = vsel %vm74, %v179, %v183
    %v185 = vshrl.u32 %v33, 16
    %v187 = vrot.slane %v185, 4
    %v188 = vor.u32 %v187, %v183
    %v189 = vrot.slane %v188, 4
    %v191 = vshll.u32 %v60, 16
    %v193 = vrot.slane %v191, 5
    %v194 = vsel %vm74, %v189, %v193
    %v196 = vshrl.u32 %v34, 16
    %v198 = vrot.slane %v196, 4
    %v199 = vshll.u32 %v34, 16
    %v201 = vrot.slane %v199, 5
    %v202 = vor.u32 %v198, %v201
    %v203 = vrot.slane %v202, 4
    %v205 = vshll.u32 %v35, 16
    %v207 = vrot.slane %v205, 5
    %v208 = vsel %vm74, %v203, %v207
    %v209 = vshrl.u32 %v35, 16
    %v211 = vrot.slane %v209, 4
    %v212 = vor.u32 %v211, %v207
    %v213 = vrot.slane %v212, 4
    %v215 = vshll.u32 %v61, 16
    %v217 = vrot.slane %v215, 5
    %v218 = vsel %vm74, %v213, %v217
    %v220 = vshrl.u32 %v36, 16
    %v222 = vrot.slane %v220, 4
    %v223 = vshll.u32 %v36, 16
    %v225 = vrot.slane %v223, 5
    %v226 = vor.u32 %v222, %v225
    %v227 = vrot.slane %v226, 4
    %v229 = vshll.u32 %v37, 16
    %v231 = vrot.slane %v229, 5
    %v232 = vsel %vm74, %v227, %v231
    %v233 = vshrl.u32 %v37, 16
    %v235 = vrot.slane %v233, 4
    %v236 = vor.u32 %v235, %v231
    %v237 = vrot.slane %v236, 4
    %v239 = vshll.u32 %v62, 16
    %v241 = vrot.slane %v239, 5
    %v242 = vsel %vm74, %v237, %v241
    %v244 = vshrl.u32 %v38, 16
    %v246 = vrot.slane %v244, 4
    %v247 = vshll.u32 %v38, 16
    %v249 = vrot.slane %v247, 5
    %v250 = vor.u32 %v246, %v249
    %v251 = vrot.slane %v250, 4
    %v253 = vshll.u32 %v39, 16
    %v255 = vrot.slane %v253, 5
    %v256 = vsel %vm74, %v251, %v255
    %v257 = vshrl.u32 %v39, 16
    %v259 = vrot.slane %v257, 4
    %v260 = vor.u32 %v259, %v255
    %v261 = vrot.slane %v260, 4
    %v263 = vshll.u32 %v63, 16
    %v265 = vrot.slane %v263, 5
    %v266 = vsel %vm74, %v261, %v265
    %v268 = vshrl.u32 %v40, 16
    %v270 = vrot.slane %v268, 4
    %v271 = vshll.u32 %v40, 16
    %v273 = vrot.slane %v271, 5
    %v274 = vor.u32 %v270, %v273
    %v275 = vrot.slane %v274, 4
    %v277 = vshll.u32 %v41, 16
    %v279 = vrot.slane %v277, 5
    %v280 = vsel %vm74, %v275, %v279
    %v281 = vshrl.u32 %v41, 16
    %v283 = vrot.slane %v281, 4
    %v284 = vor.u32 %v283, %v279
    %v285 = vrot.slane %v284, 4
    %v287 = vshll.u32 %v64, 16
    %v289 = vrot.slane %v287, 5
    %v290 = vsel %vm74, %v285, %v289
    %v292 = vshrl.u32 %v42, 16
    %v294 = vrot.slane %v292, 4
    %v295 = vshll.u32 %v42, 16
    %v297 = vrot.slane %v295, 5
    %v298 = vor.u32 %v294, %v297
    %v299 = vrot.slane %v298, 4
    %v301 = vshll.u32 %v43, 16
    %v303 = vrot.slane %v301, 5
    %v304 = vsel %vm74, %v299, %v303
    %v305 = vshrl.u32 %v43, 16
    %v307 = vrot.slane %v305, 4
    %v308 = vor.u32 %v307, %v303
    %v309 = vrot.slane %v308, 4
    %v311 = vshll.u32 %v65, 16
    %v313 = vrot.slane %v311, 5
    %v314 = vsel %vm74, %v309, %v313
    %v316 = vshrl.u32 %v44, 16
    %v318 = vrot.slane %v316, 4
    %v319 = vshll.u32 %v44, 16
    %v321 = vrot.slane %v319, 5
    %v322 = vor.u32 %v318, %v321
    %v323 = vrot.slane %v322, 4
    %v325 = vshll.u32 %v45, 16
    %v327 = vrot.slane %v325, 5
    %v328 = vsel %vm74, %v323, %v327
    %v329 = vshrl.u32 %v45, 16
    %v331 = vrot.slane %v329, 4
    %v332 = vor.u32 %v331, %v327
    %v333 = vrot.slane %v332, 4
    %v335 = vshll.u32 %v66, 16
    %v337 = vrot.slane %v335, 5
    %v338 = vsel %vm74, %v333, %v337
    %v340 = vshrl.u32 %v46, 16
    %v342 = vrot.slane %v340, 4
    %v343 = vshll.u32 %v46, 16
    %v345 = vrot.slane %v343, 5
    %v346 = vor.u32 %v342, %v345
    %v347 = vrot.slane %v346, 4
    %v349 = vshll.u32 %v47, 16
    %v351 = vrot.slane %v349, 5
    %v352 = vsel %vm74, %v347, %v351
    %v353 = vshrl.u32 %v47, 16
    %v355 = vrot.slane %v353, 4
    %v356 = vor.u32 %v355, %v351
    %v357 = vrot.slane %v356, 4
    %v359 = vshll.u32 %v67, 16
    %v361 = vrot.slane %v359, 5
    %v362 = vsel %vm74, %v357, %v361
    %v364 = vshrl.u32 %v48, 16
    %v366 = vrot.slane %v364, 4
    %v367 = vshll.u32 %v48, 16
    %v369 = vrot.slane %v367, 5
    %v370 = vor.u32 %v366, %v369
    %v371 = vrot.slane %v370, 4
    %v373 = vshll.u32 %v49, 16
    %v375 = vrot.slane %v373, 5
    %v376 = vsel %vm74, %v371, %v375
    %v377 = vshrl.u32 %v49, 16
    %v379 = vrot.slane %v377, 4
    %v380 = vor.u32 %v379, %v375
    %v381 = vrot.slane %v380, 4
    %v383 = vshll.u32 %v68, 16
    %v385 = vrot.slane %v383, 5
    %v386 = vsel %vm74, %v381, %v385
    %v388 = vshrl.u32 %v50, 16
    %v390 = vrot.slane %v388, 4
    %v391 = vshll.u32 %v50, 16
    %v393 = vrot.slane %v391, 5
    %v394 = vor.u32 %v390, %v393
    %v395 = vrot.slane %v394, 4
    %v397 = vshll.u32 %v51, 16
    %v399 = vrot.slane %v397, 5
    %v400 = vsel %vm74, %v395, %v399
    %v401 = vshrl.u32 %v51, 16
    %v403 = vrot.slane %v401, 4
    %v404 = vor.u32 %v403, %v399
    %v405 = vrot.slane %v404, 4
    %v407 = vshll.u32 %v69, 16
    %v409 = vrot.slane %v407, 5
    %v410 = vsel %vm74, %v405, %v409
    %v412 = vshrl.u32 %v52, 16
    %v414 = vrot.slane %v412, 4
    %v415 = vshll.u32 %v52, 16
    %v417 = vrot.slane %v415, 5
    %v418 = vor.u32 %v414, %v417
    %v419 = vrot.slane %v418, 4
    %v421 = vshll.u32 %v53, 16
    %v423 = vrot.slane %v421, 5
    %v424 = vsel %vm74, %v419, %v423
    %v425 = vshrl.u32 %v53, 16
    %v427 = vrot.slane %v425, 4
    %v428 = vor.u32 %v427, %v423
    %v429 = vrot.slane %v428, 4
    %v431 = vshll.u32 %v70, 16
    %v433 = vrot.slane %v431, 5
    %v434 = vsel %vm74, %v429, %v433
    %v436 = vshrl.u32 %v54, 16
    %v438 = vrot.slane %v436, 4
    %v439 = vshll.u32 %v54, 16
    %v441 = vrot.slane %v439, 5
    %v442 = vor.u32 %v438, %v441
    %v443 = vrot.slane %v442, 4
    %v445 = vshll.u32 %v55, 16
    %v447 = vrot.slane %v445, 5
    %v448 = vsel %vm74, %v443, %v447
    %v449 = vshrl.u32 %v55, 16
    %v451 = vrot.slane %v449, 4
    %v452 = vor.u32 %v451, %v447
    %v453 = vrot.slane %v452, 4
    %v455 = vshll.u32 %v71, 16
    %v457 = vrot.slane %v455, 5
    %v458 = vsel %vm74, %v453, %v457
    %v459 = vunpack.c.l.b16 %v88
    %v460 = vunpack.c.l.b16 %v98
    %v461 = vunpack.c.l.b16 %v112
    %v462 = vunpack.c.l.b16 %v122
    %v463 = vunpack.c.l.b16 %v136
    %v464 = vunpack.c.l.b16 %v146
    %v465 = vunpack.c.l.b16 %v160
    %v466 = vunpack.c.l.b16 %v170
    %v467 = vunpack.c.l.b16 %v184
    %v468 = vunpack.c.l.b16 %v194
    %v469 = vunpack.c.l.b16 %v208
    %v470 = vunpack.c.l.b16 %v218
    %v471 = vunpack.c.l.b16 %v232
    %v472 = vunpack.c.l.b16 %v242
    %v473 = vunpack.c.l.b16 %v256
    %v474 = vunpack.c.l.b16 %v266
    %v475 = vunpack.c.l.b16 %v280
    %v476 = vunpack.c.l.b16 %v290
    %v477 = vunpack.c.l.b16 %v304
    %v478 = vunpack.c.l.b16 %v314
    %v479 = vunpack.c.l.b16 %v328
    %v480 = vunpack.c.l.b16 %v338
    %v481 = vunpack.c.l.b16 %v352
    %v482 = vunpack.c.l.b16 %v362
    %v483 = vunpack.c.l.b16 %v376
    %v484 = vunpack.c.l.b16 %v386
    %v485 = vunpack.c.l.b16 %v400
    %v486 = vunpack.c.l.b16 %v410
    %v487 = vunpack.c.l.b16 %v424
    %v488 = vunpack.c.l.b16 %v434
    %v489 = vunpack.c.l.b16 %v448
    %v490 = vunpack.c.l.b16 %v458
    %v491 = vpack.c.b16 %v460, %v459
    %v492 = vpack.c.b16 %v462, %v461
    %v493 = vpack.c.b16 %v464, %v463
    %v494 = vpack.c.b16 %v466, %v465
    %v495 = vpack.c.b16 %v468, %v467
    %v496 = vpack.c.b16 %v470, %v469
    %v497 = vpack.c.b16 %v472, %v471
    %v498 = vpack.c.b16 %v474, %v473
    %v499 = vpack.c.b16 %v476, %v475
    %v500 = vpack.c.b16 %v478, %v477
    %v501 = vpack.c.b16 %v480, %v479
    %v502 = vpack.c.b16 %v482, %v481
    %v503 = vpack.c.b16 %v484, %v483
    %v504 = vpack.c.b16 %v486, %v485
    %v505 = vpack.c.b16 %v488, %v487
    %v506 = vpack.c.b16 %v490, %v489
    %v509 = vunpack.c.l.b16 %v17
    %v510 = vunpack.c.l.b16 %v18
    %v511 = vpack.c.b16 %v510, %v509
    %v513 = vshrl.u32 %v511, 16
    %v515 = vrot.slane %v513, 2
    %v516 = vshll.u32 %v511, 16
    %v518 = vrot.slane %v516, 3
    %v519 = vor.u32 %v515, %v518
    %vm520 = vcmask 39936
    %v522 = vsel %vm520, %v491, 0
    %v525 = vsel %vm520, %v492, 0
    %v528 = vsel %vm520, %v493, 0
    %v531 = vsel %vm520, %v494, 0
    %v534 = vsel %vm520, %v495, 0
    %v537 = vsel %vm520, %v496, 0
    %v540 = vsel %vm520, %v497, 0
    %v543 = vsel %vm520, %v498, 0
    %v546 = vsel %vm520, %v499, 0
    %v549 = vsel %vm520, %v500, 0
    %v552 = vsel %vm520, %v501, 0
    %v555 = vsel %vm520, %v502, 0
    %v558 = vsel %vm520, %v503, 0
    %v561 = vsel %vm520, %v504, 0
    %v564 = vsel %vm520, %v505, 0
    %v567 = vsel %vm520, %v506, 0
    %vm569 = vcmask 1041408
    %vm570 = vcmask 1042432
    %v571 = vsel %vm569, 4294967295, 65535
    %v572 = vsel %vm570, %v571, 0
    %v574 = vand.u32 %v519, %v572
    %576 = vmatprep.subr.bf16.mxu0 0
    %577 = vmatpush1.bf16.msra.mxu0 0
    %578 = vmatprep.subr.bf16.mxu0 0
    %579 = vmatpush1.bf16.msra.mxu0 0
    %580 = vmatprep.subr.bf16.mxu0 0
    %581 = vmatpush1.bf16.msra.mxu0 0
    %582 = vmatprep.subr.bf16.mxu0 0
    %583 = vmatpush1.bf16.msra.mxu0 0
    %584 = vmatprep.subr.bf16.mxu0 0
    %585 = vmatpush1.bf16.msra.mxu0 0
    %586 = vmatprep.subr.bf16.mxu0 0
    %587 = vmatpush1.bf16.msra.mxu0 0
    %588 = vmatprep.subr.bf16.mxu0 0
    %589 = vmatpush1.bf16.msra.mxu0 0
    %590 = vmatprep.subr.bf16.mxu0 0
    %591 = vmatpush1.bf16.msra.mxu0 %v574
    %592 = vmatprep.subr.bf16.mxu0 0
    %593 = vmatpush2.bf16.msra.mxu0 0
    %594 = vmatprep.subr.bf16.mxu0 0
    %595 = vmatpush2.bf16.msra.mxu0 0
    %596 = vmatprep.subr.bf16.mxu0 0
    %597 = vmatpush2.bf16.msra.mxu0 0
    %598 = vmatprep.subr.bf16.mxu0 0
    %599 = vmatpush2.bf16.msra.mxu0 0
    %600 = vmatprep.subr.bf16.mxu0 0
    %601 = vmatpush2.bf16.msra.mxu0 0
    %602 = vmatprep.subr.bf16.mxu0 0
    %603 = vmatpush2.bf16.msra.mxu0 0
    %604 = vmatprep.subr.bf16.mxu0 0
    %605 = vmatpush2.bf16.msra.mxu0 0
    %606 = vmatprep.subr.bf16.mxu0 0
    %607 = vmatpush2.bf16.msra.mxu0 0
    %608 = vmatprep.mubr.bf16.mxu0 0
    %609 = vmatmul.mubr.bf16.gmra.mxu0 %v522
    %v610 = vpop.f32.mrf.mxu0
    %v611 = vadd.f32 0.0, %v610
    %v612 = vpop.f32.mrf.mxu0
    %v613 = vpop.f32.mrf.mxu0
    %v614 = vadd.f32 0.0, %v613
    %v615 = vpop.f32.mrf.mxu0
    %616 = vmatprep.mubr.bf16.mxu0 0
    %617 = vmatmul.mubr.bf16.gmra.mxu0 %v525
    %v618 = vpop.f32.mrf.mxu0
    %v619 = vadd.f32 0.0, %v618
    %v620 = vpop.f32.mrf.mxu0
    %v621 = vpop.f32.mrf.mxu0
    %v622 = vadd.f32 0.0, %v621
    %v623 = vpop.f32.mrf.mxu0
    %624 = vmatprep.mubr.bf16.mxu0 0
    %625 = vmatmul.mubr.bf16.gmra.mxu0 %v528
    %v626 = vpop.f32.mrf.mxu0
    %v627 = vadd.f32 0.0, %v626
    %v628 = vpop.f32.mrf.mxu0
    %v629 = vpop.f32.mrf.mxu0
    %v630 = vadd.f32 0.0, %v629
    %v631 = vpop.f32.mrf.mxu0
    %632 = vmatprep.mubr.bf16.mxu0 0
    %633 = vmatmul.mubr.bf16.gmra.mxu0 %v531
    %v634 = vpop.f32.mrf.mxu0
    %v635 = vadd.f32 0.0, %v634
    %v636 = vpop.f32.mrf.mxu0
    %v637 = vpop.f32.mrf.mxu0
    %v638 = vadd.f32 0.0, %v637
    %v639 = vpop.f32.mrf.mxu0
    %640 = vmatprep.mubr.bf16.mxu0 0
    %641 = vmatmul.mubr.bf16.gmra.mxu0 %v534
    %v642 = vpop.f32.mrf.mxu0
    %v643 = vadd.f32 0.0, %v642
    %v644 = vpop.f32.mrf.mxu0
    %v645 = vpop.f32.mrf.mxu0
    %v646 = vadd.f32 0.0, %v645
    %v647 = vpop.f32.mrf.mxu0
    %648 = vmatprep.mubr.bf16.mxu0 0
    %649 = vmatmul.mubr.bf16.gmra.mxu0 %v537
    %v650 = vpop.f32.mrf.mxu0
    %v651 = vadd.f32 0.0, %v650
    %v652 = vpop.f32.mrf.mxu0
    %v653 = vpop.f32.mrf.mxu0
    %v654 = vadd.f32 0.0, %v653
    %v655 = vpop.f32.mrf.mxu0
    %656 = vmatprep.mubr.bf16.mxu0 0
    %657 = vmatmul.mubr.bf16.gmra.mxu0 %v540
    %v658 = vpop.f32.mrf.mxu0
    %v659 = vadd.f32 0.0, %v658
    %v660 = vpop.f32.mrf.mxu0
    %v661 = vpop.f32.mrf.mxu0
    %v662 = vadd.f32 0.0, %v661
    %v663 = vpop.f32.mrf.mxu0
    %664 = vmatprep.mubr.bf16.mxu0 0
    %665 = vmatmul.mubr.bf16.gmra.mxu0 %v543
    %v666 = vpop.f32.mrf.mxu0
    %v667 = vadd.f32 0.0, %v666
    %v668 = vpop.f32.mrf.mxu0
    %v669 = vpop.f32.mrf.mxu0
    %v670 = vadd.f32 0.0, %v669
    %v671 = vpop.f32.mrf.mxu0
    %672 = vmatprep.mubr.bf16.mxu0 0
    %673 = vmatmul.mubr.bf16.gmra.mxu0 %v546
    %v674 = vpop.f32.mrf.mxu0
    %v675 = vadd.f32 0.0, %v674
    %v676 = vpop.f32.mrf.mxu0
    %v677 = vpop.f32.mrf.mxu0
    %v678 = vadd.f32 0.0, %v677
    %v679 = vpop.f32.mrf.mxu0
    %680 = vmatprep.mubr.bf16.mxu0 0
    %681 = vmatmul.mubr.bf16.gmra.mxu0 %v549
    %v682 = vpop.f32.mrf.mxu0
    %v683 = vadd.f32 0.0, %v682
    %v684 = vpop.f32.mrf.mxu0
    %v685 = vpop.f32.mrf.mxu0
    %v686 = vadd.f32 0.0, %v685
    %v687 = vpop.f32.mrf.mxu0
    %688 = vmatprep.mubr.bf16.mxu0 0
    %689 = vmatmul.mubr.bf16.gmra.mxu0 %v552
    %v690 = vpop.f32.mrf.mxu0
    %v691 = vadd.f32 0.0, %v690
    %v692 = vpop.f32.mrf.mxu0
    %v693 = vpop.f32.mrf.mxu0
    %v694 = vadd.f32 0.0, %v693
    %v695 = vpop.f32.mrf.mxu0
    %696 = vmatprep.mubr.bf16.mxu0 0
    %697 = vmatmul.mubr.bf16.gmra.mxu0 %v555
    %v698 = vpop.f32.mrf.mxu0
    %v699 = vadd.f32 0.0, %v698
    %v700 = vpop.f32.mrf.mxu0
    %v701 = vpop.f32.mrf.mxu0
    %v702 = vadd.f32 0.0, %v701
    %v703 = vpop.f32.mrf.mxu0
    %704 = vmatprep.mubr.bf16.mxu0 0
    %705 = vmatmul.mubr.bf16.gmra.mxu0 %v558
    %v706 = vpop.f32.mrf.mxu0
    %v707 = vadd.f32 0.0, %v706
    %v708 = vpop.f32.mrf.mxu0
    %v709 = vpop.f32.mrf.mxu0
    %v710 = vadd.f32 0.0, %v709
    %v711 = vpop.f32.mrf.mxu0
    %712 = vmatprep.mubr.bf16.mxu0 0
    %713 = vmatmul.mubr.bf16.gmra.mxu0 %v561
    %v714 = vpop.f32.mrf.mxu0
    %v715 = vadd.f32 0.0, %v714
    %v716 = vpop.f32.mrf.mxu0
    %v717 = vpop.f32.mrf.mxu0
    %v718 = vadd.f32 0.0, %v717
    %v719 = vpop.f32.mrf.mxu0
    %720 = vmatprep.mubr.bf16.mxu0 0
    %721 = vmatmul.mubr.bf16.gmra.mxu0 %v564
    %v722 = vpop.f32.mrf.mxu0
    %v723 = vadd.f32 0.0, %v722
    %v724 = vpop.f32.mrf.mxu0
    %v725 = vpop.f32.mrf.mxu0
    %v726 = vadd.f32 0.0, %v725
    %v727 = vpop.f32.mrf.mxu0
    %728 = vmatprep.mubr.bf16.mxu0 0
    %729 = vmatmul.mubr.bf16.gmra.mxu0 %v567
    %v730 = vpop.f32.mrf.mxu0
    %v731 = vadd.f32 0.0, %v730
    %v732 = vpop.f32.mrf.mxu0
    %v733 = vpop.f32.mrf.mxu0
    %v734 = vadd.f32 0.0, %v733
    %v735 = vpop.f32.mrf.mxu0
    %736 = vdwg.mxu0
    %v769 = vunpack.c.l.b16 %v24
    %v770 = vunpack.c.l.b16 %v25
    %v771 = vunpack.c.l.b16 %v26
    %v772 = vunpack.c.l.b16 %v27
    %v773 = vunpack.c.l.b16 %v28
    %v774 = vunpack.c.l.b16 %v29
    %v775 = vunpack.c.l.b16 %v30
    %v776 = vunpack.c.l.b16 %v31
    %v777 = vunpack.c.l.b16 %v32
    %v778 = vunpack.c.l.b16 %v33
    %v779 = vunpack.c.l.b16 %v34
    %v780 = vunpack.c.l.b16 %v35
    %v781 = vunpack.c.l.b16 %v36
    %v782 = vunpack.c.l.b16 %v37
    %v783 = vunpack.c.l.b16 %v38
    %v784 = vunpack.c.l.b16 %v39
    %v785 = vunpack.c.l.b16 %v40
    %v786 = vunpack.c.l.b16 %v41
    %v787 = vunpack.c.l.b16 %v42
    %v788 = vunpack.c.l.b16 %v43
    %v789 = vunpack.c.l.b16 %v44
    %v790 = vunpack.c.l.b16 %v45
    %v791 = vunpack.c.l.b16 %v46
    %v792 = vunpack.c.l.b16 %v47
    %v793 = vunpack.c.l.b16 %v48
    %v794 = vunpack.c.l.b16 %v49
    %v795 = vunpack.c.l.b16 %v50
    %v796 = vunpack.c.l.b16 %v51
    %v797 = vunpack.c.l.b16 %v52
    %v798 = vunpack.c.l.b16 %v53
    %v799 = vunpack.c.l.b16 %v54
    %v800 = vunpack.c.l.b16 %v55
    %v801 = vpack.c.b16 %v770, %v769
    %v802 = vpack.c.b16 %v772, %v771
    %v803 = vpack.c.b16 %v774, %v773
    %v804 = vpack.c.b16 %v776, %v775
    %v805 = vpack.c.b16 %v778, %v777
    %v806 = vpack.c.b16 %v780, %v779
    %v807 = vpack.c.b16 %v782, %v781
    %v808 = vpack.c.b16 %v784, %v783
    %v809 = vpack.c.b16 %v786, %v785
    %v810 = vpack.c.b16 %v788, %v787
    %v811 = vpack.c.b16 %v790, %v789
    %v812 = vpack.c.b16 %v792, %v791
    %v813 = vpack.c.b16 %v794, %v793
    %v814 = vpack.c.b16 %v796, %v795
    %v815 = vpack.c.b16 %v798, %v797
    %v816 = vpack.c.b16 %v800, %v799
    %v818 = vsel %vm520, %v801, 0
    %v821 = vsel %vm520, %v802, 0
    %v824 = vsel %vm520, %v803, 0
    %v827 = vsel %vm520, %v804, 0
    %v830 = vsel %vm520, %v805, 0
    %v833 = vsel %vm520, %v806, 0
    %v836 = vsel %vm520, %v807, 0
    %v839 = vsel %vm520, %v808, 0
    %v842 = vsel %vm520, %v809, 0
    %v845 = vsel %vm520, %v810, 0
    %v848 = vsel %vm520, %v811, 0
    %v851 = vsel %vm520, %v812, 0
    %v854 = vsel %vm520, %v813, 0
    %v857 = vsel %vm520, %v814, 0
    %v860 = vsel %vm520, %v815, 0
    %v863 = vsel %vm520, %v816, 0
    %v866 = vand.u32 %v17, %v572
    %868 = vmatprep.subr.bf16.mxu0 0
    %869 = vmatpush1.bf16.msra.mxu0 0
    %870 = vmatprep.subr.bf16.mxu0 0
    %871 = vmatpush1.bf16.msra.mxu0 0
    %872 = vmatprep.subr.bf16.mxu0 0
    %873 = vmatpush1.bf16.msra.mxu0 0
    %874 = vmatprep.subr.bf16.mxu0 0
    %875 = vmatpush1.bf16.msra.mxu0 0
    %876 = vmatprep.subr.bf16.mxu0 0
    %877 = vmatpush1.bf16.msra.mxu0 0
    %878 = vmatprep.subr.bf16.mxu0 0
    %879 = vmatpush1.bf16.msra.mxu0 0
    %880 = vmatprep.subr.bf16.mxu0 0
    %881 = vmatpush1.bf16.msra.mxu0 0
    %882 = vmatprep.subr.bf16.mxu0 0
    %883 = vmatpush1.bf16.msra.mxu0 %v866
    %884 = vmatprep.subr.bf16.mxu0 0
    %885 = vmatpush2.bf16.msra.mxu0 0
    %886 = vmatprep.subr.bf16.mxu0 0
    %887 = vmatpush2.bf16.msra.mxu0 0
    %888 = vmatprep.subr.bf16.mxu0 0
    %889 = vmatpush2.bf16.msra.mxu0 0
    %890 = vmatprep.subr.bf16.mxu0 0
    %891 = vmatpush2.bf16.msra.mxu0 0
    %892 = vmatprep.subr.bf16.mxu0 0
    %893 = vmatpush2.bf16.msra.mxu0 0
    %894 = vmatprep.subr.bf16.mxu0 0
    %895 = vmatpush2.bf16.msra.mxu0 0
    %896 = vmatprep.subr.bf16.mxu0 0
    %897 = vmatpush2.bf16.msra.mxu0 0
    %898 = vmatprep.subr.bf16.mxu0 0
    %899 = vmatpush2.bf16.msra.mxu0 0
    %900 = vmatprep.mubr.bf16.mxu0 0
    %901 = vmatmul.mubr.bf16.gmra.mxu0 %v818
    %v902 = vpop.f32.mrf.mxu0
    %v903 = vadd.f32 %v611, %v902
    %v904 = vpop.f32.mrf.mxu0
    %v905 = vpop.f32.mrf.mxu0
    %v906 = vadd.f32 %v614, %v905
    %v907 = vpop.f32.mrf.mxu0
    %908 = vmatprep.mubr.bf16.mxu0 0
    %909 = vmatmul.mubr.bf16.gmra.mxu0 %v821
    %v910 = vpop.f32.mrf.mxu0
    %v911 = vadd.f32 %v619, %v910
    %v912 = vpop.f32.mrf.mxu0
    %v913 = vpop.f32.mrf.mxu0
    %v914 = vadd.f32 %v622, %v913
    %v915 = vpop.f32.mrf.mxu0
    %916 = vmatprep.mubr.bf16.mxu0 0
    %917 = vmatmul.mubr.bf16.gmra.mxu0 %v824
    %v918 = vpop.f32.mrf.mxu0
    %v919 = vadd.f32 %v627, %v918
    %v920 = vpop.f32.mrf.mxu0
    %v921 = vpop.f32.mrf.mxu0
    %v922 = vadd.f32 %v630, %v921
    %v923 = vpop.f32.mrf.mxu0
    %924 = vmatprep.mubr.bf16.mxu0 0
    %925 = vmatmul.mubr.bf16.gmra.mxu0 %v827
    %v926 = vpop.f32.mrf.mxu0
    %v927 = vadd.f32 %v635, %v926
    %v928 = vpop.f32.mrf.mxu0
    %v929 = vpop.f32.mrf.mxu0
    %v930 = vadd.f32 %v638, %v929
    %v931 = vpop.f32.mrf.mxu0
    %932 = vmatprep.mubr.bf16.mxu0 0
    %933 = vmatmul.mubr.bf16.gmra.mxu0 %v830
    %v934 = vpop.f32.mrf.mxu0
    %v935 = vadd.f32 %v643, %v934
    %v936 = vpop.f32.mrf.mxu0
    %v937 = vpop.f32.mrf.mxu0
    %v938 = vadd.f32 %v646, %v937
    %v939 = vpop.f32.mrf.mxu0
    %940 = vmatprep.mubr.bf16.mxu0 0
    %941 = vmatmul.mubr.bf16.gmra.mxu0 %v833
    %v942 = vpop.f32.mrf.mxu0
    %v943 = vadd.f32 %v651, %v942
    %v944 = vpop.f32.mrf.mxu0
    %v945 = vpop.f32.mrf.mxu0
    %v946 = vadd.f32 %v654, %v945
    %v947 = vpop.f32.mrf.mxu0
    %948 = vmatprep.mubr.bf16.mxu0 0
    %949 = vmatmul.mubr.bf16.gmra.mxu0 %v836
    %v950 = vpop.f32.mrf.mxu0
    %v951 = vadd.f32 %v659, %v950
    %v952 = vpop.f32.mrf.mxu0
    %v953 = vpop.f32.mrf.mxu0
    %v954 = vadd.f32 %v662, %v953
    %v955 = vpop.f32.mrf.mxu0
    %956 = vmatprep.mubr.bf16.mxu0 0
    %957 = vmatmul.mubr.bf16.gmra.mxu0 %v839
    %v958 = vpop.f32.mrf.mxu0
    %v959 = vadd.f32 %v667, %v958
    %v960 = vpop.f32.mrf.mxu0
    %v961 = vpop.f32.mrf.mxu0
    %v962 = vadd.f32 %v670, %v961
    %v963 = vpop.f32.mrf.mxu0
    %964 = vmatprep.mubr.bf16.mxu0 0
    %965 = vmatmul.mubr.bf16.gmra.mxu0 %v842
    %v966 = vpop.f32.mrf.mxu0
    %v967 = vadd.f32 %v675, %v966
    %v968 = vpop.f32.mrf.mxu0
    %v969 = vpop.f32.mrf.mxu0
    %v970 = vadd.f32 %v678, %v969
    %v971 = vpop.f32.mrf.mxu0
    %972 = vmatprep.mubr.bf16.mxu0 0
    %973 = vmatmul.mubr.bf16.gmra.mxu0 %v845
    %v974 = vpop.f32.mrf.mxu0
    %v975 = vadd.f32 %v683, %v974
    %v976 = vpop.f32.mrf.mxu0
    %v977 = vpop.f32.mrf.mxu0
    %v978 = vadd.f32 %v686, %v977
    %v979 = vpop.f32.mrf.mxu0
    %980 = vmatprep.mubr.bf16.mxu0 0
    %981 = vmatmul.mubr.bf16.gmra.mxu0 %v848
    %v982 = vpop.f32.mrf.mxu0
    %v983 = vadd.f32 %v691, %v982
    %v984 = vpop.f32.mrf.mxu0
    %v985 = vpop.f32.mrf.mxu0
    %v986 = vadd.f32 %v694, %v985
    %v987 = vpop.f32.mrf.mxu0
    %988 = vmatprep.mubr.bf16.mxu0 0
    %989 = vmatmul.mubr.bf16.gmra.mxu0 %v851
    %v990 = vpop.f32.mrf.mxu0
    %v991 = vadd.f32 %v699, %v990
    %v992 = vpop.f32.mrf.mxu0
    %v993 = vpop.f32.mrf.mxu0
    %v994 = vadd.f32 %v702, %v993
    %v995 = vpop.f32.mrf.mxu0
    %996 = vmatprep.mubr.bf16.mxu0 0
    %997 = vmatmul.mubr.bf16.gmra.mxu0 %v854
    %v998 = vpop.f32.mrf.mxu0
    %v999 = vadd.f32 %v707, %v998
    %v1000 = vpop.f32.mrf.mxu0
    %v1001 = vpop.f32.mrf.mxu0
    %v1002 = vadd.f32 %v710, %v1001
    %v1003 = vpop.f32.mrf.mxu0
    %1004 = vmatprep.mubr.bf16.mxu0 0
    %1005 = vmatmul.mubr.bf16.gmra.mxu0 %v857
    %v1006 = vpop.f32.mrf.mxu0
    %v1007 = vadd.f32 %v715, %v1006
    %v1008 = vpop.f32.mrf.mxu0
    %v1009 = vpop.f32.mrf.mxu0
    %v1010 = vadd.f32 %v718, %v1009
    %v1011 = vpop.f32.mrf.mxu0
    %1012 = vmatprep.mubr.bf16.mxu0 0
    %1013 = vmatmul.mubr.bf16.gmra.mxu0 %v860
    %v1014 = vpop.f32.mrf.mxu0
    %v1015 = vadd.f32 %v723, %v1014
    %v1016 = vpop.f32.mrf.mxu0
    %v1017 = vpop.f32.mrf.mxu0
    %v1018 = vadd.f32 %v726, %v1017
    %v1019 = vpop.f32.mrf.mxu0
    %1020 = vmatprep.mubr.bf16.mxu0 0
    %1021 = vmatmul.mubr.bf16.gmra.mxu0 %v863
    %v1022 = vpop.f32.mrf.mxu0
    %v1023 = vadd.f32 %v731, %v1022
    %v1024 = vpop.f32.mrf.mxu0
    %v1025 = vpop.f32.mrf.mxu0
    %v1026 = vadd.f32 %v734, %v1025
    %v1027 = vpop.f32.mrf.mxu0
    %1028 = vdwg.mxu0
    %v1029 = vld [vmem:[%s23] sm:$0xe]
    %v1030 = vld [vmem:[%s23 + $0xc] sm:$0xe]
    %v1031 = vld [vmem:[%s23 + $0x18] sm:$0xe]
    %v1032 = vld [vmem:[%s23 + $0x24] sm:$0xe]
    %v1033 = vld [vmem:[%s23 + $0x30] sm:$0xe]
    %v1034 = vld [vmem:[%s23 + $0x3c] sm:$0xe]
    %v1035 = vld [vmem:[%s23 + $0x48] sm:$0xe]
    %v1036 = vld [vmem:[%s23 + $0x54] sm:$0xe]
    %v1037 = vld [vmem:[%s23 + $0x60] sm:$0xe]
    %v1038 = vld [vmem:[%s23 + $0x6c] sm:$0xe]
    %v1039 = vld [vmem:[%s23 + $0x78] sm:$0xe]
    %v1040 = vld [vmem:[%s23 + $0x84] sm:$0xe]
    %v1041 = vld [vmem:[%s23 + $0x90] sm:$0xe]
    %v1042 = vld [vmem:[%s23 + $0x9c] sm:$0xe]
    %v1043 = vld [vmem:[%s23 + $0xa8] sm:$0xe]
    %v1044 = vld [vmem:[%s23 + $0xb4] sm:$0xe]
    %vm1077 = vcmask 1042432
    %vm1078 = vcmask 1046532
    %vm1079 = vmor %vm1077, %vm1078
    %v1080 = vrot.slane %v1029, 5
    %v1081 = vrot.slane %v1080, 4
    %v1082 = vrot.slane %v25, 5
    %v1083 = vsel %vm1079, %v1081, %v1082
    %v1084 = vrot.slane %v1082, 4
    %v1085 = vrot.slane %v56, 5
    %v1086 = vsel %vm1079, %v1084, %v1085
    %v1087 = vrot.slane %v1030, 5
    %v1088 = vrot.slane %v1087, 4
    %v1089 = vrot.slane %v27, 5
    %v1090 = vsel %vm1079, %v1088, %v1089
    %v1091 = vrot.slane %v1089, 4
    %v1092 = vrot.slane %v57, 5
    %v1093 = vsel %vm1079, %v1091, %v1092
    %v1094 = vrot.slane %v1031, 5
    %v1095 = vrot.slane %v1094, 4
    %v1096 = vrot.slane %v29, 5
    %v1097 = vsel %vm1079, %v1095, %v1096
    %v1098 = vrot.slane %v1096, 4
    %v1099 = vrot.slane %v58, 5
    %v1100 = vsel %vm1079, %v1098, %v1099
    %v1101 = vrot.slane %v1032, 5
    %v1102 = vrot.slane %v1101, 4
    %v1103 = vrot.slane %v31, 5
    %v1104 = vsel %vm1079, %v1102, %v1103
    %v1105 = vrot.slane %v1103, 4
    %v1106 = vrot.slane %v59, 5
    %v1107 = vsel %vm1079, %v1105, %v1106
    %v1108 = vrot.slane %v1033, 5
    %v1109 = vrot.slane %v1108, 4
    %v1110 = vrot.slane %v33, 5
    %v1111 = vsel %vm1079, %v1109, %v1110
    %v1112 = vrot.slane %v1110, 4
    %v1113 = vrot.slane %v60, 5
    %v1114 = vsel %vm1079, %v1112, %v1113
    %v1115 = vrot.slane %v1034, 5
    %v1116 = vrot.slane %v1115, 4
    %v1117 = vrot.slane %v35, 5
    %v1118 = vsel %vm1079, %v1116, %v1117
    %v1119 = vrot.slane %v1117, 4
    %v1120 = vrot.slane %v61, 5
    %v1121 = vsel %vm1079, %v1119, %v1120
    %v1122 = vrot.slane %v1035, 5
    %v1123 = vrot.slane %v1122, 4
    %v1124 = vrot.slane %v37, 5
    %v1125 = vsel %vm1079, %v1123, %v1124
    %v1126 = vrot.slane %v1124, 4
    %v1127 = vrot.slane %v62, 5
    %v1128 = vsel %vm1079, %v1126, %v1127
    %v1129 = vrot.slane %v1036, 5
    %v1130 = vrot.slane %v1129, 4
    %v1131 = vrot.slane %v39, 5
    %v1132 = vsel %vm1079, %v1130, %v1131
    %v1133 = vrot.slane %v1131, 4
    %v1134 = vrot.slane %v63, 5
    %v1135 = vsel %vm1079, %v1133, %v1134
    %v1136 = vrot.slane %v1037, 5
    %v1137 = vrot.slane %v1136, 4
    %v1138 = vrot.slane %v41, 5
    %v1139 = vsel %vm1079, %v1137, %v1138
    %v1140 = vrot.slane %v1138, 4
    %v1141 = vrot.slane %v64, 5
    %v1142 = vsel %vm1079, %v1140, %v1141
    %v1143 = vrot.slane %v1038, 5
    %v1144 = vrot.slane %v1143, 4
    %v1145 = vrot.slane %v43, 5
    %v1146 = vsel %vm1079, %v1144, %v1145
    %v1147 = vrot.slane %v1145, 4
    %v1148 = vrot.slane %v65, 5
    %v1149 = vsel %vm1079, %v1147, %v1148
    %v1150 = vrot.slane %v1039, 5
    %v1151 = vrot.slane %v1150, 4
    %v1152 = vrot.slane %v45, 5
    %v1153 = vsel %vm1079, %v1151, %v1152
    %v1154 = vrot.slane %v1152, 4
    %v1155 = vrot.slane %v66, 5
    %v1156 = vsel %vm1079, %v1154, %v1155
    %v1157 = vrot.slane %v1040, 5
    %v1158 = vrot.slane %v1157, 4
    %v1159 = vrot.slane %v47, 5
    %v1160 = vsel %vm1079, %v1158, %v1159
    %v1161 = vrot.slane %v1159, 4
    %v1162 = vrot.slane %v67, 5
    %v1163 = vsel %vm1079, %v1161, %v1162
    %v1164 = vrot.slane %v1041, 5
    %v1165 = vrot.slane %v1164, 4
    %v1166 = vrot.slane %v49, 5
    %v1167 = vsel %vm1079, %v1165, %v1166
    %v1168 = vrot.slane %v1166, 4
    %v1169 = vrot.slane %v68, 5
    %v1170 = vsel %vm1079, %v1168, %v1169
    %v1171 = vrot.slane %v1042, 5
    %v1172 = vrot.slane %v1171, 4
    %v1173 = vrot.slane %v51, 5
    %v1174 = vsel %vm1079, %v1172, %v1173
    %v1175 = vrot.slane %v1173, 4
    %v1176 = vrot.slane %v69, 5
    %v1177 = vsel %vm1079, %v1175, %v1176
    %v1178 = vrot.slane %v1043, 5
    %v1179 = vrot.slane %v1178, 4
    %v1180 = vrot.slane %v53, 5
    %v1181 = vsel %vm1079, %v1179, %v1180
    %v1182 = vrot.slane %v1180, 4
    %v1183 = vrot.slane %v70, 5
    %v1184 = vsel %vm1079, %v1182, %v1183
    %v1185 = vrot.slane %v1044, 5
    %v1186 = vrot.slane %v1185, 4
    %v1187 = vrot.slane %v55, 5
    %v1188 = vsel %vm1079, %v1186, %v1187
    %v1189 = vrot.slane %v1187, 4
    %v1190 = vrot.slane %v71, 5
    %v1191 = vsel %vm1079, %v1189, %v1190
    %v1192 = vunpack.c.l.b16 %v1083
    %v1193 = vunpack.c.l.b16 %v1086
    %v1194 = vunpack.c.l.b16 %v1090
    %v1195 = vunpack.c.l.b16 %v1093
    %v1196 = vunpack.c.l.b16 %v1097
    %v1197 = vunpack.c.l.b16 %v1100
    %v1198 = vunpack.c.l.b16 %v1104
    %v1199 = vunpack.c.l.b16 %v1107
    %v1200 = vunpack.c.l.b16 %v1111
    %v1201 = vunpack.c.l.b16 %v1114
    %v1202 = vunpack.c.l.b16 %v1118
    %v1203 = vunpack.c.l.b16 %v1121
    %v1204 = vunpack.c.l.b16 %v1125
    %v1205 = vunpack.c.l.b16 %v1128
    %v1206 = vunpack.c.l.b16 %v1132
    %v1207 = vunpack.c.l.b16 %v1135
    %v1208 = vunpack.c.l.b16 %v1139
    %v1209 = vunpack.c.l.b16 %v1142
    %v1210 = vunpack.c.l.b16 %v1146
    %v1211 = vunpack.c.l.b16 %v1149
    %v1212 = vunpack.c.l.b16 %v1153
    %v1213 = vunpack.c.l.b16 %v1156
    %v1214 = vunpack.c.l.b16 %v1160
    %v1215 = vunpack.c.l.b16 %v1163
    %v1216 = vunpack.c.l.b16 %v1167
    %v1217 = vunpack.c.l.b16 %v1170
    %v1218 = vunpack.c.l.b16 %v1174
    %v1219 = vunpack.c.l.b16 %v1177
    %v1220 = vunpack.c.l.b16 %v1181
    %v1221 = vunpack.c.l.b16 %v1184
    %v1222 = vunpack.c.l.b16 %v1188
    %v1223 = vunpack.c.l.b16 %v1191
    %v1224 = vpack.c.b16 %v1193, %v1192
    %v1225 = vpack.c.b16 %v1195, %v1194
    %v1226 = vpack.c.b16 %v1197, %v1196
    %v1227 = vpack.c.b16 %v1199, %v1198
    %v1228 = vpack.c.b16 %v1201, %v1200
    %v1229 = vpack.c.b16 %v1203, %v1202
    %v1230 = vpack.c.b16 %v1205, %v1204
    %v1231 = vpack.c.b16 %v1207, %v1206
    %v1232 = vpack.c.b16 %v1209, %v1208
    %v1233 = vpack.c.b16 %v1211, %v1210
    %v1234 = vpack.c.b16 %v1213, %v1212
    %v1235 = vpack.c.b16 %v1215, %v1214
    %v1236 = vpack.c.b16 %v1217, %v1216
    %v1237 = vpack.c.b16 %v1219, %v1218
    %v1238 = vpack.c.b16 %v1221, %v1220
    %v1239 = vpack.c.b16 %v1223, %v1222
    %v1240 = vpack.c.b16 %v510, %v510
    %v1241 = vrot.slane %v1240, 1
    %v1243 = vsel %vm520, %v1224, 0
    %v1246 = vsel %vm520, %v1225, 0
    %v1249 = vsel %vm520, %v1226, 0
    %v1252 = vsel %vm520, %v1227, 0
    %v1255 = vsel %vm520, %v1228, 0
    %v1258 = vsel %vm520, %v1229, 0
    %v1261 = vsel %vm520, %v1230, 0
    %v1264 = vsel %vm520, %v1231, 0
    %v1267 = vsel %vm520, %v1232, 0
    %v1270 = vsel %vm520, %v1233, 0
    %v1273 = vsel %vm520, %v1234, 0
    %v1276 = vsel %vm520, %v1235, 0
    %v1279 = vsel %vm520, %v1236, 0
    %v1282 = vsel %vm520, %v1237, 0
    %v1285 = vsel %vm520, %v1238, 0
    %v1288 = vsel %vm520, %v1239, 0
    %v1291 = vand.u32 %v1241, %v572
    %1293 = vmatprep.subr.bf16.mxu0 0
    %1294 = vmatpush1.bf16.msra.mxu0 0
    %1295 = vmatprep.subr.bf16.mxu0 0
    %1296 = vmatpush1.bf16.msra.mxu0 0
    %1297 = vmatprep.subr.bf16.mxu0 0
    %1298 = vmatpush1.bf16.msra.mxu0 0
    %1299 = vmatprep.subr.bf16.mxu0 0
    %1300 = vmatpush1.bf16.msra.mxu0 0
    %1301 = vmatprep.subr.bf16.mxu0 0
    %1302 = vmatpush1.bf16.msra.mxu0 0
    %1303 = vmatprep.subr.bf16.mxu0 0
    %1304 = vmatpush1.bf16.msra.mxu0 0
    %1305 = vmatprep.subr.bf16.mxu0 0
    %1306 = vmatpush1.bf16.msra.mxu0 0
    %1307 = vmatprep.subr.bf16.mxu0 0
    %1308 = vmatpush1.bf16.msra.mxu0 %v1291
    %1309 = vmatprep.subr.bf16.mxu0 0
    %1310 = vmatpush2.bf16.msra.mxu0 0
    %1311 = vmatprep.subr.bf16.mxu0 0
    %1312 = vmatpush2.bf16.msra.mxu0 0
    %1313 = vmatprep.subr.bf16.mxu0 0
    %1314 = vmatpush2.bf16.msra.mxu0 0
    %1315 = vmatprep.subr.bf16.mxu0 0
    %1316 = vmatpush2.bf16.msra.mxu0 0
    %1317 = vmatprep.subr.bf16.mxu0 0
    %1318 = vmatpush2.bf16.msra.mxu0 0
    %1319 = vmatprep.subr.bf16.mxu0 0
    %1320 = vmatpush2.bf16.msra.mxu0 0
    %1321 = vmatprep.subr.bf16.mxu0 0
    %1322 = vmatpush2.bf16.msra.mxu0 0
    %1323 = vmatprep.subr.bf16.mxu0 0
    %1324 = vmatpush2.bf16.msra.mxu0 0
    %1325 = vmatprep.mubr.bf16.mxu0 0
    %1326 = vmatmul.mubr.bf16.gmra.mxu0 %v1243
    %v1327 = vpop.f32.mrf.mxu0
    %v1328 = vadd.f32 0.0, %v1327
    %v1329 = vpop.f32.mrf.mxu0
    %v1330 = vpop.f32.mrf.mxu0
    %v1331 = vadd.f32 0.0, %v1330
    %v1332 = vpop.f32.mrf.mxu0
    %1333 = vmatprep.mubr.bf16.mxu0 0
    %1334 = vmatmul.mubr.bf16.gmra.mxu0 %v1246
    %v1335 = vpop.f32.mrf.mxu0
    %v1336 = vadd.f32 0.0, %v1335
    %v1337 = vpop.f32.mrf.mxu0
    %v1338 = vpop.f32.mrf.mxu0
    %v1339 = vadd.f32 0.0, %v1338
    %v1340 = vpop.f32.mrf.mxu0
    %1341 = vmatprep.mubr.bf16.mxu0 0
    %1342 = vmatmul.mubr.bf16.gmra.mxu0 %v1249
    %v1343 = vpop.f32.mrf.mxu0
    %v1344 = vadd.f32 0.0, %v1343
    %v1345 = vpop.f32.mrf.mxu0
    %v1346 = vpop.f32.mrf.mxu0
    %v1347 = vadd.f32 0.0, %v1346
    %v1348 = vpop.f32.mrf.mxu0
    %1349 = vmatprep.mubr.bf16.mxu0 0
    %1350 = vmatmul.mubr.bf16.gmra.mxu0 %v1252
    %v1351 = vpop.f32.mrf.mxu0
    %v1352 = vadd.f32 0.0, %v1351
    %v1353 = vpop.f32.mrf.mxu0
    %v1354 = vpop.f32.mrf.mxu0
    %v1355 = vadd.f32 0.0, %v1354
    %v1356 = vpop.f32.mrf.mxu0
    %1357 = vmatprep.mubr.bf16.mxu0 0
    %1358 = vmatmul.mubr.bf16.gmra.mxu0 %v1255
    %v1359 = vpop.f32.mrf.mxu0
    %v1360 = vadd.f32 0.0, %v1359
    %v1361 = vpop.f32.mrf.mxu0
    %v1362 = vpop.f32.mrf.mxu0
    %v1363 = vadd.f32 0.0, %v1362
    %v1364 = vpop.f32.mrf.mxu0
    %1365 = vmatprep.mubr.bf16.mxu0 0
    %1366 = vmatmul.mubr.bf16.gmra.mxu0 %v1258
    %v1367 = vpop.f32.mrf.mxu0
    %v1368 = vadd.f32 0.0, %v1367
    %v1369 = vpop.f32.mrf.mxu0
    %v1370 = vpop.f32.mrf.mxu0
    %v1371 = vadd.f32 0.0, %v1370
    %v1372 = vpop.f32.mrf.mxu0
    %1373 = vmatprep.mubr.bf16.mxu0 0
    %1374 = vmatmul.mubr.bf16.gmra.mxu0 %v1261
    %v1375 = vpop.f32.mrf.mxu0
    %v1376 = vadd.f32 0.0, %v1375
    %v1377 = vpop.f32.mrf.mxu0
    %v1378 = vpop.f32.mrf.mxu0
    %v1379 = vadd.f32 0.0, %v1378
    %v1380 = vpop.f32.mrf.mxu0
    %1381 = vmatprep.mubr.bf16.mxu0 0
    %1382 = vmatmul.mubr.bf16.gmra.mxu0 %v1264
    %v1383 = vpop.f32.mrf.mxu0
    %v1384 = vadd.f32 0.0, %v1383
    %v1385 = vpop.f32.mrf.mxu0
    %v1386 = vpop.f32.mrf.mxu0
    %v1387 = vadd.f32 0.0, %v1386
    %v1388 = vpop.f32.mrf.mxu0
    %1389 = vmatprep.mubr.bf16.mxu0 0
    %1390 = vmatmul.mubr.bf16.gmra.mxu0 %v1267
    %v1391 = vpop.f32.mrf.mxu0
    %v1392 = vadd.f32 0.0, %v1391
    %v1393 = vpop.f32.mrf.mxu0
    %v1394 = vpop.f32.mrf.mxu0
    %v1395 = vadd.f32 0.0, %v1394
    %v1396 = vpop.f32.mrf.mxu0
    %1397 = vmatprep.mubr.bf16.mxu0 0
    %1398 = vmatmul.mubr.bf16.gmra.mxu0 %v1270
    %v1399 = vpop.f32.mrf.mxu0
    %v1400 = vadd.f32 0.0, %v1399
    %v1401 = vpop.f32.mrf.mxu0
    %v1402 = vpop.f32.mrf.mxu0
    %v1403 = vadd.f32 0.0, %v1402
    %v1404 = vpop.f32.mrf.mxu0
    %1405 = vmatprep.mubr.bf16.mxu0 0
    %1406 = vmatmul.mubr.bf16.gmra.mxu0 %v1273
    %v1407 = vpop.f32.mrf.mxu0
    %v1408 = vadd.f32 0.0, %v1407
    %v1409 = vpop.f32.mrf.mxu0
    %v1410 = vpop.f32.mrf.mxu0
    %v1411 = vadd.f32 0.0, %v1410
    %v1412 = vpop.f32.mrf.mxu0
    %1413 = vmatprep.mubr.bf16.mxu0 0
    %1414 = vmatmul.mubr.bf16.gmra.mxu0 %v1276
    %v1415 = vpop.f32.mrf.mxu0
    %v1416 = vadd.f32 0.0, %v1415
    %v1417 = vpop.f32.mrf.mxu0
    %v1418 = vpop.f32.mrf.mxu0
    %v1419 = vadd.f32 0.0, %v1418
    %v1420 = vpop.f32.mrf.mxu0
    %1421 = vmatprep.mubr.bf16.mxu0 0
    %1422 = vmatmul.mubr.bf16.gmra.mxu0 %v1279
    %v1423 = vpop.f32.mrf.mxu0
    %v1424 = vadd.f32 0.0, %v1423
    %v1425 = vpop.f32.mrf.mxu0
    %v1426 = vpop.f32.mrf.mxu0
    %v1427 = vadd.f32 0.0, %v1426
    %v1428 = vpop.f32.mrf.mxu0
    %1429 = vmatprep.mubr.bf16.mxu0 0
    %1430 = vmatmul.mubr.bf16.gmra.mxu0 %v1282
    %v1431 = vpop.f32.mrf.mxu0
    %v1432 = vadd.f32 0.0, %v1431
    %v1433 = vpop.f32.mrf.mxu0
    %v1434 = vpop.f32.mrf.mxu0
    %v1435 = vadd.f32 0.0, %v1434
    %v1436 = vpop.f32.mrf.mxu0
    %1437 = vmatprep.mubr.bf16.mxu0 0
    %1438 = vmatmul.mubr.bf16.gmra.mxu0 %v1285
    %v1439 = vpop.f32.mrf.mxu0
    %v1440 = vadd.f32 0.0, %v1439
    %v1441 = vpop.f32.mrf.mxu0
    %v1442 = vpop.f32.mrf.mxu0
    %v1443 = vadd.f32 0.0, %v1442
    %v1444 = vpop.f32.mrf.mxu0
    %1445 = vmatprep.mubr.bf16.mxu0 0
    %1446 = vmatmul.mubr.bf16.gmra.mxu0 %v1288
    %v1447 = vpop.f32.mrf.mxu0
    %v1448 = vadd.f32 0.0, %v1447
    %v1449 = vpop.f32.mrf.mxu0
    %v1450 = vpop.f32.mrf.mxu0
    %v1451 = vadd.f32 0.0, %v1450
    %v1452 = vpop.f32.mrf.mxu0
    %1453 = vdwg.mxu0
    %v1454 = vadd.f32 %v903, %v1328
    %v1455 = vadd.f32 %v906, %v1331
    %v1456 = vadd.f32 %v911, %v1336
    %v1457 = vadd.f32 %v914, %v1339
    %v1458 = vadd.f32 %v919, %v1344
    %v1459 = vadd.f32 %v922, %v1347
    %v1460 = vadd.f32 %v927, %v1352
    %v1461 = vadd.f32 %v930, %v1355
    %v1462 = vadd.f32 %v935, %v1360
    %v1463 = vadd.f32 %v938, %v1363
    %v1464 = vadd.f32 %v943, %v1368
    %v1465 = vadd.f32 %v946, %v1371
    %v1466 = vadd.f32 %v951, %v1376
    %v1467 = vadd.f32 %v954, %v1379
    %v1468 = vadd.f32 %v959, %v1384
    %v1469 = vadd.f32 %v962, %v1387
    %v1470 = vadd.f32 %v967, %v1392
    %v1471 = vadd.f32 %v970, %v1395
    %v1472 = vadd.f32 %v975, %v1400
    %v1473 = vadd.f32 %v978, %v1403
    %v1474 = vadd.f32 %v983, %v1408
    %v1475 = vadd.f32 %v986, %v1411
    %v1476 = vadd.f32 %v991, %v1416
    %v1477 = vadd.f32 %v994, %v1419
    %v1478 = vadd.f32 %v999, %v1424
    %v1479 = vadd.f32 %v1002, %v1427
    %v1480 = vadd.f32 %v1007, %v1432
    %v1481 = vadd.f32 %v1010, %v1435
    %v1482 = vadd.f32 %v1015, %v1440
    %v1483 = vadd.f32 %v1018, %v1443
    %v1484 = vadd.f32 %v1023, %v1448
    %v1485 = vadd.f32 %v1026, %v1451
    %v1486 = vld [vmem:[%s23 + $0x8] sm:$0x3]
    %v1487 = vld [vmem:[%s23 + $0x14] sm:$0x3]
    %v1488 = vld [vmem:[%s23 + $0x20] sm:$0x3]
    %v1489 = vld [vmem:[%s23 + $0x2c] sm:$0x3]
    %v1490 = vld [vmem:[%s23 + $0x38] sm:$0x3]
    %v1491 = vld [vmem:[%s23 + $0x44] sm:$0x3]
    %v1492 = vld [vmem:[%s23 + $0x50] sm:$0x3]
    %v1493 = vld [vmem:[%s23 + $0x5c] sm:$0x3]
    %v1494 = vld [vmem:[%s23 + $0x68] sm:$0x3]
    %v1495 = vld [vmem:[%s23 + $0x74] sm:$0x3]
    %v1496 = vld [vmem:[%s23 + $0x80] sm:$0x3]
    %v1497 = vld [vmem:[%s23 + $0x8c] sm:$0x3]
    %v1498 = vld [vmem:[%s23 + $0x98] sm:$0x3]
    %v1499 = vld [vmem:[%s23 + $0xa4] sm:$0x3]
    %v1500 = vld [vmem:[%s23 + $0xb0] sm:$0x3]
    %v1501 = vld [vmem:[%s23 + $0xbc] sm:$0x3]
    %vm1502 = vsmask.f32 2304
    %vm1503 = vsmask.f32 6416
    %vm1504 = vmor %vm1502, %vm1503
    %v1506 = vshrl.u32 %v1029, 16
    %v1508 = vrot.slane %v1506, 5
    %v1509 = vshll.u32 %v1029, 16
    %v1511 = vrot.slane %v1509, 6
    %v1512 = vor.u32 %v1508, %v1511
    %v1513 = vrot.slane %v1512, 4
    %v1514 = vrot.slane %v89, 5
    %v1515 = vrot.slane %v85, 6
    %v1516 = vor.u32 %v1514, %v1515
    %v1517 = vsel %vm1504, %v1513, %v1516
    %v1518 = vrot.slane %v1516, 4
    %v1520 = vshrl.u32 %v1486, 16
    %v1522 = vrot.slane %v1520, 5
    %v1523 = vshll.u32 %v1486, 16
    %v1525 = vrot.slane %v1523, 6
    %v1526 = vor.u32 %v1522, %v1525
    %v1527 = vsel %vm1504, %v1518, %v1526
    %v1529 = vshrl.u32 %v1030, 16
    %v1531 = vrot.slane %v1529, 5
    %v1532 = vshll.u32 %v1030, 16
    %v1534 = vrot.slane %v1532, 6
    %v1535 = vor.u32 %v1531, %v1534
    %v1536 = vrot.slane %v1535, 4
    %v1537 = vrot.slane %v113, 5
    %v1538 = vrot.slane %v109, 6
    %v1539 = vor.u32 %v1537, %v1538
    %v1540 = vsel %vm1504, %v1536, %v1539
    %v1541 = vrot.slane %v1539, 4
    %v1543 = vshrl.u32 %v1487, 16
    %v1545 = vrot.slane %v1543, 5
    %v1546 = vshll.u32 %v1487, 16
    %v1548 = vrot.slane %v1546, 6
    %v1549 = vor.u32 %v1545, %v1548
    %v1550 = vsel %vm1504, %v1541, %v1549
    %v1552 = vshrl.u32 %v1031, 16
    %v1554 = vrot.slane %v1552, 5
    %v1555 = vshll.u32 %v1031, 16
    %v1557 = vrot.slane %v1555, 6
    %v1558 = vor.u32 %v1554, %v1557
    %v1559 = vrot.slane %v1558, 4
    %v1560 = vrot.slane %v137, 5
    %v1561 = vrot.slane %v133, 6
    %v1562 = vor.u32 %v1560, %v1561
    %v1563 = vsel %vm1504, %v1559, %v1562
    %v1564 = vrot.slane %v1562, 4
    %v1566 = vshrl.u32 %v1488, 16
    %v1568 = vrot.slane %v1566, 5
    %v1569 = vshll.u32 %v1488, 16
    %v1571 = vrot.slane %v1569, 6
    %v1572 = vor.u32 %v1568, %v1571
    %v1573 = vsel %vm1504, %v1564, %v1572
    %v1575 = vshrl.u32 %v1032, 16
    %v1577 = vrot.slane %v1575, 5
    %v1578 = vshll.u32 %v1032, 16
    %v1580 = vrot.slane %v1578, 6
    %v1581 = vor.u32 %v1577, %v1580
    %v1582 = vrot.slane %v1581, 4
    %v1583 = vrot.slane %v161, 5
    %v1584 = vrot.slane %v157, 6
    %v1585 = vor.u32 %v1583, %v1584
    %v1586 = vsel %vm1504, %v1582, %v1585
    %v1587 = vrot.slane %v1585, 4
    %v1589 = vshrl.u32 %v1489, 16
    %v1591 = vrot.slane %v1589, 5
    %v1592 = vshll.u32 %v1489, 16
    %v1594 = vrot.slane %v1592, 6
    %v1595 = vor.u32 %v1591, %v1594
    %v1596 = vsel %vm1504, %v1587, %v1595
    %v1598 = vshrl.u32 %v1033, 16
    %v1600 = vrot.slane %v1598, 5
    %v1601 = vshll.u32 %v1033, 16
    %v1603 = vrot.slane %v1601, 6
    %v1604 = vor.u32 %v1600, %v1603
    %v1605 = vrot.slane %v1604, 4
    %v1606 = vrot.slane %v185, 5
    %v1607 = vrot.slane %v181, 6
    %v1608 = vor.u32 %v1606, %v1607
    %v1609 = vsel %vm1504, %v1605, %v1608
    %v1610 = vrot.slane %v1608, 4
    %v1612 = vshrl.u32 %v1490, 16
    %v1614 = vrot.slane %v1612, 5
    %v1615 = vshll.u32 %v1490, 16
    %v1617 = vrot.slane %v1615, 6
    %v1618 = vor.u32 %v1614, %v1617
    %v1619 = vsel %vm1504, %v1610, %v1618
    %v1621 = vshrl.u32 %v1034, 16
    %v1623 = vrot.slane %v1621, 5
    %v1624 = vshll.u32 %v1034, 16
    %v1626 = vrot.slane %v1624, 6
    %v1627 = vor.u32 %v1623, %v1626
    %v1628 = vrot.slane %v1627, 4
    %v1629 = vrot.slane %v209, 5
    %v1630 = vrot.slane %v205, 6
    %v1631 = vor.u32 %v1629, %v1630
    %v1632 = vsel %vm1504, %v1628, %v1631
    %v1633 = vrot.slane %v1631, 4
    %v1635 = vshrl.u32 %v1491, 16
    %v1637 = vrot.slane %v1635, 5
    %v1638 = vshll.u32 %v1491, 16
    %v1640 = vrot.slane %v1638, 6
    %v1641 = vor.u32 %v1637, %v1640
    %v1642 = vsel %vm1504, %v1633, %v1641
    %v1644 = vshrl.u32 %v1035, 16
    %v1646 = vrot.slane %v1644, 5
    %v1647 = vshll.u32 %v1035, 16
    %v1649 = vrot.slane %v1647, 6
    %v1650 = vor.u32 %v1646, %v1649
    %v1651 = vrot.slane %v1650, 4
    %v1652 = vrot.slane %v233, 5
    %v1653 = vrot.slane %v229, 6
    %v1654 = vor.u32 %v1652, %v1653
    %v1655 = vsel %vm1504, %v1651, %v1654
    %v1656 = vrot.slane %v1654, 4
    %v1658 = vshrl.u32 %v1492, 16
    %v1660 = vrot.slane %v1658, 5
    %v1661 = vshll.u32 %v1492, 16
    %v1663 = vrot.slane %v1661, 6
    %v1664 = vor.u32 %v1660, %v1663
    %v1665 = vsel %vm1504, %v1656, %v1664
    %v1667 = vshrl.u32 %v1036, 16
    %v1669 = vrot.slane %v1667, 5
    %v1670 = vshll.u32 %v1036, 16
    %v1672 = vrot.slane %v1670, 6
    %v1673 = vor.u32 %v1669, %v1672
    %v1674 = vrot.slane %v1673, 4
    %v1675 = vrot.slane %v257, 5
    %v1676 = vrot.slane %v253, 6
    %v1677 = vor.u32 %v1675, %v1676
    %v1678 = vsel %vm1504, %v1674, %v1677
    %v1679 = vrot.slane %v1677, 4
    %v1681 = vshrl.u32 %v1493, 16
    %v1683 = vrot.slane %v1681, 5
    %v1684 = vshll.u32 %v1493, 16
    %v1686 = vrot.slane %v1684, 6
    %v1687 = vor.u32 %v1683, %v1686
    %v1688 = vsel %vm1504, %v1679, %v1687
    %v1690 = vshrl.u32 %v1037, 16
    %v1692 = vrot.slane %v1690, 5
    %v1693 = vshll.u32 %v1037, 16
    %v1695 = vrot.slane %v1693, 6
    %v1696 = vor.u32 %v1692, %v1695
    %v1697 = vrot.slane %v1696, 4
    %v1698 = vrot.slane %v281, 5
    %v1699 = vrot.slane %v277, 6
    %v1700 = vor.u32 %v1698, %v1699
    %v1701 = vsel %vm1504, %v1697, %v1700
    %v1702 = vrot.slane %v1700, 4
    %v1704 = vshrl.u32 %v1494, 16
    %v1706 = vrot.slane %v1704, 5
    %v1707 = vshll.u32 %v1494, 16
    %v1709 = vrot.slane %v1707, 6
    %v1710 = vor.u32 %v1706, %v1709
    %v1711 = vsel %vm1504, %v1702, %v1710
    %v1713 = vshrl.u32 %v1038, 16
    %v1715 = vrot.slane %v1713, 5
    %v1716 = vshll.u32 %v1038, 16
    %v1718 = vrot.slane %v1716, 6
    %v1719 = vor.u32 %v1715, %v1718
    %v1720 = vrot.slane %v1719, 4
    %v1721 = vrot.slane %v305, 5
    %v1722 = vrot.slane %v301, 6
    %v1723 = vor.u32 %v1721, %v1722
    %v1724 = vsel %vm1504, %v1720, %v1723
    %v1725 = vrot.slane %v1723, 4
    %v1727 = vshrl.u32 %v1495, 16
    %v1729 = vrot.slane %v1727, 5
    %v1730 = vshll.u32 %v1495, 16
    %v1732 = vrot.slane %v1730, 6
    %v1733 = vor.u32 %v1729, %v1732
    %v1734 = vsel %vm1504, %v1725, %v1733
    %v1736 = vshrl.u32 %v1039, 16
    %v1738 = vrot.slane %v1736, 5
    %v1739 = vshll.u32 %v1039, 16
    %v1741 = vrot.slane %v1739, 6
    %v1742 = vor.u32 %v1738, %v1741
    %v1743 = vrot.slane %v1742, 4
    %v1744 = vrot.slane %v329, 5
    %v1745 = vrot.slane %v325, 6
    %v1746 = vor.u32 %v1744, %v1745
    %v1747 = vsel %vm1504, %v1743, %v1746
    %v1748 = vrot.slane %v1746, 4
    %v1750 = vshrl.u32 %v1496, 16
    %v1752 = vrot.slane %v1750, 5
    %v1753 = vshll.u32 %v1496, 16
    %v1755 = vrot.slane %v1753, 6
    %v1756 = vor.u32 %v1752, %v1755
    %v1757 = vsel %vm1504, %v1748, %v1756
    %v1759 = vshrl.u32 %v1040, 16
    %v1761 = vrot.slane %v1759, 5
    %v1762 = vshll.u32 %v1040, 16
    %v1764 = vrot.slane %v1762, 6
    %v1765 = vor.u32 %v1761, %v1764
    %v1766 = vrot.slane %v1765, 4
    %v1767 = vrot.slane %v353, 5
    %v1768 = vrot.slane %v349, 6
    %v1769 = vor.u32 %v1767, %v1768
    %v1770 = vsel %vm1504, %v1766, %v1769
    %v1771 = vrot.slane %v1769, 4
    %v1773 = vshrl.u32 %v1497, 16
    %v1775 = vrot.slane %v1773, 5
    %v1776 = vshll.u32 %v1497, 16
    %v1778 = vrot.slane %v1776, 6
    %v1779 = vor.u32 %v1775, %v1778
    %v1780 = vsel %vm1504, %v1771, %v1779
    %v1782 = vshrl.u32 %v1041, 16
    %v1784 = vrot.slane %v1782, 5
    %v1785 = vshll.u32 %v1041, 16
    %v1787 = vrot.slane %v1785, 6
    %v1788 = vor.u32 %v1784, %v1787
    %v1789 = vrot.slane %v1788, 4
    %v1790 = vrot.slane %v377, 5
    %v1791 = vrot.slane %v373, 6
    %v1792 = vor.u32 %v1790, %v1791
    %v1793 = vsel %vm1504, %v1789, %v1792
    %v1794 = vrot.slane %v1792, 4
    %v1796 = vshrl.u32 %v1498, 16
    %v1798 = vrot.slane %v1796, 5
    %v1799 = vshll.u32 %v1498, 16
    %v1801 = vrot.slane %v1799, 6
    %v1802 = vor.u32 %v1798, %v1801
    %v1803 = vsel %vm1504, %v1794, %v1802
    %v1805 = vshrl.u32 %v1042, 16
    %v1807 = vrot.slane %v1805, 5
    %v1808 = vshll.u32 %v1042, 16
    %v1810 = vrot.slane %v1808, 6
    %v1811 = vor.u32 %v1807, %v1810
    %v1812 = vrot.slane %v1811, 4
    %v1813 = vrot.slane %v401, 5
    %v1814 = vrot.slane %v397, 6
    %v1815 = vor.u32 %v1813, %v1814
    %v1816 = vsel %vm1504, %v1812, %v1815
    %v1817 = vrot.slane %v1815, 4
    %v1819 = vshrl.u32 %v1499, 16
    %v1821 = vrot.slane %v1819, 5
    %v1822 = vshll.u32 %v1499, 16
    %v1824 = vrot.slane %v1822, 6
    %v1825 = vor.u32 %v1821, %v1824
    %v1826 = vsel %vm1504, %v1817, %v1825
    %v1828 = vshrl.u32 %v1043, 16
    %v1830 = vrot.slane %v1828, 5
    %v1831 = vshll.u32 %v1043, 16
    %v1833 = vrot.slane %v1831, 6
    %v1834 = vor.u32 %v1830, %v1833
    %v1835 = vrot.slane %v1834, 4
    %v1836 = vrot.slane %v425, 5
    %v1837 = vrot.slane %v421, 6
    %v1838 = vor.u32 %v1836, %v1837
    %v1839 = vsel %vm1504, %v1835, %v1838
    %v1840 = vrot.slane %v1838, 4
    %v1842 = vshrl.u32 %v1500, 16
    %v1844 = vrot.slane %v1842, 5
    %v1845 = vshll.u32 %v1500, 16
    %v1847 = vrot.slane %v1845, 6
    %v1848 = vor.u32 %v1844, %v1847
    %v1849 = vsel %vm1504, %v1840, %v1848
    %v1851 = vshrl.u32 %v1044, 16
    %v1853 = vrot.slane %v1851, 5
    %v1854 = vshll.u32 %v1044, 16
    %v1856 = vrot.slane %v1854, 6
    %v1857 = vor.u32 %v1853, %v1856
    %v1858 = vrot.slane %v1857, 4
    %v1859 = vrot.slane %v449, 5
    %v1860 = vrot.slane %v445, 6
    %v1861 = vor.u32 %v1859, %v1860
    %v1862 = vsel %vm1504, %v1858, %v1861
    %v1863 = vrot.slane %v1861, 4
    %v1865 = vshrl.u32 %v1501, 16
    %v1867 = vrot.slane %v1865, 5
    %v1868 = vshll.u32 %v1501, 16
    %v1870 = vrot.slane %v1868, 6
    %v1871 = vor.u32 %v1867, %v1870
    %v1872 = vsel %vm1504, %v1863, %v1871
    %v1873 = vunpack.c.l.b16 %v1517
    %v1874 = vunpack.c.l.b16 %v1527
    %v1875 = vunpack.c.l.b16 %v1540
    %v1876 = vunpack.c.l.b16 %v1550
    %v1877 = vunpack.c.l.b16 %v1563
    %v1878 = vunpack.c.l.b16 %v1573
    %v1879 = vunpack.c.l.b16 %v1586
    %v1880 = vunpack.c.l.b16 %v1596
    %v1881 = vunpack.c.l.b16 %v1609
    %v1882 = vunpack.c.l.b16 %v1619
    %v1883 = vunpack.c.l.b16 %v1632
    %v1884 = vunpack.c.l.b16 %v1642
    %v1885 = vunpack.c.l.b16 %v1655
    %v1886 = vunpack.c.l.b16 %v1665
    %v1887 = vunpack.c.l.b16 %v1678
    %v1888 = vunpack.c.l.b16 %v1688
    %v1889 = vunpack.c.l.b16 %v1701
    %v1890 = vunpack.c.l.b16 %v1711
    %v1891 = vunpack.c.l.b16 %v1724
    %v1892 = vunpack.c.l.b16 %v1734
    %v1893 = vunpack.c.l.b16 %v1747
    %v1894 = vunpack.c.l.b16 %v1757
    %v1895 = vunpack.c.l.b16 %v1770
    %v1896 = vunpack.c.l.b16 %v1780
    %v1897 = vunpack.c.l.b16 %v1793
    %v1898 = vunpack.c.l.b16 %v1803
    %v1899 = vunpack.c.l.b16 %v1816
    %v1900 = vunpack.c.l.b16 %v1826
    %v1901 = vunpack.c.l.b16 %v1839
    %v1902 = vunpack.c.l.b16 %v1849
    %v1903 = vunpack.c.l.b16 %v1862
    %v1904 = vunpack.c.l.b16 %v1872
    %v1905 = vpack.c.b16 %v1874, %v1873
    %v1906 = vpack.c.b16 %v1876, %v1875
    %v1907 = vpack.c.b16 %v1878, %v1877
    %v1908 = vpack.c.b16 %v1880, %v1879
    %v1909 = vpack.c.b16 %v1882, %v1881
    %v1910 = vpack.c.b16 %v1884, %v1883
    %v1911 = vpack.c.b16 %v1886, %v1885
    %v1912 = vpack.c.b16 %v1888, %v1887
    %v1913 = vpack.c.b16 %v1890, %v1889
    %v1914 = vpack.c.b16 %v1892, %v1891
    %v1915 = vpack.c.b16 %v1894, %v1893
    %v1916 = vpack.c.b16 %v1896, %v1895
    %v1917 = vpack.c.b16 %v1898, %v1897
    %v1918 = vpack.c.b16 %v1900, %v1899
    %v1919 = vpack.c.b16 %v1902, %v1901
    %v1920 = vpack.c.b16 %v1904, %v1903
    %v1922 = vunpack.c.l.b16 %v19
    %v1923 = vpack.c.b16 %v1922, %v510
    %v1925 = vshrl.u32 %v1923, 16
    %v1927 = vrot.slane %v1925, 3
    %v1928 = vshll.u32 %v1923, 16
    %v1930 = vrot.slane %v1928, 4
    %v1931 = vor.u32 %v1927, %v1930
    %v1933 = vsel %vm520, %v1905, 0
    %v1936 = vsel %vm520, %v1906, 0
    %v1939 = vsel %vm520, %v1907, 0
    %v1942 = vsel %vm520, %v1908, 0
    %v1945 = vsel %vm520, %v1909, 0
    %v1948 = vsel %vm520, %v1910, 0
    %v1951 = vsel %vm520, %v1911, 0
    %v1954 = vsel %vm520, %v1912, 0
    %v1957 = vsel %vm520, %v1913, 0
    %v1960 = vsel %vm520, %v1914, 0
    %v1963 = vsel %vm520, %v1915, 0
    %v1966 = vsel %vm520, %v1916, 0
    %v1969 = vsel %vm520, %v1917, 0
    %v1972 = vsel %vm520, %v1918, 0
    %v1975 = vsel %vm520, %v1919, 0
    %v1978 = vsel %vm520, %v1920, 0
    %v1981 = vand.u32 %v1931, %v572
    %1983 = vmatprep.subr.bf16.mxu0 0
    %1984 = vmatpush1.bf16.msra.mxu0 0
    %1985 = vmatprep.subr.bf16.mxu0 0
    %1986 = vmatpush1.bf16.msra.mxu0 0
    %1987 = vmatprep.subr.bf16.mxu0 0
    %1988 = vmatpush1.bf16.msra.mxu0 0
    %1989 = vmatprep.subr.bf16.mxu0 0
    %1990 = vmatpush1.bf16.msra.mxu0 0
    %1991 = vmatprep.subr.bf16.mxu0 0
    %1992 = vmatpush1.bf16.msra.mxu0 0
    %1993 = vmatprep.subr.bf16.mxu0 0
    %1994 = vmatpush1.bf16.msra.mxu0 0
    %1995 = vmatprep.subr.bf16.mxu0 0
    %1996 = vmatpush1.bf16.msra.mxu0 0
    %1997 = vmatprep.subr.bf16.mxu0 0
    %1998 = vmatpush1.bf16.msra.mxu0 %v1981
    %1999 = vmatprep.subr.bf16.mxu0 0
    %2000 = vmatpush2.bf16.msra.mxu0 0
    %2001 = vmatprep.subr.bf16.mxu0 0
    %2002 = vmatpush2.bf16.msra.mxu0 0
    %2003 = vmatprep.subr.bf16.mxu0 0
    %2004 = vmatpush2.bf16.msra.mxu0 0
    %2005 = vmatprep.subr.bf16.mxu0 0
    %2006 = vmatpush2.bf16.msra.mxu0 0
    %2007 = vmatprep.subr.bf16.mxu0 0
    %2008 = vmatpush2.bf16.msra.mxu0 0
    %2009 = vmatprep.subr.bf16.mxu0 0
    %2010 = vmatpush2.bf16.msra.mxu0 0
    %2011 = vmatprep.subr.bf16.mxu0 0
    %2012 = vmatpush2.bf16.msra.mxu0 0
    %2013 = vmatprep.subr.bf16.mxu0 0
    %2014 = vmatpush2.bf16.msra.mxu0 0
    %2015 = vmatprep.mubr.bf16.mxu0 0
    %2016 = vmatmul.mubr.bf16.gmra.mxu0 %v1933
    %v2017 = vpop.f32.mrf.mxu0
    %v2018 = vadd.f32 0.0, %v2017
    %v2019 = vpop.f32.mrf.mxu0
    %v2020 = vpop.f32.mrf.mxu0
    %v2021 = vadd.f32 0.0, %v2020
    %v2022 = vpop.f32.mrf.mxu0
    %2023 = vmatprep.mubr.bf16.mxu0 0
    %2024 = vmatmul.mubr.bf16.gmra.mxu0 %v1936
    %v2025 = vpop.f32.mrf.mxu0
    %v2026 = vadd.f32 0.0, %v2025
    %v2027 = vpop.f32.mrf.mxu0
    %v2028 = vpop.f32.mrf.mxu0
    %v2029 = vadd.f32 0.0, %v2028
    %v2030 = vpop.f32.mrf.mxu0
    %2031 = vmatprep.mubr.bf16.mxu0 0
    %2032 = vmatmul.mubr.bf16.gmra.mxu0 %v1939
    %v2033 = vpop.f32.mrf.mxu0
    %v2034 = vadd.f32 0.0, %v2033
    %v2035 = vpop.f32.mrf.mxu0
    %v2036 = vpop.f32.mrf.mxu0
    %v2037 = vadd.f32 0.0, %v2036
    %v2038 = vpop.f32.mrf.mxu0
    %2039 = vmatprep.mubr.bf16.mxu0 0
    %2040 = vmatmul.mubr.bf16.gmra.mxu0 %v1942
    %v2041 = vpop.f32.mrf.mxu0
    %v2042 = vadd.f32 0.0, %v2041
    %v2043 = vpop.f32.mrf.mxu0
    %v2044 = vpop.f32.mrf.mxu0
    %v2045 = vadd.f32 0.0, %v2044
    %v2046 = vpop.f32.mrf.mxu0
    %2047 = vmatprep.mubr.bf16.mxu0 0
    %2048 = vmatmul.mubr.bf16.gmra.mxu0 %v1945
    %v2049 = vpop.f32.mrf.mxu0
    %v2050 = vadd.f32 0.0, %v2049
    %v2051 = vpop.f32.mrf.mxu0
    %v2052 = vpop.f32.mrf.mxu0
    %v2053 = vadd.f32 0.0, %v2052
    %v2054 = vpop.f32.mrf.mxu0
    %2055 = vmatprep.mubr.bf16.mxu0 0
    %2056 = vmatmul.mubr.bf16.gmra.mxu0 %v1948
    %v2057 = vpop.f32.mrf.mxu0
    %v2058 = vadd.f32 0.0, %v2057
    %v2059 = vpop.f32.mrf.mxu0
    %v2060 = vpop.f32.mrf.mxu0
    %v2061 = vadd.f32 0.0, %v2060
    %v2062 = vpop.f32.mrf.mxu0
    %2063 = vmatprep.mubr.bf16.mxu0 0
    %2064 = vmatmul.mubr.bf16.gmra.mxu0 %v1951
    %v2065 = vpop.f32.mrf.mxu0
    %v2066 = vadd.f32 0.0, %v2065
    %v2067 = vpop.f32.mrf.mxu0
    %v2068 = vpop.f32.mrf.mxu0
    %v2069 = vadd.f32 0.0, %v2068
    %v2070 = vpop.f32.mrf.mxu0
    %2071 = vmatprep.mubr.bf16.mxu0 0
    %2072 = vmatmul.mubr.bf16.gmra.mxu0 %v1954
    %v2073 = vpop.f32.mrf.mxu0
    %v2074 = vadd.f32 0.0, %v2073
    %v2075 = vpop.f32.mrf.mxu0
    %v2076 = vpop.f32.mrf.mxu0
    %v2077 = vadd.f32 0.0, %v2076
    %v2078 = vpop.f32.mrf.mxu0
    %2079 = vmatprep.mubr.bf16.mxu0 0
    %2080 = vmatmul.mubr.bf16.gmra.mxu0 %v1957
    %v2081 = vpop.f32.mrf.mxu0
    %v2082 = vadd.f32 0.0, %v2081
    %v2083 = vpop.f32.mrf.mxu0
    %v2084 = vpop.f32.mrf.mxu0
    %v2085 = vadd.f32 0.0, %v2084
    %v2086 = vpop.f32.mrf.mxu0
    %2087 = vmatprep.mubr.bf16.mxu0 0
    %2088 = vmatmul.mubr.bf16.gmra.mxu0 %v1960
    %v2089 = vpop.f32.mrf.mxu0
    %v2090 = vadd.f32 0.0, %v2089
    %v2091 = vpop.f32.mrf.mxu0
    %v2092 = vpop.f32.mrf.mxu0
    %v2093 = vadd.f32 0.0, %v2092
    %v2094 = vpop.f32.mrf.mxu0
    %2095 = vmatprep.mubr.bf16.mxu0 0
    %2096 = vmatmul.mubr.bf16.gmra.mxu0 %v1963
    %v2097 = vpop.f32.mrf.mxu0
    %v2098 = vadd.f32 0.0, %v2097
    %v2099 = vpop.f32.mrf.mxu0
    %v2100 = vpop.f32.mrf.mxu0
    %v2101 = vadd.f32 0.0, %v2100
    %v2102 = vpop.f32.mrf.mxu0
    %2103 = vmatprep.mubr.bf16.mxu0 0
    %2104 = vmatmul.mubr.bf16.gmra.mxu0 %v1966
    %v2105 = vpop.f32.mrf.mxu0
    %v2106 = vadd.f32 0.0, %v2105
    %v2107 = vpop.f32.mrf.mxu0
    %v2108 = vpop.f32.mrf.mxu0
    %v2109 = vadd.f32 0.0, %v2108
    %v2110 = vpop.f32.mrf.mxu0
    %2111 = vmatprep.mubr.bf16.mxu0 0
    %2112 = vmatmul.mubr.bf16.gmra.mxu0 %v1969
    %v2113 = vpop.f32.mrf.mxu0
    %v2114 = vadd.f32 0.0, %v2113
    %v2115 = vpop.f32.mrf.mxu0
    %v2116 = vpop.f32.mrf.mxu0
    %v2117 = vadd.f32 0.0, %v2116
    %v2118 = vpop.f32.mrf.mxu0
    %2119 = vmatprep.mubr.bf16.mxu0 0
    %2120 = vmatmul.mubr.bf16.gmra.mxu0 %v1972
    %v2121 = vpop.f32.mrf.mxu0
    %v2122 = vadd.f32 0.0, %v2121
    %v2123 = vpop.f32.mrf.mxu0
    %v2124 = vpop.f32.mrf.mxu0
    %v2125 = vadd.f32 0.0, %v2124
    %v2126 = vpop.f32.mrf.mxu0
    %2127 = vmatprep.mubr.bf16.mxu0 0
    %2128 = vmatmul.mubr.bf16.gmra.mxu0 %v1975
    %v2129 = vpop.f32.mrf.mxu0
    %v2130 = vadd.f32 0.0, %v2129
    %v2131 = vpop.f32.mrf.mxu0
    %v2132 = vpop.f32.mrf.mxu0
    %v2133 = vadd.f32 0.0, %v2132
    %v2134 = vpop.f32.mrf.mxu0
    %2135 = vmatprep.mubr.bf16.mxu0 0
    %2136 = vmatmul.mubr.bf16.gmra.mxu0 %v1978
    %v2137 = vpop.f32.mrf.mxu0
    %v2138 = vadd.f32 0.0, %v2137
    %v2139 = vpop.f32.mrf.mxu0
    %v2140 = vpop.f32.mrf.mxu0
    %v2141 = vadd.f32 0.0, %v2140
    %v2142 = vpop.f32.mrf.mxu0
    %2143 = vdwg.mxu0
    %v2144 = vadd.f32 %v1454, %v2018
    %v2145 = vadd.f32 %v1455, %v2021
    %v2146 = vadd.f32 %v1456, %v2026
    %v2147 = vadd.f32 %v1457, %v2029
    %v2148 = vadd.f32 %v1458, %v2034
    %v2149 = vadd.f32 %v1459, %v2037
    %v2150 = vadd.f32 %v1460, %v2042
    %v2151 = vadd.f32 %v1461, %v2045
    %v2152 = vadd.f32 %v1462, %v2050
    %v2153 = vadd.f32 %v1463, %v2053
    %v2154 = vadd.f32 %v1464, %v2058
    %v2155 = vadd.f32 %v1465, %v2061
    %v2156 = vadd.f32 %v1466, %v2066
    %v2157 = vadd.f32 %v1467, %v2069
    %v2158 = vadd.f32 %v1468, %v2074
    %v2159 = vadd.f32 %v1469, %v2077
    %v2160 = vadd.f32 %v1470, %v2082
    %v2161 = vadd.f32 %v1471, %v2085
    %v2162 = vadd.f32 %v1472, %v2090
    %v2163 = vadd.f32 %v1473, %v2093
    %v2164 = vadd.f32 %v1474, %v2098
    %v2165 = vadd.f32 %v1475, %v2101
    %v2166 = vadd.f32 %v1476, %v2106
    %v2167 = vadd.f32 %v1477, %v2109
    %v2168 = vadd.f32 %v1478, %v2114
    %v2169 = vadd.f32 %v1479, %v2117
    %v2170 = vadd.f32 %v1480, %v2122
    %v2171 = vadd.f32 %v1481, %v2125
    %v2172 = vadd.f32 %v1482, %v2130
    %v2173 = vadd.f32 %v1483, %v2133
    %v2174 = vadd.f32 %v1484, %v2138
    %v2175 = vadd.f32 %v1485, %v2141
    %v2176 = vld [vmem:[%s23] sm:$0xc]
    %v2177 = vld [vmem:[%s23 + $0xc] sm:$0xc]
    %v2178 = vld [vmem:[%s23 + $0x18] sm:$0xc]
    %v2179 = vld [vmem:[%s23 + $0x24] sm:$0xc]
    %v2180 = vld [vmem:[%s23 + $0x30] sm:$0xc]
    %v2181 = vld [vmem:[%s23 + $0x3c] sm:$0xc]
    %v2182 = vld [vmem:[%s23 + $0x48] sm:$0xc]
    %v2183 = vld [vmem:[%s23 + $0x54] sm:$0xc]
    %v2184 = vld [vmem:[%s23 + $0x60] sm:$0xc]
    %v2185 = vld [vmem:[%s23 + $0x6c] sm:$0xc]
    %v2186 = vld [vmem:[%s23 + $0x78] sm:$0xc]
    %v2187 = vld [vmem:[%s23 + $0x84] sm:$0xc]
    %v2188 = vld [vmem:[%s23 + $0x90] sm:$0xc]
    %v2189 = vld [vmem:[%s23 + $0x9c] sm:$0xc]
    %v2190 = vld [vmem:[%s23 + $0xa8] sm:$0xc]
    %v2191 = vld [vmem:[%s23 + $0xb4] sm:$0xc]
    %vm2224 = vcmask 1041408
    %vm2225 = vcmask 1045508
    %vm2226 = vmor %vm2224, %vm2225
    %v2227 = vrot.slane %v2176, 6
    %v2228 = vrot.slane %v2227, 4
    %v2229 = vrot.slane %v25, 6
    %v2230 = vsel %vm2226, %v2228, %v2229
    %v2231 = vrot.slane %v2229, 4
    %v2232 = vrot.slane %v1486, 6
    %v2233 = vsel %vm2226, %v2231, %v2232
    %v2234 = vrot.slane %v2177, 6
    %v2235 = vrot.slane %v2234, 4
    %v2236 = vrot.slane %v27, 6
    %v2237 = vsel %vm2226, %v2235, %v2236
    %v2238 = vrot.slane %v2236, 4
    %v2239 = vrot.slane %v1487, 6
    %v2240 = vsel %vm2226, %v2238, %v2239
    %v2241 = vrot.slane %v2178, 6
    %v2242 = vrot.slane %v2241, 4
    %v2243 = vrot.slane %v29, 6
    %v2244 = vsel %vm2226, %v2242, %v2243
    %v2245 = vrot.slane %v2243, 4
    %v2246 = vrot.slane %v1488, 6
    %v2247 = vsel %vm2226, %v2245, %v2246
    %v2248 = vrot.slane %v2179, 6
    %v2249 = vrot.slane %v2248, 4
    %v2250 = vrot.slane %v31, 6
    %v2251 = vsel %vm2226, %v2249, %v2250
    %v2252 = vrot.slane %v2250, 4
    %v2253 = vrot.slane %v1489, 6
    %v2254 = vsel %vm2226, %v2252, %v2253
    %v2255 = vrot.slane %v2180, 6
    %v2256 = vrot.slane %v2255, 4
    %v2257 = vrot.slane %v33, 6
    %v2258 = vsel %vm2226, %v2256, %v2257
    %v2259 = vrot.slane %v2257, 4
    %v2260 = vrot.slane %v1490, 6
    %v2261 = vsel %vm2226, %v2259, %v2260
    %v2262 = vrot.slane %v2181, 6
    %v2263 = vrot.slane %v2262, 4
    %v2264 = vrot.slane %v35, 6
    %v2265 = vsel %vm2226, %v2263, %v2264
    %v2266 = vrot.slane %v2264, 4
    %v2267 = vrot.slane %v1491, 6
    %v2268 = vsel %vm2226, %v2266, %v2267
    %v2269 = vrot.slane %v2182, 6
    %v2270 = vrot.slane %v2269, 4
    %v2271 = vrot.slane %v37, 6
    %v2272 = vsel %vm2226, %v2270, %v2271
    %v2273 = vrot.slane %v2271, 4
    %v2274 = vrot.slane %v1492, 6
    %v2275 = vsel %vm2226, %v2273, %v2274
    %v2276 = vrot.slane %v2183, 6
    %v2277 = vrot.slane %v2276, 4
    %v2278 = vrot.slane %v39, 6
    %v2279 = vsel %vm2226, %v2277, %v2278
    %v2280 = vrot.slane %v2278, 4
    %v2281 = vrot.slane %v1493, 6
    %v2282 = vsel %vm2226, %v2280, %v2281
    %v2283 = vrot.slane %v2184, 6
    %v2284 = vrot.slane %v2283, 4
    %v2285 = vrot.slane %v41, 6
    %v2286 = vsel %vm2226, %v2284, %v2285
    %v2287 = vrot.slane %v2285, 4
    %v2288 = vrot.slane %v1494, 6
    %v2289 = vsel %vm2226, %v2287, %v2288
    %v2290 = vrot.slane %v2185, 6
    %v2291 = vrot.slane %v2290, 4
    %v2292 = vrot.slane %v43, 6
    %v2293 = vsel %vm2226, %v2291, %v2292
    %v2294 = vrot.slane %v2292, 4
    %v2295 = vrot.slane %v1495, 6
    %v2296 = vsel %vm2226, %v2294, %v2295
    %v2297 = vrot.slane %v2186, 6
    %v2298 = vrot.slane %v2297, 4
    %v2299 = vrot.slane %v45, 6
    %v2300 = vsel %vm2226, %v2298, %v2299
    %v2301 = vrot.slane %v2299, 4
    %v2302 = vrot.slane %v1496, 6
    %v2303 = vsel %vm2226, %v2301, %v2302
    %v2304 = vrot.slane %v2187, 6
    %v2305 = vrot.slane %v2304, 4
    %v2306 = vrot.slane %v47, 6
    %v2307 = vsel %vm2226, %v2305, %v2306
    %v2308 = vrot.slane %v2306, 4
    %v2309 = vrot.slane %v1497, 6
    %v2310 = vsel %vm2226, %v2308, %v2309
    %v2311 = vrot.slane %v2188, 6
    %v2312 = vrot.slane %v2311, 4
    %v2313 = vrot.slane %v49, 6
    %v2314 = vsel %vm2226, %v2312, %v2313
    %v2315 = vrot.slane %v2313, 4
    %v2316 = vrot.slane %v1498, 6
    %v2317 = vsel %vm2226, %v2315, %v2316
    %v2318 = vrot.slane %v2189, 6
    %v2319 = vrot.slane %v2318, 4
    %v2320 = vrot.slane %v51, 6
    %v2321 = vsel %vm2226, %v2319, %v2320
    %v2322 = vrot.slane %v2320, 4
    %v2323 = vrot.slane %v1499, 6
    %v2324 = vsel %vm2226, %v2322, %v2323
    %v2325 = vrot.slane %v2190, 6
    %v2326 = vrot.slane %v2325, 4
    %v2327 = vrot.slane %v53, 6
    %v2328 = vsel %vm2226, %v2326, %v2327
    %v2329 = vrot.slane %v2327, 4
    %v2330 = vrot.slane %v1500, 6
    %v2331 = vsel %vm2226, %v2329, %v2330
    %v2332 = vrot.slane %v2191, 6
    %v2333 = vrot.slane %v2332, 4
    %v2334 = vrot.slane %v55, 6
    %v2335 = vsel %vm2226, %v2333, %v2334
    %v2336 = vrot.slane %v2334, 4
    %v2337 = vrot.slane %v1501, 6
    %v2338 = vsel %vm2226, %v2336, %v2337
    %v2339 = vunpack.c.l.b16 %v2230
    %v2340 = vunpack.c.l.b16 %v2233
    %v2341 = vunpack.c.l.b16 %v2237
    %v2342 = vunpack.c.l.b16 %v2240
    %v2343 = vunpack.c.l.b16 %v2244
    %v2344 = vunpack.c.l.b16 %v2247
    %v2345 = vunpack.c.l.b16 %v2251
    %v2346 = vunpack.c.l.b16 %v2254
    %v2347 = vunpack.c.l.b16 %v2258
    %v2348 = vunpack.c.l.b16 %v2261
    %v2349 = vunpack.c.l.b16 %v2265
    %v2350 = vunpack.c.l.b16 %v2268
    %v2351 = vunpack.c.l.b16 %v2272
    %v2352 = vunpack.c.l.b16 %v2275
    %v2353 = vunpack.c.l.b16 %v2279
    %v2354 = vunpack.c.l.b16 %v2282
    %v2355 = vunpack.c.l.b16 %v2286
    %v2356 = vunpack.c.l.b16 %v2289
    %v2357 = vunpack.c.l.b16 %v2293
    %v2358 = vunpack.c.l.b16 %v2296
    %v2359 = vunpack.c.l.b16 %v2300
    %v2360 = vunpack.c.l.b16 %v2303
    %v2361 = vunpack.c.l.b16 %v2307
    %v2362 = vunpack.c.l.b16 %v2310
    %v2363 = vunpack.c.l.b16 %v2314
    %v2364 = vunpack.c.l.b16 %v2317
    %v2365 = vunpack.c.l.b16 %v2321
    %v2366 = vunpack.c.l.b16 %v2324
    %v2367 = vunpack.c.l.b16 %v2328
    %v2368 = vunpack.c.l.b16 %v2331
    %v2369 = vunpack.c.l.b16 %v2335
    %v2370 = vunpack.c.l.b16 %v2338
    %v2371 = vpack.c.b16 %v2340, %v2339
    %v2372 = vpack.c.b16 %v2342, %v2341
    %v2373 = vpack.c.b16 %v2344, %v2343
    %v2374 = vpack.c.b16 %v2346, %v2345
    %v2375 = vpack.c.b16 %v2348, %v2347
    %v2376 = vpack.c.b16 %v2350, %v2349
    %v2377 = vpack.c.b16 %v2352, %v2351
    %v2378 = vpack.c.b16 %v2354, %v2353
    %v2379 = vpack.c.b16 %v2356, %v2355
    %v2380 = vpack.c.b16 %v2358, %v2357
    %v2381 = vpack.c.b16 %v2360, %v2359
    %v2382 = vpack.c.b16 %v2362, %v2361
    %v2383 = vpack.c.b16 %v2364, %v2363
    %v2384 = vpack.c.b16 %v2366, %v2365
    %v2385 = vpack.c.b16 %v2368, %v2367
    %v2386 = vpack.c.b16 %v2370, %v2369
    %v2388 = vunpack.c.l.b16 %v20
    %v2389 = vpack.c.b16 %v2388, %v1922
    %v2390 = vrot.slane %v2389, 2
    %v2392 = vsel %vm520, %v2371, 0
    %v2395 = vsel %vm520, %v2372, 0
    %v2398 = vsel %vm520, %v2373, 0
    %v2401 = vsel %vm520, %v2374, 0
    %v2404 = vsel %vm520, %v2375, 0
    %v2407 = vsel %vm520, %v2376, 0
    %v2410 = vsel %vm520, %v2377, 0
    %v2413 = vsel %vm520, %v2378, 0
    %v2416 = vsel %vm520, %v2379, 0
    %v2419 = vsel %vm520, %v2380, 0
    %v2422 = vsel %vm520, %v2381, 0
    %v2425 = vsel %vm520, %v2382, 0
    %v2428 = vsel %vm520, %v2383, 0
    %v2431 = vsel %vm520, %v2384, 0
    %v2434 = vsel %vm520, %v2385, 0
    %v2437 = vsel %vm520, %v2386, 0
    %v2440 = vand.u32 %v2390, %v572
    %2442 = vmatprep.subr.bf16.mxu0 0
    %2443 = vmatpush1.bf16.msra.mxu0 0
    %2444 = vmatprep.subr.bf16.mxu0 0
    %2445 = vmatpush1.bf16.msra.mxu0 0
    %2446 = vmatprep.subr.bf16.mxu0 0
    %2447 = vmatpush1.bf16.msra.mxu0 0
    %2448 = vmatprep.subr.bf16.mxu0 0
    %2449 = vmatpush1.bf16.msra.mxu0 0
    %2450 = vmatprep.subr.bf16.mxu0 0
    %2451 = vmatpush1.bf16.msra.mxu0 0
    %2452 = vmatprep.subr.bf16.mxu0 0
    %2453 = vmatpush1.bf16.msra.mxu0 0
    %2454 = vmatprep.subr.bf16.mxu0 0
    %2455 = vmatpush1.bf16.msra.mxu0 0
    %2456 = vmatprep.subr.bf16.mxu0 0
    %2457 = vmatpush1.bf16.msra.mxu0 %v2440
    %2458 = vmatprep.subr.bf16.mxu0 0
    %2459 = vmatpush2.bf16.msra.mxu0 0
    %2460 = vmatprep.subr.bf16.mxu0 0
    %2461 = vmatpush2.bf16.msra.mxu0 0
    %2462 = vmatprep.subr.bf16.mxu0 0
    %2463 = vmatpush2.bf16.msra.mxu0 0
    %2464 = vmatprep.subr.bf16.mxu0 0
    %2465 = vmatpush2.bf16.msra.mxu0 0
    %2466 = vmatprep.subr.bf16.mxu0 0
    %2467 = vmatpush2.bf16.msra.mxu0 0
    %2468 = vmatprep.subr.bf16.mxu0 0
    %2469 = vmatpush2.bf16.msra.mxu0 0
    %2470 = vmatprep.subr.bf16.mxu0 0
    %2471 = vmatpush2.bf16.msra.mxu0 0
    %2472 = vmatprep.subr.bf16.mxu0 0
    %2473 = vmatpush2.bf16.msra.mxu0 0
    %2474 = vmatprep.mubr.bf16.mxu0 0
    %2475 = vmatmul.mubr.bf16.gmra.mxu0 %v2392
    %v2476 = vpop.f32.mrf.mxu0
    %v2477 = vadd.f32 0.0, %v2476
    %v2478 = vpop.f32.mrf.mxu0
    %v2479 = vpop.f32.mrf.mxu0
    %v2480 = vadd.f32 0.0, %v2479
    %v2481 = vpop.f32.mrf.mxu0
    %2482 = vmatprep.mubr.bf16.mxu0 0
    %2483 = vmatmul.mubr.bf16.gmra.mxu0 %v2395
    %v2484 = vpop.f32.mrf.mxu0
    %v2485 = vadd.f32 0.0, %v2484
    %v2486 = vpop.f32.mrf.mxu0
    %v2487 = vpop.f32.mrf.mxu0
    %v2488 = vadd.f32 0.0, %v2487
    %v2489 = vpop.f32.mrf.mxu0
    %2490 = vmatprep.mubr.bf16.mxu0 0
    %2491 = vmatmul.mubr.bf16.gmra.mxu0 %v2398
    %v2492 = vpop.f32.mrf.mxu0
    %v2493 = vadd.f32 0.0, %v2492
    %v2494 = vpop.f32.mrf.mxu0
    %v2495 = vpop.f32.mrf.mxu0
    %v2496 = vadd.f32 0.0, %v2495
    %v2497 = vpop.f32.mrf.mxu0
    %2498 = vmatprep.mubr.bf16.mxu0 0
    %2499 = vmatmul.mubr.bf16.gmra.mxu0 %v2401
    %v2500 = vpop.f32.mrf.mxu0
    %v2501 = vadd.f32 0.0, %v2500
    %v2502 = vpop.f32.mrf.mxu0
    %v2503 = vpop.f32.mrf.mxu0
    %v2504 = vadd.f32 0.0, %v2503
    %v2505 = vpop.f32.mrf.mxu0
    %2506 = vmatprep.mubr.bf16.mxu0 0
    %2507 = vmatmul.mubr.bf16.gmra.mxu0 %v2404
    %v2508 = vpop.f32.mrf.mxu0
    %v2509 = vadd.f32 0.0, %v2508
    %v2510 = vpop.f32.mrf.mxu0
    %v2511 = vpop.f32.mrf.mxu0
    %v2512 = vadd.f32 0.0, %v2511
    %v2513 = vpop.f32.mrf.mxu0
    %2514 = vmatprep.mubr.bf16.mxu0 0
    %2515 = vmatmul.mubr.bf16.gmra.mxu0 %v2407
    %v2516 = vpop.f32.mrf.mxu0
    %v2517 = vadd.f32 0.0, %v2516
    %v2518 = vpop.f32.mrf.mxu0
    %v2519 = vpop.f32.mrf.mxu0
    %v2520 = vadd.f32 0.0, %v2519
    %v2521 = vpop.f32.mrf.mxu0
    %2522 = vmatprep.mubr.bf16.mxu0 0
    %2523 = vmatmul.mubr.bf16.gmra.mxu0 %v2410
    %v2524 = vpop.f32.mrf.mxu0
    %v2525 = vadd.f32 0.0, %v2524
    %v2526 = vpop.f32.mrf.mxu0
    %v2527 = vpop.f32.mrf.mxu0
    %v2528 = vadd.f32 0.0, %v2527
    %v2529 = vpop.f32.mrf.mxu0
    %2530 = vmatprep.mubr.bf16.mxu0 0
    %2531 = vmatmul.mubr.bf16.gmra.mxu0 %v2413
    %v2532 = vpop.f32.mrf.mxu0
    %v2533 = vadd.f32 0.0, %v2532
    %v2534 = vpop.f32.mrf.mxu0
    %v2535 = vpop.f32.mrf.mxu0
    %v2536 = vadd.f32 0.0, %v2535
    %v2537 = vpop.f32.mrf.mxu0
    %2538 = vmatprep.mubr.bf16.mxu0 0
    %2539 = vmatmul.mubr.bf16.gmra.mxu0 %v2416
    %v2540 = vpop.f32.mrf.mxu0
    %v2541 = vadd.f32 0.0, %v2540
    %v2542 = vpop.f32.mrf.mxu0
    %v2543 = vpop.f32.mrf.mxu0
    %v2544 = vadd.f32 0.0, %v2543
    %v2545 = vpop.f32.mrf.mxu0
    %2546 = vmatprep.mubr.bf16.mxu0 0
    %2547 = vmatmul.mubr.bf16.gmra.mxu0 %v2419
    %v2548 = vpop.f32.mrf.mxu0
    %v2549 = vadd.f32 0.0, %v2548
    %v2550 = vpop.f32.mrf.mxu0
    %v2551 = vpop.f32.mrf.mxu0
    %v2552 = vadd.f32 0.0, %v2551
    %v2553 = vpop.f32.mrf.mxu0
    %2554 = vmatprep.mubr.bf16.mxu0 0
    %2555 = vmatmul.mubr.bf16.gmra.mxu0 %v2422
    %v2556 = vpop.f32.mrf.mxu0
    %v2557 = vadd.f32 0.0, %v2556
    %v2558 = vpop.f32.mrf.mxu0
    %v2559 = vpop.f32.mrf.mxu0
    %v2560 = vadd.f32 0.0, %v2559
    %v2561 = vpop.f32.mrf.mxu0
    %2562 = vmatprep.mubr.bf16.mxu0 0
    %2563 = vmatmul.mubr.bf16.gmra.mxu0 %v2425
    %v2564 = vpop.f32.mrf.mxu0
    %v2565 = vadd.f32 0.0, %v2564
    %v2566 = vpop.f32.mrf.mxu0
    %v2567 = vpop.f32.mrf.mxu0
    %v2568 = vadd.f32 0.0, %v2567
    %v2569 = vpop.f32.mrf.mxu0
    %2570 = vmatprep.mubr.bf16.mxu0 0
    %2571 = vmatmul.mubr.bf16.gmra.mxu0 %v2428
    %v2572 = vpop.f32.mrf.mxu0
    %v2573 = vadd.f32 0.0, %v2572
    %v2574 = vpop.f32.mrf.mxu0
    %v2575 = vpop.f32.mrf.mxu0
    %v2576 = vadd.f32 0.0, %v2575
    %v2577 = vpop.f32.mrf.mxu0
    %2578 = vmatprep.mubr.bf16.mxu0 0
    %2579 = vmatmul.mubr.bf16.gmra.mxu0 %v2431
    %v2580 = vpop.f32.mrf.mxu0
    %v2581 = vadd.f32 0.0, %v2580
    %v2582 = vpop.f32.mrf.mxu0
    %v2583 = vpop.f32.mrf.mxu0
    %v2584 = vadd.f32 0.0, %v2583
    %v2585 = vpop.f32.mrf.mxu0
    %2586 = vmatprep.mubr.bf16.mxu0 0
    %2587 = vmatmul.mubr.bf16.gmra.mxu0 %v2434
    %v2588 = vpop.f32.mrf.mxu0
    %v2589 = vadd.f32 0.0, %v2588
    %v2590 = vpop.f32.mrf.mxu0
    %v2591 = vpop.f32.mrf.mxu0
    %v2592 = vadd.f32 0.0, %v2591
    %v2593 = vpop.f32.mrf.mxu0
    %2594 = vmatprep.mubr.bf16.mxu0 0
    %2595 = vmatmul.mubr.bf16.gmra.mxu0 %v2437
    %v2596 = vpop.f32.mrf.mxu0
    %v2597 = vadd.f32 0.0, %v2596
    %v2598 = vpop.f32.mrf.mxu0
    %v2599 = vpop.f32.mrf.mxu0
    %v2600 = vadd.f32 0.0, %v2599
    %v2601 = vpop.f32.mrf.mxu0
    %2602 = vdwg.mxu0
    %v2603 = vadd.f32 %v2144, %v2477
    %v2604 = vadd.f32 %v2145, %v2480
    %v2605 = vadd.f32 %v2146, %v2485
    %v2606 = vadd.f32 %v2147, %v2488
    %v2607 = vadd.f32 %v2148, %v2493
    %v2608 = vadd.f32 %v2149, %v2496
    %v2609 = vadd.f32 %v2150, %v2501
    %v2610 = vadd.f32 %v2151, %v2504
    %v2611 = vadd.f32 %v2152, %v2509
    %v2612 = vadd.f32 %v2153, %v2512
    %v2613 = vadd.f32 %v2154, %v2517
    %v2614 = vadd.f32 %v2155, %v2520
    %v2615 = vadd.f32 %v2156, %v2525
    %v2616 = vadd.f32 %v2157, %v2528
    %v2617 = vadd.f32 %v2158, %v2533
    %v2618 = vadd.f32 %v2159, %v2536
    %v2619 = vadd.f32 %v2160, %v2541
    %v2620 = vadd.f32 %v2161, %v2544
    %v2621 = vadd.f32 %v2162, %v2549
    %v2622 = vadd.f32 %v2163, %v2552
    %v2623 = vadd.f32 %v2164, %v2557
    %v2624 = vadd.f32 %v2165, %v2560
    %v2625 = vadd.f32 %v2166, %v2565
    %v2626 = vadd.f32 %v2167, %v2568
    %v2627 = vadd.f32 %v2168, %v2573
    %v2628 = vadd.f32 %v2169, %v2576
    %v2629 = vadd.f32 %v2170, %v2581
    %v2630 = vadd.f32 %v2171, %v2584
    %v2631 = vadd.f32 %v2172, %v2589
    %v2632 = vadd.f32 %v2173, %v2592
    %v2633 = vadd.f32 %v2174, %v2597
    %v2634 = vadd.f32 %v2175, %v2600
    %s2635 = scalar_lea.vmem %s1, 16
    %v2636 = vld [vmem:[%s2635] sm:$0xf]
    %v2637 = vld [vmem:[%s2635 + $0x4] sm:$0xf]
    %v2638 = vld [vmem:[%s2635 + $0x8] sm:$0xf]
    %v2639 = vld [vmem:[%s2635 + $0xc] sm:$0x1]
    %s2640 = sadd.s32 %s16, 1
    %s2641 = smul.u32 %s2640, 3
    %s2642 = smul.addr %s2641, 4
    %s2643 = scalar_lea.vmem %s0, %s2642
    %v2644 = vld [vmem:[%s2643] sm:$0xf]
    %v2645 = vld [vmem:[%s2643 + $0x4] sm:$0xf]
    %v2646 = vld [vmem:[%s2643 + $0xc] sm:$0xf]
    %v2647 = vld [vmem:[%s2643 + $0x10] sm:$0xf]
    %v2648 = vld [vmem:[%s2643 + $0x18] sm:$0xf]
    %v2649 = vld [vmem:[%s2643 + $0x1c] sm:$0xf]
    %v2650 = vld [vmem:[%s2643 + $0x24] sm:$0xf]
    %v2651 = vld [vmem:[%s2643 + $0x28] sm:$0xf]
    %v2652 = vld [vmem:[%s2643 + $0x30] sm:$0xf]
    %v2653 = vld [vmem:[%s2643 + $0x34] sm:$0xf]
    %v2654 = vld [vmem:[%s2643 + $0x3c] sm:$0xf]
    %v2655 = vld [vmem:[%s2643 + $0x40] sm:$0xf]
    %v2656 = vld [vmem:[%s2643 + $0x48] sm:$0xf]
    %v2657 = vld [vmem:[%s2643 + $0x4c] sm:$0xf]
    %v2658 = vld [vmem:[%s2643 + $0x54] sm:$0xf]
    %v2659 = vld [vmem:[%s2643 + $0x58] sm:$0xf]
    %v2660 = vld [vmem:[%s2643 + $0x60] sm:$0xf]
    %v2661 = vld [vmem:[%s2643 + $0x64] sm:$0xf]
    %v2662 = vld [vmem:[%s2643 + $0x6c] sm:$0xf]
    %v2663 = vld [vmem:[%s2643 + $0x70] sm:$0xf]
    %v2664 = vld [vmem:[%s2643 + $0x78] sm:$0xf]
    %v2665 = vld [vmem:[%s2643 + $0x7c] sm:$0xf]
    %v2666 = vld [vmem:[%s2643 + $0x84] sm:$0xf]
    %v2667 = vld [vmem:[%s2643 + $0x88] sm:$0xf]
    %v2668 = vld [vmem:[%s2643 + $0x90] sm:$0xf]
    %v2669 = vld [vmem:[%s2643 + $0x94] sm:$0xf]
    %v2670 = vld [vmem:[%s2643 + $0x9c] sm:$0xf]
    %v2671 = vld [vmem:[%s2643 + $0xa0] sm:$0xf]
    %v2672 = vld [vmem:[%s2643 + $0xa8] sm:$0xf]
    %v2673 = vld [vmem:[%s2643 + $0xac] sm:$0xf]
    %v2674 = vld [vmem:[%s2643 + $0xb4] sm:$0xf]
    %v2675 = vld [vmem:[%s2643 + $0xb8] sm:$0xf]
    %v2708 = vunpack.c.l.b16 %v2644
    %v2709 = vunpack.c.l.b16 %v2645
    %v2710 = vunpack.c.l.b16 %v2646
    %v2711 = vunpack.c.l.b16 %v2647
    %v2712 = vunpack.c.l.b16 %v2648
    %v2713 = vunpack.c.l.b16 %v2649
    %v2714 = vunpack.c.l.b16 %v2650
    %v2715 = vunpack.c.l.b16 %v2651
    %v2716 = vunpack.c.l.b16 %v2652
    %v2717 = vunpack.c.l.b16 %v2653
    %v2718 = vunpack.c.l.b16 %v2654
    %v2719 = vunpack.c.l.b16 %v2655
    %v2720 = vunpack.c.l.b16 %v2656
    %v2721 = vunpack.c.l.b16 %v2657
    %v2722 = vunpack.c.l.b16 %v2658
    %v2723 = vunpack.c.l.b16 %v2659
    %v2724 = vunpack.c.l.b16 %v2660
    %v2725 = vunpack.c.l.b16 %v2661
    %v2726 = vunpack.c.l.b16 %v2662
    %v2727 = vunpack.c.l.b16 %v2663
    %v2728 = vunpack.c.l.b16 %v2664
    %v2729 = vunpack.c.l.b16 %v2665
    %v2730 = vunpack.c.l.b16 %v2666
    %v2731 = vunpack.c.l.b16 %v2667
    %v2732 = vunpack.c.l.b16 %v2668
    %v2733 = vunpack.c.l.b16 %v2669
    %v2734 = vunpack.c.l.b16 %v2670
    %v2735 = vunpack.c.l.b16 %v2671
    %v2736 = vunpack.c.l.b16 %v2672
    %v2737 = vunpack.c.l.b16 %v2673
    %v2738 = vunpack.c.l.b16 %v2674
    %v2739 = vunpack.c.l.b16 %v2675
    %v2740 = vpack.c.b16 %v2709, %v2708
    %v2741 = vpack.c.b16 %v2711, %v2710
    %v2742 = vpack.c.b16 %v2713, %v2712
    %v2743 = vpack.c.b16 %v2715, %v2714
    %v2744 = vpack.c.b16 %v2717, %v2716
    %v2745 = vpack.c.b16 %v2719, %v2718
    %v2746 = vpack.c.b16 %v2721, %v2720
    %v2747 = vpack.c.b16 %v2723, %v2722
    %v2748 = vpack.c.b16 %v2725, %v2724
    %v2749 = vpack.c.b16 %v2727, %v2726
    %v2750 = vpack.c.b16 %v2729, %v2728
    %v2751 = vpack.c.b16 %v2731, %v2730
    %v2752 = vpack.c.b16 %v2733, %v2732
    %v2753 = vpack.c.b16 %v2735, %v2734
    %v2754 = vpack.c.b16 %v2737, %v2736
    %v2755 = vpack.c.b16 %v2739, %v2738
    %v2757 = vsel %vm520, %v2740, 0
    %v2760 = vsel %vm520, %v2741, 0
    %v2763 = vsel %vm520, %v2742, 0
    %v2766 = vsel %vm520, %v2743, 0
    %v2769 = vsel %vm520, %v2744, 0
    %v2772 = vsel %vm520, %v2745, 0
    %v2775 = vsel %vm520, %v2746, 0
    %v2778 = vsel %vm520, %v2747, 0
    %v2781 = vsel %vm520, %v2748, 0
    %v2784 = vsel %vm520, %v2749, 0
    %v2787 = vsel %vm520, %v2750, 0
    %v2790 = vsel %vm520, %v2751, 0
    %v2793 = vsel %vm520, %v2752, 0
    %v2796 = vsel %vm520, %v2753, 0
    %v2799 = vsel %vm520, %v2754, 0
    %v2802 = vsel %vm520, %v2755, 0
    %v2805 = vand.u32 %v2636, %v572
    %2807 = vmatprep.subr.bf16.mxu0 0
    %2808 = vmatpush1.bf16.msra.mxu0 0
    %2809 = vmatprep.subr.bf16.mxu0 0
    %2810 = vmatpush1.bf16.msra.mxu0 0
    %2811 = vmatprep.subr.bf16.mxu0 0
    %2812 = vmatpush1.bf16.msra.mxu0 0
    %2813 = vmatprep.subr.bf16.mxu0 0
    %2814 = vmatpush1.bf16.msra.mxu0 0
    %2815 = vmatprep.subr.bf16.mxu0 0
    %2816 = vmatpush1.bf16.msra.mxu0 0
    %2817 = vmatprep.subr.bf16.mxu0 0
    %2818 = vmatpush1.bf16.msra.mxu0 0
    %2819 = vmatprep.subr.bf16.mxu0 0
    %2820 = vmatpush1.bf16.msra.mxu0 0
    %2821 = vmatprep.subr.bf16.mxu0 0
    %2822 = vmatpush1.bf16.msra.mxu0 %v2805
    %2823 = vmatprep.subr.bf16.mxu0 0
    %2824 = vmatpush2.bf16.msra.mxu0 0
    %2825 = vmatprep.subr.bf16.mxu0 0
    %2826 = vmatpush2.bf16.msra.mxu0 0
    %2827 = vmatprep.subr.bf16.mxu0 0
    %2828 = vmatpush2.bf16.msra.mxu0 0
    %2829 = vmatprep.subr.bf16.mxu0 0
    %2830 = vmatpush2.bf16.msra.mxu0 0
    %2831 = vmatprep.subr.bf16.mxu0 0
    %2832 = vmatpush2.bf16.msra.mxu0 0
    %2833 = vmatprep.subr.bf16.mxu0 0
    %2834 = vmatpush2.bf16.msra.mxu0 0
    %2835 = vmatprep.subr.bf16.mxu0 0
    %2836 = vmatpush2.bf16.msra.mxu0 0
    %2837 = vmatprep.subr.bf16.mxu0 0
    %2838 = vmatpush2.bf16.msra.mxu0 0
    %2839 = vmatprep.mubr.bf16.mxu0 0
    %2840 = vmatmul.mubr.bf16.gmra.mxu0 %v2757
    %v2841 = vpop.f32.mrf.mxu0
    %v2842 = vadd.f32 0.0, %v2841
    %v2843 = vpop.f32.mrf.mxu0
    %v2844 = vpop.f32.mrf.mxu0
    %v2845 = vadd.f32 0.0, %v2844
    %v2846 = vpop.f32.mrf.mxu0
    %2847 = vmatprep.mubr.bf16.mxu0 0
    %2848 = vmatmul.mubr.bf16.gmra.mxu0 %v2760
    %v2849 = vpop.f32.mrf.mxu0
    %v2850 = vadd.f32 0.0, %v2849
    %v2851 = vpop.f32.mrf.mxu0
    %v2852 = vpop.f32.mrf.mxu0
    %v2853 = vadd.f32 0.0, %v2852
    %v2854 = vpop.f32.mrf.mxu0
    %2855 = vmatprep.mubr.bf16.mxu0 0
    %2856 = vmatmul.mubr.bf16.gmra.mxu0 %v2763
    %v2857 = vpop.f32.mrf.mxu0
    %v2858 = vadd.f32 0.0, %v2857
    %v2859 = vpop.f32.mrf.mxu0
    %v2860 = vpop.f32.mrf.mxu0
    %v2861 = vadd.f32 0.0, %v2860
    %v2862 = vpop.f32.mrf.mxu0
    %2863 = vmatprep.mubr.bf16.mxu0 0
    %2864 = vmatmul.mubr.bf16.gmra.mxu0 %v2766
    %v2865 = vpop.f32.mrf.mxu0
    %v2866 = vadd.f32 0.0, %v2865
    %v2867 = vpop.f32.mrf.mxu0
    %v2868 = vpop.f32.mrf.mxu0
    %v2869 = vadd.f32 0.0, %v2868
    %v2870 = vpop.f32.mrf.mxu0
    %2871 = vmatprep.mubr.bf16.mxu0 0
    %2872 = vmatmul.mubr.bf16.gmra.mxu0 %v2769
    %v2873 = vpop.f32.mrf.mxu0
    %v2874 = vadd.f32 0.0, %v2873
    %v2875 = vpop.f32.mrf.mxu0
    %v2876 = vpop.f32.mrf.mxu0
    %v2877 = vadd.f32 0.0, %v2876
    %v2878 = vpop.f32.mrf.mxu0
    %2879 = vmatprep.mubr.bf16.mxu0 0
    %2880 = vmatmul.mubr.bf16.gmra.mxu0 %v2772
    %v2881 = vpop.f32.mrf.mxu0
    %v2882 = vadd.f32 0.0, %v2881
    %v2883 = vpop.f32.mrf.mxu0
    %v2884 = vpop.f32.mrf.mxu0
    %v2885 = vadd.f32 0.0, %v2884
    %v2886 = vpop.f32.mrf.mxu0
    %2887 = vmatprep.mubr.bf16.mxu0 0
    %2888 = vmatmul.mubr.bf16.gmra.mxu0 %v2775
    %v2889 = vpop.f32.mrf.mxu0
    %v2890 = vadd.f32 0.0, %v2889
    %v2891 = vpop.f32.mrf.mxu0
    %v2892 = vpop.f32.mrf.mxu0
    %v2893 = vadd.f32 0.0, %v2892
    %v2894 = vpop.f32.mrf.mxu0
    %2895 = vmatprep.mubr.bf16.mxu0 0
    %2896 = vmatmul.mubr.bf16.gmra.mxu0 %v2778
    %v2897 = vpop.f32.mrf.mxu0
    %v2898 = vadd.f32 0.0, %v2897
    %v2899 = vpop.f32.mrf.mxu0
    %v2900 = vpop.f32.mrf.mxu0
    %v2901 = vadd.f32 0.0, %v2900
    %v2902 = vpop.f32.mrf.mxu0
    %2903 = vmatprep.mubr.bf16.mxu0 0
    %2904 = vmatmul.mubr.bf16.gmra.mxu0 %v2781
    %v2905 = vpop.f32.mrf.mxu0
    %v2906 = vadd.f32 0.0, %v2905
    %v2907 = vpop.f32.mrf.mxu0
    %v2908 = vpop.f32.mrf.mxu0
    %v2909 = vadd.f32 0.0, %v2908
    %v2910 = vpop.f32.mrf.mxu0
    %2911 = vmatprep.mubr.bf16.mxu0 0
    %2912 = vmatmul.mubr.bf16.gmra.mxu0 %v2784
    %v2913 = vpop.f32.mrf.mxu0
    %v2914 = vadd.f32 0.0, %v2913
    %v2915 = vpop.f32.mrf.mxu0
    %v2916 = vpop.f32.mrf.mxu0
    %v2917 = vadd.f32 0.0, %v2916
    %v2918 = vpop.f32.mrf.mxu0
    %2919 = vmatprep.mubr.bf16.mxu0 0
    %2920 = vmatmul.mubr.bf16.gmra.mxu0 %v2787
    %v2921 = vpop.f32.mrf.mxu0
    %v2922 = vadd.f32 0.0, %v2921
    %v2923 = vpop.f32.mrf.mxu0
    %v2924 = vpop.f32.mrf.mxu0
    %v2925 = vadd.f32 0.0, %v2924
    %v2926 = vpop.f32.mrf.mxu0
    %2927 = vmatprep.mubr.bf16.mxu0 0
    %2928 = vmatmul.mubr.bf16.gmra.mxu0 %v2790
    %v2929 = vpop.f32.mrf.mxu0
    %v2930 = vadd.f32 0.0, %v2929
    %v2931 = vpop.f32.mrf.mxu0
    %v2932 = vpop.f32.mrf.mxu0
    %v2933 = vadd.f32 0.0, %v2932
    %v2934 = vpop.f32.mrf.mxu0
    %2935 = vmatprep.mubr.bf16.mxu0 0
    %2936 = vmatmul.mubr.bf16.gmra.mxu0 %v2793
    %v2937 = vpop.f32.mrf.mxu0
    %v2938 = vadd.f32 0.0, %v2937
    %v2939 = vpop.f32.mrf.mxu0
    %v2940 = vpop.f32.mrf.mxu0
    %v2941 = vadd.f32 0.0, %v2940
    %v2942 = vpop.f32.mrf.mxu0
    %2943 = vmatprep.mubr.bf16.mxu0 0
    %2944 = vmatmul.mubr.bf16.gmra.mxu0 %v2796
    %v2945 = vpop.f32.mrf.mxu0
    %v2946 = vadd.f32 0.0, %v2945
    %v2947 = vpop.f32.mrf.mxu0
    %v2948 = vpop.f32.mrf.mxu0
    %v2949 = vadd.f32 0.0, %v2948
    %v2950 = vpop.f32.mrf.mxu0
    %2951 = vmatprep.mubr.bf16.mxu0 0
    %2952 = vmatmul.mubr.bf16.gmra.mxu0 %v2799
    %v2953 = vpop.f32.mrf.mxu0
    %v2954 = vadd.f32 0.0, %v2953
    %v2955 = vpop.f32.mrf.mxu0
    %v2956 = vpop.f32.mrf.mxu0
    %v2957 = vadd.f32 0.0, %v2956
    %v2958 = vpop.f32.mrf.mxu0
    %2959 = vmatprep.mubr.bf16.mxu0 0
    %2960 = vmatmul.mubr.bf16.gmra.mxu0 %v2802
    %v2961 = vpop.f32.mrf.mxu0
    %v2962 = vadd.f32 0.0, %v2961
    %v2963 = vpop.f32.mrf.mxu0
    %v2964 = vpop.f32.mrf.mxu0
    %v2965 = vadd.f32 0.0, %v2964
    %v2966 = vpop.f32.mrf.mxu0
    %2967 = vdwg.mxu0
    %v2968 = vadd.f32 %v2603, %v2842
    %v2969 = vadd.f32 %v2604, %v2845
    %v2970 = vadd.f32 %v2605, %v2850
    %v2971 = vadd.f32 %v2606, %v2853
    %v2972 = vadd.f32 %v2607, %v2858
    %v2973 = vadd.f32 %v2608, %v2861
    %v2974 = vadd.f32 %v2609, %v2866
    %v2975 = vadd.f32 %v2610, %v2869
    %v2976 = vadd.f32 %v2611, %v2874
    %v2977 = vadd.f32 %v2612, %v2877
    %v2978 = vadd.f32 %v2613, %v2882
    %v2979 = vadd.f32 %v2614, %v2885
    %v2980 = vadd.f32 %v2615, %v2890
    %v2981 = vadd.f32 %v2616, %v2893
    %v2982 = vadd.f32 %v2617, %v2898
    %v2983 = vadd.f32 %v2618, %v2901
    %v2984 = vadd.f32 %v2619, %v2906
    %v2985 = vadd.f32 %v2620, %v2909
    %v2986 = vadd.f32 %v2621, %v2914
    %v2987 = vadd.f32 %v2622, %v2917
    %v2988 = vadd.f32 %v2623, %v2922
    %v2989 = vadd.f32 %v2624, %v2925
    %v2990 = vadd.f32 %v2625, %v2930
    %v2991 = vadd.f32 %v2626, %v2933
    %v2992 = vadd.f32 %v2627, %v2938
    %v2993 = vadd.f32 %v2628, %v2941
    %v2994 = vadd.f32 %v2629, %v2946
    %v2995 = vadd.f32 %v2630, %v2949
    %v2996 = vadd.f32 %v2631, %v2954
    %v2997 = vadd.f32 %v2632, %v2957
    %v2998 = vadd.f32 %v2633, %v2962
    %v2999 = vadd.f32 %v2634, %v2965
    %v3000 = vld [vmem:[%s2643] sm:$0xf]
    %v3001 = vld [vmem:[%s2643 + $0x4] sm:$0xf]
    %v3002 = vld [vmem:[%s2643 + $0x8] sm:$0x1]
    %v3003 = vld [vmem:[%s2643 + $0xc] sm:$0xf]
    %v3004 = vld [vmem:[%s2643 + $0x10] sm:$0xf]
    %v3005 = vld [vmem:[%s2643 + $0x14] sm:$0x1]
    %v3006 = vld [vmem:[%s2643 + $0x18] sm:$0xf]
    %v3007 = vld [vmem:[%s2643 + $0x1c] sm:$0xf]
    %v3008 = vld [vmem:[%s2643 + $0x20] sm:$0x1]
    %v3009 = vld [vmem:[%s2643 + $0x24] sm:$0xf]
    %v3010 = vld [vmem:[%s2643 + $0x28] sm:$0xf]
    %v3011 = vld [vmem:[%s2643 + $0x2c] sm:$0x1]
    %v3012 = vld [vmem:[%s2643 + $0x30] sm:$0xf]
    %v3013 = vld [vmem:[%s2643 + $0x34] sm:$0xf]
    %v3014 = vld [vmem:[%s2643 + $0x38] sm:$0x1]
    %v3015 = vld [vmem:[%s2643 + $0x3c] sm:$0xf]
    %v3016 = vld [vmem:[%s2643 + $0x40] sm:$0xf]
    %v3017 = vld [vmem:[%s2643 + $0x44] sm:$0x1]
    %v3018 = vld [vmem:[%s2643 + $0x48] sm:$0xf]
    %v3019 = vld [vmem:[%s2643 + $0x4c] sm:$0xf]
    %v3020 = vld [vmem:[%s2643 + $0x50] sm:$0x1]
    %v3021 = vld [vmem:[%s2643 + $0x54] sm:$0xf]
    %v3022 = vld [vmem:[%s2643 + $0x58] sm:$0xf]
    %v3023 = vld [vmem:[%s2643 + $0x5c] sm:$0x1]
    %v3024 = vld [vmem:[%s2643 + $0x60] sm:$0xf]
    %v3025 = vld [vmem:[%s2643 + $0x64] sm:$0xf]
    %v3026 = vld [vmem:[%s2643 + $0x68] sm:$0x1]
    %v3027 = vld [vmem:[%s2643 + $0x6c] sm:$0xf]
    %v3028 = vld [vmem:[%s2643 + $0x70] sm:$0xf]
    %v3029 = vld [vmem:[%s2643 + $0x74] sm:$0x1]
    %v3030 = vld [vmem:[%s2643 + $0x78] sm:$0xf]
    %v3031 = vld [vmem:[%s2643 + $0x7c] sm:$0xf]
    %v3032 = vld [vmem:[%s2643 + $0x80] sm:$0x1]
    %v3033 = vld [vmem:[%s2643 + $0x84] sm:$0xf]
    %v3034 = vld [vmem:[%s2643 + $0x88] sm:$0xf]
    %v3035 = vld [vmem:[%s2643 + $0x8c] sm:$0x1]
    %v3036 = vld [vmem:[%s2643 + $0x90] sm:$0xf]
    %v3037 = vld [vmem:[%s2643 + $0x94] sm:$0xf]
    %v3038 = vld [vmem:[%s2643 + $0x98] sm:$0x1]
    %v3039 = vld [vmem:[%s2643 + $0x9c] sm:$0xf]
    %v3040 = vld [vmem:[%s2643 + $0xa0] sm:$0xf]
    %v3041 = vld [vmem:[%s2643 + $0xa4] sm:$0x1]
    %v3042 = vld [vmem:[%s2643 + $0xa8] sm:$0xf]
    %v3043 = vld [vmem:[%s2643 + $0xac] sm:$0xf]
    %v3044 = vld [vmem:[%s2643 + $0xb0] sm:$0x1]
    %v3045 = vld [vmem:[%s2643 + $0xb4] sm:$0xf]
    %v3046 = vld [vmem:[%s2643 + $0xb8] sm:$0xf]
    %v3047 = vld [vmem:[%s2643 + $0xbc] sm:$0x1]
    %v3049 = vshrl.u32 %v3000, 16
    %v3051 = vrot.slane %v3049, 4
    %v3052 = vshll.u32 %v3000, 16
    %v3054 = vrot.slane %v3052, 5
    %v3055 = vor.u32 %v3051, %v3054
    %v3056 = vrot.slane %v3055, 4
    %v3058 = vshll.u32 %v3001, 16
    %v3060 = vrot.slane %v3058, 5
    %v3061 = vsel %vm74, %v3056, %v3060
    %v3062 = vshrl.u32 %v3001, 16
    %v3064 = vrot.slane %v3062, 4
    %v3065 = vor.u32 %v3064, %v3060
    %v3066 = vrot.slane %v3065, 4
    %v3068 = vshll.u32 %v3002, 16
    %v3070 = vrot.slane %v3068, 5
    %v3071 = vsel %vm74, %v3066, %v3070
    %v3073 = vshrl.u32 %v3003, 16
    %v3075 = vrot.slane %v3073, 4
    %v3076 = vshll.u32 %v3003, 16
    %v3078 = vrot.slane %v3076, 5
    %v3079 = vor.u32 %v3075, %v3078
    %v3080 = vrot.slane %v3079, 4
    %v3082 = vshll.u32 %v3004, 16
    %v3084 = vrot.slane %v3082, 5
    %v3085 = vsel %vm74, %v3080, %v3084
    %v3086 = vshrl.u32 %v3004, 16
    %v3088 = vrot.slane %v3086, 4
    %v3089 = vor.u32 %v3088, %v3084
    %v3090 = vrot.slane %v3089, 4
    %v3092 = vshll.u32 %v3005, 16
    %v3094 = vrot.slane %v3092, 5
    %v3095 = vsel %vm74, %v3090, %v3094
    %v3097 = vshrl.u32 %v3006, 16
    %v3099 = vrot.slane %v3097, 4
    %v3100 = vshll.u32 %v3006, 16
    %v3102 = vrot.slane %v3100, 5
    %v3103 = vor.u32 %v3099, %v3102
    %v3104 = vrot.slane %v3103, 4
    %v3106 = vshll.u32 %v3007, 16
    %v3108 = vrot.slane %v3106, 5
    %v3109 = vsel %vm74, %v3104, %v3108
    %v3110 = vshrl.u32 %v3007, 16
    %v3112 = vrot.slane %v3110, 4
    %v3113 = vor.u32 %v3112, %v3108
    %v3114 = vrot.slane %v3113, 4
    %v3116 = vshll.u32 %v3008, 16
    %v3118 = vrot.slane %v3116, 5
    %v3119 = vsel %vm74, %v3114, %v3118
    %v3121 = vshrl.u32 %v3009, 16
    %v3123 = vrot.slane %v3121, 4
    %v3124 = vshll.u32 %v3009, 16
    %v3126 = vrot.slane %v3124, 5
    %v3127 = vor.u32 %v3123, %v3126
    %v3128 = vrot.slane %v3127, 4
    %v3130 = vshll.u32 %v3010, 16
    %v3132 = vrot.slane %v3130, 5
    %v3133 = vsel %vm74, %v3128, %v3132
    %v3134 = vshrl.u32 %v3010, 16
    %v3136 = vrot.slane %v3134, 4
    %v3137 = vor.u32 %v3136, %v3132
    %v3138 = vrot.slane %v3137, 4
    %v3140 = vshll.u32 %v3011, 16
    %v3142 = vrot.slane %v3140, 5
    %v3143 = vsel %vm74, %v3138, %v3142
    %v3145 = vshrl.u32 %v3012, 16
    %v3147 = vrot.slane %v3145, 4
    %v3148 = vshll.u32 %v3012, 16
    %v3150 = vrot.slane %v3148, 5
    %v3151 = vor.u32 %v3147, %v3150
    %v3152 = vrot.slane %v3151, 4
    %v3154 = vshll.u32 %v3013, 16
    %v3156 = vrot.slane %v3154, 5
    %v3157 = vsel %vm74, %v3152, %v3156
    %v3158 = vshrl.u32 %v3013, 16
    %v3160 = vrot.slane %v3158, 4
    %v3161 = vor.u32 %v3160, %v3156
    %v3162 = vrot.slane %v3161, 4
    %v3164 = vshll.u32 %v3014, 16
    %v3166 = vrot.slane %v3164, 5
    %v3167 = vsel %vm74, %v3162, %v3166
    %v3169 = vshrl.u32 %v3015, 16
    %v3171 = vrot.slane %v3169, 4
    %v3172 = vshll.u32 %v3015, 16
    %v3174 = vrot.slane %v3172, 5
    %v3175 = vor.u32 %v3171, %v3174
    %v3176 = vrot.slane %v3175, 4
    %v3178 = vshll.u32 %v3016, 16
    %v3180 = vrot.slane %v3178, 5
    %v3181 = vsel %vm74, %v3176, %v3180
    %v3182 = vshrl.u32 %v3016, 16
    %v3184 = vrot.slane %v3182, 4
    %v3185 = vor.u32 %v3184, %v3180
    %v3186 = vrot.slane %v3185, 4
    %v3188 = vshll.u32 %v3017, 16
    %v3190 = vrot.slane %v3188, 5
    %v3191 = vsel %vm74, %v3186, %v3190
    %v3193 = vshrl.u32 %v3018, 16
    %v3195 = vrot.slane %v3193, 4
    %v3196 = vshll.u32 %v3018, 16
    %v3198 = vrot.slane %v3196, 5
    %v3199 = vor.u32 %v3195, %v3198
    %v3200 = vrot.slane %v3199, 4
    %v3202 = vshll.u32 %v3019, 16
    %v3204 = vrot.slane %v3202, 5
    %v3205 = vsel %vm74, %v3200, %v3204
    %v3206 = vshrl.u32 %v3019, 16
    %v3208 = vrot.slane %v3206, 4
    %v3209 = vor.u32 %v3208, %v3204
    %v3210 = vrot.slane %v3209, 4
    %v3212 = vshll.u32 %v3020, 16
    %v3214 = vrot.slane %v3212, 5
    %v3215 = vsel %vm74, %v3210, %v3214
    %v3217 = vshrl.u32 %v3021, 16
    %v3219 = vrot.slane %v3217, 4
    %v3220 = vshll.u32 %v3021, 16
    %v3222 = vrot.slane %v3220, 5
    %v3223 = vor.u32 %v3219, %v3222
    %v3224 = vrot.slane %v3223, 4
    %v3226 = vshll.u32 %v3022, 16
    %v3228 = vrot.slane %v3226, 5
    %v3229 = vsel %vm74, %v3224, %v3228
    %v3230 = vshrl.u32 %v3022, 16
    %v3232 = vrot.slane %v3230, 4
    %v3233 = vor.u32 %v3232, %v3228
    %v3234 = vrot.slane %v3233, 4
    %v3236 = vshll.u32 %v3023, 16
    %v3238 = vrot.slane %v3236, 5
    %v3239 = vsel %vm74, %v3234, %v3238
    %v3241 = vshrl.u32 %v3024, 16
    %v3243 = vrot.slane %v3241, 4
    %v3244 = vshll.u32 %v3024, 16
    %v3246 = vrot.slane %v3244, 5
    %v3247 = vor.u32 %v3243, %v3246
    %v3248 = vrot.slane %v3247, 4
    %v3250 = vshll.u32 %v3025, 16
    %v3252 = vrot.slane %v3250, 5
    %v3253 = vsel %vm74, %v3248, %v3252
    %v3254 = vshrl.u32 %v3025, 16
    %v3256 = vrot.slane %v3254, 4
    %v3257 = vor.u32 %v3256, %v3252
    %v3258 = vrot.slane %v3257, 4
    %v3260 = vshll.u32 %v3026, 16
    %v3262 = vrot.slane %v3260, 5
    %v3263 = vsel %vm74, %v3258, %v3262
    %v3265 = vshrl.u32 %v3027, 16
    %v3267 = vrot.slane %v3265, 4
    %v3268 = vshll.u32 %v3027, 16
    %v3270 = vrot.slane %v3268, 5
    %v3271 = vor.u32 %v3267, %v3270
    %v3272 = vrot.slane %v3271, 4
    %v3274 = vshll.u32 %v3028, 16
    %v3276 = vrot.slane %v3274, 5
    %v3277 = vsel %vm74, %v3272, %v3276
    %v3278 = vshrl.u32 %v3028, 16
    %v3280 = vrot.slane %v3278, 4
    %v3281 = vor.u32 %v3280, %v3276
    %v3282 = vrot.slane %v3281, 4
    %v3284 = vshll.u32 %v3029, 16
    %v3286 = vrot.slane %v3284, 5
    %v3287 = vsel %vm74, %v3282, %v3286
    %v3289 = vshrl.u32 %v3030, 16
    %v3291 = vrot.slane %v3289, 4
    %v3292 = vshll.u32 %v3030, 16
    %v3294 = vrot.slane %v3292, 5
    %v3295 = vor.u32 %v3291, %v3294
    %v3296 = vrot.slane %v3295, 4
    %v3298 = vshll.u32 %v3031, 16
    %v3300 = vrot.slane %v3298, 5
    %v3301 = vsel %vm74, %v3296, %v3300
    %v3302 = vshrl.u32 %v3031, 16
    %v3304 = vrot.slane %v3302, 4
    %v3305 = vor.u32 %v3304, %v3300
    %v3306 = vrot.slane %v3305, 4
    %v3308 = vshll.u32 %v3032, 16
    %v3310 = vrot.slane %v3308, 5
    %v3311 = vsel %vm74, %v3306, %v3310
    %v3313 = vshrl.u32 %v3033, 16
    %v3315 = vrot.slane %v3313, 4
    %v3316 = vshll.u32 %v3033, 16
    %v3318 = vrot.slane %v3316, 5
    %v3319 = vor.u32 %v3315, %v3318
    %v3320 = vrot.slane %v3319, 4
    %v3322 = vshll.u32 %v3034, 16
    %v3324 = vrot.slane %v3322, 5
    %v3325 = vsel %vm74, %v3320, %v3324
    %v3326 = vshrl.u32 %v3034, 16
    %v3328 = vrot.slane %v3326, 4
    %v3329 = vor.u32 %v3328, %v3324
    %v3330 = vrot.slane %v3329, 4
    %v3332 = vshll.u32 %v3035, 16
    %v3334 = vrot.slane %v3332, 5
    %v3335 = vsel %vm74, %v3330, %v3334
    %v3337 = vshrl.u32 %v3036, 16
    %v3339 = vrot.slane %v3337, 4
    %v3340 = vshll.u32 %v3036, 16
    %v3342 = vrot.slane %v3340, 5
    %v3343 = vor.u32 %v3339, %v3342
    %v3344 = vrot.slane %v3343, 4
    %v3346 = vshll.u32 %v3037, 16
    %v3348 = vrot.slane %v3346, 5
    %v3349 = vsel %vm74, %v3344, %v3348
    %v3350 = vshrl.u32 %v3037, 16
    %v3352 = vrot.slane %v3350, 4
    %v3353 = vor.u32 %v3352, %v3348
    %v3354 = vrot.slane %v3353, 4
    %v3356 = vshll.u32 %v3038, 16
    %v3358 = vrot.slane %v3356, 5
    %v3359 = vsel %vm74, %v3354, %v3358
    %v3361 = vshrl.u32 %v3039, 16
    %v3363 = vrot.slane %v3361, 4
    %v3364 = vshll.u32 %v3039, 16
    %v3366 = vrot.slane %v3364, 5
    %v3367 = vor.u32 %v3363, %v3366
    %v3368 = vrot.slane %v3367, 4
    %v3370 = vshll.u32 %v3040, 16
    %v3372 = vrot.slane %v3370, 5
    %v3373 = vsel %vm74, %v3368, %v3372
    %v3374 = vshrl.u32 %v3040, 16
    %v3376 = vrot.slane %v3374, 4
    %v3377 = vor.u32 %v3376, %v3372
    %v3378 = vrot.slane %v3377, 4
    %v3380 = vshll.u32 %v3041, 16
    %v3382 = vrot.slane %v3380, 5
    %v3383 = vsel %vm74, %v3378, %v3382
    %v3385 = vshrl.u32 %v3042, 16
    %v3387 = vrot.slane %v3385, 4
    %v3388 = vshll.u32 %v3042, 16
    %v3390 = vrot.slane %v3388, 5
    %v3391 = vor.u32 %v3387, %v3390
    %v3392 = vrot.slane %v3391, 4
    %v3394 = vshll.u32 %v3043, 16
    %v3396 = vrot.slane %v3394, 5
    %v3397 = vsel %vm74, %v3392, %v3396
    %v3398 = vshrl.u32 %v3043, 16
    %v3400 = vrot.slane %v3398, 4
    %v3401 = vor.u32 %v3400, %v3396
    %v3402 = vrot.slane %v3401, 4
    %v3404 = vshll.u32 %v3044, 16
    %v3406 = vrot.slane %v3404, 5
    %v3407 = vsel %vm74, %v3402, %v3406
    %v3409 = vshrl.u32 %v3045, 16
    %v3411 = vrot.slane %v3409, 4
    %v3412 = vshll.u32 %v3045, 16
    %v3414 = vrot.slane %v3412, 5
    %v3415 = vor.u32 %v3411, %v3414
    %v3416 = vrot.slane %v3415, 4
    %v3418 = vshll.u32 %v3046, 16
    %v3420 = vrot.slane %v3418, 5
    %v3421 = vsel %vm74, %v3416, %v3420
    %v3422 = vshrl.u32 %v3046, 16
    %v3424 = vrot.slane %v3422, 4
    %v3425 = vor.u32 %v3424, %v3420
    %v3426 = vrot.slane %v3425, 4
    %v3428 = vshll.u32 %v3047, 16
    %v3430 = vrot.slane %v3428, 5
    %v3431 = vsel %vm74, %v3426, %v3430
    %v3432 = vunpack.c.l.b16 %v3061
    %v3433 = vunpack.c.l.b16 %v3071
    %v3434 = vunpack.c.l.b16 %v3085
    %v3435 = vunpack.c.l.b16 %v3095
    %v3436 = vunpack.c.l.b16 %v3109
    %v3437 = vunpack.c.l.b16 %v3119
    %v3438 = vunpack.c.l.b16 %v3133
    %v3439 = vunpack.c.l.b16 %v3143
    %v3440 = vunpack.c.l.b16 %v3157
    %v3441 = vunpack.c.l.b16 %v3167
    %v3442 = vunpack.c.l.b16 %v3181
    %v3443 = vunpack.c.l.b16 %v3191
    %v3444 = vunpack.c.l.b16 %v3205
    %v3445 = vunpack.c.l.b16 %v3215
    %v3446 = vunpack.c.l.b16 %v3229
    %v3447 = vunpack.c.l.b16 %v3239
    %v3448 = vunpack.c.l.b16 %v3253
    %v3449 = vunpack.c.l.b16 %v3263
    %v3450 = vunpack.c.l.b16 %v3277
    %v3451 = vunpack.c.l.b16 %v3287
    %v3452 = vunpack.c.l.b16 %v3301
    %v3453 = vunpack.c.l.b16 %v3311
    %v3454 = vunpack.c.l.b16 %v3325
    %v3455 = vunpack.c.l.b16 %v3335
    %v3456 = vunpack.c.l.b16 %v3349
    %v3457 = vunpack.c.l.b16 %v3359
    %v3458 = vunpack.c.l.b16 %v3373
    %v3459 = vunpack.c.l.b16 %v3383
    %v3460 = vunpack.c.l.b16 %v3397
    %v3461 = vunpack.c.l.b16 %v3407
    %v3462 = vunpack.c.l.b16 %v3421
    %v3463 = vunpack.c.l.b16 %v3431
    %v3464 = vpack.c.b16 %v3433, %v3432
    %v3465 = vpack.c.b16 %v3435, %v3434
    %v3466 = vpack.c.b16 %v3437, %v3436
    %v3467 = vpack.c.b16 %v3439, %v3438
    %v3468 = vpack.c.b16 %v3441, %v3440
    %v3469 = vpack.c.b16 %v3443, %v3442
    %v3470 = vpack.c.b16 %v3445, %v3444
    %v3471 = vpack.c.b16 %v3447, %v3446
    %v3472 = vpack.c.b16 %v3449, %v3448
    %v3473 = vpack.c.b16 %v3451, %v3450
    %v3474 = vpack.c.b16 %v3453, %v3452
    %v3475 = vpack.c.b16 %v3455, %v3454
    %v3476 = vpack.c.b16 %v3457, %v3456
    %v3477 = vpack.c.b16 %v3459, %v3458
    %v3478 = vpack.c.b16 %v3461, %v3460
    %v3479 = vpack.c.b16 %v3463, %v3462
    %v3482 = vunpack.c.l.b16 %v2636
    %v3483 = vunpack.c.l.b16 %v2637
    %v3484 = vpack.c.b16 %v3483, %v3482
    %v3486 = vshrl.u32 %v3484, 16
    %v3488 = vrot.slane %v3486, 2
    %v3489 = vshll.u32 %v3484, 16
    %v3491 = vrot.slane %v3489, 3
    %v3492 = vor.u32 %v3488, %v3491
    %v3494 = vsel %vm520, %v3464, 0
    %v3497 = vsel %vm520, %v3465, 0
    %v3500 = vsel %vm520, %v3466, 0
    %v3503 = vsel %vm520, %v3467, 0
    %v3506 = vsel %vm520, %v3468, 0
    %v3509 = vsel %vm520, %v3469, 0
    %v3512 = vsel %vm520, %v3470, 0
    %v3515 = vsel %vm520, %v3471, 0
    %v3518 = vsel %vm520, %v3472, 0
    %v3521 = vsel %vm520, %v3473, 0
    %v3524 = vsel %vm520, %v3474, 0
    %v3527 = vsel %vm520, %v3475, 0
    %v3530 = vsel %vm520, %v3476, 0
    %v3533 = vsel %vm520, %v3477, 0
    %v3536 = vsel %vm520, %v3478, 0
    %v3539 = vsel %vm520, %v3479, 0
    %v3542 = vand.u32 %v3492, %v572
    %3544 = vmatprep.subr.bf16.mxu0 0
    %3545 = vmatpush1.bf16.msra.mxu0 0
    %3546 = vmatprep.subr.bf16.mxu0 0
    %3547 = vmatpush1.bf16.msra.mxu0 0
    %3548 = vmatprep.subr.bf16.mxu0 0
    %3549 = vmatpush1.bf16.msra.mxu0 0
    %3550 = vmatprep.subr.bf16.mxu0 0
    %3551 = vmatpush1.bf16.msra.mxu0 0
    %3552 = vmatprep.subr.bf16.mxu0 0
    %3553 = vmatpush1.bf16.msra.mxu0 0
    %3554 = vmatprep.subr.bf16.mxu0 0
    %3555 = vmatpush1.bf16.msra.mxu0 0
    %3556 = vmatprep.subr.bf16.mxu0 0
    %3557 = vmatpush1.bf16.msra.mxu0 0
    %3558 = vmatprep.subr.bf16.mxu0 0
    %3559 = vmatpush1.bf16.msra.mxu0 %v3542
    %3560 = vmatprep.subr.bf16.mxu0 0
    %3561 = vmatpush2.bf16.msra.mxu0 0
    %3562 = vmatprep.subr.bf16.mxu0 0
    %3563 = vmatpush2.bf16.msra.mxu0 0
    %3564 = vmatprep.subr.bf16.mxu0 0
    %3565 = vmatpush2.bf16.msra.mxu0 0
    %3566 = vmatprep.subr.bf16.mxu0 0
    %3567 = vmatpush2.bf16.msra.mxu0 0
    %3568 = vmatprep.subr.bf16.mxu0 0
    %3569 = vmatpush2.bf16.msra.mxu0 0
    %3570 = vmatprep.subr.bf16.mxu0 0
    %3571 = vmatpush2.bf16.msra.mxu0 0
    %3572 = vmatprep.subr.bf16.mxu0 0
    %3573 = vmatpush2.bf16.msra.mxu0 0
    %3574 = vmatprep.subr.bf16.mxu0 0
    %3575 = vmatpush2.bf16.msra.mxu0 0
    %3576 = vmatprep.mubr.bf16.mxu0 0
    %3577 = vmatmul.mubr.bf16.gmra.mxu0 %v3494
    %v3578 = vpop.f32.mrf.mxu0
    %v3579 = vadd.f32 0.0, %v3578
    %v3580 = vpop.f32.mrf.mxu0
    %v3581 = vpop.f32.mrf.mxu0
    %v3582 = vadd.f32 0.0, %v3581
    %v3583 = vpop.f32.mrf.mxu0
    %3584 = vmatprep.mubr.bf16.mxu0 0
    %3585 = vmatmul.mubr.bf16.gmra.mxu0 %v3497
    %v3586 = vpop.f32.mrf.mxu0
    %v3587 = vadd.f32 0.0, %v3586
    %v3588 = vpop.f32.mrf.mxu0
    %v3589 = vpop.f32.mrf.mxu0
    %v3590 = vadd.f32 0.0, %v3589
    %v3591 = vpop.f32.mrf.mxu0
    %3592 = vmatprep.mubr.bf16.mxu0 0
    %3593 = vmatmul.mubr.bf16.gmra.mxu0 %v3500
    %v3594 = vpop.f32.mrf.mxu0
    %v3595 = vadd.f32 0.0, %v3594
    %v3596 = vpop.f32.mrf.mxu0
    %v3597 = vpop.f32.mrf.mxu0
    %v3598 = vadd.f32 0.0, %v3597
    %v3599 = vpop.f32.mrf.mxu0
    %3600 = vmatprep.mubr.bf16.mxu0 0
    %3601 = vmatmul.mubr.bf16.gmra.mxu0 %v3503
    %v3602 = vpop.f32.mrf.mxu0
    %v3603 = vadd.f32 0.0, %v3602
    %v3604 = vpop.f32.mrf.mxu0
    %v3605 = vpop.f32.mrf.mxu0
    %v3606 = vadd.f32 0.0, %v3605
    %v3607 = vpop.f32.mrf.mxu0
    %3608 = vmatprep.mubr.bf16.mxu0 0
    %3609 = vmatmul.mubr.bf16.gmra.mxu0 %v3506
    %v3610 = vpop.f32.mrf.mxu0
    %v3611 = vadd.f32 0.0, %v3610
    %v3612 = vpop.f32.mrf.mxu0
    %v3613 = vpop.f32.mrf.mxu0
    %v3614 = vadd.f32 0.0, %v3613
    %v3615 = vpop.f32.mrf.mxu0
    %3616 = vmatprep.mubr.bf16.mxu0 0
    %3617 = vmatmul.mubr.bf16.gmra.mxu0 %v3509
    %v3618 = vpop.f32.mrf.mxu0
    %v3619 = vadd.f32 0.0, %v3618
    %v3620 = vpop.f32.mrf.mxu0
    %v3621 = vpop.f32.mrf.mxu0
    %v3622 = vadd.f32 0.0, %v3621
    %v3623 = vpop.f32.mrf.mxu0
    %3624 = vmatprep.mubr.bf16.mxu0 0
    %3625 = vmatmul.mubr.bf16.gmra.mxu0 %v3512
    %v3626 = vpop.f32.mrf.mxu0
    %v3627 = vadd.f32 0.0, %v3626
    %v3628 = vpop.f32.mrf.mxu0
    %v3629 = vpop.f32.mrf.mxu0
    %v3630 = vadd.f32 0.0, %v3629
    %v3631 = vpop.f32.mrf.mxu0
    %3632 = vmatprep.mubr.bf16.mxu0 0
    %3633 = vmatmul.mubr.bf16.gmra.mxu0 %v3515
    %v3634 = vpop.f32.mrf.mxu0
    %v3635 = vadd.f32 0.0, %v3634
    %v3636 = vpop.f32.mrf.mxu0
    %v3637 = vpop.f32.mrf.mxu0
    %v3638 = vadd.f32 0.0, %v3637
    %v3639 = vpop.f32.mrf.mxu0
    %3640 = vmatprep.mubr.bf16.mxu0 0
    %3641 = vmatmul.mubr.bf16.gmra.mxu0 %v3518
    %v3642 = vpop.f32.mrf.mxu0
    %v3643 = vadd.f32 0.0, %v3642
    %v3644 = vpop.f32.mrf.mxu0
    %v3645 = vpop.f32.mrf.mxu0
    %v3646 = vadd.f32 0.0, %v3645
    %v3647 = vpop.f32.mrf.mxu0
    %3648 = vmatprep.mubr.bf16.mxu0 0
    %3649 = vmatmul.mubr.bf16.gmra.mxu0 %v3521
    %v3650 = vpop.f32.mrf.mxu0
    %v3651 = vadd.f32 0.0, %v3650
    %v3652 = vpop.f32.mrf.mxu0
    %v3653 = vpop.f32.mrf.mxu0
    %v3654 = vadd.f32 0.0, %v3653
    %v3655 = vpop.f32.mrf.mxu0
    %3656 = vmatprep.mubr.bf16.mxu0 0
    %3657 = vmatmul.mubr.bf16.gmra.mxu0 %v3524
    %v3658 = vpop.f32.mrf.mxu0
    %v3659 = vadd.f32 0.0, %v3658
    %v3660 = vpop.f32.mrf.mxu0
    %v3661 = vpop.f32.mrf.mxu0
    %v3662 = vadd.f32 0.0, %v3661
    %v3663 = vpop.f32.mrf.mxu0
    %3664 = vmatprep.mubr.bf16.mxu0 0
    %3665 = vmatmul.mubr.bf16.gmra.mxu0 %v3527
    %v3666 = vpop.f32.mrf.mxu0
    %v3667 = vadd.f32 0.0, %v3666
    %v3668 = vpop.f32.mrf.mxu0
    %v3669 = vpop.f32.mrf.mxu0
    %v3670 = vadd.f32 0.0, %v3669
    %v3671 = vpop.f32.mrf.mxu0
    %3672 = vmatprep.mubr.bf16.mxu0 0
    %3673 = vmatmul.mubr.bf16.gmra.mxu0 %v3530
    %v3674 = vpop.f32.mrf.mxu0
    %v3675 = vadd.f32 0.0, %v3674
    %v3676 = vpop.f32.mrf.mxu0
    %v3677 = vpop.f32.mrf.mxu0
    %v3678 = vadd.f32 0.0, %v3677
    %v3679 = vpop.f32.mrf.mxu0
    %3680 = vmatprep.mubr.bf16.mxu0 0
    %3681 = vmatmul.mubr.bf16.gmra.mxu0 %v3533
    %v3682 = vpop.f32.mrf.mxu0
    %v3683 = vadd.f32 0.0, %v3682
    %v3684 = vpop.f32.mrf.mxu0
    %v3685 = vpop.f32.mrf.mxu0
    %v3686 = vadd.f32 0.0, %v3685
    %v3687 = vpop.f32.mrf.mxu0
    %3688 = vmatprep.mubr.bf16.mxu0 0
    %3689 = vmatmul.mubr.bf16.gmra.mxu0 %v3536
    %v3690 = vpop.f32.mrf.mxu0
    %v3691 = vadd.f32 0.0, %v3690
    %v3692 = vpop.f32.mrf.mxu0
    %v3693 = vpop.f32.mrf.mxu0
    %v3694 = vadd.f32 0.0, %v3693
    %v3695 = vpop.f32.mrf.mxu0
    %3696 = vmatprep.mubr.bf16.mxu0 0
    %3697 = vmatmul.mubr.bf16.gmra.mxu0 %v3539
    %v3698 = vpop.f32.mrf.mxu0
    %v3699 = vadd.f32 0.0, %v3698
    %v3700 = vpop.f32.mrf.mxu0
    %v3701 = vpop.f32.mrf.mxu0
    %v3702 = vadd.f32 0.0, %v3701
    %v3703 = vpop.f32.mrf.mxu0
    %3704 = vdwg.mxu0
    %v3705 = vadd.f32 %v2968, %v3579
    %v3706 = vadd.f32 %v2969, %v3582
    %v3707 = vadd.f32 %v2970, %v3587
    %v3708 = vadd.f32 %v2971, %v3590
    %v3709 = vadd.f32 %v2972, %v3595
    %v3710 = vadd.f32 %v2973, %v3598
    %v3711 = vadd.f32 %v2974, %v3603
    %v3712 = vadd.f32 %v2975, %v3606
    %v3713 = vadd.f32 %v2976, %v3611
    %v3714 = vadd.f32 %v2977, %v3614
    %v3715 = vadd.f32 %v2978, %v3619
    %v3716 = vadd.f32 %v2979, %v3622
    %v3717 = vadd.f32 %v2980, %v3627
    %v3718 = vadd.f32 %v2981, %v3630
    %v3719 = vadd.f32 %v2982, %v3635
    %v3720 = vadd.f32 %v2983, %v3638
    %v3721 = vadd.f32 %v2984, %v3643
    %v3722 = vadd.f32 %v2985, %v3646
    %v3723 = vadd.f32 %v2986, %v3651
    %v3724 = vadd.f32 %v2987, %v3654
    %v3725 = vadd.f32 %v2988, %v3659
    %v3726 = vadd.f32 %v2989, %v3662
    %v3727 = vadd.f32 %v2990, %v3667
    %v3728 = vadd.f32 %v2991, %v3670
    %v3729 = vadd.f32 %v2992, %v3675
    %v3730 = vadd.f32 %v2993, %v3678
    %v3731 = vadd.f32 %v2994, %v3683
    %v3732 = vadd.f32 %v2995, %v3686
    %v3733 = vadd.f32 %v2996, %v3691
    %v3734 = vadd.f32 %v2997, %v3694
    %v3735 = vadd.f32 %v2998, %v3699
    %v3736 = vadd.f32 %v2999, %v3702
    %v3737 = vld [vmem:[%s2643] sm:$0xe]
    %v3738 = vld [vmem:[%s2643 + $0xc] sm:$0xe]
    %v3739 = vld [vmem:[%s2643 + $0x18] sm:$0xe]
    %v3740 = vld [vmem:[%s2643 + $0x24] sm:$0xe]
    %v3741 = vld [vmem:[%s2643 + $0x30] sm:$0xe]
    %v3742 = vld [vmem:[%s2643 + $0x3c] sm:$0xe]
    %v3743 = vld [vmem:[%s2643 + $0x48] sm:$0xe]
    %v3744 = vld [vmem:[%s2643 + $0x54] sm:$0xe]
    %v3745 = vld [vmem:[%s2643 + $0x60] sm:$0xe]
    %v3746 = vld [vmem:[%s2643 + $0x6c] sm:$0xe]
    %v3747 = vld [vmem:[%s2643 + $0x78] sm:$0xe]
    %v3748 = vld [vmem:[%s2643 + $0x84] sm:$0xe]
    %v3749 = vld [vmem:[%s2643 + $0x90] sm:$0xe]
    %v3750 = vld [vmem:[%s2643 + $0x9c] sm:$0xe]
    %v3751 = vld [vmem:[%s2643 + $0xa8] sm:$0xe]
    %v3752 = vld [vmem:[%s2643 + $0xb4] sm:$0xe]
    %v3801 = vrot.slane %v3737, 5
    %v3802 = vrot.slane %v3801, 4
    %v3803 = vrot.slane %v3001, 5
    %v3804 = vsel %vm1079, %v3802, %v3803
    %v3805 = vrot.slane %v3803, 4
    %v3806 = vrot.slane %v3002, 5
    %v3807 = vsel %vm1079, %v3805, %v3806
    %v3808 = vrot.slane %v3738, 5
    %v3809 = vrot.slane %v3808, 4
    %v3810 = vrot.slane %v3004, 5
    %v3811 = vsel %vm1079, %v3809, %v3810
    %v3812 = vrot.slane %v3810, 4
    %v3813 = vrot.slane %v3005, 5
    %v3814 = vsel %vm1079, %v3812, %v3813
    %v3815 = vrot.slane %v3739, 5
    %v3816 = vrot.slane %v3815, 4
    %v3817 = vrot.slane %v3007, 5
    %v3818 = vsel %vm1079, %v3816, %v3817
    %v3819 = vrot.slane %v3817, 4
    %v3820 = vrot.slane %v3008, 5
    %v3821 = vsel %vm1079, %v3819, %v3820
    %v3822 = vrot.slane %v3740, 5
    %v3823 = vrot.slane %v3822, 4
    %v3824 = vrot.slane %v3010, 5
    %v3825 = vsel %vm1079, %v3823, %v3824
    %v3826 = vrot.slane %v3824, 4
    %v3827 = vrot.slane %v3011, 5
    %v3828 = vsel %vm1079, %v3826, %v3827
    %v3829 = vrot.slane %v3741, 5
    %v3830 = vrot.slane %v3829, 4
    %v3831 = vrot.slane %v3013, 5
    %v3832 = vsel %vm1079, %v3830, %v3831
    %v3833 = vrot.slane %v3831, 4
    %v3834 = vrot.slane %v3014, 5
    %v3835 = vsel %vm1079, %v3833, %v3834
    %v3836 = vrot.slane %v3742, 5
    %v3837 = vrot.slane %v3836, 4
    %v3838 = vrot.slane %v3016, 5
    %v3839 = vsel %vm1079, %v3837, %v3838
    %v3840 = vrot.slane %v3838, 4
    %v3841 = vrot.slane %v3017, 5
    %v3842 = vsel %vm1079, %v3840, %v3841
    %v3843 = vrot.slane %v3743, 5
    %v3844 = vrot.slane %v3843, 4
    %v3845 = vrot.slane %v3019, 5
    %v3846 = vsel %vm1079, %v3844, %v3845
    %v3847 = vrot.slane %v3845, 4
    %v3848 = vrot.slane %v3020, 5
    %v3849 = vsel %vm1079, %v3847, %v3848
    %v3850 = vrot.slane %v3744, 5
    %v3851 = vrot.slane %v3850, 4
    %v3852 = vrot.slane %v3022, 5
    %v3853 = vsel %vm1079, %v3851, %v3852
    %v3854 = vrot.slane %v3852, 4
    %v3855 = vrot.slane %v3023, 5
    %v3856 = vsel %vm1079, %v3854, %v3855
    %v3857 = vrot.slane %v3745, 5
    %v3858 = vrot.slane %v3857, 4
    %v3859 = vrot.slane %v3025, 5
    %v3860 = vsel %vm1079, %v3858, %v3859
    %v3861 = vrot.slane %v3859, 4
    %v3862 = vrot.slane %v3026, 5
    %v3863 = vsel %vm1079, %v3861, %v3862
    %v3864 = vrot.slane %v3746, 5
    %v3865 = vrot.slane %v3864, 4
    %v3866 = vrot.slane %v3028, 5
    %v3867 = vsel %vm1079, %v3865, %v3866
    %v3868 = vrot.slane %v3866, 4
    %v3869 = vrot.slane %v3029, 5
    %v3870 = vsel %vm1079, %v3868, %v3869
    %v3871 = vrot.slane %v3747, 5
    %v3872 = vrot.slane %v3871, 4
    %v3873 = vrot.slane %v3031, 5
    %v3874 = vsel %vm1079, %v3872, %v3873
    %v3875 = vrot.slane %v3873, 4
    %v3876 = vrot.slane %v3032, 5
    %v3877 = vsel %vm1079, %v3875, %v3876
    %v3878 = vrot.slane %v3748, 5
    %v3879 = vrot.slane %v3878, 4
    %v3880 = vrot.slane %v3034, 5
    %v3881 = vsel %vm1079, %v3879, %v3880
    %v3882 = vrot.slane %v3880, 4
    %v3883 = vrot.slane %v3035, 5
    %v3884 = vsel %vm1079, %v3882, %v3883
    %v3885 = vrot.slane %v3749, 5
    %v3886 = vrot.slane %v3885, 4
    %v3887 = vrot.slane %v3037, 5
    %v3888 = vsel %vm1079, %v3886, %v3887
    %v3889 = vrot.slane %v3887, 4
    %v3890 = vrot.slane %v3038, 5
    %v3891 = vsel %vm1079, %v3889, %v3890
    %v3892 = vrot.slane %v3750, 5
    %v3893 = vrot.slane %v3892, 4
    %v3894 = vrot.slane %v3040, 5
    %v3895 = vsel %vm1079, %v3893, %v3894
    %v3896 = vrot.slane %v3894, 4
    %v3897 = vrot.slane %v3041, 5
    %v3898 = vsel %vm1079, %v3896, %v3897
    %v3899 = vrot.slane %v3751, 5
    %v3900 = vrot.slane %v3899, 4
    %v3901 = vrot.slane %v3043, 5
    %v3902 = vsel %vm1079, %v3900, %v3901
    %v3903 = vrot.slane %v3901, 4
    %v3904 = vrot.slane %v3044, 5
    %v3905 = vsel %vm1079, %v3903, %v3904
    %v3906 = vrot.slane %v3752, 5
    %v3907 = vrot.slane %v3906, 4
    %v3908 = vrot.slane %v3046, 5
    %v3909 = vsel %vm1079, %v3907, %v3908
    %v3910 = vrot.slane %v3908, 4
    %v3911 = vrot.slane %v3047, 5
    %v3912 = vsel %vm1079, %v3910, %v3911
    %v3913 = vunpack.c.l.b16 %v3804
    %v3914 = vunpack.c.l.b16 %v3807
    %v3915 = vunpack.c.l.b16 %v3811
    %v3916 = vunpack.c.l.b16 %v3814
    %v3917 = vunpack.c.l.b16 %v3818
    %v3918 = vunpack.c.l.b16 %v3821
    %v3919 = vunpack.c.l.b16 %v3825
    %v3920 = vunpack.c.l.b16 %v3828
    %v3921 = vunpack.c.l.b16 %v3832
    %v3922 = vunpack.c.l.b16 %v3835
    %v3923 = vunpack.c.l.b16 %v3839
    %v3924 = vunpack.c.l.b16 %v3842
    %v3925 = vunpack.c.l.b16 %v3846
    %v3926 = vunpack.c.l.b16 %v3849
    %v3927 = vunpack.c.l.b16 %v3853
    %v3928 = vunpack.c.l.b16 %v3856
    %v3929 = vunpack.c.l.b16 %v3860
    %v3930 = vunpack.c.l.b16 %v3863
    %v3931 = vunpack.c.l.b16 %v3867
    %v3932 = vunpack.c.l.b16 %v3870
    %v3933 = vunpack.c.l.b16 %v3874
    %v3934 = vunpack.c.l.b16 %v3877
    %v3935 = vunpack.c.l.b16 %v3881
    %v3936 = vunpack.c.l.b16 %v3884
    %v3937 = vunpack.c.l.b16 %v3888
    %v3938 = vunpack.c.l.b16 %v3891
    %v3939 = vunpack.c.l.b16 %v3895
    %v3940 = vunpack.c.l.b16 %v3898
    %v3941 = vunpack.c.l.b16 %v3902
    %v3942 = vunpack.c.l.b16 %v3905
    %v3943 = vunpack.c.l.b16 %v3909
    %v3944 = vunpack.c.l.b16 %v3912
    %v3945 = vpack.c.b16 %v3914, %v3913
    %v3946 = vpack.c.b16 %v3916, %v3915
    %v3947 = vpack.c.b16 %v3918, %v3917
    %v3948 = vpack.c.b16 %v3920, %v3919
    %v3949 = vpack.c.b16 %v3922, %v3921
    %v3950 = vpack.c.b16 %v3924, %v3923
    %v3951 = vpack.c.b16 %v3926, %v3925
    %v3952 = vpack.c.b16 %v3928, %v3927
    %v3953 = vpack.c.b16 %v3930, %v3929
    %v3954 = vpack.c.b16 %v3932, %v3931
    %v3955 = vpack.c.b16 %v3934, %v3933
    %v3956 = vpack.c.b16 %v3936, %v3935
    %v3957 = vpack.c.b16 %v3938, %v3937
    %v3958 = vpack.c.b16 %v3940, %v3939
    %v3959 = vpack.c.b16 %v3942, %v3941
    %v3960 = vpack.c.b16 %v3944, %v3943
    %v3961 = vpack.c.b16 %v3483, %v3483
    %v3962 = vrot.slane %v3961, 1
    %v3964 = vsel %vm520, %v3945, 0
    %v3967 = vsel %vm520, %v3946, 0
    %v3970 = vsel %vm520, %v3947, 0
    %v3973 = vsel %vm520, %v3948, 0
    %v3976 = vsel %vm520, %v3949, 0
    %v3979 = vsel %vm520, %v3950, 0
    %v3982 = vsel %vm520, %v3951, 0
    %v3985 = vsel %vm520, %v3952, 0
    %v3988 = vsel %vm520, %v3953, 0
    %v3991 = vsel %vm520, %v3954, 0
    %v3994 = vsel %vm520, %v3955, 0
    %v3997 = vsel %vm520, %v3956, 0
    %v4000 = vsel %vm520, %v3957, 0
    %v4003 = vsel %vm520, %v3958, 0
    %v4006 = vsel %vm520, %v3959, 0
    %v4009 = vsel %vm520, %v3960, 0
    %v4012 = vand.u32 %v3962, %v572
    %4014 = vmatprep.subr.bf16.mxu0 0
    %4015 = vmatpush1.bf16.msra.mxu0 0
    %4016 = vmatprep.subr.bf16.mxu0 0
    %4017 = vmatpush1.bf16.msra.mxu0 0
    %4018 = vmatprep.subr.bf16.mxu0 0
    %4019 = vmatpush1.bf16.msra.mxu0 0
    %4020 = vmatprep.subr.bf16.mxu0 0
    %4021 = vmatpush1.bf16.msra.mxu0 0
    %4022 = vmatprep.subr.bf16.mxu0 0
    %4023 = vmatpush1.bf16.msra.mxu0 0
    %4024 = vmatprep.subr.bf16.mxu0 0
    %4025 = vmatpush1.bf16.msra.mxu0 0
    %4026 = vmatprep.subr.bf16.mxu0 0
    %4027 = vmatpush1.bf16.msra.mxu0 0
    %4028 = vmatprep.subr.bf16.mxu0 0
    %4029 = vmatpush1.bf16.msra.mxu0 %v4012
    %4030 = vmatprep.subr.bf16.mxu0 0
    %4031 = vmatpush2.bf16.msra.mxu0 0
    %4032 = vmatprep.subr.bf16.mxu0 0
    %4033 = vmatpush2.bf16.msra.mxu0 0
    %4034 = vmatprep.subr.bf16.mxu0 0
    %4035 = vmatpush2.bf16.msra.mxu0 0
    %4036 = vmatprep.subr.bf16.mxu0 0
    %4037 = vmatpush2.bf16.msra.mxu0 0
    %4038 = vmatprep.subr.bf16.mxu0 0
    %4039 = vmatpush2.bf16.msra.mxu0 0
    %4040 = vmatprep.subr.bf16.mxu0 0
    %4041 = vmatpush2.bf16.msra.mxu0 0
    %4042 = vmatprep.subr.bf16.mxu0 0
    %4043 = vmatpush2.bf16.msra.mxu0 0
    %4044 = vmatprep.subr.bf16.mxu0 0
    %4045 = vmatpush2.bf16.msra.mxu0 0
    %4046 = vmatprep.mubr.bf16.mxu0 0
    %4047 = vmatmul.mubr.bf16.gmra.mxu0 %v3964
    %v4048 = vpop.f32.mrf.mxu0
    %v4049 = vadd.f32 0.0, %v4048
    %v4050 = vpop.f32.mrf.mxu0
    %v4051 = vpop.f32.mrf.mxu0
    %v4052 = vadd.f32 0.0, %v4051
    %v4053 = vpop.f32.mrf.mxu0
    %4054 = vmatprep.mubr.bf16.mxu0 0
    %4055 = vmatmul.mubr.bf16.gmra.mxu0 %v3967
    %v4056 = vpop.f32.mrf.mxu0
    %v4057 = vadd.f32 0.0, %v4056
    %v4058 = vpop.f32.mrf.mxu0
    %v4059 = vpop.f32.mrf.mxu0
    %v4060 = vadd.f32 0.0, %v4059
    %v4061 = vpop.f32.mrf.mxu0
    %4062 = vmatprep.mubr.bf16.mxu0 0
    %4063 = vmatmul.mubr.bf16.gmra.mxu0 %v3970
    %v4064 = vpop.f32.mrf.mxu0
    %v4065 = vadd.f32 0.0, %v4064
    %v4066 = vpop.f32.mrf.mxu0
    %v4067 = vpop.f32.mrf.mxu0
    %v4068 = vadd.f32 0.0, %v4067
    %v4069 = vpop.f32.mrf.mxu0
    %4070 = vmatprep.mubr.bf16.mxu0 0
    %4071 = vmatmul.mubr.bf16.gmra.mxu0 %v3973
    %v4072 = vpop.f32.mrf.mxu0
    %v4073 = vadd.f32 0.0, %v4072
    %v4074 = vpop.f32.mrf.mxu0
    %v4075 = vpop.f32.mrf.mxu0
    %v4076 = vadd.f32 0.0, %v4075
    %v4077 = vpop.f32.mrf.mxu0
    %4078 = vmatprep.mubr.bf16.mxu0 0
    %4079 = vmatmul.mubr.bf16.gmra.mxu0 %v3976
    %v4080 = vpop.f32.mrf.mxu0
    %v4081 = vadd.f32 0.0, %v4080
    %v4082 = vpop.f32.mrf.mxu0
    %v4083 = vpop.f32.mrf.mxu0
    %v4084 = vadd.f32 0.0, %v4083
    %v4085 = vpop.f32.mrf.mxu0
    %4086 = vmatprep.mubr.bf16.mxu0 0
    %4087 = vmatmul.mubr.bf16.gmra.mxu0 %v3979
    %v4088 = vpop.f32.mrf.mxu0
    %v4089 = vadd.f32 0.0, %v4088
    %v4090 = vpop.f32.mrf.mxu0
    %v4091 = vpop.f32.mrf.mxu0
    %v4092 = vadd.f32 0.0, %v4091
    %v4093 = vpop.f32.mrf.mxu0
    %4094 = vmatprep.mubr.bf16.mxu0 0
    %4095 = vmatmul.mubr.bf16.gmra.mxu0 %v3982
    %v4096 = vpop.f32.mrf.mxu0
    %v4097 = vadd.f32 0.0, %v4096
    %v4098 = vpop.f32.mrf.mxu0
    %v4099 = vpop.f32.mrf.mxu0
    %v4100 = vadd.f32 0.0, %v4099
    %v4101 = vpop.f32.mrf.mxu0
    %4102 = vmatprep.mubr.bf16.mxu0 0
    %4103 = vmatmul.mubr.bf16.gmra.mxu0 %v3985
    %v4104 = vpop.f32.mrf.mxu0
    %v4105 = vadd.f32 0.0, %v4104
    %v4106 = vpop.f32.mrf.mxu0
    %v4107 = vpop.f32.mrf.mxu0
    %v4108 = vadd.f32 0.0, %v4107
    %v4109 = vpop.f32.mrf.mxu0
    %4110 = vmatprep.mubr.bf16.mxu0 0
    %4111 = vmatmul.mubr.bf16.gmra.mxu0 %v3988
    %v4112 = vpop.f32.mrf.mxu0
    %v4113 = vadd.f32 0.0, %v4112
    %v4114 = vpop.f32.mrf.mxu0
    %v4115 = vpop.f32.mrf.mxu0
    %v4116 = vadd.f32 0.0, %v4115
    %v4117 = vpop.f32.mrf.mxu0
    %4118 = vmatprep.mubr.bf16.mxu0 0
    %4119 = vmatmul.mubr.bf16.gmra.mxu0 %v3991
    %v4120 = vpop.f32.mrf.mxu0
    %v4121 = vadd.f32 0.0, %v4120
    %v4122 = vpop.f32.mrf.mxu0
    %v4123 = vpop.f32.mrf.mxu0
    %v4124 = vadd.f32 0.0, %v4123
    %v4125 = vpop.f32.mrf.mxu0
    %4126 = vmatprep.mubr.bf16.mxu0 0
    %4127 = vmatmul.mubr.bf16.gmra.mxu0 %v3994
    %v4128 = vpop.f32.mrf.mxu0
    %v4129 = vadd.f32 0.0, %v4128
    %v4130 = vpop.f32.mrf.mxu0
    %v4131 = vpop.f32.mrf.mxu0
    %v4132 = vadd.f32 0.0, %v4131
    %v4133 = vpop.f32.mrf.mxu0
    %4134 = vmatprep.mubr.bf16.mxu0 0
    %4135 = vmatmul.mubr.bf16.gmra.mxu0 %v3997
    %v4136 = vpop.f32.mrf.mxu0
    %v4137 = vadd.f32 0.0, %v4136
    %v4138 = vpop.f32.mrf.mxu0
    %v4139 = vpop.f32.mrf.mxu0
    %v4140 = vadd.f32 0.0, %v4139
    %v4141 = vpop.f32.mrf.mxu0
    %4142 = vmatprep.mubr.bf16.mxu0 0
    %4143 = vmatmul.mubr.bf16.gmra.mxu0 %v4000
    %v4144 = vpop.f32.mrf.mxu0
    %v4145 = vadd.f32 0.0, %v4144
    %v4146 = vpop.f32.mrf.mxu0
    %v4147 = vpop.f32.mrf.mxu0
    %v4148 = vadd.f32 0.0, %v4147
    %v4149 = vpop.f32.mrf.mxu0
    %4150 = vmatprep.mubr.bf16.mxu0 0
    %4151 = vmatmul.mubr.bf16.gmra.mxu0 %v4003
    %v4152 = vpop.f32.mrf.mxu0
    %v4153 = vadd.f32 0.0, %v4152
    %v4154 = vpop.f32.mrf.mxu0
    %v4155 = vpop.f32.mrf.mxu0
    %v4156 = vadd.f32 0.0, %v4155
    %v4157 = vpop.f32.mrf.mxu0
    %4158 = vmatprep.mubr.bf16.mxu0 0
    %4159 = vmatmul.mubr.bf16.gmra.mxu0 %v4006
    %v4160 = vpop.f32.mrf.mxu0
    %v4161 = vadd.f32 0.0, %v4160
    %v4162 = vpop.f32.mrf.mxu0
    %v4163 = vpop.f32.mrf.mxu0
    %v4164 = vadd.f32 0.0, %v4163
    %v4165 = vpop.f32.mrf.mxu0
    %4166 = vmatprep.mubr.bf16.mxu0 0
    %4167 = vmatmul.mubr.bf16.gmra.mxu0 %v4009
    %v4168 = vpop.f32.mrf.mxu0
    %v4169 = vadd.f32 0.0, %v4168
    %v4170 = vpop.f32.mrf.mxu0
    %v4171 = vpop.f32.mrf.mxu0
    %v4172 = vadd.f32 0.0, %v4171
    %v4173 = vpop.f32.mrf.mxu0
    %4174 = vdwg.mxu0
    %v4175 = vadd.f32 %v3705, %v4049
    %v4176 = vadd.f32 %v3706, %v4052
    %v4177 = vadd.f32 %v3707, %v4057
    %v4178 = vadd.f32 %v3708, %v4060
    %v4179 = vadd.f32 %v3709, %v4065
    %v4180 = vadd.f32 %v3710, %v4068
    %v4181 = vadd.f32 %v3711, %v4073
    %v4182 = vadd.f32 %v3712, %v4076
    %v4183 = vadd.f32 %v3713, %v4081
    %v4184 = vadd.f32 %v3714, %v4084
    %v4185 = vadd.f32 %v3715, %v4089
    %v4186 = vadd.f32 %v3716, %v4092
    %v4187 = vadd.f32 %v3717, %v4097
    %v4188 = vadd.f32 %v3718, %v4100
    %v4189 = vadd.f32 %v3719, %v4105
    %v4190 = vadd.f32 %v3720, %v4108
    %v4191 = vadd.f32 %v3721, %v4113
    %v4192 = vadd.f32 %v3722, %v4116
    %v4193 = vadd.f32 %v3723, %v4121
    %v4194 = vadd.f32 %v3724, %v4124
    %v4195 = vadd.f32 %v3725, %v4129
    %v4196 = vadd.f32 %v3726, %v4132
    %v4197 = vadd.f32 %v3727, %v4137
    %v4198 = vadd.f32 %v3728, %v4140
    %v4199 = vadd.f32 %v3729, %v4145
    %v4200 = vadd.f32 %v3730, %v4148
    %v4201 = vadd.f32 %v3731, %v4153
    %v4202 = vadd.f32 %v3732, %v4156
    %v4203 = vadd.f32 %v3733, %v4161
    %v4204 = vadd.f32 %v3734, %v4164
    %v4205 = vadd.f32 %v3735, %v4169
    %v4206 = vadd.f32 %v3736, %v4172
    %v4207 = vld [vmem:[%s2643 + $0x8] sm:$0x3]
    %v4208 = vld [vmem:[%s2643 + $0x14] sm:$0x3]
    %v4209 = vld [vmem:[%s2643 + $0x20] sm:$0x3]
    %v4210 = vld [vmem:[%s2643 + $0x2c] sm:$0x3]
    %v4211 = vld [vmem:[%s2643 + $0x38] sm:$0x3]
    %v4212 = vld [vmem:[%s2643 + $0x44] sm:$0x3]
    %v4213 = vld [vmem:[%s2643 + $0x50] sm:$0x3]
    %v4214 = vld [vmem:[%s2643 + $0x5c] sm:$0x3]
    %v4215 = vld [vmem:[%s2643 + $0x68] sm:$0x3]
    %v4216 = vld [vmem:[%s2643 + $0x74] sm:$0x3]
    %v4217 = vld [vmem:[%s2643 + $0x80] sm:$0x3]
    %v4218 = vld [vmem:[%s2643 + $0x8c] sm:$0x3]
    %v4219 = vld [vmem:[%s2643 + $0x98] sm:$0x3]
    %v4220 = vld [vmem:[%s2643 + $0xa4] sm:$0x3]
    %v4221 = vld [vmem:[%s2643 + $0xb0] sm:$0x3]
    %v4222 = vld [vmem:[%s2643 + $0xbc] sm:$0x3]
    %v4224 = vshrl.u32 %v3737, 16
    %v4226 = vrot.slane %v4224, 5
    %v4227 = vshll.u32 %v3737, 16
    %v4229 = vrot.slane %v4227, 6
    %v4230 = vor.u32 %v4226, %v4229
    %v4231 = vrot.slane %v4230, 4
    %v4232 = vrot.slane %v3062, 5
    %v4233 = vrot.slane %v3058, 6
    %v4234 = vor.u32 %v4232, %v4233
    %v4235 = vsel %vm1504, %v4231, %v4234
    %v4236 = vrot.slane %v4234, 4
    %v4238 = vshrl.u32 %v4207, 16
    %v4240 = vrot.slane %v4238, 5
    %v4241 = vshll.u32 %v4207, 16
    %v4243 = vrot.slane %v4241, 6
    %v4244 = vor.u32 %v4240, %v4243
    %v4245 = vsel %vm1504, %v4236, %v4244
    %v4247 = vshrl.u32 %v3738, 16
    %v4249 = vrot.slane %v4247, 5
    %v4250 = vshll.u32 %v3738, 16
    %v4252 = vrot.slane %v4250, 6
    %v4253 = vor.u32 %v4249, %v4252
    %v4254 = vrot.slane %v4253, 4
    %v4255 = vrot.slane %v3086, 5
    %v4256 = vrot.slane %v3082, 6
    %v4257 = vor.u32 %v4255, %v4256
    %v4258 = vsel %vm1504, %v4254, %v4257
    %v4259 = vrot.slane %v4257, 4
    %v4261 = vshrl.u32 %v4208, 16
    %v4263 = vrot.slane %v4261, 5
    %v4264 = vshll.u32 %v4208, 16
    %v4266 = vrot.slane %v4264, 6
    %v4267 = vor.u32 %v4263, %v4266
    %v4268 = vsel %vm1504, %v4259, %v4267
    %v4270 = vshrl.u32 %v3739, 16
    %v4272 = vrot.slane %v4270, 5
    %v4273 = vshll.u32 %v3739, 16
    %v4275 = vrot.slane %v4273, 6
    %v4276 = vor.u32 %v4272, %v4275
    %v4277 = vrot.slane %v4276, 4
    %v4278 = vrot.slane %v3110, 5
    %v4279 = vrot.slane %v3106, 6
    %v4280 = vor.u32 %v4278, %v4279
    %v4281 = vsel %vm1504, %v4277, %v4280
    %v4282 = vrot.slane %v4280, 4
    %v4284 = vshrl.u32 %v4209, 16
    %v4286 = vrot.slane %v4284, 5
    %v4287 = vshll.u32 %v4209, 16
    %v4289 = vrot.slane %v4287, 6
    %v4290 = vor.u32 %v4286, %v4289
    %v4291 = vsel %vm1504, %v4282, %v4290
    %v4293 = vshrl.u32 %v3740, 16
    %v4295 = vrot.slane %v4293, 5
    %v4296 = vshll.u32 %v3740, 16
    %v4298 = vrot.slane %v4296, 6
    %v4299 = vor.u32 %v4295, %v4298
    %v4300 = vrot.slane %v4299, 4
    %v4301 = vrot.slane %v3134, 5
    %v4302 = vrot.slane %v3130, 6
    %v4303 = vor.u32 %v4301, %v4302
    %v4304 = vsel %vm1504, %v4300, %v4303
    %v4305 = vrot.slane %v4303, 4
    %v4307 = vshrl.u32 %v4210, 16
    %v4309 = vrot.slane %v4307, 5
    %v4310 = vshll.u32 %v4210, 16
    %v4312 = vrot.slane %v4310, 6
    %v4313 = vor.u32 %v4309, %v4312
    %v4314 = vsel %vm1504, %v4305, %v4313
    %v4316 = vshrl.u32 %v3741, 16
    %v4318 = vrot.slane %v4316, 5
    %v4319 = vshll.u32 %v3741, 16
    %v4321 = vrot.slane %v4319, 6
    %v4322 = vor.u32 %v4318, %v4321
    %v4323 = vrot.slane %v4322, 4
    %v4324 = vrot.slane %v3158, 5
    %v4325 = vrot.slane %v3154, 6
    %v4326 = vor.u32 %v4324, %v4325
    %v4327 = vsel %vm1504, %v4323, %v4326
    %v4328 = vrot.slane %v4326, 4
    %v4330 = vshrl.u32 %v4211, 16
    %v4332 = vrot.slane %v4330, 5
    %v4333 = vshll.u32 %v4211, 16
    %v4335 = vrot.slane %v4333, 6
    %v4336 = vor.u32 %v4332, %v4335
    %v4337 = vsel %vm1504, %v4328, %v4336
    %v4339 = vshrl.u32 %v3742, 16
    %v4341 = vrot.slane %v4339, 5
    %v4342 = vshll.u32 %v3742, 16
    %v4344 = vrot.slane %v4342, 6
    %v4345 = vor.u32 %v4341, %v4344
    %v4346 = vrot.slane %v4345, 4
    %v4347 = vrot.slane %v3182, 5
    %v4348 = vrot.slane %v3178, 6
    %v4349 = vor.u32 %v4347, %v4348
    %v4350 = vsel %vm1504, %v4346, %v4349
    %v4351 = vrot.slane %v4349, 4
    %v4353 = vshrl.u32 %v4212, 16
    %v4355 = vrot.slane %v4353, 5
    %v4356 = vshll.u32 %v4212, 16
    %v4358 = vrot.slane %v4356, 6
    %v4359 = vor.u32 %v4355, %v4358
    %v4360 = vsel %vm1504, %v4351, %v4359
    %v4362 = vshrl.u32 %v3743, 16
    %v4364 = vrot.slane %v4362, 5
    %v4365 = vshll.u32 %v3743, 16
    %v4367 = vrot.slane %v4365, 6
    %v4368 = vor.u32 %v4364, %v4367
    %v4369 = vrot.slane %v4368, 4
    %v4370 = vrot.slane %v3206, 5
    %v4371 = vrot.slane %v3202, 6
    %v4372 = vor.u32 %v4370, %v4371
    %v4373 = vsel %vm1504, %v4369, %v4372
    %v4374 = vrot.slane %v4372, 4
    %v4376 = vshrl.u32 %v4213, 16
    %v4378 = vrot.slane %v4376, 5
    %v4379 = vshll.u32 %v4213, 16
    %v4381 = vrot.slane %v4379, 6
    %v4382 = vor.u32 %v4378, %v4381
    %v4383 = vsel %vm1504, %v4374, %v4382
    %v4385 = vshrl.u32 %v3744, 16
    %v4387 = vrot.slane %v4385, 5
    %v4388 = vshll.u32 %v3744, 16
    %v4390 = vrot.slane %v4388, 6
    %v4391 = vor.u32 %v4387, %v4390
    %v4392 = vrot.slane %v4391, 4
    %v4393 = vrot.slane %v3230, 5
    %v4394 = vrot.slane %v3226, 6
    %v4395 = vor.u32 %v4393, %v4394
    %v4396 = vsel %vm1504, %v4392, %v4395
    %v4397 = vrot.slane %v4395, 4
    %v4399 = vshrl.u32 %v4214, 16
    %v4401 = vrot.slane %v4399, 5
    %v4402 = vshll.u32 %v4214, 16
    %v4404 = vrot.slane %v4402, 6
    %v4405 = vor.u32 %v4401, %v4404
    %v4406 = vsel %vm1504, %v4397, %v4405
    %v4408 = vshrl.u32 %v3745, 16
    %v4410 = vrot.slane %v4408, 5
    %v4411 = vshll.u32 %v3745, 16
    %v4413 = vrot.slane %v4411, 6
    %v4414 = vor.u32 %v4410, %v4413
    %v4415 = vrot.slane %v4414, 4
    %v4416 = vrot.slane %v3254, 5
    %v4417 = vrot.slane %v3250, 6
    %v4418 = vor.u32 %v4416, %v4417
    %v4419 = vsel %vm1504, %v4415, %v4418
    %v4420 = vrot.slane %v4418, 4
    %v4422 = vshrl.u32 %v4215, 16
    %v4424 = vrot.slane %v4422, 5
    %v4425 = vshll.u32 %v4215, 16
    %v4427 = vrot.slane %v4425, 6
    %v4428 = vor.u32 %v4424, %v4427
    %v4429 = vsel %vm1504, %v4420, %v4428
    %v4431 = vshrl.u32 %v3746, 16
    %v4433 = vrot.slane %v4431, 5
    %v4434 = vshll.u32 %v3746, 16
    %v4436 = vrot.slane %v4434, 6
    %v4437 = vor.u32 %v4433, %v4436
    %v4438 = vrot.slane %v4437, 4
    %v4439 = vrot.slane %v3278, 5
    %v4440 = vrot.slane %v3274, 6
    %v4441 = vor.u32 %v4439, %v4440
    %v4442 = vsel %vm1504, %v4438, %v4441
    %v4443 = vrot.slane %v4441, 4
    %v4445 = vshrl.u32 %v4216, 16
    %v4447 = vrot.slane %v4445, 5
    %v4448 = vshll.u32 %v4216, 16
    %v4450 = vrot.slane %v4448, 6
    %v4451 = vor.u32 %v4447, %v4450
    %v4452 = vsel %vm1504, %v4443, %v4451
    %v4454 = vshrl.u32 %v3747, 16
    %v4456 = vrot.slane %v4454, 5
    %v4457 = vshll.u32 %v3747, 16
    %v4459 = vrot.slane %v4457, 6
    %v4460 = vor.u32 %v4456, %v4459
    %v4461 = vrot.slane %v4460, 4
    %v4462 = vrot.slane %v3302, 5
    %v4463 = vrot.slane %v3298, 6
    %v4464 = vor.u32 %v4462, %v4463
    %v4465 = vsel %vm1504, %v4461, %v4464
    %v4466 = vrot.slane %v4464, 4
    %v4468 = vshrl.u32 %v4217, 16
    %v4470 = vrot.slane %v4468, 5
    %v4471 = vshll.u32 %v4217, 16
    %v4473 = vrot.slane %v4471, 6
    %v4474 = vor.u32 %v4470, %v4473
    %v4475 = vsel %vm1504, %v4466, %v4474
    %v4477 = vshrl.u32 %v3748, 16
    %v4479 = vrot.slane %v4477, 5
    %v4480 = vshll.u32 %v3748, 16
    %v4482 = vrot.slane %v4480, 6
    %v4483 = vor.u32 %v4479, %v4482
    %v4484 = vrot.slane %v4483, 4
    %v4485 = vrot.slane %v3326, 5
    %v4486 = vrot.slane %v3322, 6
    %v4487 = vor.u32 %v4485, %v4486
    %v4488 = vsel %vm1504, %v4484, %v4487
    %v4489 = vrot.slane %v4487, 4
    %v4491 = vshrl.u32 %v4218, 16
    %v4493 = vrot.slane %v4491, 5
    %v4494 = vshll.u32 %v4218, 16
    %v4496 = vrot.slane %v4494, 6
    %v4497 = vor.u32 %v4493, %v4496
    %v4498 = vsel %vm1504, %v4489, %v4497
    %v4500 = vshrl.u32 %v3749, 16
    %v4502 = vrot.slane %v4500, 5
    %v4503 = vshll.u32 %v3749, 16
    %v4505 = vrot.slane %v4503, 6
    %v4506 = vor.u32 %v4502, %v4505
    %v4507 = vrot.slane %v4506, 4
    %v4508 = vrot.slane %v3350, 5
    %v4509 = vrot.slane %v3346, 6
    %v4510 = vor.u32 %v4508, %v4509
    %v4511 = vsel %vm1504, %v4507, %v4510
    %v4512 = vrot.slane %v4510, 4
    %v4514 = vshrl.u32 %v4219, 16
    %v4516 = vrot.slane %v4514, 5
    %v4517 = vshll.u32 %v4219, 16
    %v4519 = vrot.slane %v4517, 6
    %v4520 = vor.u32 %v4516, %v4519
    %v4521 = vsel %vm1504, %v4512, %v4520
    %v4523 = vshrl.u32 %v3750, 16
    %v4525 = vrot.slane %v4523, 5
    %v4526 = vshll.u32 %v3750, 16
    %v4528 = vrot.slane %v4526, 6
    %v4529 = vor.u32 %v4525, %v4528
    %v4530 = vrot.slane %v4529, 4
    %v4531 = vrot.slane %v3374, 5
    %v4532 = vrot.slane %v3370, 6
    %v4533 = vor.u32 %v4531, %v4532
    %v4534 = vsel %vm1504, %v4530, %v4533
    %v4535 = vrot.slane %v4533, 4
    %v4537 = vshrl.u32 %v4220, 16
    %v4539 = vrot.slane %v4537, 5
    %v4540 = vshll.u32 %v4220, 16
    %v4542 = vrot.slane %v4540, 6
    %v4543 = vor.u32 %v4539, %v4542
    %v4544 = vsel %vm1504, %v4535, %v4543
    %v4546 = vshrl.u32 %v3751, 16
    %v4548 = vrot.slane %v4546, 5
    %v4549 = vshll.u32 %v3751, 16
    %v4551 = vrot.slane %v4549, 6
    %v4552 = vor.u32 %v4548, %v4551
    %v4553 = vrot.slane %v4552, 4
    %v4554 = vrot.slane %v3398, 5
    %v4555 = vrot.slane %v3394, 6
    %v4556 = vor.u32 %v4554, %v4555
    %v4557 = vsel %vm1504, %v4553, %v4556
    %v4558 = vrot.slane %v4556, 4
    %v4560 = vshrl.u32 %v4221, 16
    %v4562 = vrot.slane %v4560, 5
    %v4563 = vshll.u32 %v4221, 16
    %v4565 = vrot.slane %v4563, 6
    %v4566 = vor.u32 %v4562, %v4565
    %v4567 = vsel %vm1504, %v4558, %v4566
    %v4569 = vshrl.u32 %v3752, 16
    %v4571 = vrot.slane %v4569, 5
    %v4572 = vshll.u32 %v3752, 16
    %v4574 = vrot.slane %v4572, 6
    %v4575 = vor.u32 %v4571, %v4574
    %v4576 = vrot.slane %v4575, 4
    %v4577 = vrot.slane %v3422, 5
    %v4578 = vrot.slane %v3418, 6
    %v4579 = vor.u32 %v4577, %v4578
    %v4580 = vsel %vm1504, %v4576, %v4579
    %v4581 = vrot.slane %v4579, 4
    %v4583 = vshrl.u32 %v4222, 16
    %v4585 = vrot.slane %v4583, 5
    %v4586 = vshll.u32 %v4222, 16
    %v4588 = vrot.slane %v4586, 6
    %v4589 = vor.u32 %v4585, %v4588
    %v4590 = vsel %vm1504, %v4581, %v4589
    %v4591 = vunpack.c.l.b16 %v4235
    %v4592 = vunpack.c.l.b16 %v4245
    %v4593 = vunpack.c.l.b16 %v4258
    %v4594 = vunpack.c.l.b16 %v4268
    %v4595 = vunpack.c.l.b16 %v4281
    %v4596 = vunpack.c.l.b16 %v4291
    %v4597 = vunpack.c.l.b16 %v4304
    %v4598 = vunpack.c.l.b16 %v4314
    %v4599 = vunpack.c.l.b16 %v4327
    %v4600 = vunpack.c.l.b16 %v4337
    %v4601 = vunpack.c.l.b16 %v4350
    %v4602 = vunpack.c.l.b16 %v4360
    %v4603 = vunpack.c.l.b16 %v4373
    %v4604 = vunpack.c.l.b16 %v4383
    %v4605 = vunpack.c.l.b16 %v4396
    %v4606 = vunpack.c.l.b16 %v4406
    %v4607 = vunpack.c.l.b16 %v4419
    %v4608 = vunpack.c.l.b16 %v4429
    %v4609 = vunpack.c.l.b16 %v4442
    %v4610 = vunpack.c.l.b16 %v4452
    %v4611 = vunpack.c.l.b16 %v4465
    %v4612 = vunpack.c.l.b16 %v4475
    %v4613 = vunpack.c.l.b16 %v4488
    %v4614 = vunpack.c.l.b16 %v4498
    %v4615 = vunpack.c.l.b16 %v4511
    %v4616 = vunpack.c.l.b16 %v4521
    %v4617 = vunpack.c.l.b16 %v4534
    %v4618 = vunpack.c.l.b16 %v4544
    %v4619 = vunpack.c.l.b16 %v4557
    %v4620 = vunpack.c.l.b16 %v4567
    %v4621 = vunpack.c.l.b16 %v4580
    %v4622 = vunpack.c.l.b16 %v4590
    %v4623 = vpack.c.b16 %v4592, %v4591
    %v4624 = vpack.c.b16 %v4594, %v4593
    %v4625 = vpack.c.b16 %v4596, %v4595
    %v4626 = vpack.c.b16 %v4598, %v4597
    %v4627 = vpack.c.b16 %v4600, %v4599
    %v4628 = vpack.c.b16 %v4602, %v4601
    %v4629 = vpack.c.b16 %v4604, %v4603
    %v4630 = vpack.c.b16 %v4606, %v4605
    %v4631 = vpack.c.b16 %v4608, %v4607
    %v4632 = vpack.c.b16 %v4610, %v4609
    %v4633 = vpack.c.b16 %v4612, %v4611
    %v4634 = vpack.c.b16 %v4614, %v4613
    %v4635 = vpack.c.b16 %v4616, %v4615
    %v4636 = vpack.c.b16 %v4618, %v4617
    %v4637 = vpack.c.b16 %v4620, %v4619
    %v4638 = vpack.c.b16 %v4622, %v4621
    %v4640 = vunpack.c.l.b16 %v2638
    %v4641 = vpack.c.b16 %v4640, %v3483
    %v4643 = vshrl.u32 %v4641, 16
    %v4645 = vrot.slane %v4643, 3
    %v4646 = vshll.u32 %v4641, 16
    %v4648 = vrot.slane %v4646, 4
    %v4649 = vor.u32 %v4645, %v4648
    %v4651 = vsel %vm520, %v4623, 0
    %v4654 = vsel %vm520, %v4624, 0
    %v4657 = vsel %vm520, %v4625, 0
    %v4660 = vsel %vm520, %v4626, 0
    %v4663 = vsel %vm520, %v4627, 0
    %v4666 = vsel %vm520, %v4628, 0
    %v4669 = vsel %vm520, %v4629, 0
    %v4672 = vsel %vm520, %v4630, 0
    %v4675 = vsel %vm520, %v4631, 0
    %v4678 = vsel %vm520, %v4632, 0
    %v4681 = vsel %vm520, %v4633, 0
    %v4684 = vsel %vm520, %v4634, 0
    %v4687 = vsel %vm520, %v4635, 0
    %v4690 = vsel %vm520, %v4636, 0
    %v4693 = vsel %vm520, %v4637, 0
    %v4696 = vsel %vm520, %v4638, 0
    %v4699 = vand.u32 %v4649, %v572
    %4701 = vmatprep.subr.bf16.mxu0 0
    %4702 = vmatpush1.bf16.msra.mxu0 0
    %4703 = vmatprep.subr.bf16.mxu0 0
    %4704 = vmatpush1.bf16.msra.mxu0 0
    %4705 = vmatprep.subr.bf16.mxu0 0
    %4706 = vmatpush1.bf16.msra.mxu0 0
    %4707 = vmatprep.subr.bf16.mxu0 0
    %4708 = vmatpush1.bf16.msra.mxu0 0
    %4709 = vmatprep.subr.bf16.mxu0 0
    %4710 = vmatpush1.bf16.msra.mxu0 0
    %4711 = vmatprep.subr.bf16.mxu0 0
    %4712 = vmatpush1.bf16.msra.mxu0 0
    %4713 = vmatprep.subr.bf16.mxu0 0
    %4714 = vmatpush1.bf16.msra.mxu0 0
    %4715 = vmatprep.subr.bf16.mxu0 0
    %4716 = vmatpush1.bf16.msra.mxu0 %v4699
    %4717 = vmatprep.subr.bf16.mxu0 0
    %4718 = vmatpush2.bf16.msra.mxu0 0
    %4719 = vmatprep.subr.bf16.mxu0 0
    %4720 = vmatpush2.bf16.msra.mxu0 0
    %4721 = vmatprep.subr.bf16.mxu0 0
    %4722 = vmatpush2.bf16.msra.mxu0 0
    %4723 = vmatprep.subr.bf16.mxu0 0
    %4724 = vmatpush2.bf16.msra.mxu0 0
    %4725 = vmatprep.subr.bf16.mxu0 0
    %4726 = vmatpush2.bf16.msra.mxu0 0
    %4727 = vmatprep.subr.bf16.mxu0 0
    %4728 = vmatpush2.bf16.msra.mxu0 0
    %4729 = vmatprep.subr.bf16.mxu0 0
    %4730 = vmatpush2.bf16.msra.mxu0 0
    %4731 = vmatprep.subr.bf16.mxu0 0
    %4732 = vmatpush2.bf16.msra.mxu0 0
    %4733 = vmatprep.mubr.bf16.mxu0 0
    %4734 = vmatmul.mubr.bf16.gmra.mxu0 %v4651
    %v4735 = vpop.f32.mrf.mxu0
    %v4736 = vadd.f32 0.0, %v4735
    %v4737 = vpop.f32.mrf.mxu0
    %v4738 = vpop.f32.mrf.mxu0
    %v4739 = vadd.f32 0.0, %v4738
    %v4740 = vpop.f32.mrf.mxu0
    %4741 = vmatprep.mubr.bf16.mxu0 0
    %4742 = vmatmul.mubr.bf16.gmra.mxu0 %v4654
    %v4743 = vpop.f32.mrf.mxu0
    %v4744 = vadd.f32 0.0, %v4743
    %v4745 = vpop.f32.mrf.mxu0
    %v4746 = vpop.f32.mrf.mxu0
    %v4747 = vadd.f32 0.0, %v4746
    %v4748 = vpop.f32.mrf.mxu0
    %4749 = vmatprep.mubr.bf16.mxu0 0
    %4750 = vmatmul.mubr.bf16.gmra.mxu0 %v4657
    %v4751 = vpop.f32.mrf.mxu0
    %v4752 = vadd.f32 0.0, %v4751
    %v4753 = vpop.f32.mrf.mxu0
    %v4754 = vpop.f32.mrf.mxu0
    %v4755 = vadd.f32 0.0, %v4754
    %v4756 = vpop.f32.mrf.mxu0
    %4757 = vmatprep.mubr.bf16.mxu0 0
    %4758 = vmatmul.mubr.bf16.gmra.mxu0 %v4660
    %v4759 = vpop.f32.mrf.mxu0
    %v4760 = vadd.f32 0.0, %v4759
    %v4761 = vpop.f32.mrf.mxu0
    %v4762 = vpop.f32.mrf.mxu0
    %v4763 = vadd.f32 0.0, %v4762
    %v4764 = vpop.f32.mrf.mxu0
    %4765 = vmatprep.mubr.bf16.mxu0 0
    %4766 = vmatmul.mubr.bf16.gmra.mxu0 %v4663
    %v4767 = vpop.f32.mrf.mxu0
    %v4768 = vadd.f32 0.0, %v4767
    %v4769 = vpop.f32.mrf.mxu0
    %v4770 = vpop.f32.mrf.mxu0
    %v4771 = vadd.f32 0.0, %v4770
    %v4772 = vpop.f32.mrf.mxu0
    %4773 = vmatprep.mubr.bf16.mxu0 0
    %4774 = vmatmul.mubr.bf16.gmra.mxu0 %v4666
    %v4775 = vpop.f32.mrf.mxu0
    %v4776 = vadd.f32 0.0, %v4775
    %v4777 = vpop.f32.mrf.mxu0
    %v4778 = vpop.f32.mrf.mxu0
    %v4779 = vadd.f32 0.0, %v4778
    %v4780 = vpop.f32.mrf.mxu0
    %4781 = vmatprep.mubr.bf16.mxu0 0
    %4782 = vmatmul.mubr.bf16.gmra.mxu0 %v4669
    %v4783 = vpop.f32.mrf.mxu0
    %v4784 = vadd.f32 0.0, %v4783
    %v4785 = vpop.f32.mrf.mxu0
    %v4786 = vpop.f32.mrf.mxu0
    %v4787 = vadd.f32 0.0, %v4786
    %v4788 = vpop.f32.mrf.mxu0
    %4789 = vmatprep.mubr.bf16.mxu0 0
    %4790 = vmatmul.mubr.bf16.gmra.mxu0 %v4672
    %v4791 = vpop.f32.mrf.mxu0
    %v4792 = vadd.f32 0.0, %v4791
    %v4793 = vpop.f32.mrf.mxu0
    %v4794 = vpop.f32.mrf.mxu0
    %v4795 = vadd.f32 0.0, %v4794
    %v4796 = vpop.f32.mrf.mxu0
    %4797 = vmatprep.mubr.bf16.mxu0 0
    %4798 = vmatmul.mubr.bf16.gmra.mxu0 %v4675
    %v4799 = vpop.f32.mrf.mxu0
    %v4800 = vadd.f32 0.0, %v4799
    %v4801 = vpop.f32.mrf.mxu0
    %v4802 = vpop.f32.mrf.mxu0
    %v4803 = vadd.f32 0.0, %v4802
    %v4804 = vpop.f32.mrf.mxu0
    %4805 = vmatprep.mubr.bf16.mxu0 0
    %4806 = vmatmul.mubr.bf16.gmra.mxu0 %v4678
    %v4807 = vpop.f32.mrf.mxu0
    %v4808 = vadd.f32 0.0, %v4807
    %v4809 = vpop.f32.mrf.mxu0
    %v4810 = vpop.f32.mrf.mxu0
    %v4811 = vadd.f32 0.0, %v4810
    %v4812 = vpop.f32.mrf.mxu0
    %4813 = vmatprep.mubr.bf16.mxu0 0
    %4814 = vmatmul.mubr.bf16.gmra.mxu0 %v4681
    %v4815 = vpop.f32.mrf.mxu0
    %v4816 = vadd.f32 0.0, %v4815
    %v4817 = vpop.f32.mrf.mxu0
    %v4818 = vpop.f32.mrf.mxu0
    %v4819 = vadd.f32 0.0, %v4818
    %v4820 = vpop.f32.mrf.mxu0
    %4821 = vmatprep.mubr.bf16.mxu0 0
    %4822 = vmatmul.mubr.bf16.gmra.mxu0 %v4684
    %v4823 = vpop.f32.mrf.mxu0
    %v4824 = vadd.f32 0.0, %v4823
    %v4825 = vpop.f32.mrf.mxu0
    %v4826 = vpop.f32.mrf.mxu0
    %v4827 = vadd.f32 0.0, %v4826
    %v4828 = vpop.f32.mrf.mxu0
    %4829 = vmatprep.mubr.bf16.mxu0 0
    %4830 = vmatmul.mubr.bf16.gmra.mxu0 %v4687
    %v4831 = vpop.f32.mrf.mxu0
    %v4832 = vadd.f32 0.0, %v4831
    %v4833 = vpop.f32.mrf.mxu0
    %v4834 = vpop.f32.mrf.mxu0
    %v4835 = vadd.f32 0.0, %v4834
    %v4836 = vpop.f32.mrf.mxu0
    %4837 = vmatprep.mubr.bf16.mxu0 0
    %4838 = vmatmul.mubr.bf16.gmra.mxu0 %v4690
    %v4839 = vpop.f32.mrf.mxu0
    %v4840 = vadd.f32 0.0, %v4839
    %v4841 = vpop.f32.mrf.mxu0
    %v4842 = vpop.f32.mrf.mxu0
    %v4843 = vadd.f32 0.0, %v4842
    %v4844 = vpop.f32.mrf.mxu0
    %4845 = vmatprep.mubr.bf16.mxu0 0
    %4846 = vmatmul.mubr.bf16.gmra.mxu0 %v4693
    %v4847 = vpop.f32.mrf.mxu0
    %v4848 = vadd.f32 0.0, %v4847
    %v4849 = vpop.f32.mrf.mxu0
    %v4850 = vpop.f32.mrf.mxu0
    %v4851 = vadd.f32 0.0, %v4850
    %v4852 = vpop.f32.mrf.mxu0
    %4853 = vmatprep.mubr.bf16.mxu0 0
    %4854 = vmatmul.mubr.bf16.gmra.mxu0 %v4696
    %v4855 = vpop.f32.mrf.mxu0
    %v4856 = vadd.f32 0.0, %v4855
    %v4857 = vpop.f32.mrf.mxu0
    %v4858 = vpop.f32.mrf.mxu0
    %v4859 = vadd.f32 0.0, %v4858
    %v4860 = vpop.f32.mrf.mxu0
    %4861 = vdwg.mxu0
    %v4862 = vadd.f32 %v4175, %v4736
    %v4863 = vadd.f32 %v4176, %v4739
    %v4864 = vadd.f32 %v4177, %v4744
    %v4865 = vadd.f32 %v4178, %v4747
    %v4866 = vadd.f32 %v4179, %v4752
    %v4867 = vadd.f32 %v4180, %v4755
    %v4868 = vadd.f32 %v4181, %v4760
    %v4869 = vadd.f32 %v4182, %v4763
    %v4870 = vadd.f32 %v4183, %v4768
    %v4871 = vadd.f32 %v4184, %v4771
    %v4872 = vadd.f32 %v4185, %v4776
    %v4873 = vadd.f32 %v4186, %v4779
    %v4874 = vadd.f32 %v4187, %v4784
    %v4875 = vadd.f32 %v4188, %v4787
    %v4876 = vadd.f32 %v4189, %v4792
    %v4877 = vadd.f32 %v4190, %v4795
    %v4878 = vadd.f32 %v4191, %v4800
    %v4879 = vadd.f32 %v4192, %v4803
    %v4880 = vadd.f32 %v4193, %v4808
    %v4881 = vadd.f32 %v4194, %v4811
    %v4882 = vadd.f32 %v4195, %v4816
    %v4883 = vadd.f32 %v4196, %v4819
    %v4884 = vadd.f32 %v4197, %v4824
    %v4885 = vadd.f32 %v4198, %v4827
    %v4886 = vadd.f32 %v4199, %v4832
    %v4887 = vadd.f32 %v4200, %v4835
    %v4888 = vadd.f32 %v4201, %v4840
    %v4889 = vadd.f32 %v4202, %v4843
    %v4890 = vadd.f32 %v4203, %v4848
    %v4891 = vadd.f32 %v4204, %v4851
    %v4892 = vadd.f32 %v4205, %v4856
    %v4893 = vadd.f32 %v4206, %v4859
    %v4894 = vld [vmem:[%s2643] sm:$0xc]
    %v4895 = vld [vmem:[%s2643 + $0xc] sm:$0xc]
    %v4896 = vld [vmem:[%s2643 + $0x18] sm:$0xc]
    %v4897 = vld [vmem:[%s2643 + $0x24] sm:$0xc]
    %v4898 = vld [vmem:[%s2643 + $0x30] sm:$0xc]
    %v4899 = vld [vmem:[%s2643 + $0x3c] sm:$0xc]
    %v4900 = vld [vmem:[%s2643 + $0x48] sm:$0xc]
    %v4901 = vld [vmem:[%s2643 + $0x54] sm:$0xc]
    %v4902 = vld [vmem:[%s2643 + $0x60] sm:$0xc]
    %v4903 = vld [vmem:[%s2643 + $0x6c] sm:$0xc]
    %v4904 = vld [vmem:[%s2643 + $0x78] sm:$0xc]
    %v4905 = vld [vmem:[%s2643 + $0x84] sm:$0xc]
    %v4906 = vld [vmem:[%s2643 + $0x90] sm:$0xc]
    %v4907 = vld [vmem:[%s2643 + $0x9c] sm:$0xc]
    %v4908 = vld [vmem:[%s2643 + $0xa8] sm:$0xc]
    %v4909 = vld [vmem:[%s2643 + $0xb4] sm:$0xc]
    %v4942 = vrot.slane %v4894, 6
    %v4943 = vrot.slane %v4942, 4
    %v4944 = vrot.slane %v3001, 6
    %v4945 = vsel %vm2226, %v4943, %v4944
    %v4946 = vrot.slane %v4944, 4
    %v4947 = vrot.slane %v4207, 6
    %v4948 = vsel %vm2226, %v4946, %v4947
    %v4949 = vrot.slane %v4895, 6
    %v4950 = vrot.slane %v4949, 4
    %v4951 = vrot.slane %v3004, 6
    %v4952 = vsel %vm2226, %v4950, %v4951
    %v4953 = vrot.slane %v4951, 4
    %v4954 = vrot.slane %v4208, 6
    %v4955 = vsel %vm2226, %v4953, %v4954
    %v4956 = vrot.slane %v4896, 6
    %v4957 = vrot.slane %v4956, 4
    %v4958 = vrot.slane %v3007, 6
    %v4959 = vsel %vm2226, %v4957, %v4958
    %v4960 = vrot.slane %v4958, 4
    %v4961 = vrot.slane %v4209, 6
    %v4962 = vsel %vm2226, %v4960, %v4961
    %v4963 = vrot.slane %v4897, 6
    %v4964 = vrot.slane %v4963, 4
    %v4965 = vrot.slane %v3010, 6
    %v4966 = vsel %vm2226, %v4964, %v4965
    %v4967 = vrot.slane %v4965, 4
    %v4968 = vrot.slane %v4210, 6
    %v4969 = vsel %vm2226, %v4967, %v4968
    %v4970 = vrot.slane %v4898, 6
    %v4971 = vrot.slane %v4970, 4
    %v4972 = vrot.slane %v3013, 6
    %v4973 = vsel %vm2226, %v4971, %v4972
    %v4974 = vrot.slane %v4972, 4
    %v4975 = vrot.slane %v4211, 6
    %v4976 = vsel %vm2226, %v4974, %v4975
    %v4977 = vrot.slane %v4899, 6
    %v4978 = vrot.slane %v4977, 4
    %v4979 = vrot.slane %v3016, 6
    %v4980 = vsel %vm2226, %v4978, %v4979
    %v4981 = vrot.slane %v4979, 4
    %v4982 = vrot.slane %v4212, 6
    %v4983 = vsel %vm2226, %v4981, %v4982
    %v4984 = vrot.slane %v4900, 6
    %v4985 = vrot.slane %v4984, 4
    %v4986 = vrot.slane %v3019, 6
    %v4987 = vsel %vm2226, %v4985, %v4986
    %v4988 = vrot.slane %v4986, 4
    %v4989 = vrot.slane %v4213, 6
    %v4990 = vsel %vm2226, %v4988, %v4989
    %v4991 = vrot.slane %v4901, 6
    %v4992 = vrot.slane %v4991, 4
    %v4993 = vrot.slane %v3022, 6
    %v4994 = vsel %vm2226, %v4992, %v4993
    %v4995 = vrot.slane %v4993, 4
    %v4996 = vrot.slane %v4214, 6
    %v4997 = vsel %vm2226, %v4995, %v4996
    %v4998 = vrot.slane %v4902, 6
    %v4999 = vrot.slane %v4998, 4
    %v5000 = vrot.slane %v3025, 6
    %v5001 = vsel %vm2226, %v4999, %v5000
    %v5002 = vrot.slane %v5000, 4
    %v5003 = vrot.slane %v4215, 6
    %v5004 = vsel %vm2226, %v5002, %v5003
    %v5005 = vrot.slane %v4903, 6
    %v5006 = vrot.slane %v5005, 4
    %v5007 = vrot.slane %v3028, 6
    %v5008 = vsel %vm2226, %v5006, %v5007
    %v5009 = vrot.slane %v5007, 4
    %v5010 = vrot.slane %v4216, 6
    %v5011 = vsel %vm2226, %v5009, %v5010
    %v5012 = vrot.slane %v4904, 6
    %v5013 = vrot.slane %v5012, 4
    %v5014 = vrot.slane %v3031, 6
    %v5015 = vsel %vm2226, %v5013, %v5014
    %v5016 = vrot.slane %v5014, 4
    %v5017 = vrot.slane %v4217, 6
    %v5018 = vsel %vm2226, %v5016, %v5017
    %v5019 = vrot.slane %v4905, 6
    %v5020 = vrot.slane %v5019, 4
    %v5021 = vrot.slane %v3034, 6
    %v5022 = vsel %vm2226, %v5020, %v5021
    %v5023 = vrot.slane %v5021, 4
    %v5024 = vrot.slane %v4218, 6
    %v5025 = vsel %vm2226, %v5023, %v5024
    %v5026 = vrot.slane %v4906, 6
    %v5027 = vrot.slane %v5026, 4
    %v5028 = vrot.slane %v3037, 6
    %v5029 = vsel %vm2226, %v5027, %v5028
    %v5030 = vrot.slane %v5028, 4
    %v5031 = vrot.slane %v4219, 6
    %v5032 = vsel %vm2226, %v5030, %v5031
    %v5033 = vrot.slane %v4907, 6
    %v5034 = vrot.slane %v5033, 4
    %v5035 = vrot.slane %v3040, 6
    %v5036 = vsel %vm2226, %v5034, %v5035
    %v5037 = vrot.slane %v5035, 4
    %v5038 = vrot.slane %v4220, 6
    %v5039 = vsel %vm2226, %v5037, %v5038
    %v5040 = vrot.slane %v4908, 6
    %v5041 = vrot.slane %v5040, 4
    %v5042 = vrot.slane %v3043, 6
    %v5043 = vsel %vm2226, %v5041, %v5042
    %v5044 = vrot.slane %v5042, 4
    %v5045 = vrot.slane %v4221, 6
    %v5046 = vsel %vm2226, %v5044, %v5045
    %v5047 = vrot.slane %v4909, 6
    %v5048 = vrot.slane %v5047, 4
    %v5049 = vrot.slane %v3046, 6
    %v5050 = vsel %vm2226, %v5048, %v5049
    %v5051 = vrot.slane %v5049, 4
    %v5052 = vrot.slane %v4222, 6
    %v5053 = vsel %vm2226, %v5051, %v5052
    %v5054 = vunpack.c.l.b16 %v4945
    %v5055 = vunpack.c.l.b16 %v4948
    %v5056 = vunpack.c.l.b16 %v4952
    %v5057 = vunpack.c.l.b16 %v4955
    %v5058 = vunpack.c.l.b16 %v4959
    %v5059 = vunpack.c.l.b16 %v4962
    %v5060 = vunpack.c.l.b16 %v4966
    %v5061 = vunpack.c.l.b16 %v4969
    %v5062 = vunpack.c.l.b16 %v4973
    %v5063 = vunpack.c.l.b16 %v4976
    %v5064 = vunpack.c.l.b16 %v4980
    %v5065 = vunpack.c.l.b16 %v4983
    %v5066 = vunpack.c.l.b16 %v4987
    %v5067 = vunpack.c.l.b16 %v4990
    %v5068 = vunpack.c.l.b16 %v4994
    %v5069 = vunpack.c.l.b16 %v4997
    %v5070 = vunpack.c.l.b16 %v5001
    %v5071 = vunpack.c.l.b16 %v5004
    %v5072 = vunpack.c.l.b16 %v5008
    %v5073 = vunpack.c.l.b16 %v5011
    %v5074 = vunpack.c.l.b16 %v5015
    %v5075 = vunpack.c.l.b16 %v5018
    %v5076 = vunpack.c.l.b16 %v5022
    %v5077 = vunpack.c.l.b16 %v5025
    %v5078 = vunpack.c.l.b16 %v5029
    %v5079 = vunpack.c.l.b16 %v5032
    %v5080 = vunpack.c.l.b16 %v5036
    %v5081 = vunpack.c.l.b16 %v5039
    %v5082 = vunpack.c.l.b16 %v5043
    %v5083 = vunpack.c.l.b16 %v5046
    %v5084 = vunpack.c.l.b16 %v5050
    %v5085 = vunpack.c.l.b16 %v5053
    %v5086 = vpack.c.b16 %v5055, %v5054
    %v5087 = vpack.c.b16 %v5057, %v5056
    %v5088 = vpack.c.b16 %v5059, %v5058
    %v5089 = vpack.c.b16 %v5061, %v5060
    %v5090 = vpack.c.b16 %v5063, %v5062
    %v5091 = vpack.c.b16 %v5065, %v5064
    %v5092 = vpack.c.b16 %v5067, %v5066
    %v5093 = vpack.c.b16 %v5069, %v5068
    %v5094 = vpack.c.b16 %v5071, %v5070
    %v5095 = vpack.c.b16 %v5073, %v5072
    %v5096 = vpack.c.b16 %v5075, %v5074
    %v5097 = vpack.c.b16 %v5077, %v5076
    %v5098 = vpack.c.b16 %v5079, %v5078
    %v5099 = vpack.c.b16 %v5081, %v5080
    %v5100 = vpack.c.b16 %v5083, %v5082
    %v5101 = vpack.c.b16 %v5085, %v5084
    %v5103 = vunpack.c.l.b16 %v2639
    %v5104 = vpack.c.b16 %v5103, %v4640
    %v5105 = vrot.slane %v5104, 2
    %v5107 = vsel %vm520, %v5086, 0
    %v5110 = vsel %vm520, %v5087, 0
    %v5113 = vsel %vm520, %v5088, 0
    %v5116 = vsel %vm520, %v5089, 0
    %v5119 = vsel %vm520, %v5090, 0
    %v5122 = vsel %vm520, %v5091, 0
    %v5125 = vsel %vm520, %v5092, 0
    %v5128 = vsel %vm520, %v5093, 0
    %v5131 = vsel %vm520, %v5094, 0
    %v5134 = vsel %vm520, %v5095, 0
    %v5137 = vsel %vm520, %v5096, 0
    %v5140 = vsel %vm520, %v5097, 0
    %v5143 = vsel %vm520, %v5098, 0
    %v5146 = vsel %vm520, %v5099, 0
    %v5149 = vsel %vm520, %v5100, 0
    %v5152 = vsel %vm520, %v5101, 0
    %v5155 = vand.u32 %v5105, %v572
    %5157 = vmatprep.subr.bf16.mxu0 0
    %5158 = vmatpush1.bf16.msra.mxu0 0
    %5159 = vmatprep.subr.bf16.mxu0 0
    %5160 = vmatpush1.bf16.msra.mxu0 0
    %5161 = vmatprep.subr.bf16.mxu0 0
    %5162 = vmatpush1.bf16.msra.mxu0 0
    %5163 = vmatprep.subr.bf16.mxu0 0
    %5164 = vmatpush1.bf16.msra.mxu0 0
    %5165 = vmatprep.subr.bf16.mxu0 0
    %5166 = vmatpush1.bf16.msra.mxu0 0
    %5167 = vmatprep.subr.bf16.mxu0 0
    %5168 = vmatpush1.bf16.msra.mxu0 0
    %5169 = vmatprep.subr.bf16.mxu0 0
    %5170 = vmatpush1.bf16.msra.mxu0 0
    %5171 = vmatprep.subr.bf16.mxu0 0
    %5172 = vmatpush1.bf16.msra.mxu0 %v5155
    %5173 = vmatprep.subr.bf16.mxu0 0
    %5174 = vmatpush2.bf16.msra.mxu0 0
    %5175 = vmatprep.subr.bf16.mxu0 0
    %5176 = vmatpush2.bf16.msra.mxu0 0
    %5177 = vmatprep.subr.bf16.mxu0 0
    %5178 = vmatpush2.bf16.msra.mxu0 0
    %5179 = vmatprep.subr.bf16.mxu0 0
    %5180 = vmatpush2.bf16.msra.mxu0 0
    %5181 = vmatprep.subr.bf16.mxu0 0
    %5182 = vmatpush2.bf16.msra.mxu0 0
    %5183 = vmatprep.subr.bf16.mxu0 0
    %5184 = vmatpush2.bf16.msra.mxu0 0
    %5185 = vmatprep.subr.bf16.mxu0 0
    %5186 = vmatpush2.bf16.msra.mxu0 0
    %5187 = vmatprep.subr.bf16.mxu0 0
    %5188 = vmatpush2.bf16.msra.mxu0 0
    %5189 = vmatprep.mubr.bf16.mxu0 0
    %5190 = vmatmul.mubr.bf16.gmra.mxu0 %v5107
    %v5191 = vpop.f32.mrf.mxu0
    %v5192 = vadd.f32 0.0, %v5191
    %v5193 = vpop.f32.mrf.mxu0
    %v5194 = vpop.f32.mrf.mxu0
    %v5195 = vadd.f32 0.0, %v5194
    %v5196 = vpop.f32.mrf.mxu0
    %5197 = vmatprep.mubr.bf16.mxu0 0
    %5198 = vmatmul.mubr.bf16.gmra.mxu0 %v5110
    %v5199 = vpop.f32.mrf.mxu0
    %v5200 = vadd.f32 0.0, %v5199
    %v5201 = vpop.f32.mrf.mxu0
    %v5202 = vpop.f32.mrf.mxu0
    %v5203 = vadd.f32 0.0, %v5202
    %v5204 = vpop.f32.mrf.mxu0
    %5205 = vmatprep.mubr.bf16.mxu0 0
    %5206 = vmatmul.mubr.bf16.gmra.mxu0 %v5113
    %v5207 = vpop.f32.mrf.mxu0
    %v5208 = vadd.f32 0.0, %v5207
    %v5209 = vpop.f32.mrf.mxu0
    %v5210 = vpop.f32.mrf.mxu0
    %v5211 = vadd.f32 0.0, %v5210
    %v5212 = vpop.f32.mrf.mxu0
    %5213 = vmatprep.mubr.bf16.mxu0 0
    %5214 = vmatmul.mubr.bf16.gmra.mxu0 %v5116
    %v5215 = vpop.f32.mrf.mxu0
    %v5216 = vadd.f32 0.0, %v5215
    %v5217 = vpop.f32.mrf.mxu0
    %v5218 = vpop.f32.mrf.mxu0
    %v5219 = vadd.f32 0.0, %v5218
    %v5220 = vpop.f32.mrf.mxu0
    %5221 = vmatprep.mubr.bf16.mxu0 0
    %5222 = vmatmul.mubr.bf16.gmra.mxu0 %v5119
    %v5223 = vpop.f32.mrf.mxu0
    %v5224 = vadd.f32 0.0, %v5223
    %v5225 = vpop.f32.mrf.mxu0
    %v5226 = vpop.f32.mrf.mxu0
    %v5227 = vadd.f32 0.0, %v5226
    %v5228 = vpop.f32.mrf.mxu0
    %5229 = vmatprep.mubr.bf16.mxu0 0
    %5230 = vmatmul.mubr.bf16.gmra.mxu0 %v5122
    %v5231 = vpop.f32.mrf.mxu0
    %v5232 = vadd.f32 0.0, %v5231
    %v5233 = vpop.f32.mrf.mxu0
    %v5234 = vpop.f32.mrf.mxu0
    %v5235 = vadd.f32 0.0, %v5234
    %v5236 = vpop.f32.mrf.mxu0
    %5237 = vmatprep.mubr.bf16.mxu0 0
    %5238 = vmatmul.mubr.bf16.gmra.mxu0 %v5125
    %v5239 = vpop.f32.mrf.mxu0
    %v5240 = vadd.f32 0.0, %v5239
    %v5241 = vpop.f32.mrf.mxu0
    %v5242 = vpop.f32.mrf.mxu0
    %v5243 = vadd.f32 0.0, %v5242
    %v5244 = vpop.f32.mrf.mxu0
    %5245 = vmatprep.mubr.bf16.mxu0 0
    %5246 = vmatmul.mubr.bf16.gmra.mxu0 %v5128
    %v5247 = vpop.f32.mrf.mxu0
    %v5248 = vadd.f32 0.0, %v5247
    %v5249 = vpop.f32.mrf.mxu0
    %v5250 = vpop.f32.mrf.mxu0
    %v5251 = vadd.f32 0.0, %v5250
    %v5252 = vpop.f32.mrf.mxu0
    %5253 = vmatprep.mubr.bf16.mxu0 0
    %5254 = vmatmul.mubr.bf16.gmra.mxu0 %v5131
    %v5255 = vpop.f32.mrf.mxu0
    %v5256 = vadd.f32 0.0, %v5255
    %v5257 = vpop.f32.mrf.mxu0
    %v5258 = vpop.f32.mrf.mxu0
    %v5259 = vadd.f32 0.0, %v5258
    %v5260 = vpop.f32.mrf.mxu0
    %5261 = vmatprep.mubr.bf16.mxu0 0
    %5262 = vmatmul.mubr.bf16.gmra.mxu0 %v5134
    %v5263 = vpop.f32.mrf.mxu0
    %v5264 = vadd.f32 0.0, %v5263
    %v5265 = vpop.f32.mrf.mxu0
    %v5266 = vpop.f32.mrf.mxu0
    %v5267 = vadd.f32 0.0, %v5266
    %v5268 = vpop.f32.mrf.mxu0
    %5269 = vmatprep.mubr.bf16.mxu0 0
    %5270 = vmatmul.mubr.bf16.gmra.mxu0 %v5137
    %v5271 = vpop.f32.mrf.mxu0
    %v5272 = vadd.f32 0.0, %v5271
    %v5273 = vpop.f32.mrf.mxu0
    %v5274 = vpop.f32.mrf.mxu0
    %v5275 = vadd.f32 0.0, %v5274
    %v5276 = vpop.f32.mrf.mxu0
    %5277 = vmatprep.mubr.bf16.mxu0 0
    %5278 = vmatmul.mubr.bf16.gmra.mxu0 %v5140
    %v5279 = vpop.f32.mrf.mxu0
    %v5280 = vadd.f32 0.0, %v5279
    %v5281 = vpop.f32.mrf.mxu0
    %v5282 = vpop.f32.mrf.mxu0
    %v5283 = vadd.f32 0.0, %v5282
    %v5284 = vpop.f32.mrf.mxu0
    %5285 = vmatprep.mubr.bf16.mxu0 0
    %5286 = vmatmul.mubr.bf16.gmra.mxu0 %v5143
    %v5287 = vpop.f32.mrf.mxu0
    %v5288 = vadd.f32 0.0, %v5287
    %v5289 = vpop.f32.mrf.mxu0
    %v5290 = vpop.f32.mrf.mxu0
    %v5291 = vadd.f32 0.0, %v5290
    %v5292 = vpop.f32.mrf.mxu0
    %5293 = vmatprep.mubr.bf16.mxu0 0
    %5294 = vmatmul.mubr.bf16.gmra.mxu0 %v5146
    %v5295 = vpop.f32.mrf.mxu0
    %v5296 = vadd.f32 0.0, %v5295
    %v5297 = vpop.f32.mrf.mxu0
    %v5298 = vpop.f32.mrf.mxu0
    %v5299 = vadd.f32 0.0, %v5298
    %v5300 = vpop.f32.mrf.mxu0
    %5301 = vmatprep.mubr.bf16.mxu0 0
    %5302 = vmatmul.mubr.bf16.gmra.mxu0 %v5149
    %v5303 = vpop.f32.mrf.mxu0
    %v5304 = vadd.f32 0.0, %v5303
    %v5305 = vpop.f32.mrf.mxu0
    %v5306 = vpop.f32.mrf.mxu0
    %v5307 = vadd.f32 0.0, %v5306
    %v5308 = vpop.f32.mrf.mxu0
    %5309 = vmatprep.mubr.bf16.mxu0 0
    %5310 = vmatmul.mubr.bf16.gmra.mxu0 %v5152
    %v5311 = vpop.f32.mrf.mxu0
    %v5312 = vadd.f32 0.0, %v5311
    %v5313 = vpop.f32.mrf.mxu0
    %v5314 = vpop.f32.mrf.mxu0
    %v5315 = vadd.f32 0.0, %v5314
    %v5316 = vpop.f32.mrf.mxu0
    %5317 = vdwg.mxu0
    %v5318 = vadd.f32 %v4862, %v5192
    %v5319 = vadd.f32 %v4863, %v5195
    %v5320 = vadd.f32 %v4864, %v5200
    %v5321 = vadd.f32 %v4865, %v5203
    %v5322 = vadd.f32 %v4866, %v5208
    %v5323 = vadd.f32 %v4867, %v5211
    %v5324 = vadd.f32 %v4868, %v5216
    %v5325 = vadd.f32 %v4869, %v5219
    %v5326 = vadd.f32 %v4870, %v5224
    %v5327 = vadd.f32 %v4871, %v5227
    %v5328 = vadd.f32 %v4872, %v5232
    %v5329 = vadd.f32 %v4873, %v5235
    %v5330 = vadd.f32 %v4874, %v5240
    %v5331 = vadd.f32 %v4875, %v5243
    %v5332 = vadd.f32 %v4876, %v5248
    %v5333 = vadd.f32 %v4877, %v5251
    %v5334 = vadd.f32 %v4878, %v5256
    %v5335 = vadd.f32 %v4879, %v5259
    %v5336 = vadd.f32 %v4880, %v5264
    %v5337 = vadd.f32 %v4881, %v5267
    %v5338 = vadd.f32 %v4882, %v5272
    %v5339 = vadd.f32 %v4883, %v5275
    %v5340 = vadd.f32 %v4884, %v5280
    %v5341 = vadd.f32 %v4885, %v5283
    %v5342 = vadd.f32 %v4886, %v5288
    %v5343 = vadd.f32 %v4887, %v5291
    %v5344 = vadd.f32 %v4888, %v5296
    %v5345 = vadd.f32 %v4889, %v5299
    %v5346 = vadd.f32 %v4890, %v5304
    %v5347 = vadd.f32 %v4891, %v5307
    %v5348 = vadd.f32 %v4892, %v5312
    %v5349 = vadd.f32 %v4893, %v5315
    %s5350 = scalar_lea.vmem %s1, 32
    %v5351 = vld [vmem:[%s5350] sm:$0xf]
    %v5352 = vld [vmem:[%s5350 + $0x4] sm:$0xf]
    %v5353 = vld [vmem:[%s5350 + $0x8] sm:$0xf]
    %v5354 = vld [vmem:[%s5350 + $0xc] sm:$0x1]
    %s5355 = sadd.s32 %s16, 2
    %s5356 = smul.u32 %s5355, 3
    %s5357 = smul.addr %s5356, 4
    %s5358 = scalar_lea.vmem %s0, %s5357
    %v5359 = vld [vmem:[%s5358] sm:$0xf]
    %v5360 = vld [vmem:[%s5358 + $0x4] sm:$0xf]
    %v5361 = vld [vmem:[%s5358 + $0xc] sm:$0xf]
    %v5362 = vld [vmem:[%s5358 + $0x10] sm:$0xf]
    %v5363 = vld [vmem:[%s5358 + $0x18] sm:$0xf]
    %v5364 = vld [vmem:[%s5358 + $0x1c] sm:$0xf]
    %v5365 = vld [vmem:[%s5358 + $0x24] sm:$0xf]
    %v5366 = vld [vmem:[%s5358 + $0x28] sm:$0xf]
    %v5367 = vld [vmem:[%s5358 + $0x30] sm:$0xf]
    %v5368 = vld [vmem:[%s5358 + $0x34] sm:$0xf]
    %v5369 = vld [vmem:[%s5358 + $0x3c] sm:$0xf]
    %v5370 = vld [vmem:[%s5358 + $0x40] sm:$0xf]
    %v5371 = vld [vmem:[%s5358 + $0x48] sm:$0xf]
    %v5372 = vld [vmem:[%s5358 + $0x4c] sm:$0xf]
    %v5373 = vld [vmem:[%s5358 + $0x54] sm:$0xf]
    %v5374 = vld [vmem:[%s5358 + $0x58] sm:$0xf]
    %v5375 = vld [vmem:[%s5358 + $0x60] sm:$0xf]
    %v5376 = vld [vmem:[%s5358 + $0x64] sm:$0xf]
    %v5377 = vld [vmem:[%s5358 + $0x6c] sm:$0xf]
    %v5378 = vld [vmem:[%s5358 + $0x70] sm:$0xf]
    %v5379 = vld [vmem:[%s5358 + $0x78] sm:$0xf]
    %v5380 = vld [vmem:[%s5358 + $0x7c] sm:$0xf]
    %v5381 = vld [vmem:[%s5358 + $0x84] sm:$0xf]
    %v5382 = vld [vmem:[%s5358 + $0x88] sm:$0xf]
    %v5383 = vld [vmem:[%s5358 + $0x90] sm:$0xf]
    %v5384 = vld [vmem:[%s5358 + $0x94] sm:$0xf]
    %v5385 = vld [vmem:[%s5358 + $0x9c] sm:$0xf]
    %v5386 = vld [vmem:[%s5358 + $0xa0] sm:$0xf]
    %v5387 = vld [vmem:[%s5358 + $0xa8] sm:$0xf]
    %v5388 = vld [vmem:[%s5358 + $0xac] sm:$0xf]
    %v5389 = vld [vmem:[%s5358 + $0xb4] sm:$0xf]
    %v5390 = vld [vmem:[%s5358 + $0xb8] sm:$0xf]
    %v5423 = vunpack.c.l.b16 %v5359
    %v5424 = vunpack.c.l.b16 %v5360
    %v5425 = vunpack.c.l.b16 %v5361
    %v5426 = vunpack.c.l.b16 %v5362
    %v5427 = vunpack.c.l.b16 %v5363
    %v5428 = vunpack.c.l.b16 %v5364
    %v5429 = vunpack.c.l.b16 %v5365
    %v5430 = vunpack.c.l.b16 %v5366
    %v5431 = vunpack.c.l.b16 %v5367
    %v5432 = vunpack.c.l.b16 %v5368
    %v5433 = vunpack.c.l.b16 %v5369
    %v5434 = vunpack.c.l.b16 %v5370
    %v5435 = vunpack.c.l.b16 %v5371
    %v5436 = vunpack.c.l.b16 %v5372
    %v5437 = vunpack.c.l.b16 %v5373
    %v5438 = vunpack.c.l.b16 %v5374
    %v5439 = vunpack.c.l.b16 %v5375
    %v5440 = vunpack.c.l.b16 %v5376
    %v5441 = vunpack.c.l.b16 %v5377
    %v5442 = vunpack.c.l.b16 %v5378
    %v5443 = vunpack.c.l.b16 %v5379
    %v5444 = vunpack.c.l.b16 %v5380
    %v5445 = vunpack.c.l.b16 %v5381
    %v5446 = vunpack.c.l.b16 %v5382
    %v5447 = vunpack.c.l.b16 %v5383
    %v5448 = vunpack.c.l.b16 %v5384
    %v5449 = vunpack.c.l.b16 %v5385
    %v5450 = vunpack.c.l.b16 %v5386
    %v5451 = vunpack.c.l.b16 %v5387
    %v5452 = vunpack.c.l.b16 %v5388
    %v5453 = vunpack.c.l.b16 %v5389
    %v5454 = vunpack.c.l.b16 %v5390
    %v5455 = vpack.c.b16 %v5424, %v5423
    %v5456 = vpack.c.b16 %v5426, %v5425
    %v5457 = vpack.c.b16 %v5428, %v5427
    %v5458 = vpack.c.b16 %v5430, %v5429
    %v5459 = vpack.c.b16 %v5432, %v5431
    %v5460 = vpack.c.b16 %v5434, %v5433
    %v5461 = vpack.c.b16 %v5436, %v5435
    %v5462 = vpack.c.b16 %v5438, %v5437
    %v5463 = vpack.c.b16 %v5440, %v5439
    %v5464 = vpack.c.b16 %v5442, %v5441
    %v5465 = vpack.c.b16 %v5444, %v5443
    %v5466 = vpack.c.b16 %v5446, %v5445
    %v5467 = vpack.c.b16 %v5448, %v5447
    %v5468 = vpack.c.b16 %v5450, %v5449
    %v5469 = vpack.c.b16 %v5452, %v5451
    %v5470 = vpack.c.b16 %v5454, %v5453
    %v5472 = vsel %vm520, %v5455, 0
    %v5475 = vsel %vm520, %v5456, 0
    %v5478 = vsel %vm520, %v5457, 0
    %v5481 = vsel %vm520, %v5458, 0
    %v5484 = vsel %vm520, %v5459, 0
    %v5487 = vsel %vm520, %v5460, 0
    %v5490 = vsel %vm520, %v5461, 0
    %v5493 = vsel %vm520, %v5462, 0
    %v5496 = vsel %vm520, %v5463, 0
    %v5499 = vsel %vm520, %v5464, 0
    %v5502 = vsel %vm520, %v5465, 0
    %v5505 = vsel %vm520, %v5466, 0
    %v5508 = vsel %vm520, %v5467, 0
    %v5511 = vsel %vm520, %v5468, 0
    %v5514 = vsel %vm520, %v5469, 0
    %v5517 = vsel %vm520, %v5470, 0
    %v5520 = vand.u32 %v5351, %v572
    %5522 = vmatprep.subr.bf16.mxu0 0
    %5523 = vmatpush1.bf16.msra.mxu0 0
    %5524 = vmatprep.subr.bf16.mxu0 0
    %5525 = vmatpush1.bf16.msra.mxu0 0
    %5526 = vmatprep.subr.bf16.mxu0 0
    %5527 = vmatpush1.bf16.msra.mxu0 0
    %5528 = vmatprep.subr.bf16.mxu0 0
    %5529 = vmatpush1.bf16.msra.mxu0 0
    %5530 = vmatprep.subr.bf16.mxu0 0
    %5531 = vmatpush1.bf16.msra.mxu0 0
    %5532 = vmatprep.subr.bf16.mxu0 0
    %5533 = vmatpush1.bf16.msra.mxu0 0
    %5534 = vmatprep.subr.bf16.mxu0 0
    %5535 = vmatpush1.bf16.msra.mxu0 0
    %5536 = vmatprep.subr.bf16.mxu0 0
    %5537 = vmatpush1.bf16.msra.mxu0 %v5520
    %5538 = vmatprep.subr.bf16.mxu0 0
    %5539 = vmatpush2.bf16.msra.mxu0 0
    %5540 = vmatprep.subr.bf16.mxu0 0
    %5541 = vmatpush2.bf16.msra.mxu0 0
    %5542 = vmatprep.subr.bf16.mxu0 0
    %5543 = vmatpush2.bf16.msra.mxu0 0
    %5544 = vmatprep.subr.bf16.mxu0 0
    %5545 = vmatpush2.bf16.msra.mxu0 0
    %5546 = vmatprep.subr.bf16.mxu0 0
    %5547 = vmatpush2.bf16.msra.mxu0 0
    %5548 = vmatprep.subr.bf16.mxu0 0
    %5549 = vmatpush2.bf16.msra.mxu0 0
    %5550 = vmatprep.subr.bf16.mxu0 0
    %5551 = vmatpush2.bf16.msra.mxu0 0
    %5552 = vmatprep.subr.bf16.mxu0 0
    %5553 = vmatpush2.bf16.msra.mxu0 0
    %5554 = vmatprep.mubr.bf16.mxu0 0
    %5555 = vmatmul.mubr.bf16.gmra.mxu0 %v5472
    %v5556 = vpop.f32.mrf.mxu0
    %v5557 = vadd.f32 0.0, %v5556
    %v5558 = vpop.f32.mrf.mxu0
    %v5559 = vpop.f32.mrf.mxu0
    %v5560 = vadd.f32 0.0, %v5559
    %v5561 = vpop.f32.mrf.mxu0
    %5562 = vmatprep.mubr.bf16.mxu0 0
    %5563 = vmatmul.mubr.bf16.gmra.mxu0 %v5475
    %v5564 = vpop.f32.mrf.mxu0
    %v5565 = vadd.f32 0.0, %v5564
    %v5566 = vpop.f32.mrf.mxu0
    %v5567 = vpop.f32.mrf.mxu0
    %v5568 = vadd.f32 0.0, %v5567
    %v5569 = vpop.f32.mrf.mxu0
    %5570 = vmatprep.mubr.bf16.mxu0 0
    %5571 = vmatmul.mubr.bf16.gmra.mxu0 %v5478
    %v5572 = vpop.f32.mrf.mxu0
    %v5573 = vadd.f32 0.0, %v5572
    %v5574 = vpop.f32.mrf.mxu0
    %v5575 = vpop.f32.mrf.mxu0
    %v5576 = vadd.f32 0.0, %v5575
    %v5577 = vpop.f32.mrf.mxu0
    %5578 = vmatprep.mubr.bf16.mxu0 0
    %5579 = vmatmul.mubr.bf16.gmra.mxu0 %v5481
    %v5580 = vpop.f32.mrf.mxu0
    %v5581 = vadd.f32 0.0, %v5580
    %v5582 = vpop.f32.mrf.mxu0
    %v5583 = vpop.f32.mrf.mxu0
    %v5584 = vadd.f32 0.0, %v5583
    %v5585 = vpop.f32.mrf.mxu0
    %5586 = vmatprep.mubr.bf16.mxu0 0
    %5587 = vmatmul.mubr.bf16.gmra.mxu0 %v5484
    %v5588 = vpop.f32.mrf.mxu0
    %v5589 = vadd.f32 0.0, %v5588
    %v5590 = vpop.f32.mrf.mxu0
    %v5591 = vpop.f32.mrf.mxu0
    %v5592 = vadd.f32 0.0, %v5591
    %v5593 = vpop.f32.mrf.mxu0
    %5594 = vmatprep.mubr.bf16.mxu0 0
    %5595 = vmatmul.mubr.bf16.gmra.mxu0 %v5487
    %v5596 = vpop.f32.mrf.mxu0
    %v5597 = vadd.f32 0.0, %v5596
    %v5598 = vpop.f32.mrf.mxu0
    %v5599 = vpop.f32.mrf.mxu0
    %v5600 = vadd.f32 0.0, %v5599
    %v5601 = vpop.f32.mrf.mxu0
    %5602 = vmatprep.mubr.bf16.mxu0 0
    %5603 = vmatmul.mubr.bf16.gmra.mxu0 %v5490
    %v5604 = vpop.f32.mrf.mxu0
    %v5605 = vadd.f32 0.0, %v5604
    %v5606 = vpop.f32.mrf.mxu0
    %v5607 = vpop.f32.mrf.mxu0
    %v5608 = vadd.f32 0.0, %v5607
    %v5609 = vpop.f32.mrf.mxu0
    %5610 = vmatprep.mubr.bf16.mxu0 0
    %5611 = vmatmul.mubr.bf16.gmra.mxu0 %v5493
    %v5612 = vpop.f32.mrf.mxu0
    %v5613 = vadd.f32 0.0, %v5612
    %v5614 = vpop.f32.mrf.mxu0
    %v5615 = vpop.f32.mrf.mxu0
    %v5616 = vadd.f32 0.0, %v5615
    %v5617 = vpop.f32.mrf.mxu0
    %5618 = vmatprep.mubr.bf16.mxu0 0
    %5619 = vmatmul.mubr.bf16.gmra.mxu0 %v5496
    %v5620 = vpop.f32.mrf.mxu0
    %v5621 = vadd.f32 0.0, %v5620
    %v5622 = vpop.f32.mrf.mxu0
    %v5623 = vpop.f32.mrf.mxu0
    %v5624 = vadd.f32 0.0, %v5623
    %v5625 = vpop.f32.mrf.mxu0
    %5626 = vmatprep.mubr.bf16.mxu0 0
    %5627 = vmatmul.mubr.bf16.gmra.mxu0 %v5499
    %v5628 = vpop.f32.mrf.mxu0
    %v5629 = vadd.f32 0.0, %v5628
    %v5630 = vpop.f32.mrf.mxu0
    %v5631 = vpop.f32.mrf.mxu0
    %v5632 = vadd.f32 0.0, %v5631
    %v5633 = vpop.f32.mrf.mxu0
    %5634 = vmatprep.mubr.bf16.mxu0 0
    %5635 = vmatmul.mubr.bf16.gmra.mxu0 %v5502
    %v5636 = vpop.f32.mrf.mxu0
    %v5637 = vadd.f32 0.0, %v5636
    %v5638 = vpop.f32.mrf.mxu0
    %v5639 = vpop.f32.mrf.mxu0
    %v5640 = vadd.f32 0.0, %v5639
    %v5641 = vpop.f32.mrf.mxu0
    %5642 = vmatprep.mubr.bf16.mxu0 0
    %5643 = vmatmul.mubr.bf16.gmra.mxu0 %v5505
    %v5644 = vpop.f32.mrf.mxu0
    %v5645 = vadd.f32 0.0, %v5644
    %v5646 = vpop.f32.mrf.mxu0
    %v5647 = vpop.f32.mrf.mxu0
    %v5648 = vadd.f32 0.0, %v5647
    %v5649 = vpop.f32.mrf.mxu0
    %5650 = vmatprep.mubr.bf16.mxu0 0
    %5651 = vmatmul.mubr.bf16.gmra.mxu0 %v5508
    %v5652 = vpop.f32.mrf.mxu0
    %v5653 = vadd.f32 0.0, %v5652
    %v5654 = vpop.f32.mrf.mxu0
    %v5655 = vpop.f32.mrf.mxu0
    %v5656 = vadd.f32 0.0, %v5655
    %v5657 = vpop.f32.mrf.mxu0
    %5658 = vmatprep.mubr.bf16.mxu0 0
    %5659 = vmatmul.mubr.bf16.gmra.mxu0 %v5511
    %v5660 = vpop.f32.mrf.mxu0
    %v5661 = vadd.f32 0.0, %v5660
    %v5662 = vpop.f32.mrf.mxu0
    %v5663 = vpop.f32.mrf.mxu0
    %v5664 = vadd.f32 0.0, %v5663
    %v5665 = vpop.f32.mrf.mxu0
    %5666 = vmatprep.mubr.bf16.mxu0 0
    %5667 = vmatmul.mubr.bf16.gmra.mxu0 %v5514
    %v5668 = vpop.f32.mrf.mxu0
    %v5669 = vadd.f32 0.0, %v5668
    %v5670 = vpop.f32.mrf.mxu0
    %v5671 = vpop.f32.mrf.mxu0
    %v5672 = vadd.f32 0.0, %v5671
    %v5673 = vpop.f32.mrf.mxu0
    %5674 = vmatprep.mubr.bf16.mxu0 0
    %5675 = vmatmul.mubr.bf16.gmra.mxu0 %v5517
    %v5676 = vpop.f32.mrf.mxu0
    %v5677 = vadd.f32 0.0, %v5676
    %v5678 = vpop.f32.mrf.mxu0
    %v5679 = vpop.f32.mrf.mxu0
    %v5680 = vadd.f32 0.0, %v5679
    %v5681 = vpop.f32.mrf.mxu0
    %5682 = vdwg.mxu0
    %v5683 = vadd.f32 %v5318, %v5557
    %v5684 = vadd.f32 %v5319, %v5560
    %v5685 = vadd.f32 %v5320, %v5565
    %v5686 = vadd.f32 %v5321, %v5568
    %v5687 = vadd.f32 %v5322, %v5573
    %v5688 = vadd.f32 %v5323, %v5576
    %v5689 = vadd.f32 %v5324, %v5581
    %v5690 = vadd.f32 %v5325, %v5584
    %v5691 = vadd.f32 %v5326, %v5589
    %v5692 = vadd.f32 %v5327, %v5592
    %v5693 = vadd.f32 %v5328, %v5597
    %v5694 = vadd.f32 %v5329, %v5600
    %v5695 = vadd.f32 %v5330, %v5605
    %v5696 = vadd.f32 %v5331, %v5608
    %v5697 = vadd.f32 %v5332, %v5613
    %v5698 = vadd.f32 %v5333, %v5616
    %v5699 = vadd.f32 %v5334, %v5621
    %v5700 = vadd.f32 %v5335, %v5624
    %v5701 = vadd.f32 %v5336, %v5629
    %v5702 = vadd.f32 %v5337, %v5632
    %v5703 = vadd.f32 %v5338, %v5637
    %v5704 = vadd.f32 %v5339, %v5640
    %v5705 = vadd.f32 %v5340, %v5645
    %v5706 = vadd.f32 %v5341, %v5648
    %v5707 = vadd.f32 %v5342, %v5653
    %v5708 = vadd.f32 %v5343, %v5656
    %v5709 = vadd.f32 %v5344, %v5661
    %v5710 = vadd.f32 %v5345, %v5664
    %v5711 = vadd.f32 %v5346, %v5669
    %v5712 = vadd.f32 %v5347, %v5672
    %v5713 = vadd.f32 %v5348, %v5677
    %v5714 = vadd.f32 %v5349, %v5680
    %v5715 = vld [vmem:[%s5358] sm:$0xf]
    %v5716 = vld [vmem:[%s5358 + $0x4] sm:$0xf]
    %v5717 = vld [vmem:[%s5358 + $0x8] sm:$0x1]
    %v5718 = vld [vmem:[%s5358 + $0xc] sm:$0xf]
    %v5719 = vld [vmem:[%s5358 + $0x10] sm:$0xf]
    %v5720 = vld [vmem:[%s5358 + $0x14] sm:$0x1]
    %v5721 = vld [vmem:[%s5358 + $0x18] sm:$0xf]
    %v5722 = vld [vmem:[%s5358 + $0x1c] sm:$0xf]
    %v5723 = vld [vmem:[%s5358 + $0x20] sm:$0x1]
    %v5724 = vld [vmem:[%s5358 + $0x24] sm:$0xf]
    %v5725 = vld [vmem:[%s5358 + $0x28] sm:$0xf]
    %v5726 = vld [vmem:[%s5358 + $0x2c] sm:$0x1]
    %v5727 = vld [vmem:[%s5358 + $0x30] sm:$0xf]
    %v5728 = vld [vmem:[%s5358 + $0x34] sm:$0xf]
    %v5729 = vld [vmem:[%s5358 + $0x38] sm:$0x1]
    %v5730 = vld [vmem:[%s5358 + $0x3c] sm:$0xf]
    %v5731 = vld [vmem:[%s5358 + $0x40] sm:$0xf]
    %v5732 = vld [vmem:[%s5358 + $0x44] sm:$0x1]
    %v5733 = vld [vmem:[%s5358 + $0x48] sm:$0xf]
    %v5734 = vld [vmem:[%s5358 + $0x4c] sm:$0xf]
    %v5735 = vld [vmem:[%s5358 + $0x50] sm:$0x1]
    %v5736 = vld [vmem:[%s5358 + $0x54] sm:$0xf]
    %v5737 = vld [vmem:[%s5358 + $0x58] sm:$0xf]
    %v5738 = vld [vmem:[%s5358 + $0x5c] sm:$0x1]
    %v5739 = vld [vmem:[%s5358 + $0x60] sm:$0xf]
    %v5740 = vld [vmem:[%s5358 + $0x64] sm:$0xf]
    %v5741 = vld [vmem:[%s5358 + $0x68] sm:$0x1]
    %v5742 = vld [vmem:[%s5358 + $0x6c] sm:$0xf]
    %v5743 = vld [vmem:[%s5358 + $0x70] sm:$0xf]
    %v5744 = vld [vmem:[%s5358 + $0x74] sm:$0x1]
    %v5745 = vld [vmem:[%s5358 + $0x78] sm:$0xf]
    %v5746 = vld [vmem:[%s5358 + $0x7c] sm:$0xf]
    %v5747 = vld [vmem:[%s5358 + $0x80] sm:$0x1]
    %v5748 = vld [vmem:[%s5358 + $0x84] sm:$0xf]
    %v5749 = vld [vmem:[%s5358 + $0x88] sm:$0xf]
    %v5750 = vld [vmem:[%s5358 + $0x8c] sm:$0x1]
    %v5751 = vld [vmem:[%s5358 + $0x90] sm:$0xf]
    %v5752 = vld [vmem:[%s5358 + $0x94] sm:$0xf]
    %v5753 = vld [vmem:[%s5358 + $0x98] sm:$0x1]
    %v5754 = vld [vmem:[%s5358 + $0x9c] sm:$0xf]
    %v5755 = vld [vmem:[%s5358 + $0xa0] sm:$0xf]
    %v5756 = vld [vmem:[%s5358 + $0xa4] sm:$0x1]
    %v5757 = vld [vmem:[%s5358 + $0xa8] sm:$0xf]
    %v5758 = vld [vmem:[%s5358 + $0xac] sm:$0xf]
    %v5759 = vld [vmem:[%s5358 + $0xb0] sm:$0x1]
    %v5760 = vld [vmem:[%s5358 + $0xb4] sm:$0xf]
    %v5761 = vld [vmem:[%s5358 + $0xb8] sm:$0xf]
    %v5762 = vld [vmem:[%s5358 + $0xbc] sm:$0x1]
    %v5764 = vshrl.u32 %v5715, 16
    %v5766 = vrot.slane %v5764, 4
    %v5767 = vshll.u32 %v5715, 16
    %v5769 = vrot.slane %v5767, 5
    %v5770 = vor.u32 %v5766, %v5769
    %v5771 = vrot.slane %v5770, 4
    %v5773 = vshll.u32 %v5716, 16
    %v5775 = vrot.slane %v5773, 5
    %v5776 = vsel %vm74, %v5771, %v5775
    %v5777 = vshrl.u32 %v5716, 16
    %v5779 = vrot.slane %v5777, 4
    %v5780 = vor.u32 %v5779, %v5775
    %v5781 = vrot.slane %v5780, 4
    %v5783 = vshll.u32 %v5717, 16
    %v5785 = vrot.slane %v5783, 5
    %v5786 = vsel %vm74, %v5781, %v5785
    %v5788 = vshrl.u32 %v5718, 16
    %v5790 = vrot.slane %v5788, 4
    %v5791 = vshll.u32 %v5718, 16
    %v5793 = vrot.slane %v5791, 5
    %v5794 = vor.u32 %v5790, %v5793
    %v5795 = vrot.slane %v5794, 4
    %v5797 = vshll.u32 %v5719, 16
    %v5799 = vrot.slane %v5797, 5
    %v5800 = vsel %vm74, %v5795, %v5799
    %v5801 = vshrl.u32 %v5719, 16
    %v5803 = vrot.slane %v5801, 4
    %v5804 = vor.u32 %v5803, %v5799
    %v5805 = vrot.slane %v5804, 4
    %v5807 = vshll.u32 %v5720, 16
    %v5809 = vrot.slane %v5807, 5
    %v5810 = vsel %vm74, %v5805, %v5809
    %v5812 = vshrl.u32 %v5721, 16
    %v5814 = vrot.slane %v5812, 4
    %v5815 = vshll.u32 %v5721, 16
    %v5817 = vrot.slane %v5815, 5
    %v5818 = vor.u32 %v5814, %v5817
    %v5819 = vrot.slane %v5818, 4
    %v5821 = vshll.u32 %v5722, 16
    %v5823 = vrot.slane %v5821, 5
    %v5824 = vsel %vm74, %v5819, %v5823
    %v5825 = vshrl.u32 %v5722, 16
    %v5827 = vrot.slane %v5825, 4
    %v5828 = vor.u32 %v5827, %v5823
    %v5829 = vrot.slane %v5828, 4
    %v5831 = vshll.u32 %v5723, 16
    %v5833 = vrot.slane %v5831, 5
    %v5834 = vsel %vm74, %v5829, %v5833
    %v5836 = vshrl.u32 %v5724, 16
    %v5838 = vrot.slane %v5836, 4
    %v5839 = vshll.u32 %v5724, 16
    %v5841 = vrot.slane %v5839, 5
    %v5842 = vor.u32 %v5838, %v5841
    %v5843 = vrot.slane %v5842, 4
    %v5845 = vshll.u32 %v5725, 16
    %v5847 = vrot.slane %v5845, 5
    %v5848 = vsel %vm74, %v5843, %v5847
    %v5849 = vshrl.u32 %v5725, 16
    %v5851 = vrot.slane %v5849, 4
    %v5852 = vor.u32 %v5851, %v5847
    %v5853 = vrot.slane %v5852, 4
    %v5855 = vshll.u32 %v5726, 16
    %v5857 = vrot.slane %v5855, 5
    %v5858 = vsel %vm74, %v5853, %v5857
    %v5860 = vshrl.u32 %v5727, 16
    %v5862 = vrot.slane %v5860, 4
    %v5863 = vshll.u32 %v5727, 16
    %v5865 = vrot.slane %v5863, 5
    %v5866 = vor.u32 %v5862, %v5865
    %v5867 = vrot.slane %v5866, 4
    %v5869 = vshll.u32 %v5728, 16
    %v5871 = vrot.slane %v5869, 5
    %v5872 = vsel %vm74, %v5867, %v5871
    %v5873 = vshrl.u32 %v5728, 16
    %v5875 = vrot.slane %v5873, 4
    %v5876 = vor.u32 %v5875, %v5871
    %v5877 = vrot.slane %v5876, 4
    %v5879 = vshll.u32 %v5729, 16
    %v5881 = vrot.slane %v5879, 5
    %v5882 = vsel %vm74, %v5877, %v5881
    %v5884 = vshrl.u32 %v5730, 16
    %v5886 = vrot.slane %v5884, 4
    %v5887 = vshll.u32 %v5730, 16
    %v5889 = vrot.slane %v5887, 5
    %v5890 = vor.u32 %v5886, %v5889
    %v5891 = vrot.slane %v5890, 4
    %v5893 = vshll.u32 %v5731, 16
    %v5895 = vrot.slane %v5893, 5
    %v5896 = vsel %vm74, %v5891, %v5895
    %v5897 = vshrl.u32 %v5731, 16
    %v5899 = vrot.slane %v5897, 4
    %v5900 = vor.u32 %v5899, %v5895
    %v5901 = vrot.slane %v5900, 4
    %v5903 = vshll.u32 %v5732, 16
    %v5905 = vrot.slane %v5903, 5
    %v5906 = vsel %vm74, %v5901, %v5905
    %v5908 = vshrl.u32 %v5733, 16
    %v5910 = vrot.slane %v5908, 4
    %v5911 = vshll.u32 %v5733, 16
    %v5913 = vrot.slane %v5911, 5
    %v5914 = vor.u32 %v5910, %v5913
    %v5915 = vrot.slane %v5914, 4
    %v5917 = vshll.u32 %v5734, 16
    %v5919 = vrot.slane %v5917, 5
    %v5920 = vsel %vm74, %v5915, %v5919
    %v5921 = vshrl.u32 %v5734, 16
    %v5923 = vrot.slane %v5921, 4
    %v5924 = vor.u32 %v5923, %v5919
    %v5925 = vrot.slane %v5924, 4
    %v5927 = vshll.u32 %v5735, 16
    %v5929 = vrot.slane %v5927, 5
    %v5930 = vsel %vm74, %v5925, %v5929
    %v5932 = vshrl.u32 %v5736, 16
    %v5934 = vrot.slane %v5932, 4
    %v5935 = vshll.u32 %v5736, 16
    %v5937 = vrot.slane %v5935, 5
    %v5938 = vor.u32 %v5934, %v5937
    %v5939 = vrot.slane %v5938, 4
    %v5941 = vshll.u32 %v5737, 16
    %v5943 = vrot.slane %v5941, 5
    %v5944 = vsel %vm74, %v5939, %v5943
    %v5945 = vshrl.u32 %v5737, 16
    %v5947 = vrot.slane %v5945, 4
    %v5948 = vor.u32 %v5947, %v5943
    %v5949 = vrot.slane %v5948, 4
    %v5951 = vshll.u32 %v5738, 16
    %v5953 = vrot.slane %v5951, 5
    %v5954 = vsel %vm74, %v5949, %v5953
    %v5956 = vshrl.u32 %v5739, 16
    %v5958 = vrot.slane %v5956, 4
    %v5959 = vshll.u32 %v5739, 16
    %v5961 = vrot.slane %v5959, 5
    %v5962 = vor.u32 %v5958, %v5961
    %v5963 = vrot.slane %v5962, 4
    %v5965 = vshll.u32 %v5740, 16
    %v5967 = vrot.slane %v5965, 5
    %v5968 = vsel %vm74, %v5963, %v5967
    %v5969 = vshrl.u32 %v5740, 16
    %v5971 = vrot.slane %v5969, 4
    %v5972 = vor.u32 %v5971, %v5967
    %v5973 = vrot.slane %v5972, 4
    %v5975 = vshll.u32 %v5741, 16
    %v5977 = vrot.slane %v5975, 5
    %v5978 = vsel %vm74, %v5973, %v5977
    %v5980 = vshrl.u32 %v5742, 16
    %v5982 = vrot.slane %v5980, 4
    %v5983 = vshll.u32 %v5742, 16
    %v5985 = vrot.slane %v5983, 5
    %v5986 = vor.u32 %v5982, %v5985
    %v5987 = vrot.slane %v5986, 4
    %v5989 = vshll.u32 %v5743, 16
    %v5991 = vrot.slane %v5989, 5
    %v5992 = vsel %vm74, %v5987, %v5991
    %v5993 = vshrl.u32 %v5743, 16
    %v5995 = vrot.slane %v5993, 4
    %v5996 = vor.u32 %v5995, %v5991
    %v5997 = vrot.slane %v5996, 4
    %v5999 = vshll.u32 %v5744, 16
    %v6001 = vrot.slane %v5999, 5
    %v6002 = vsel %vm74, %v5997, %v6001
    %v6004 = vshrl.u32 %v5745, 16
    %v6006 = vrot.slane %v6004, 4
    %v6007 = vshll.u32 %v5745, 16
    %v6009 = vrot.slane %v6007, 5
    %v6010 = vor.u32 %v6006, %v6009
    %v6011 = vrot.slane %v6010, 4
    %v6013 = vshll.u32 %v5746, 16
    %v6015 = vrot.slane %v6013, 5
    %v6016 = vsel %vm74, %v6011, %v6015
    %v6017 = vshrl.u32 %v5746, 16
    %v6019 = vrot.slane %v6017, 4
    %v6020 = vor.u32 %v6019, %v6015
    %v6021 = vrot.slane %v6020, 4
    %v6023 = vshll.u32 %v5747, 16
    %v6025 = vrot.slane %v6023, 5
    %v6026 = vsel %vm74, %v6021, %v6025
    %v6028 = vshrl.u32 %v5748, 16
    %v6030 = vrot.slane %v6028, 4
    %v6031 = vshll.u32 %v5748, 16
    %v6033 = vrot.slane %v6031, 5
    %v6034 = vor.u32 %v6030, %v6033
    %v6035 = vrot.slane %v6034, 4
    %v6037 = vshll.u32 %v5749, 16
    %v6039 = vrot.slane %v6037, 5
    %v6040 = vsel %vm74, %v6035, %v6039
    %v6041 = vshrl.u32 %v5749, 16
    %v6043 = vrot.slane %v6041, 4
    %v6044 = vor.u32 %v6043, %v6039
    %v6045 = vrot.slane %v6044, 4
    %v6047 = vshll.u32 %v5750, 16
    %v6049 = vrot.slane %v6047, 5
    %v6050 = vsel %vm74, %v6045, %v6049
    %v6052 = vshrl.u32 %v5751, 16
    %v6054 = vrot.slane %v6052, 4
    %v6055 = vshll.u32 %v5751, 16
    %v6057 = vrot.slane %v6055, 5
    %v6058 = vor.u32 %v6054, %v6057
    %v6059 = vrot.slane %v6058, 4
    %v6061 = vshll.u32 %v5752, 16
    %v6063 = vrot.slane %v6061, 5
    %v6064 = vsel %vm74, %v6059, %v6063
    %v6065 = vshrl.u32 %v5752, 16
    %v6067 = vrot.slane %v6065, 4
    %v6068 = vor.u32 %v6067, %v6063
    %v6069 = vrot.slane %v6068, 4
    %v6071 = vshll.u32 %v5753, 16
    %v6073 = vrot.slane %v6071, 5
    %v6074 = vsel %vm74, %v6069, %v6073
    %v6076 = vshrl.u32 %v5754, 16
    %v6078 = vrot.slane %v6076, 4
    %v6079 = vshll.u32 %v5754, 16
    %v6081 = vrot.slane %v6079, 5
    %v6082 = vor.u32 %v6078, %v6081
    %v6083 = vrot.slane %v6082, 4
    %v6085 = vshll.u32 %v5755, 16
    %v6087 = vrot.slane %v6085, 5
    %v6088 = vsel %vm74, %v6083, %v6087
    %v6089 = vshrl.u32 %v5755, 16
    %v6091 = vrot.slane %v6089, 4
    %v6092 = vor.u32 %v6091, %v6087
    %v6093 = vrot.slane %v6092, 4
    %v6095 = vshll.u32 %v5756, 16
    %v6097 = vrot.slane %v6095, 5
    %v6098 = vsel %vm74, %v6093, %v6097
    %v6100 = vshrl.u32 %v5757, 16
    %v6102 = vrot.slane %v6100, 4
    %v6103 = vshll.u32 %v5757, 16
    %v6105 = vrot.slane %v6103, 5
    %v6106 = vor.u32 %v6102, %v6105
    %v6107 = vrot.slane %v6106, 4
    %v6109 = vshll.u32 %v5758, 16
    %v6111 = vrot.slane %v6109, 5
    %v6112 = vsel %vm74, %v6107, %v6111
    %v6113 = vshrl.u32 %v5758, 16
    %v6115 = vrot.slane %v6113, 4
    %v6116 = vor.u32 %v6115, %v6111
    %v6117 = vrot.slane %v6116, 4
    %v6119 = vshll.u32 %v5759, 16
    %v6121 = vrot.slane %v6119, 5
    %v6122 = vsel %vm74, %v6117, %v6121
    %v6124 = vshrl.u32 %v5760, 16
    %v6126 = vrot.slane %v6124, 4
    %v6127 = vshll.u32 %v5760, 16
    %v6129 = vrot.slane %v6127, 5
    %v6130 = vor.u32 %v6126, %v6129
    %v6131 = vrot.slane %v6130, 4
    %v6133 = vshll.u32 %v5761, 16
    %v6135 = vrot.slane %v6133, 5
    %v6136 = vsel %vm74, %v6131, %v6135
    %v6137 = vshrl.u32 %v5761, 16
    %v6139 = vrot.slane %v6137, 4
    %v6140 = vor.u32 %v6139, %v6135
    %v6141 = vrot.slane %v6140, 4
    %v6143 = vshll.u32 %v5762, 16
    %v6145 = vrot.slane %v6143, 5
    %v6146 = vsel %vm74, %v6141, %v6145
    %v6147 = vunpack.c.l.b16 %v5776
    %v6148 = vunpack.c.l.b16 %v5786
    %v6149 = vunpack.c.l.b16 %v5800
    %v6150 = vunpack.c.l.b16 %v5810
    %v6151 = vunpack.c.l.b16 %v5824
    %v6152 = vunpack.c.l.b16 %v5834
    %v6153 = vunpack.c.l.b16 %v5848
    %v6154 = vunpack.c.l.b16 %v5858
    %v6155 = vunpack.c.l.b16 %v5872
    %v6156 = vunpack.c.l.b16 %v5882
    %v6157 = vunpack.c.l.b16 %v5896
    %v6158 = vunpack.c.l.b16 %v5906
    %v6159 = vunpack.c.l.b16 %v5920
    %v6160 = vunpack.c.l.b16 %v5930
    %v6161 = vunpack.c.l.b16 %v5944
    %v6162 = vunpack.c.l.b16 %v5954
    %v6163 = vunpack.c.l.b16 %v5968
    %v6164 = vunpack.c.l.b16 %v5978
    %v6165 = vunpack.c.l.b16 %v5992
    %v6166 = vunpack.c.l.b16 %v6002
    %v6167 = vunpack.c.l.b16 %v6016
    %v6168 = vunpack.c.l.b16 %v6026
    %v6169 = vunpack.c.l.b16 %v6040
    %v6170 = vunpack.c.l.b16 %v6050
    %v6171 = vunpack.c.l.b16 %v6064
    %v6172 = vunpack.c.l.b16 %v6074
    %v6173 = vunpack.c.l.b16 %v6088
    %v6174 = vunpack.c.l.b16 %v6098
    %v6175 = vunpack.c.l.b16 %v6112
    %v6176 = vunpack.c.l.b16 %v6122
    %v6177 = vunpack.c.l.b16 %v6136
    %v6178 = vunpack.c.l.b16 %v6146
    %v6179 = vpack.c.b16 %v6148, %v6147
    %v6180 = vpack.c.b16 %v6150, %v6149
    %v6181 = vpack.c.b16 %v6152, %v6151
    %v6182 = vpack.c.b16 %v6154, %v6153
    %v6183 = vpack.c.b16 %v6156, %v6155
    %v6184 = vpack.c.b16 %v6158, %v6157
    %v6185 = vpack.c.b16 %v6160, %v6159
    %v6186 = vpack.c.b16 %v6162, %v6161
    %v6187 = vpack.c.b16 %v6164, %v6163
    %v6188 = vpack.c.b16 %v6166, %v6165
    %v6189 = vpack.c.b16 %v6168, %v6167
    %v6190 = vpack.c.b16 %v6170, %v6169
    %v6191 = vpack.c.b16 %v6172, %v6171
    %v6192 = vpack.c.b16 %v6174, %v6173
    %v6193 = vpack.c.b16 %v6176, %v6175
    %v6194 = vpack.c.b16 %v6178, %v6177
    %v6197 = vunpack.c.l.b16 %v5351
    %v6198 = vunpack.c.l.b16 %v5352
    %v6199 = vpack.c.b16 %v6198, %v6197
    %v6201 = vshrl.u32 %v6199, 16
    %v6203 = vrot.slane %v6201, 2
    %v6204 = vshll.u32 %v6199, 16
    %v6206 = vrot.slane %v6204, 3
    %v6207 = vor.u32 %v6203, %v6206
    %v6209 = vsel %vm520, %v6179, 0
    %v6212 = vsel %vm520, %v6180, 0
    %v6215 = vsel %vm520, %v6181, 0
    %v6218 = vsel %vm520, %v6182, 0
    %v6221 = vsel %vm520, %v6183, 0
    %v6224 = vsel %vm520, %v6184, 0
    %v6227 = vsel %vm520, %v6185, 0
    %v6230 = vsel %vm520, %v6186, 0
    %v6233 = vsel %vm520, %v6187, 0
    %v6236 = vsel %vm520, %v6188, 0
    %v6239 = vsel %vm520, %v6189, 0
    %v6242 = vsel %vm520, %v6190, 0
    %v6245 = vsel %vm520, %v6191, 0
    %v6248 = vsel %vm520, %v6192, 0
    %v6251 = vsel %vm520, %v6193, 0
    %v6254 = vsel %vm520, %v6194, 0
    %v6257 = vand.u32 %v6207, %v572
    %6259 = vmatprep.subr.bf16.mxu0 0
    %6260 = vmatpush1.bf16.msra.mxu0 0
    %6261 = vmatprep.subr.bf16.mxu0 0
    %6262 = vmatpush1.bf16.msra.mxu0 0
    %6263 = vmatprep.subr.bf16.mxu0 0
    %6264 = vmatpush1.bf16.msra.mxu0 0
    %6265 = vmatprep.subr.bf16.mxu0 0
    %6266 = vmatpush1.bf16.msra.mxu0 0
    %6267 = vmatprep.subr.bf16.mxu0 0
    %6268 = vmatpush1.bf16.msra.mxu0 0
    %6269 = vmatprep.subr.bf16.mxu0 0
    %6270 = vmatpush1.bf16.msra.mxu0 0
    %6271 = vmatprep.subr.bf16.mxu0 0
    %6272 = vmatpush1.bf16.msra.mxu0 0
    %6273 = vmatprep.subr.bf16.mxu0 0
    %6274 = vmatpush1.bf16.msra.mxu0 %v6257
    %6275 = vmatprep.subr.bf16.mxu0 0
    %6276 = vmatpush2.bf16.msra.mxu0 0
    %6277 = vmatprep.subr.bf16.mxu0 0
    %6278 = vmatpush2.bf16.msra.mxu0 0
    %6279 = vmatprep.subr.bf16.mxu0 0
    %6280 = vmatpush2.bf16.msra.mxu0 0
    %6281 = vmatprep.subr.bf16.mxu0 0
    %6282 = vmatpush2.bf16.msra.mxu0 0
    %6283 = vmatprep.subr.bf16.mxu0 0
    %6284 = vmatpush2.bf16.msra.mxu0 0
    %6285 = vmatprep.subr.bf16.mxu0 0
    %6286 = vmatpush2.bf16.msra.mxu0 0
    %6287 = vmatprep.subr.bf16.mxu0 0
    %6288 = vmatpush2.bf16.msra.mxu0 0
    %6289 = vmatprep.subr.bf16.mxu0 0
    %6290 = vmatpush2.bf16.msra.mxu0 0
    %6291 = vmatprep.mubr.bf16.mxu0 0
    %6292 = vmatmul.mubr.bf16.gmra.mxu0 %v6209
    %v6293 = vpop.f32.mrf.mxu0
    %v6294 = vadd.f32 0.0, %v6293
    %v6295 = vpop.f32.mrf.mxu0
    %v6296 = vpop.f32.mrf.mxu0
    %v6297 = vadd.f32 0.0, %v6296
    %v6298 = vpop.f32.mrf.mxu0
    %6299 = vmatprep.mubr.bf16.mxu0 0
    %6300 = vmatmul.mubr.bf16.gmra.mxu0 %v6212
    %v6301 = vpop.f32.mrf.mxu0
    %v6302 = vadd.f32 0.0, %v6301
    %v6303 = vpop.f32.mrf.mxu0
    %v6304 = vpop.f32.mrf.mxu0
    %v6305 = vadd.f32 0.0, %v6304
    %v6306 = vpop.f32.mrf.mxu0
    %6307 = vmatprep.mubr.bf16.mxu0 0
    %6308 = vmatmul.mubr.bf16.gmra.mxu0 %v6215
    %v6309 = vpop.f32.mrf.mxu0
    %v6310 = vadd.f32 0.0, %v6309
    %v6311 = vpop.f32.mrf.mxu0
    %v6312 = vpop.f32.mrf.mxu0
    %v6313 = vadd.f32 0.0, %v6312
    %v6314 = vpop.f32.mrf.mxu0
    %6315 = vmatprep.mubr.bf16.mxu0 0
    %6316 = vmatmul.mubr.bf16.gmra.mxu0 %v6218
    %v6317 = vpop.f32.mrf.mxu0
    %v6318 = vadd.f32 0.0, %v6317
    %v6319 = vpop.f32.mrf.mxu0
    %v6320 = vpop.f32.mrf.mxu0
    %v6321 = vadd.f32 0.0, %v6320
    %v6322 = vpop.f32.mrf.mxu0
    %6323 = vmatprep.mubr.bf16.mxu0 0
    %6324 = vmatmul.mubr.bf16.gmra.mxu0 %v6221
    %v6325 = vpop.f32.mrf.mxu0
    %v6326 = vadd.f32 0.0, %v6325
    %v6327 = vpop.f32.mrf.mxu0
    %v6328 = vpop.f32.mrf.mxu0
    %v6329 = vadd.f32 0.0, %v6328
    %v6330 = vpop.f32.mrf.mxu0
    %6331 = vmatprep.mubr.bf16.mxu0 0
    %6332 = vmatmul.mubr.bf16.gmra.mxu0 %v6224
    %v6333 = vpop.f32.mrf.mxu0
    %v6334 = vadd.f32 0.0, %v6333
    %v6335 = vpop.f32.mrf.mxu0
    %v6336 = vpop.f32.mrf.mxu0
    %v6337 = vadd.f32 0.0, %v6336
    %v6338 = vpop.f32.mrf.mxu0
    %6339 = vmatprep.mubr.bf16.mxu0 0
    %6340 = vmatmul.mubr.bf16.gmra.mxu0 %v6227
    %v6341 = vpop.f32.mrf.mxu0
    %v6342 = vadd.f32 0.0, %v6341
    %v6343 = vpop.f32.mrf.mxu0
    %v6344 = vpop.f32.mrf.mxu0
    %v6345 = vadd.f32 0.0, %v6344
    %v6346 = vpop.f32.mrf.mxu0
    %6347 = vmatprep.mubr.bf16.mxu0 0
    %6348 = vmatmul.mubr.bf16.gmra.mxu0 %v6230
    %v6349 = vpop.f32.mrf.mxu0
    %v6350 = vadd.f32 0.0, %v6349
    %v6351 = vpop.f32.mrf.mxu0
    %v6352 = vpop.f32.mrf.mxu0
    %v6353 = vadd.f32 0.0, %v6352
    %v6354 = vpop.f32.mrf.mxu0
    %6355 = vmatprep.mubr.bf16.mxu0 0
    %6356 = vmatmul.mubr.bf16.gmra.mxu0 %v6233
    %v6357 = vpop.f32.mrf.mxu0
    %v6358 = vadd.f32 0.0, %v6357
    %v6359 = vpop.f32.mrf.mxu0
    %v6360 = vpop.f32.mrf.mxu0
    %v6361 = vadd.f32 0.0, %v6360
    %v6362 = vpop.f32.mrf.mxu0
    %6363 = vmatprep.mubr.bf16.mxu0 0
    %6364 = vmatmul.mubr.bf16.gmra.mxu0 %v6236
    %v6365 = vpop.f32.mrf.mxu0
    %v6366 = vadd.f32 0.0, %v6365
    %v6367 = vpop.f32.mrf.mxu0
    %v6368 = vpop.f32.mrf.mxu0
    %v6369 = vadd.f32 0.0, %v6368
    %v6370 = vpop.f32.mrf.mxu0
    %6371 = vmatprep.mubr.bf16.mxu0 0
    %6372 = vmatmul.mubr.bf16.gmra.mxu0 %v6239
    %v6373 = vpop.f32.mrf.mxu0
    %v6374 = vadd.f32 0.0, %v6373
    %v6375 = vpop.f32.mrf.mxu0
    %v6376 = vpop.f32.mrf.mxu0
    %v6377 = vadd.f32 0.0, %v6376
    %v6378 = vpop.f32.mrf.mxu0
    %6379 = vmatprep.mubr.bf16.mxu0 0
    %6380 = vmatmul.mubr.bf16.gmra.mxu0 %v6242
    %v6381 = vpop.f32.mrf.mxu0
    %v6382 = vadd.f32 0.0, %v6381
    %v6383 = vpop.f32.mrf.mxu0
    %v6384 = vpop.f32.mrf.mxu0
    %v6385 = vadd.f32 0.0, %v6384
    %v6386 = vpop.f32.mrf.mxu0
    %6387 = vmatprep.mubr.bf16.mxu0 0
    %6388 = vmatmul.mubr.bf16.gmra.mxu0 %v6245
    %v6389 = vpop.f32.mrf.mxu0
    %v6390 = vadd.f32 0.0, %v6389
    %v6391 = vpop.f32.mrf.mxu0
    %v6392 = vpop.f32.mrf.mxu0
    %v6393 = vadd.f32 0.0, %v6392
    %v6394 = vpop.f32.mrf.mxu0
    %6395 = vmatprep.mubr.bf16.mxu0 0
    %6396 = vmatmul.mubr.bf16.gmra.mxu0 %v6248
    %v6397 = vpop.f32.mrf.mxu0
    %v6398 = vadd.f32 0.0, %v6397
    %v6399 = vpop.f32.mrf.mxu0
    %v6400 = vpop.f32.mrf.mxu0
    %v6401 = vadd.f32 0.0, %v6400
    %v6402 = vpop.f32.mrf.mxu0
    %6403 = vmatprep.mubr.bf16.mxu0 0
    %6404 = vmatmul.mubr.bf16.gmra.mxu0 %v6251
    %v6405 = vpop.f32.mrf.mxu0
    %v6406 = vadd.f32 0.0, %v6405
    %v6407 = vpop.f32.mrf.mxu0
    %v6408 = vpop.f32.mrf.mxu0
    %v6409 = vadd.f32 0.0, %v6408
    %v6410 = vpop.f32.mrf.mxu0
    %6411 = vmatprep.mubr.bf16.mxu0 0
    %6412 = vmatmul.mubr.bf16.gmra.mxu0 %v6254
    %v6413 = vpop.f32.mrf.mxu0
    %v6414 = vadd.f32 0.0, %v6413
    %v6415 = vpop.f32.mrf.mxu0
    %v6416 = vpop.f32.mrf.mxu0
    %v6417 = vadd.f32 0.0, %v6416
    %v6418 = vpop.f32.mrf.mxu0
    %6419 = vdwg.mxu0
    %v6420 = vadd.f32 %v5683, %v6294
    %v6421 = vadd.f32 %v5684, %v6297
    %v6422 = vadd.f32 %v5685, %v6302
    %v6423 = vadd.f32 %v5686, %v6305
    %v6424 = vadd.f32 %v5687, %v6310
    %v6425 = vadd.f32 %v5688, %v6313
    %v6426 = vadd.f32 %v5689, %v6318
    %v6427 = vadd.f32 %v5690, %v6321
    %v6428 = vadd.f32 %v5691, %v6326
    %v6429 = vadd.f32 %v5692, %v6329
    %v6430 = vadd.f32 %v5693, %v6334
    %v6431 = vadd.f32 %v5694, %v6337
    %v6432 = vadd.f32 %v5695, %v6342
    %v6433 = vadd.f32 %v5696, %v6345
    %v6434 = vadd.f32 %v5697, %v6350
    %v6435 = vadd.f32 %v5698, %v6353
    %v6436 = vadd.f32 %v5699, %v6358
    %v6437 = vadd.f32 %v5700, %v6361
    %v6438 = vadd.f32 %v5701, %v6366
    %v6439 = vadd.f32 %v5702, %v6369
    %v6440 = vadd.f32 %v5703, %v6374
    %v6441 = vadd.f32 %v5704, %v6377
    %v6442 = vadd.f32 %v5705, %v6382
    %v6443 = vadd.f32 %v5706, %v6385
    %v6444 = vadd.f32 %v5707, %v6390
    %v6445 = vadd.f32 %v5708, %v6393
    %v6446 = vadd.f32 %v5709, %v6398
    %v6447 = vadd.f32 %v5710, %v6401
    %v6448 = vadd.f32 %v5711, %v6406
    %v6449 = vadd.f32 %v5712, %v6409
    %v6450 = vadd.f32 %v5713, %v6414
    %v6451 = vadd.f32 %v5714, %v6417
    %v6452 = vld [vmem:[%s5358] sm:$0xe]
    %v6453 = vld [vmem:[%s5358 + $0xc] sm:$0xe]
    %v6454 = vld [vmem:[%s5358 + $0x18] sm:$0xe]
    %v6455 = vld [vmem:[%s5358 + $0x24] sm:$0xe]
    %v6456 = vld [vmem:[%s5358 + $0x30] sm:$0xe]
    %v6457 = vld [vmem:[%s5358 + $0x3c] sm:$0xe]
    %v6458 = vld [vmem:[%s5358 + $0x48] sm:$0xe]
    %v6459 = vld [vmem:[%s5358 + $0x54] sm:$0xe]
    %v6460 = vld [vmem:[%s5358 + $0x60] sm:$0xe]
    %v6461 = vld [vmem:[%s5358 + $0x6c] sm:$0xe]
    %v6462 = vld [vmem:[%s5358 + $0x78] sm:$0xe]
    %v6463 = vld [vmem:[%s5358 + $0x84] sm:$0xe]
    %v6464 = vld [vmem:[%s5358 + $0x90] sm:$0xe]
    %v6465 = vld [vmem:[%s5358 + $0x9c] sm:$0xe]
    %v6466 = vld [vmem:[%s5358 + $0xa8] sm:$0xe]
    %v6467 = vld [vmem:[%s5358 + $0xb4] sm:$0xe]
    %v6516 = vrot.slane %v6452, 5
    %v6517 = vrot.slane %v6516, 4
    %v6518 = vrot.slane %v5716, 5
    %v6519 = vsel %vm1079, %v6517, %v6518
    %v6520 = vrot.slane %v6518, 4
    %v6521 = vrot.slane %v5717, 5
    %v6522 = vsel %vm1079, %v6520, %v6521
    %v6523 = vrot.slane %v6453, 5
    %v6524 = vrot.slane %v6523, 4
    %v6525 = vrot.slane %v5719, 5
    %v6526 = vsel %vm1079, %v6524, %v6525
    %v6527 = vrot.slane %v6525, 4
    %v6528 = vrot.slane %v5720, 5
    %v6529 = vsel %vm1079, %v6527, %v6528
    %v6530 = vrot.slane %v6454, 5
    %v6531 = vrot.slane %v6530, 4
    %v6532 = vrot.slane %v5722, 5
    %v6533 = vsel %vm1079, %v6531, %v6532
    %v6534 = vrot.slane %v6532, 4
    %v6535 = vrot.slane %v5723, 5
    %v6536 = vsel %vm1079, %v6534, %v6535
    %v6537 = vrot.slane %v6455, 5
    %v6538 = vrot.slane %v6537, 4
    %v6539 = vrot.slane %v5725, 5
    %v6540 = vsel %vm1079, %v6538, %v6539
    %v6541 = vrot.slane %v6539, 4
    %v6542 = vrot.slane %v5726, 5
    %v6543 = vsel %vm1079, %v6541, %v6542
    %v6544 = vrot.slane %v6456, 5
    %v6545 = vrot.slane %v6544, 4
    %v6546 = vrot.slane %v5728, 5
    %v6547 = vsel %vm1079, %v6545, %v6546
    %v6548 = vrot.slane %v6546, 4
    %v6549 = vrot.slane %v5729, 5
    %v6550 = vsel %vm1079, %v6548, %v6549
    %v6551 = vrot.slane %v6457, 5
    %v6552 = vrot.slane %v6551, 4
    %v6553 = vrot.slane %v5731, 5
    %v6554 = vsel %vm1079, %v6552, %v6553
    %v6555 = vrot.slane %v6553, 4
    %v6556 = vrot.slane %v5732, 5
    %v6557 = vsel %vm1079, %v6555, %v6556
    %v6558 = vrot.slane %v6458, 5
    %v6559 = vrot.slane %v6558, 4
    %v6560 = vrot.slane %v5734, 5
    %v6561 = vsel %vm1079, %v6559, %v6560
    %v6562 = vrot.slane %v6560, 4
    %v6563 = vrot.slane %v5735, 5
    %v6564 = vsel %vm1079, %v6562, %v6563
    %v6565 = vrot.slane %v6459, 5
    %v6566 = vrot.slane %v6565, 4
    %v6567 = vrot.slane %v5737, 5
    %v6568 = vsel %vm1079, %v6566, %v6567
    %v6569 = vrot.slane %v6567, 4
    %v6570 = vrot.slane %v5738, 5
    %v6571 = vsel %vm1079, %v6569, %v6570
    %v6572 = vrot.slane %v6460, 5
    %v6573 = vrot.slane %v6572, 4
    %v6574 = vrot.slane %v5740, 5
    %v6575 = vsel %vm1079, %v6573, %v6574
    %v6576 = vrot.slane %v6574, 4
    %v6577 = vrot.slane %v5741, 5
    %v6578 = vsel %vm1079, %v6576, %v6577
    %v6579 = vrot.slane %v6461, 5
    %v6580 = vrot.slane %v6579, 4
    %v6581 = vrot.slane %v5743, 5
    %v6582 = vsel %vm1079, %v6580, %v6581
    %v6583 = vrot.slane %v6581, 4
    %v6584 = vrot.slane %v5744, 5
    %v6585 = vsel %vm1079, %v6583, %v6584
    %v6586 = vrot.slane %v6462, 5
    %v6587 = vrot.slane %v6586, 4
    %v6588 = vrot.slane %v5746, 5
    %v6589 = vsel %vm1079, %v6587, %v6588
    %v6590 = vrot.slane %v6588, 4
    %v6591 = vrot.slane %v5747, 5
    %v6592 = vsel %vm1079, %v6590, %v6591
    %v6593 = vrot.slane %v6463, 5
    %v6594 = vrot.slane %v6593, 4
    %v6595 = vrot.slane %v5749, 5
    %v6596 = vsel %vm1079, %v6594, %v6595
    %v6597 = vrot.slane %v6595, 4
    %v6598 = vrot.slane %v5750, 5
    %v6599 = vsel %vm1079, %v6597, %v6598
    %v6600 = vrot.slane %v6464, 5
    %v6601 = vrot.slane %v6600, 4
    %v6602 = vrot.slane %v5752, 5
    %v6603 = vsel %vm1079, %v6601, %v6602
    %v6604 = vrot.slane %v6602, 4
    %v6605 = vrot.slane %v5753, 5
    %v6606 = vsel %vm1079, %v6604, %v6605
    %v6607 = vrot.slane %v6465, 5
    %v6608 = vrot.slane %v6607, 4
    %v6609 = vrot.slane %v5755, 5
    %v6610 = vsel %vm1079, %v6608, %v6609
    %v6611 = vrot.slane %v6609, 4
    %v6612 = vrot.slane %v5756, 5
    %v6613 = vsel %vm1079, %v6611, %v6612
    %v6614 = vrot.slane %v6466, 5
    %v6615 = vrot.slane %v6614, 4
    %v6616 = vrot.slane %v5758, 5
    %v6617 = vsel %vm1079, %v6615, %v6616
    %v6618 = vrot.slane %v6616, 4
    %v6619 = vrot.slane %v5759, 5
    %v6620 = vsel %vm1079, %v6618, %v6619
    %v6621 = vrot.slane %v6467, 5
    %v6622 = vrot.slane %v6621, 4
    %v6623 = vrot.slane %v5761, 5
    %v6624 = vsel %vm1079, %v6622, %v6623
    %v6625 = vrot.slane %v6623, 4
    %v6626 = vrot.slane %v5762, 5
    %v6627 = vsel %vm1079, %v6625, %v6626
    %v6628 = vunpack.c.l.b16 %v6519
    %v6629 = vunpack.c.l.b16 %v6522
    %v6630 = vunpack.c.l.b16 %v6526
    %v6631 = vunpack.c.l.b16 %v6529
    %v6632 = vunpack.c.l.b16 %v6533
    %v6633 = vunpack.c.l.b16 %v6536
    %v6634 = vunpack.c.l.b16 %v6540
    %v6635 = vunpack.c.l.b16 %v6543
    %v6636 = vunpack.c.l.b16 %v6547
    %v6637 = vunpack.c.l.b16 %v6550
    %v6638 = vunpack.c.l.b16 %v6554
    %v6639 = vunpack.c.l.b16 %v6557
    %v6640 = vunpack.c.l.b16 %v6561
    %v6641 = vunpack.c.l.b16 %v6564
    %v6642 = vunpack.c.l.b16 %v6568
    %v6643 = vunpack.c.l.b16 %v6571
    %v6644 = vunpack.c.l.b16 %v6575
    %v6645 = vunpack.c.l.b16 %v6578
    %v6646 = vunpack.c.l.b16 %v6582
    %v6647 = vunpack.c.l.b16 %v6585
    %v6648 = vunpack.c.l.b16 %v6589
    %v6649 = vunpack.c.l.b16 %v6592
    %v6650 = vunpack.c.l.b16 %v6596
    %v6651 = vunpack.c.l.b16 %v6599
    %v6652 = vunpack.c.l.b16 %v6603
    %v6653 = vunpack.c.l.b16 %v6606
    %v6654 = vunpack.c.l.b16 %v6610
    %v6655 = vunpack.c.l.b16 %v6613
    %v6656 = vunpack.c.l.b16 %v6617
    %v6657 = vunpack.c.l.b16 %v6620
    %v6658 = vunpack.c.l.b16 %v6624
    %v6659 = vunpack.c.l.b16 %v6627
    %v6660 = vpack.c.b16 %v6629, %v6628
    %v6661 = vpack.c.b16 %v6631, %v6630
    %v6662 = vpack.c.b16 %v6633, %v6632
    %v6663 = vpack.c.b16 %v6635, %v6634
    %v6664 = vpack.c.b16 %v6637, %v6636
    %v6665 = vpack.c.b16 %v6639, %v6638
    %v6666 = vpack.c.b16 %v6641, %v6640
    %v6667 = vpack.c.b16 %v6643, %v6642
    %v6668 = vpack.c.b16 %v6645, %v6644
    %v6669 = vpack.c.b16 %v6647, %v6646
    %v6670 = vpack.c.b16 %v6649, %v6648
    %v6671 = vpack.c.b16 %v6651, %v6650
    %v6672 = vpack.c.b16 %v6653, %v6652
    %v6673 = vpack.c.b16 %v6655, %v6654
    %v6674 = vpack.c.b16 %v6657, %v6656
    %v6675 = vpack.c.b16 %v6659, %v6658
    %v6676 = vpack.c.b16 %v6198, %v6198
    %v6677 = vrot.slane %v6676, 1
    %v6679 = vsel %vm520, %v6660, 0
    %v6682 = vsel %vm520, %v6661, 0
    %v6685 = vsel %vm520, %v6662, 0
    %v6688 = vsel %vm520, %v6663, 0
    %v6691 = vsel %vm520, %v6664, 0
    %v6694 = vsel %vm520, %v6665, 0
    %v6697 = vsel %vm520, %v6666, 0
    %v6700 = vsel %vm520, %v6667, 0
    %v6703 = vsel %vm520, %v6668, 0
    %v6706 = vsel %vm520, %v6669, 0
    %v6709 = vsel %vm520, %v6670, 0
    %v6712 = vsel %vm520, %v6671, 0
    %v6715 = vsel %vm520, %v6672, 0
    %v6718 = vsel %vm520, %v6673, 0
    %v6721 = vsel %vm520, %v6674, 0
    %v6724 = vsel %vm520, %v6675, 0
    %v6727 = vand.u32 %v6677, %v572
    %6729 = vmatprep.subr.bf16.mxu0 0
    %6730 = vmatpush1.bf16.msra.mxu0 0
    %6731 = vmatprep.subr.bf16.mxu0 0
    %6732 = vmatpush1.bf16.msra.mxu0 0
    %6733 = vmatprep.subr.bf16.mxu0 0
    %6734 = vmatpush1.bf16.msra.mxu0 0
    %6735 = vmatprep.subr.bf16.mxu0 0
    %6736 = vmatpush1.bf16.msra.mxu0 0
    %6737 = vmatprep.subr.bf16.mxu0 0
    %6738 = vmatpush1.bf16.msra.mxu0 0
    %6739 = vmatprep.subr.bf16.mxu0 0
    %6740 = vmatpush1.bf16.msra.mxu0 0
    %6741 = vmatprep.subr.bf16.mxu0 0
    %6742 = vmatpush1.bf16.msra.mxu0 0
    %6743 = vmatprep.subr.bf16.mxu0 0
    %6744 = vmatpush1.bf16.msra.mxu0 %v6727
    %6745 = vmatprep.subr.bf16.mxu0 0
    %6746 = vmatpush2.bf16.msra.mxu0 0
    %6747 = vmatprep.subr.bf16.mxu0 0
    %6748 = vmatpush2.bf16.msra.mxu0 0
    %6749 = vmatprep.subr.bf16.mxu0 0
    %6750 = vmatpush2.bf16.msra.mxu0 0
    %6751 = vmatprep.subr.bf16.mxu0 0
    %6752 = vmatpush2.bf16.msra.mxu0 0
    %6753 = vmatprep.subr.bf16.mxu0 0
    %6754 = vmatpush2.bf16.msra.mxu0 0
    %6755 = vmatprep.subr.bf16.mxu0 0
    %6756 = vmatpush2.bf16.msra.mxu0 0
    %6757 = vmatprep.subr.bf16.mxu0 0
    %6758 = vmatpush2.bf16.msra.mxu0 0
    %6759 = vmatprep.subr.bf16.mxu0 0
    %6760 = vmatpush2.bf16.msra.mxu0 0
    %6761 = vmatprep.mubr.bf16.mxu0 0
    %6762 = vmatmul.mubr.bf16.gmra.mxu0 %v6679
    %v6763 = vpop.f32.mrf.mxu0
    %v6764 = vadd.f32 0.0, %v6763
    %v6765 = vpop.f32.mrf.mxu0
    %v6766 = vpop.f32.mrf.mxu0
    %v6767 = vadd.f32 0.0, %v6766
    %v6768 = vpop.f32.mrf.mxu0
    %6769 = vmatprep.mubr.bf16.mxu0 0
    %6770 = vmatmul.mubr.bf16.gmra.mxu0 %v6682
    %v6771 = vpop.f32.mrf.mxu0
    %v6772 = vadd.f32 0.0, %v6771
    %v6773 = vpop.f32.mrf.mxu0
    %v6774 = vpop.f32.mrf.mxu0
    %v6775 = vadd.f32 0.0, %v6774
    %v6776 = vpop.f32.mrf.mxu0
    %6777 = vmatprep.mubr.bf16.mxu0 0
    %6778 = vmatmul.mubr.bf16.gmra.mxu0 %v6685
    %v6779 = vpop.f32.mrf.mxu0
    %v6780 = vadd.f32 0.0, %v6779
    %v6781 = vpop.f32.mrf.mxu0
    %v6782 = vpop.f32.mrf.mxu0
    %v6783 = vadd.f32 0.0, %v6782
    %v6784 = vpop.f32.mrf.mxu0
    %6785 = vmatprep.mubr.bf16.mxu0 0
    %6786 = vmatmul.mubr.bf16.gmra.mxu0 %v6688
    %v6787 = vpop.f32.mrf.mxu0
    %v6788 = vadd.f32 0.0, %v6787
    %v6789 = vpop.f32.mrf.mxu0
    %v6790 = vpop.f32.mrf.mxu0
    %v6791 = vadd.f32 0.0, %v6790
    %v6792 = vpop.f32.mrf.mxu0
    %6793 = vmatprep.mubr.bf16.mxu0 0
    %6794 = vmatmul.mubr.bf16.gmra.mxu0 %v6691
    %v6795 = vpop.f32.mrf.mxu0
    %v6796 = vadd.f32 0.0, %v6795
    %v6797 = vpop.f32.mrf.mxu0
    %v6798 = vpop.f32.mrf.mxu0
    %v6799 = vadd.f32 0.0, %v6798
    %v6800 = vpop.f32.mrf.mxu0
    %6801 = vmatprep.mubr.bf16.mxu0 0
    %6802 = vmatmul.mubr.bf16.gmra.mxu0 %v6694
    %v6803 = vpop.f32.mrf.mxu0
    %v6804 = vadd.f32 0.0, %v6803
    %v6805 = vpop.f32.mrf.mxu0
    %v6806 = vpop.f32.mrf.mxu0
    %v6807 = vadd.f32 0.0, %v6806
    %v6808 = vpop.f32.mrf.mxu0
    %6809 = vmatprep.mubr.bf16.mxu0 0
    %6810 = vmatmul.mubr.bf16.gmra.mxu0 %v6697
    %v6811 = vpop.f32.mrf.mxu0
    %v6812 = vadd.f32 0.0, %v6811
    %v6813 = vpop.f32.mrf.mxu0
    %v6814 = vpop.f32.mrf.mxu0
    %v6815 = vadd.f32 0.0, %v6814
    %v6816 = vpop.f32.mrf.mxu0
    %6817 = vmatprep.mubr.bf16.mxu0 0
    %6818 = vmatmul.mubr.bf16.gmra.mxu0 %v6700
    %v6819 = vpop.f32.mrf.mxu0
    %v6820 = vadd.f32 0.0, %v6819
    %v6821 = vpop.f32.mrf.mxu0
    %v6822 = vpop.f32.mrf.mxu0
    %v6823 = vadd.f32 0.0, %v6822
    %v6824 = vpop.f32.mrf.mxu0
    %6825 = vmatprep.mubr.bf16.mxu0 0
    %6826 = vmatmul.mubr.bf16.gmra.mxu0 %v6703
    %v6827 = vpop.f32.mrf.mxu0
    %v6828 = vadd.f32 0.0, %v6827
    %v6829 = vpop.f32.mrf.mxu0
    %v6830 = vpop.f32.mrf.mxu0
    %v6831 = vadd.f32 0.0, %v6830
    %v6832 = vpop.f32.mrf.mxu0
    %6833 = vmatprep.mubr.bf16.mxu0 0
    %6834 = vmatmul.mubr.bf16.gmra.mxu0 %v6706
    %v6835 = vpop.f32.mrf.mxu0
    %v6836 = vadd.f32 0.0, %v6835
    %v6837 = vpop.f32.mrf.mxu0
    %v6838 = vpop.f32.mrf.mxu0
    %v6839 = vadd.f32 0.0, %v6838
    %v6840 = vpop.f32.mrf.mxu0
    %6841 = vmatprep.mubr.bf16.mxu0 0
    %6842 = vmatmul.mubr.bf16.gmra.mxu0 %v6709
    %v6843 = vpop.f32.mrf.mxu0
    %v6844 = vadd.f32 0.0, %v6843
    %v6845 = vpop.f32.mrf.mxu0
    %v6846 = vpop.f32.mrf.mxu0
    %v6847 = vadd.f32 0.0, %v6846
    %v6848 = vpop.f32.mrf.mxu0
    %6849 = vmatprep.mubr.bf16.mxu0 0
    %6850 = vmatmul.mubr.bf16.gmra.mxu0 %v6712
    %v6851 = vpop.f32.mrf.mxu0
    %v6852 = vadd.f32 0.0, %v6851
    %v6853 = vpop.f32.mrf.mxu0
    %v6854 = vpop.f32.mrf.mxu0
    %v6855 = vadd.f32 0.0, %v6854
    %v6856 = vpop.f32.mrf.mxu0
    %6857 = vmatprep.mubr.bf16.mxu0 0
    %6858 = vmatmul.mubr.bf16.gmra.mxu0 %v6715
    %v6859 = vpop.f32.mrf.mxu0
    %v6860 = vadd.f32 0.0, %v6859
    %v6861 = vpop.f32.mrf.mxu0
    %v6862 = vpop.f32.mrf.mxu0
    %v6863 = vadd.f32 0.0, %v6862
    %v6864 = vpop.f32.mrf.mxu0
    %6865 = vmatprep.mubr.bf16.mxu0 0
    %6866 = vmatmul.mubr.bf16.gmra.mxu0 %v6718
    %v6867 = vpop.f32.mrf.mxu0
    %v6868 = vadd.f32 0.0, %v6867
    %v6869 = vpop.f32.mrf.mxu0
    %v6870 = vpop.f32.mrf.mxu0
    %v6871 = vadd.f32 0.0, %v6870
    %v6872 = vpop.f32.mrf.mxu0
    %6873 = vmatprep.mubr.bf16.mxu0 0
    %6874 = vmatmul.mubr.bf16.gmra.mxu0 %v6721
    %v6875 = vpop.f32.mrf.mxu0
    %v6876 = vadd.f32 0.0, %v6875
    %v6877 = vpop.f32.mrf.mxu0
    %v6878 = vpop.f32.mrf.mxu0
    %v6879 = vadd.f32 0.0, %v6878
    %v6880 = vpop.f32.mrf.mxu0
    %6881 = vmatprep.mubr.bf16.mxu0 0
    %6882 = vmatmul.mubr.bf16.gmra.mxu0 %v6724
    %v6883 = vpop.f32.mrf.mxu0
    %v6884 = vadd.f32 0.0, %v6883
    %v6885 = vpop.f32.mrf.mxu0
    %v6886 = vpop.f32.mrf.mxu0
    %v6887 = vadd.f32 0.0, %v6886
    %v6888 = vpop.f32.mrf.mxu0
    %6889 = vdwg.mxu0
    %v6890 = vadd.f32 %v6420, %v6764
    %v6891 = vadd.f32 %v6421, %v6767
    %v6892 = vadd.f32 %v6422, %v6772
    %v6893 = vadd.f32 %v6423, %v6775
    %v6894 = vadd.f32 %v6424, %v6780
    %v6895 = vadd.f32 %v6425, %v6783
    %v6896 = vadd.f32 %v6426, %v6788
    %v6897 = vadd.f32 %v6427, %v6791
    %v6898 = vadd.f32 %v6428, %v6796
    %v6899 = vadd.f32 %v6429, %v6799
    %v6900 = vadd.f32 %v6430, %v6804
    %v6901 = vadd.f32 %v6431, %v6807
    %v6902 = vadd.f32 %v6432, %v6812
    %v6903 = vadd.f32 %v6433, %v6815
    %v6904 = vadd.f32 %v6434, %v6820
    %v6905 = vadd.f32 %v6435, %v6823
    %v6906 = vadd.f32 %v6436, %v6828
    %v6907 = vadd.f32 %v6437, %v6831
    %v6908 = vadd.f32 %v6438, %v6836
    %v6909 = vadd.f32 %v6439, %v6839
    %v6910 = vadd.f32 %v6440, %v6844
    %v6911 = vadd.f32 %v6441, %v6847
    %v6912 = vadd.f32 %v6442, %v6852
    %v6913 = vadd.f32 %v6443, %v6855
    %v6914 = vadd.f32 %v6444, %v6860
    %v6915 = vadd.f32 %v6445, %v6863
    %v6916 = vadd.f32 %v6446, %v6868
    %v6917 = vadd.f32 %v6447, %v6871
    %v6918 = vadd.f32 %v6448, %v6876
    %v6919 = vadd.f32 %v6449, %v6879
    %v6920 = vadd.f32 %v6450, %v6884
    %v6921 = vadd.f32 %v6451, %v6887
    %v6922 = vld [vmem:[%s5358 + $0x8] sm:$0x3]
    %v6923 = vld [vmem:[%s5358 + $0x14] sm:$0x3]
    %v6924 = vld [vmem:[%s5358 + $0x20] sm:$0x3]
    %v6925 = vld [vmem:[%s5358 + $0x2c] sm:$0x3]
    %v6926 = vld [vmem:[%s5358 + $0x38] sm:$0x3]
    %v6927 = vld [vmem:[%s5358 + $0x44] sm:$0x3]
    %v6928 = vld [vmem:[%s5358 + $0x50] sm:$0x3]
    %v6929 = vld [vmem:[%s5358 + $0x5c] sm:$0x3]
    %v6930 = vld [vmem:[%s5358 + $0x68] sm:$0x3]
    %v6931 = vld [vmem:[%s5358 + $0x74] sm:$0x3]
    %v6932 = vld [vmem:[%s5358 + $0x80] sm:$0x3]
    %v6933 = vld [vmem:[%s5358 + $0x8c] sm:$0x3]
    %v6934 = vld [vmem:[%s5358 + $0x98] sm:$0x3]
    %v6935 = vld [vmem:[%s5358 + $0xa4] sm:$0x3]
    %v6936 = vld [vmem:[%s5358 + $0xb0] sm:$0x3]
    %v6937 = vld [vmem:[%s5358 + $0xbc] sm:$0x3]
    %v6939 = vshrl.u32 %v6452, 16
    %v6941 = vrot.slane %v6939, 5
    %v6942 = vshll.u32 %v6452, 16
    %v6944 = vrot.slane %v6942, 6
    %v6945 = vor.u32 %v6941, %v6944
    %v6946 = vrot.slane %v6945, 4
    %v6947 = vrot.slane %v5777, 5
    %v6948 = vrot.slane %v5773, 6
    %v6949 = vor.u32 %v6947, %v6948
    %v6950 = vsel %vm1504, %v6946, %v6949
    %v6951 = vrot.slane %v6949, 4
    %v6953 = vshrl.u32 %v6922, 16
    %v6955 = vrot.slane %v6953, 5
    %v6956 = vshll.u32 %v6922, 16
    %v6958 = vrot.slane %v6956, 6
    %v6959 = vor.u32 %v6955, %v6958
    %v6960 = vsel %vm1504, %v6951, %v6959
    %v6962 = vshrl.u32 %v6453, 16
    %v6964 = vrot.slane %v6962, 5
    %v6965 = vshll.u32 %v6453, 16
    %v6967 = vrot.slane %v6965, 6
    %v6968 = vor.u32 %v6964, %v6967
    %v6969 = vrot.slane %v6968, 4
    %v6970 = vrot.slane %v5801, 5
    %v6971 = vrot.slane %v5797, 6
    %v6972 = vor.u32 %v6970, %v6971
    %v6973 = vsel %vm1504, %v6969, %v6972
    %v6974 = vrot.slane %v6972, 4
    %v6976 = vshrl.u32 %v6923, 16
    %v6978 = vrot.slane %v6976, 5
    %v6979 = vshll.u32 %v6923, 16
    %v6981 = vrot.slane %v6979, 6
    %v6982 = vor.u32 %v6978, %v6981
    %v6983 = vsel %vm1504, %v6974, %v6982
    %v6985 = vshrl.u32 %v6454, 16
    %v6987 = vrot.slane %v6985, 5
    %v6988 = vshll.u32 %v6454, 16
    %v6990 = vrot.slane %v6988, 6
    %v6991 = vor.u32 %v6987, %v6990
    %v6992 = vrot.slane %v6991, 4
    %v6993 = vrot.slane %v5825, 5
    %v6994 = vrot.slane %v5821, 6
    %v6995 = vor.u32 %v6993, %v6994
    %v6996 = vsel %vm1504, %v6992, %v6995
    %v6997 = vrot.slane %v6995, 4
    %v6999 = vshrl.u32 %v6924, 16
    %v7001 = vrot.slane %v6999, 5
    %v7002 = vshll.u32 %v6924, 16
    %v7004 = vrot.slane %v7002, 6
    %v7005 = vor.u32 %v7001, %v7004
    %v7006 = vsel %vm1504, %v6997, %v7005
    %v7008 = vshrl.u32 %v6455, 16
    %v7010 = vrot.slane %v7008, 5
    %v7011 = vshll.u32 %v6455, 16
    %v7013 = vrot.slane %v7011, 6
    %v7014 = vor.u32 %v7010, %v7013
    %v7015 = vrot.slane %v7014, 4
    %v7016 = vrot.slane %v5849, 5
    %v7017 = vrot.slane %v5845, 6
    %v7018 = vor.u32 %v7016, %v7017
    %v7019 = vsel %vm1504, %v7015, %v7018
    %v7020 = vrot.slane %v7018, 4
    %v7022 = vshrl.u32 %v6925, 16
    %v7024 = vrot.slane %v7022, 5
    %v7025 = vshll.u32 %v6925, 16
    %v7027 = vrot.slane %v7025, 6
    %v7028 = vor.u32 %v7024, %v7027
    %v7029 = vsel %vm1504, %v7020, %v7028
    %v7031 = vshrl.u32 %v6456, 16
    %v7033 = vrot.slane %v7031, 5
    %v7034 = vshll.u32 %v6456, 16
    %v7036 = vrot.slane %v7034, 6
    %v7037 = vor.u32 %v7033, %v7036
    %v7038 = vrot.slane %v7037, 4
    %v7039 = vrot.slane %v5873, 5
    %v7040 = vrot.slane %v5869, 6
    %v7041 = vor.u32 %v7039, %v7040
    %v7042 = vsel %vm1504, %v7038, %v7041
    %v7043 = vrot.slane %v7041, 4
    %v7045 = vshrl.u32 %v6926, 16
    %v7047 = vrot.slane %v7045, 5
    %v7048 = vshll.u32 %v6926, 16
    %v7050 = vrot.slane %v7048, 6
    %v7051 = vor.u32 %v7047, %v7050
    %v7052 = vsel %vm1504, %v7043, %v7051
    %v7054 = vshrl.u32 %v6457, 16
    %v7056 = vrot.slane %v7054, 5
    %v7057 = vshll.u32 %v6457, 16
    %v7059 = vrot.slane %v7057, 6
    %v7060 = vor.u32 %v7056, %v7059
    %v7061 = vrot.slane %v7060, 4
    %v7062 = vrot.slane %v5897, 5
    %v7063 = vrot.slane %v5893, 6
    %v7064 = vor.u32 %v7062, %v7063
    %v7065 = vsel %vm1504, %v7061, %v7064
    %v7066 = vrot.slane %v7064, 4
    %v7068 = vshrl.u32 %v6927, 16
    %v7070 = vrot.slane %v7068, 5
    %v7071 = vshll.u32 %v6927, 16
    %v7073 = vrot.slane %v7071, 6
    %v7074 = vor.u32 %v7070, %v7073
    %v7075 = vsel %vm1504, %v7066, %v7074
    %v7077 = vshrl.u32 %v6458, 16
    %v7079 = vrot.slane %v7077, 5
    %v7080 = vshll.u32 %v6458, 16
    %v7082 = vrot.slane %v7080, 6
    %v7083 = vor.u32 %v7079, %v7082
    %v7084 = vrot.slane %v7083, 4
    %v7085 = vrot.slane %v5921, 5
    %v7086 = vrot.slane %v5917, 6
    %v7087 = vor.u32 %v7085, %v7086
    %v7088 = vsel %vm1504, %v7084, %v7087
    %v7089 = vrot.slane %v7087, 4
    %v7091 = vshrl.u32 %v6928, 16
    %v7093 = vrot.slane %v7091, 5
    %v7094 = vshll.u32 %v6928, 16
    %v7096 = vrot.slane %v7094, 6
    %v7097 = vor.u32 %v7093, %v7096
    %v7098 = vsel %vm1504, %v7089, %v7097
    %v7100 = vshrl.u32 %v6459, 16
    %v7102 = vrot.slane %v7100, 5
    %v7103 = vshll.u32 %v6459, 16
    %v7105 = vrot.slane %v7103, 6
    %v7106 = vor.u32 %v7102, %v7105
    %v7107 = vrot.slane %v7106, 4
    %v7108 = vrot.slane %v5945, 5
    %v7109 = vrot.slane %v5941, 6
    %v7110 = vor.u32 %v7108, %v7109
    %v7111 = vsel %vm1504, %v7107, %v7110
    %v7112 = vrot.slane %v7110, 4
    %v7114 = vshrl.u32 %v6929, 16
    %v7116 = vrot.slane %v7114, 5
    %v7117 = vshll.u32 %v6929, 16
    %v7119 = vrot.slane %v7117, 6
    %v7120 = vor.u32 %v7116, %v7119
    %v7121 = vsel %vm1504, %v7112, %v7120
    %v7123 = vshrl.u32 %v6460, 16
    %v7125 = vrot.slane %v7123, 5
    %v7126 = vshll.u32 %v6460, 16
    %v7128 = vrot.slane %v7126, 6
    %v7129 = vor.u32 %v7125, %v7128
    %v7130 = vrot.slane %v7129, 4
    %v7131 = vrot.slane %v5969, 5
    %v7132 = vrot.slane %v5965, 6
    %v7133 = vor.u32 %v7131, %v7132
    %v7134 = vsel %vm1504, %v7130, %v7133
    %v7135 = vrot.slane %v7133, 4
    %v7137 = vshrl.u32 %v6930, 16
    %v7139 = vrot.slane %v7137, 5
    %v7140 = vshll.u32 %v6930, 16
    %v7142 = vrot.slane %v7140, 6
    %v7143 = vor.u32 %v7139, %v7142
    %v7144 = vsel %vm1504, %v7135, %v7143
    %v7146 = vshrl.u32 %v6461, 16
    %v7148 = vrot.slane %v7146, 5
    %v7149 = vshll.u32 %v6461, 16
    %v7151 = vrot.slane %v7149, 6
    %v7152 = vor.u32 %v7148, %v7151
    %v7153 = vrot.slane %v7152, 4
    %v7154 = vrot.slane %v5993, 5
    %v7155 = vrot.slane %v5989, 6
    %v7156 = vor.u32 %v7154, %v7155
    %v7157 = vsel %vm1504, %v7153, %v7156
    %v7158 = vrot.slane %v7156, 4
    %v7160 = vshrl.u32 %v6931, 16
    %v7162 = vrot.slane %v7160, 5
    %v7163 = vshll.u32 %v6931, 16
    %v7165 = vrot.slane %v7163, 6
    %v7166 = vor.u32 %v7162, %v7165
    %v7167 = vsel %vm1504, %v7158, %v7166
    %v7169 = vshrl.u32 %v6462, 16
    %v7171 = vrot.slane %v7169, 5
    %v7172 = vshll.u32 %v6462, 16
    %v7174 = vrot.slane %v7172, 6
    %v7175 = vor.u32 %v7171, %v7174
    %v7176 = vrot.slane %v7175, 4
    %v7177 = vrot.slane %v6017, 5
    %v7178 = vrot.slane %v6013, 6
    %v7179 = vor.u32 %v7177, %v7178
    %v7180 = vsel %vm1504, %v7176, %v7179
    %v7181 = vrot.slane %v7179, 4
    %v7183 = vshrl.u32 %v6932, 16
    %v7185 = vrot.slane %v7183, 5
    %v7186 = vshll.u32 %v6932, 16
    %v7188 = vrot.slane %v7186, 6
    %v7189 = vor.u32 %v7185, %v7188
    %v7190 = vsel %vm1504, %v7181, %v7189
    %v7192 = vshrl.u32 %v6463, 16
    %v7194 = vrot.slane %v7192, 5
    %v7195 = vshll.u32 %v6463, 16
    %v7197 = vrot.slane %v7195, 6
    %v7198 = vor.u32 %v7194, %v7197
    %v7199 = vrot.slane %v7198, 4
    %v7200 = vrot.slane %v6041, 5
    %v7201 = vrot.slane %v6037, 6
    %v7202 = vor.u32 %v7200, %v7201
    %v7203 = vsel %vm1504, %v7199, %v7202
    %v7204 = vrot.slane %v7202, 4
    %v7206 = vshrl.u32 %v6933, 16
    %v7208 = vrot.slane %v7206, 5
    %v7209 = vshll.u32 %v6933, 16
    %v7211 = vrot.slane %v7209, 6
    %v7212 = vor.u32 %v7208, %v7211
    %v7213 = vsel %vm1504, %v7204, %v7212
    %v7215 = vshrl.u32 %v6464, 16
    %v7217 = vrot.slane %v7215, 5
    %v7218 = vshll.u32 %v6464, 16
    %v7220 = vrot.slane %v7218, 6
    %v7221 = vor.u32 %v7217, %v7220
    %v7222 = vrot.slane %v7221, 4
    %v7223 = vrot.slane %v6065, 5
    %v7224 = vrot.slane %v6061, 6
    %v7225 = vor.u32 %v7223, %v7224
    %v7226 = vsel %vm1504, %v7222, %v7225
    %v7227 = vrot.slane %v7225, 4
    %v7229 = vshrl.u32 %v6934, 16
    %v7231 = vrot.slane %v7229, 5
    %v7232 = vshll.u32 %v6934, 16
    %v7234 = vrot.slane %v7232, 6
    %v7235 = vor.u32 %v7231, %v7234
    %v7236 = vsel %vm1504, %v7227, %v7235
    %v7238 = vshrl.u32 %v6465, 16
    %v7240 = vrot.slane %v7238, 5
    %v7241 = vshll.u32 %v6465, 16
    %v7243 = vrot.slane %v7241, 6
    %v7244 = vor.u32 %v7240, %v7243
    %v7245 = vrot.slane %v7244, 4
    %v7246 = vrot.slane %v6089, 5
    %v7247 = vrot.slane %v6085, 6
    %v7248 = vor.u32 %v7246, %v7247
    %v7249 = vsel %vm1504, %v7245, %v7248
    %v7250 = vrot.slane %v7248, 4
    %v7252 = vshrl.u32 %v6935, 16
    %v7254 = vrot.slane %v7252, 5
    %v7255 = vshll.u32 %v6935, 16
    %v7257 = vrot.slane %v7255, 6
    %v7258 = vor.u32 %v7254, %v7257
    %v7259 = vsel %vm1504, %v7250, %v7258
    %v7261 = vshrl.u32 %v6466, 16
    %v7263 = vrot.slane %v7261, 5
    %v7264 = vshll.u32 %v6466, 16
    %v7266 = vrot.slane %v7264, 6
    %v7267 = vor.u32 %v7263, %v7266
    %v7268 = vrot.slane %v7267, 4
    %v7269 = vrot.slane %v6113, 5
    %v7270 = vrot.slane %v6109, 6
    %v7271 = vor.u32 %v7269, %v7270
    %v7272 = vsel %vm1504, %v7268, %v7271
    %v7273 = vrot.slane %v7271, 4
    %v7275 = vshrl.u32 %v6936, 16
    %v7277 = vrot.slane %v7275, 5
    %v7278 = vshll.u32 %v6936, 16
    %v7280 = vrot.slane %v7278, 6
    %v7281 = vor.u32 %v7277, %v7280
    %v7282 = vsel %vm1504, %v7273, %v7281
    %v7284 = vshrl.u32 %v6467, 16
    %v7286 = vrot.slane %v7284, 5
    %v7287 = vshll.u32 %v6467, 16
    %v7289 = vrot.slane %v7287, 6
    %v7290 = vor.u32 %v7286, %v7289
    %v7291 = vrot.slane %v7290, 4
    %v7292 = vrot.slane %v6137, 5
    %v7293 = vrot.slane %v6133, 6
    %v7294 = vor.u32 %v7292, %v7293
    %v7295 = vsel %vm1504, %v7291, %v7294
    %v7296 = vrot.slane %v7294, 4
    %v7298 = vshrl.u32 %v6937, 16
    %v7300 = vrot.slane %v7298, 5
    %v7301 = vshll.u32 %v6937, 16
    %v7303 = vrot.slane %v7301, 6
    %v7304 = vor.u32 %v7300, %v7303
    %v7305 = vsel %vm1504, %v7296, %v7304
    %v7306 = vunpack.c.l.b16 %v6950
    %v7307 = vunpack.c.l.b16 %v6960
    %v7308 = vunpack.c.l.b16 %v6973
    %v7309 = vunpack.c.l.b16 %v6983
    %v7310 = vunpack.c.l.b16 %v6996
    %v7311 = vunpack.c.l.b16 %v7006
    %v7312 = vunpack.c.l.b16 %v7019
    %v7313 = vunpack.c.l.b16 %v7029
    %v7314 = vunpack.c.l.b16 %v7042
    %v7315 = vunpack.c.l.b16 %v7052
    %v7316 = vunpack.c.l.b16 %v7065
    %v7317 = vunpack.c.l.b16 %v7075
    %v7318 = vunpack.c.l.b16 %v7088
    %v7319 = vunpack.c.l.b16 %v7098
    %v7320 = vunpack.c.l.b16 %v7111
    %v7321 = vunpack.c.l.b16 %v7121
    %v7322 = vunpack.c.l.b16 %v7134
    %v7323 = vunpack.c.l.b16 %v7144
    %v7324 = vunpack.c.l.b16 %v7157
    %v7325 = vunpack.c.l.b16 %v7167
    %v7326 = vunpack.c.l.b16 %v7180
    %v7327 = vunpack.c.l.b16 %v7190
    %v7328 = vunpack.c.l.b16 %v7203
    %v7329 = vunpack.c.l.b16 %v7213
    %v7330 = vunpack.c.l.b16 %v7226
    %v7331 = vunpack.c.l.b16 %v7236
    %v7332 = vunpack.c.l.b16 %v7249
    %v7333 = vunpack.c.l.b16 %v7259
    %v7334 = vunpack.c.l.b16 %v7272
    %v7335 = vunpack.c.l.b16 %v7282
    %v7336 = vunpack.c.l.b16 %v7295
    %v7337 = vunpack.c.l.b16 %v7305
    %v7338 = vpack.c.b16 %v7307, %v7306
    %v7339 = vpack.c.b16 %v7309, %v7308
    %v7340 = vpack.c.b16 %v7311, %v7310
    %v7341 = vpack.c.b16 %v7313, %v7312
    %v7342 = vpack.c.b16 %v7315, %v7314
    %v7343 = vpack.c.b16 %v7317, %v7316
    %v7344 = vpack.c.b16 %v7319, %v7318
    %v7345 = vpack.c.b16 %v7321, %v7320
    %v7346 = vpack.c.b16 %v7323, %v7322
    %v7347 = vpack.c.b16 %v7325, %v7324
    %v7348 = vpack.c.b16 %v7327, %v7326
    %v7349 = vpack.c.b16 %v7329, %v7328
    %v7350 = vpack.c.b16 %v7331, %v7330
    %v7351 = vpack.c.b16 %v7333, %v7332
    %v7352 = vpack.c.b16 %v7335, %v7334
    %v7353 = vpack.c.b16 %v7337, %v7336
    %v7355 = vunpack.c.l.b16 %v5353
    %v7356 = vpack.c.b16 %v7355, %v6198
    %v7358 = vshrl.u32 %v7356, 16
    %v7360 = vrot.slane %v7358, 3
    %v7361 = vshll.u32 %v7356, 16
    %v7363 = vrot.slane %v7361, 4
    %v7364 = vor.u32 %v7360, %v7363
    %v7366 = vsel %vm520, %v7338, 0
    %v7369 = vsel %vm520, %v7339, 0
    %v7372 = vsel %vm520, %v7340, 0
    %v7375 = vsel %vm520, %v7341, 0
    %v7378 = vsel %vm520, %v7342, 0
    %v7381 = vsel %vm520, %v7343, 0
    %v7384 = vsel %vm520, %v7344, 0
    %v7387 = vsel %vm520, %v7345, 0
    %v7390 = vsel %vm520, %v7346, 0
    %v7393 = vsel %vm520, %v7347, 0
    %v7396 = vsel %vm520, %v7348, 0
    %v7399 = vsel %vm520, %v7349, 0
    %v7402 = vsel %vm520, %v7350, 0
    %v7405 = vsel %vm520, %v7351, 0
    %v7408 = vsel %vm520, %v7352, 0
    %v7411 = vsel %vm520, %v7353, 0
    %v7414 = vand.u32 %v7364, %v572
    %7416 = vmatprep.subr.bf16.mxu0 0
    %7417 = vmatpush1.bf16.msra.mxu0 0
    %7418 = vmatprep.subr.bf16.mxu0 0
    %7419 = vmatpush1.bf16.msra.mxu0 0
    %7420 = vmatprep.subr.bf16.mxu0 0
    %7421 = vmatpush1.bf16.msra.mxu0 0
    %7422 = vmatprep.subr.bf16.mxu0 0
    %7423 = vmatpush1.bf16.msra.mxu0 0
    %7424 = vmatprep.subr.bf16.mxu0 0
    %7425 = vmatpush1.bf16.msra.mxu0 0
    %7426 = vmatprep.subr.bf16.mxu0 0
    %7427 = vmatpush1.bf16.msra.mxu0 0
    %7428 = vmatprep.subr.bf16.mxu0 0
    %7429 = vmatpush1.bf16.msra.mxu0 0
    %7430 = vmatprep.subr.bf16.mxu0 0
    %7431 = vmatpush1.bf16.msra.mxu0 %v7414
    %7432 = vmatprep.subr.bf16.mxu0 0
    %7433 = vmatpush2.bf16.msra.mxu0 0
    %7434 = vmatprep.subr.bf16.mxu0 0
    %7435 = vmatpush2.bf16.msra.mxu0 0
    %7436 = vmatprep.subr.bf16.mxu0 0
    %7437 = vmatpush2.bf16.msra.mxu0 0
    %7438 = vmatprep.subr.bf16.mxu0 0
    %7439 = vmatpush2.bf16.msra.mxu0 0
    %7440 = vmatprep.subr.bf16.mxu0 0
    %7441 = vmatpush2.bf16.msra.mxu0 0
    %7442 = vmatprep.subr.bf16.mxu0 0
    %7443 = vmatpush2.bf16.msra.mxu0 0
    %7444 = vmatprep.subr.bf16.mxu0 0
    %7445 = vmatpush2.bf16.msra.mxu0 0
    %7446 = vmatprep.subr.bf16.mxu0 0
    %7447 = vmatpush2.bf16.msra.mxu0 0
    %7448 = vmatprep.mubr.bf16.mxu0 0
    %7449 = vmatmul.mubr.bf16.gmra.mxu0 %v7366
    %v7450 = vpop.f32.mrf.mxu0
    %v7451 = vadd.f32 0.0, %v7450
    %v7452 = vpop.f32.mrf.mxu0
    %v7453 = vpop.f32.mrf.mxu0
    %v7454 = vadd.f32 0.0, %v7453
    %v7455 = vpop.f32.mrf.mxu0
    %7456 = vmatprep.mubr.bf16.mxu0 0
    %7457 = vmatmul.mubr.bf16.gmra.mxu0 %v7369
    %v7458 = vpop.f32.mrf.mxu0
    %v7459 = vadd.f32 0.0, %v7458
    %v7460 = vpop.f32.mrf.mxu0
    %v7461 = vpop.f32.mrf.mxu0
    %v7462 = vadd.f32 0.0, %v7461
    %v7463 = vpop.f32.mrf.mxu0
    %7464 = vmatprep.mubr.bf16.mxu0 0
    %7465 = vmatmul.mubr.bf16.gmra.mxu0 %v7372
    %v7466 = vpop.f32.mrf.mxu0
    %v7467 = vadd.f32 0.0, %v7466
    %v7468 = vpop.f32.mrf.mxu0
    %v7469 = vpop.f32.mrf.mxu0
    %v7470 = vadd.f32 0.0, %v7469
    %v7471 = vpop.f32.mrf.mxu0
    %7472 = vmatprep.mubr.bf16.mxu0 0
    %7473 = vmatmul.mubr.bf16.gmra.mxu0 %v7375
    %v7474 = vpop.f32.mrf.mxu0
    %v7475 = vadd.f32 0.0, %v7474
    %v7476 = vpop.f32.mrf.mxu0
    %v7477 = vpop.f32.mrf.mxu0
    %v7478 = vadd.f32 0.0, %v7477
    %v7479 = vpop.f32.mrf.mxu0
    %7480 = vmatprep.mubr.bf16.mxu0 0
    %7481 = vmatmul.mubr.bf16.gmra.mxu0 %v7378
    %v7482 = vpop.f32.mrf.mxu0
    %v7483 = vadd.f32 0.0, %v7482
    %v7484 = vpop.f32.mrf.mxu0
    %v7485 = vpop.f32.mrf.mxu0
    %v7486 = vadd.f32 0.0, %v7485
    %v7487 = vpop.f32.mrf.mxu0
    %7488 = vmatprep.mubr.bf16.mxu0 0
    %7489 = vmatmul.mubr.bf16.gmra.mxu0 %v7381
    %v7490 = vpop.f32.mrf.mxu0
    %v7491 = vadd.f32 0.0, %v7490
    %v7492 = vpop.f32.mrf.mxu0
    %v7493 = vpop.f32.mrf.mxu0
    %v7494 = vadd.f32 0.0, %v7493
    %v7495 = vpop.f32.mrf.mxu0
    %7496 = vmatprep.mubr.bf16.mxu0 0
    %7497 = vmatmul.mubr.bf16.gmra.mxu0 %v7384
    %v7498 = vpop.f32.mrf.mxu0
    %v7499 = vadd.f32 0.0, %v7498
    %v7500 = vpop.f32.mrf.mxu0
    %v7501 = vpop.f32.mrf.mxu0
    %v7502 = vadd.f32 0.0, %v7501
    %v7503 = vpop.f32.mrf.mxu0
    %7504 = vmatprep.mubr.bf16.mxu0 0
    %7505 = vmatmul.mubr.bf16.gmra.mxu0 %v7387
    %v7506 = vpop.f32.mrf.mxu0
    %v7507 = vadd.f32 0.0, %v7506
    %v7508 = vpop.f32.mrf.mxu0
    %v7509 = vpop.f32.mrf.mxu0
    %v7510 = vadd.f32 0.0, %v7509
    %v7511 = vpop.f32.mrf.mxu0
    %7512 = vmatprep.mubr.bf16.mxu0 0
    %7513 = vmatmul.mubr.bf16.gmra.mxu0 %v7390
    %v7514 = vpop.f32.mrf.mxu0
    %v7515 = vadd.f32 0.0, %v7514
    %v7516 = vpop.f32.mrf.mxu0
    %v7517 = vpop.f32.mrf.mxu0
    %v7518 = vadd.f32 0.0, %v7517
    %v7519 = vpop.f32.mrf.mxu0
    %7520 = vmatprep.mubr.bf16.mxu0 0
    %7521 = vmatmul.mubr.bf16.gmra.mxu0 %v7393
    %v7522 = vpop.f32.mrf.mxu0
    %v7523 = vadd.f32 0.0, %v7522
    %v7524 = vpop.f32.mrf.mxu0
    %v7525 = vpop.f32.mrf.mxu0
    %v7526 = vadd.f32 0.0, %v7525
    %v7527 = vpop.f32.mrf.mxu0
    %7528 = vmatprep.mubr.bf16.mxu0 0
    %7529 = vmatmul.mubr.bf16.gmra.mxu0 %v7396
    %v7530 = vpop.f32.mrf.mxu0
    %v7531 = vadd.f32 0.0, %v7530
    %v7532 = vpop.f32.mrf.mxu0
    %v7533 = vpop.f32.mrf.mxu0
    %v7534 = vadd.f32 0.0, %v7533
    %v7535 = vpop.f32.mrf.mxu0
    %7536 = vmatprep.mubr.bf16.mxu0 0
    %7537 = vmatmul.mubr.bf16.gmra.mxu0 %v7399
    %v7538 = vpop.f32.mrf.mxu0
    %v7539 = vadd.f32 0.0, %v7538
    %v7540 = vpop.f32.mrf.mxu0
    %v7541 = vpop.f32.mrf.mxu0
    %v7542 = vadd.f32 0.0, %v7541
    %v7543 = vpop.f32.mrf.mxu0
    %7544 = vmatprep.mubr.bf16.mxu0 0
    %7545 = vmatmul.mubr.bf16.gmra.mxu0 %v7402
    %v7546 = vpop.f32.mrf.mxu0
    %v7547 = vadd.f32 0.0, %v7546
    %v7548 = vpop.f32.mrf.mxu0
    %v7549 = vpop.f32.mrf.mxu0
    %v7550 = vadd.f32 0.0, %v7549
    %v7551 = vpop.f32.mrf.mxu0
    %7552 = vmatprep.mubr.bf16.mxu0 0
    %7553 = vmatmul.mubr.bf16.gmra.mxu0 %v7405
    %v7554 = vpop.f32.mrf.mxu0
    %v7555 = vadd.f32 0.0, %v7554
    %v7556 = vpop.f32.mrf.mxu0
    %v7557 = vpop.f32.mrf.mxu0
    %v7558 = vadd.f32 0.0, %v7557
    %v7559 = vpop.f32.mrf.mxu0
    %7560 = vmatprep.mubr.bf16.mxu0 0
    %7561 = vmatmul.mubr.bf16.gmra.mxu0 %v7408
    %v7562 = vpop.f32.mrf.mxu0
    %v7563 = vadd.f32 0.0, %v7562
    %v7564 = vpop.f32.mrf.mxu0
    %v7565 = vpop.f32.mrf.mxu0
    %v7566 = vadd.f32 0.0, %v7565
    %v7567 = vpop.f32.mrf.mxu0
    %7568 = vmatprep.mubr.bf16.mxu0 0
    %7569 = vmatmul.mubr.bf16.gmra.mxu0 %v7411
    %v7570 = vpop.f32.mrf.mxu0
    %v7571 = vadd.f32 0.0, %v7570
    %v7572 = vpop.f32.mrf.mxu0
    %v7573 = vpop.f32.mrf.mxu0
    %v7574 = vadd.f32 0.0, %v7573
    %v7575 = vpop.f32.mrf.mxu0
    %7576 = vdwg.mxu0
    %v7577 = vadd.f32 %v6890, %v7451
    %v7578 = vadd.f32 %v6891, %v7454
    %v7579 = vadd.f32 %v6892, %v7459
    %v7580 = vadd.f32 %v6893, %v7462
    %v7581 = vadd.f32 %v6894, %v7467
    %v7582 = vadd.f32 %v6895, %v7470
    %v7583 = vadd.f32 %v6896, %v7475
    %v7584 = vadd.f32 %v6897, %v7478
    %v7585 = vadd.f32 %v6898, %v7483
    %v7586 = vadd.f32 %v6899, %v7486
    %v7587 = vadd.f32 %v6900, %v7491
    %v7588 = vadd.f32 %v6901, %v7494
    %v7589 = vadd.f32 %v6902, %v7499
    %v7590 = vadd.f32 %v6903, %v7502
    %v7591 = vadd.f32 %v6904, %v7507
    %v7592 = vadd.f32 %v6905, %v7510
    %v7593 = vadd.f32 %v6906, %v7515
    %v7594 = vadd.f32 %v6907, %v7518
    %v7595 = vadd.f32 %v6908, %v7523
    %v7596 = vadd.f32 %v6909, %v7526
    %v7597 = vadd.f32 %v6910, %v7531
    %v7598 = vadd.f32 %v6911, %v7534
    %v7599 = vadd.f32 %v6912, %v7539
    %v7600 = vadd.f32 %v6913, %v7542
    %v7601 = vadd.f32 %v6914, %v7547
    %v7602 = vadd.f32 %v6915, %v7550
    %v7603 = vadd.f32 %v6916, %v7555
    %v7604 = vadd.f32 %v6917, %v7558
    %v7605 = vadd.f32 %v6918, %v7563
    %v7606 = vadd.f32 %v6919, %v7566
    %v7607 = vadd.f32 %v6920, %v7571
    %v7608 = vadd.f32 %v6921, %v7574
    %v7609 = vld [vmem:[%s5358] sm:$0xc]
    %v7610 = vld [vmem:[%s5358 + $0xc] sm:$0xc]
    %v7611 = vld [vmem:[%s5358 + $0x18] sm:$0xc]
    %v7612 = vld [vmem:[%s5358 + $0x24] sm:$0xc]
    %v7613 = vld [vmem:[%s5358 + $0x30] sm:$0xc]
    %v7614 = vld [vmem:[%s5358 + $0x3c] sm:$0xc]
    %v7615 = vld [vmem:[%s5358 + $0x48] sm:$0xc]
    %v7616 = vld [vmem:[%s5358 + $0x54] sm:$0xc]
    %v7617 = vld [vmem:[%s5358 + $0x60] sm:$0xc]
    %v7618 = vld [vmem:[%s5358 + $0x6c] sm:$0xc]
    %v7619 = vld [vmem:[%s5358 + $0x78] sm:$0xc]
    %v7620 = vld [vmem:[%s5358 + $0x84] sm:$0xc]
    %v7621 = vld [vmem:[%s5358 + $0x90] sm:$0xc]
    %v7622 = vld [vmem:[%s5358 + $0x9c] sm:$0xc]
    %v7623 = vld [vmem:[%s5358 + $0xa8] sm:$0xc]
    %v7624 = vld [vmem:[%s5358 + $0xb4] sm:$0xc]
    %v7657 = vrot.slane %v7609, 6
    %v7658 = vrot.slane %v7657, 4
    %v7659 = vrot.slane %v5716, 6
    %v7660 = vsel %vm2226, %v7658, %v7659
    %v7661 = vrot.slane %v7659, 4
    %v7662 = vrot.slane %v6922, 6
    %v7663 = vsel %vm2226, %v7661, %v7662
    %v7664 = vrot.slane %v7610, 6
    %v7665 = vrot.slane %v7664, 4
    %v7666 = vrot.slane %v5719, 6
    %v7667 = vsel %vm2226, %v7665, %v7666
    %v7668 = vrot.slane %v7666, 4
    %v7669 = vrot.slane %v6923, 6
    %v7670 = vsel %vm2226, %v7668, %v7669
    %v7671 = vrot.slane %v7611, 6
    %v7672 = vrot.slane %v7671, 4
    %v7673 = vrot.slane %v5722, 6
    %v7674 = vsel %vm2226, %v7672, %v7673
    %v7675 = vrot.slane %v7673, 4
    %v7676 = vrot.slane %v6924, 6
    %v7677 = vsel %vm2226, %v7675, %v7676
    %v7678 = vrot.slane %v7612, 6
    %v7679 = vrot.slane %v7678, 4
    %v7680 = vrot.slane %v5725, 6
    %v7681 = vsel %vm2226, %v7679, %v7680
    %v7682 = vrot.slane %v7680, 4
    %v7683 = vrot.slane %v6925, 6
    %v7684 = vsel %vm2226, %v7682, %v7683
    %v7685 = vrot.slane %v7613, 6
    %v7686 = vrot.slane %v7685, 4
    %v7687 = vrot.slane %v5728, 6
    %v7688 = vsel %vm2226, %v7686, %v7687
    %v7689 = vrot.slane %v7687, 4
    %v7690 = vrot.slane %v6926, 6
    %v7691 = vsel %vm2226, %v7689, %v7690
    %v7692 = vrot.slane %v7614, 6
    %v7693 = vrot.slane %v7692, 4
    %v7694 = vrot.slane %v5731, 6
    %v7695 = vsel %vm2226, %v7693, %v7694
    %v7696 = vrot.slane %v7694, 4
    %v7697 = vrot.slane %v6927, 6
    %v7698 = vsel %vm2226, %v7696, %v7697
    %v7699 = vrot.slane %v7615, 6
    %v7700 = vrot.slane %v7699, 4
    %v7701 = vrot.slane %v5734, 6
    %v7702 = vsel %vm2226, %v7700, %v7701
    %v7703 = vrot.slane %v7701, 4
    %v7704 = vrot.slane %v6928, 6
    %v7705 = vsel %vm2226, %v7703, %v7704
    %v7706 = vrot.slane %v7616, 6
    %v7707 = vrot.slane %v7706, 4
    %v7708 = vrot.slane %v5737, 6
    %v7709 = vsel %vm2226, %v7707, %v7708
    %v7710 = vrot.slane %v7708, 4
    %v7711 = vrot.slane %v6929, 6
    %v7712 = vsel %vm2226, %v7710, %v7711
    %v7713 = vrot.slane %v7617, 6
    %v7714 = vrot.slane %v7713, 4
    %v7715 = vrot.slane %v5740, 6
    %v7716 = vsel %vm2226, %v7714, %v7715
    %v7717 = vrot.slane %v7715, 4
    %v7718 = vrot.slane %v6930, 6
    %v7719 = vsel %vm2226, %v7717, %v7718
    %v7720 = vrot.slane %v7618, 6
    %v7721 = vrot.slane %v7720, 4
    %v7722 = vrot.slane %v5743, 6
    %v7723 = vsel %vm2226, %v7721, %v7722
    %v7724 = vrot.slane %v7722, 4
    %v7725 = vrot.slane %v6931, 6
    %v7726 = vsel %vm2226, %v7724, %v7725
    %v7727 = vrot.slane %v7619, 6
    %v7728 = vrot.slane %v7727, 4
    %v7729 = vrot.slane %v5746, 6
    %v7730 = vsel %vm2226, %v7728, %v7729
    %v7731 = vrot.slane %v7729, 4
    %v7732 = vrot.slane %v6932, 6
    %v7733 = vsel %vm2226, %v7731, %v7732
    %v7734 = vrot.slane %v7620, 6
    %v7735 = vrot.slane %v7734, 4
    %v7736 = vrot.slane %v5749, 6
    %v7737 = vsel %vm2226, %v7735, %v7736
    %v7738 = vrot.slane %v7736, 4
    %v7739 = vrot.slane %v6933, 6
    %v7740 = vsel %vm2226, %v7738, %v7739
    %v7741 = vrot.slane %v7621, 6
    %v7742 = vrot.slane %v7741, 4
    %v7743 = vrot.slane %v5752, 6
    %v7744 = vsel %vm2226, %v7742, %v7743
    %v7745 = vrot.slane %v7743, 4
    %v7746 = vrot.slane %v6934, 6
    %v7747 = vsel %vm2226, %v7745, %v7746
    %v7748 = vrot.slane %v7622, 6
    %v7749 = vrot.slane %v7748, 4
    %v7750 = vrot.slane %v5755, 6
    %v7751 = vsel %vm2226, %v7749, %v7750
    %v7752 = vrot.slane %v7750, 4
    %v7753 = vrot.slane %v6935, 6
    %v7754 = vsel %vm2226, %v7752, %v7753
    %v7755 = vrot.slane %v7623, 6
    %v7756 = vrot.slane %v7755, 4
    %v7757 = vrot.slane %v5758, 6
    %v7758 = vsel %vm2226, %v7756, %v7757
    %v7759 = vrot.slane %v7757, 4
    %v7760 = vrot.slane %v6936, 6
    %v7761 = vsel %vm2226, %v7759, %v7760
    %v7762 = vrot.slane %v7624, 6
    %v7763 = vrot.slane %v7762, 4
    %v7764 = vrot.slane %v5761, 6
    %v7765 = vsel %vm2226, %v7763, %v7764
    %v7766 = vrot.slane %v7764, 4
    %v7767 = vrot.slane %v6937, 6
    %v7768 = vsel %vm2226, %v7766, %v7767
    %v7769 = vunpack.c.l.b16 %v7660
    %v7770 = vunpack.c.l.b16 %v7663
    %v7771 = vunpack.c.l.b16 %v7667
    %v7772 = vunpack.c.l.b16 %v7670
    %v7773 = vunpack.c.l.b16 %v7674
    %v7774 = vunpack.c.l.b16 %v7677
    %v7775 = vunpack.c.l.b16 %v7681
    %v7776 = vunpack.c.l.b16 %v7684
    %v7777 = vunpack.c.l.b16 %v7688
    %v7778 = vunpack.c.l.b16 %v7691
    %v7779 = vunpack.c.l.b16 %v7695
    %v7780 = vunpack.c.l.b16 %v7698
    %v7781 = vunpack.c.l.b16 %v7702
    %v7782 = vunpack.c.l.b16 %v7705
    %v7783 = vunpack.c.l.b16 %v7709
    %v7784 = vunpack.c.l.b16 %v7712
    %v7785 = vunpack.c.l.b16 %v7716
    %v7786 = vunpack.c.l.b16 %v7719
    %v7787 = vunpack.c.l.b16 %v7723
    %v7788 = vunpack.c.l.b16 %v7726
    %v7789 = vunpack.c.l.b16 %v7730
    %v7790 = vunpack.c.l.b16 %v7733
    %v7791 = vunpack.c.l.b16 %v7737
    %v7792 = vunpack.c.l.b16 %v7740
    %v7793 = vunpack.c.l.b16 %v7744
    %v7794 = vunpack.c.l.b16 %v7747
    %v7795 = vunpack.c.l.b16 %v7751
    %v7796 = vunpack.c.l.b16 %v7754
    %v7797 = vunpack.c.l.b16 %v7758
    %v7798 = vunpack.c.l.b16 %v7761
    %v7799 = vunpack.c.l.b16 %v7765
    %v7800 = vunpack.c.l.b16 %v7768
    %v7801 = vpack.c.b16 %v7770, %v7769
    %v7802 = vpack.c.b16 %v7772, %v7771
    %v7803 = vpack.c.b16 %v7774, %v7773
    %v7804 = vpack.c.b16 %v7776, %v7775
    %v7805 = vpack.c.b16 %v7778, %v7777
    %v7806 = vpack.c.b16 %v7780, %v7779
    %v7807 = vpack.c.b16 %v7782, %v7781
    %v7808 = vpack.c.b16 %v7784, %v7783
    %v7809 = vpack.c.b16 %v7786, %v7785
    %v7810 = vpack.c.b16 %v7788, %v7787
    %v7811 = vpack.c.b16 %v7790, %v7789
    %v7812 = vpack.c.b16 %v7792, %v7791
    %v7813 = vpack.c.b16 %v7794, %v7793
    %v7814 = vpack.c.b16 %v7796, %v7795
    %v7815 = vpack.c.b16 %v7798, %v7797
    %v7816 = vpack.c.b16 %v7800, %v7799
    %v7818 = vunpack.c.l.b16 %v5354
    %v7819 = vpack.c.b16 %v7818, %v7355
    %v7820 = vrot.slane %v7819, 2
    %v7822 = vsel %vm520, %v7801, 0
    %v7825 = vsel %vm520, %v7802, 0
    %v7828 = vsel %vm520, %v7803, 0
    %v7831 = vsel %vm520, %v7804, 0
    %v7834 = vsel %vm520, %v7805, 0
    %v7837 = vsel %vm520, %v7806, 0
    %v7840 = vsel %vm520, %v7807, 0
    %v7843 = vsel %vm520, %v7808, 0
    %v7846 = vsel %vm520, %v7809, 0
    %v7849 = vsel %vm520, %v7810, 0
    %v7852 = vsel %vm520, %v7811, 0
    %v7855 = vsel %vm520, %v7812, 0
    %v7858 = vsel %vm520, %v7813, 0
    %v7861 = vsel %vm520, %v7814, 0
    %v7864 = vsel %vm520, %v7815, 0
    %v7867 = vsel %vm520, %v7816, 0
    %v7870 = vand.u32 %v7820, %v572
    %7872 = vmatprep.subr.bf16.mxu0 0
    %7873 = vmatpush1.bf16.msra.mxu0 0
    %7874 = vmatprep.subr.bf16.mxu0 0
    %7875 = vmatpush1.bf16.msra.mxu0 0
    %7876 = vmatprep.subr.bf16.mxu0 0
    %7877 = vmatpush1.bf16.msra.mxu0 0
    %7878 = vmatprep.subr.bf16.mxu0 0
    %7879 = vmatpush1.bf16.msra.mxu0 0
    %7880 = vmatprep.subr.bf16.mxu0 0
    %7881 = vmatpush1.bf16.msra.mxu0 0
    %7882 = vmatprep.subr.bf16.mxu0 0
    %7883 = vmatpush1.bf16.msra.mxu0 0
    %7884 = vmatprep.subr.bf16.mxu0 0
    %7885 = vmatpush1.bf16.msra.mxu0 0
    %7886 = vmatprep.subr.bf16.mxu0 0
    %7887 = vmatpush1.bf16.msra.mxu0 %v7870
    %7888 = vmatprep.subr.bf16.mxu0 0
    %7889 = vmatpush2.bf16.msra.mxu0 0
    %7890 = vmatprep.subr.bf16.mxu0 0
    %7891 = vmatpush2.bf16.msra.mxu0 0
    %7892 = vmatprep.subr.bf16.mxu0 0
    %7893 = vmatpush2.bf16.msra.mxu0 0
    %7894 = vmatprep.subr.bf16.mxu0 0
    %7895 = vmatpush2.bf16.msra.mxu0 0
    %7896 = vmatprep.subr.bf16.mxu0 0
    %7897 = vmatpush2.bf16.msra.mxu0 0
    %7898 = vmatprep.subr.bf16.mxu0 0
    %7899 = vmatpush2.bf16.msra.mxu0 0
    %7900 = vmatprep.subr.bf16.mxu0 0
    %7901 = vmatpush2.bf16.msra.mxu0 0
    %7902 = vmatprep.subr.bf16.mxu0 0
    %7903 = vmatpush2.bf16.msra.mxu0 0
    %7904 = vmatprep.mubr.bf16.mxu0 0
    %7905 = vmatmul.mubr.bf16.gmra.mxu0 %v7822
    %v7906 = vpop.f32.mrf.mxu0
    %v7907 = vadd.f32 0.0, %v7906
    %v7908 = vpop.f32.mrf.mxu0
    %v7909 = vpop.f32.mrf.mxu0
    %v7910 = vadd.f32 0.0, %v7909
    %v7911 = vpop.f32.mrf.mxu0
    %7912 = vmatprep.mubr.bf16.mxu0 0
    %7913 = vmatmul.mubr.bf16.gmra.mxu0 %v7825
    %v7914 = vpop.f32.mrf.mxu0
    %v7915 = vadd.f32 0.0, %v7914
    %v7916 = vpop.f32.mrf.mxu0
    %v7917 = vpop.f32.mrf.mxu0
    %v7918 = vadd.f32 0.0, %v7917
    %v7919 = vpop.f32.mrf.mxu0
    %7920 = vmatprep.mubr.bf16.mxu0 0
    %7921 = vmatmul.mubr.bf16.gmra.mxu0 %v7828
    %v7922 = vpop.f32.mrf.mxu0
    %v7923 = vadd.f32 0.0, %v7922
    %v7924 = vpop.f32.mrf.mxu0
    %v7925 = vpop.f32.mrf.mxu0
    %v7926 = vadd.f32 0.0, %v7925
    %v7927 = vpop.f32.mrf.mxu0
    %7928 = vmatprep.mubr.bf16.mxu0 0
    %7929 = vmatmul.mubr.bf16.gmra.mxu0 %v7831
    %v7930 = vpop.f32.mrf.mxu0
    %v7931 = vadd.f32 0.0, %v7930
    %v7932 = vpop.f32.mrf.mxu0
    %v7933 = vpop.f32.mrf.mxu0
    %v7934 = vadd.f32 0.0, %v7933
    %v7935 = vpop.f32.mrf.mxu0
    %7936 = vmatprep.mubr.bf16.mxu0 0
    %7937 = vmatmul.mubr.bf16.gmra.mxu0 %v7834
    %v7938 = vpop.f32.mrf.mxu0
    %v7939 = vadd.f32 0.0, %v7938
    %v7940 = vpop.f32.mrf.mxu0
    %v7941 = vpop.f32.mrf.mxu0
    %v7942 = vadd.f32 0.0, %v7941
    %v7943 = vpop.f32.mrf.mxu0
    %7944 = vmatprep.mubr.bf16.mxu0 0
    %7945 = vmatmul.mubr.bf16.gmra.mxu0 %v7837
    %v7946 = vpop.f32.mrf.mxu0
    %v7947 = vadd.f32 0.0, %v7946
    %v7948 = vpop.f32.mrf.mxu0
    %v7949 = vpop.f32.mrf.mxu0
    %v7950 = vadd.f32 0.0, %v7949
    %v7951 = vpop.f32.mrf.mxu0
    %7952 = vmatprep.mubr.bf16.mxu0 0
    %7953 = vmatmul.mubr.bf16.gmra.mxu0 %v7840
    %v7954 = vpop.f32.mrf.mxu0
    %v7955 = vadd.f32 0.0, %v7954
    %v7956 = vpop.f32.mrf.mxu0
    %v7957 = vpop.f32.mrf.mxu0
    %v7958 = vadd.f32 0.0, %v7957
    %v7959 = vpop.f32.mrf.mxu0
    %7960 = vmatprep.mubr.bf16.mxu0 0
    %7961 = vmatmul.mubr.bf16.gmra.mxu0 %v7843
    %v7962 = vpop.f32.mrf.mxu0
    %v7963 = vadd.f32 0.0, %v7962
    %v7964 = vpop.f32.mrf.mxu0
    %v7965 = vpop.f32.mrf.mxu0
    %v7966 = vadd.f32 0.0, %v7965
    %v7967 = vpop.f32.mrf.mxu0
    %7968 = vmatprep.mubr.bf16.mxu0 0
    %7969 = vmatmul.mubr.bf16.gmra.mxu0 %v7846
    %v7970 = vpop.f32.mrf.mxu0
    %v7971 = vadd.f32 0.0, %v7970
    %v7972 = vpop.f32.mrf.mxu0
    %v7973 = vpop.f32.mrf.mxu0
    %v7974 = vadd.f32 0.0, %v7973
    %v7975 = vpop.f32.mrf.mxu0
    %7976 = vmatprep.mubr.bf16.mxu0 0
    %7977 = vmatmul.mubr.bf16.gmra.mxu0 %v7849
    %v7978 = vpop.f32.mrf.mxu0
    %v7979 = vadd.f32 0.0, %v7978
    %v7980 = vpop.f32.mrf.mxu0
    %v7981 = vpop.f32.mrf.mxu0
    %v7982 = vadd.f32 0.0, %v7981
    %v7983 = vpop.f32.mrf.mxu0
    %7984 = vmatprep.mubr.bf16.mxu0 0
    %7985 = vmatmul.mubr.bf16.gmra.mxu0 %v7852
    %v7986 = vpop.f32.mrf.mxu0
    %v7987 = vadd.f32 0.0, %v7986
    %v7988 = vpop.f32.mrf.mxu0
    %v7989 = vpop.f32.mrf.mxu0
    %v7990 = vadd.f32 0.0, %v7989
    %v7991 = vpop.f32.mrf.mxu0
    %7992 = vmatprep.mubr.bf16.mxu0 0
    %7993 = vmatmul.mubr.bf16.gmra.mxu0 %v7855
    %v7994 = vpop.f32.mrf.mxu0
    %v7995 = vadd.f32 0.0, %v7994
    %v7996 = vpop.f32.mrf.mxu0
    %v7997 = vpop.f32.mrf.mxu0
    %v7998 = vadd.f32 0.0, %v7997
    %v7999 = vpop.f32.mrf.mxu0
    %8000 = vmatprep.mubr.bf16.mxu0 0
    %8001 = vmatmul.mubr.bf16.gmra.mxu0 %v7858
    %v8002 = vpop.f32.mrf.mxu0
    %v8003 = vadd.f32 0.0, %v8002
    %v8004 = vpop.f32.mrf.mxu0
    %v8005 = vpop.f32.mrf.mxu0
    %v8006 = vadd.f32 0.0, %v8005
    %v8007 = vpop.f32.mrf.mxu0
    %8008 = vmatprep.mubr.bf16.mxu0 0
    %8009 = vmatmul.mubr.bf16.gmra.mxu0 %v7861
    %v8010 = vpop.f32.mrf.mxu0
    %v8011 = vadd.f32 0.0, %v8010
    %v8012 = vpop.f32.mrf.mxu0
    %v8013 = vpop.f32.mrf.mxu0
    %v8014 = vadd.f32 0.0, %v8013
    %v8015 = vpop.f32.mrf.mxu0
    %8016 = vmatprep.mubr.bf16.mxu0 0
    %8017 = vmatmul.mubr.bf16.gmra.mxu0 %v7864
    %v8018 = vpop.f32.mrf.mxu0
    %v8019 = vadd.f32 0.0, %v8018
    %v8020 = vpop.f32.mrf.mxu0
    %v8021 = vpop.f32.mrf.mxu0
    %v8022 = vadd.f32 0.0, %v8021
    %v8023 = vpop.f32.mrf.mxu0
    %8024 = vmatprep.mubr.bf16.mxu0 0
    %8025 = vmatmul.mubr.bf16.gmra.mxu0 %v7867
    %v8026 = vpop.f32.mrf.mxu0
    %v8027 = vadd.f32 0.0, %v8026
    %v8028 = vpop.f32.mrf.mxu0
    %v8029 = vpop.f32.mrf.mxu0
    %v8030 = vadd.f32 0.0, %v8029
    %v8031 = vpop.f32.mrf.mxu0
    %8032 = vdwg.mxu0
    %v8033 = vadd.f32 %v7577, %v7907
    %v8034 = vadd.f32 %v7578, %v7910
    %v8035 = vadd.f32 %v7579, %v7915
    %v8036 = vadd.f32 %v7580, %v7918
    %v8037 = vadd.f32 %v7581, %v7923
    %v8038 = vadd.f32 %v7582, %v7926
    %v8039 = vadd.f32 %v7583, %v7931
    %v8040 = vadd.f32 %v7584, %v7934
    %v8041 = vadd.f32 %v7585, %v7939
    %v8042 = vadd.f32 %v7586, %v7942
    %v8043 = vadd.f32 %v7587, %v7947
    %v8044 = vadd.f32 %v7588, %v7950
    %v8045 = vadd.f32 %v7589, %v7955
    %v8046 = vadd.f32 %v7590, %v7958
    %v8047 = vadd.f32 %v7591, %v7963
    %v8048 = vadd.f32 %v7592, %v7966
    %v8049 = vadd.f32 %v7593, %v7971
    %v8050 = vadd.f32 %v7594, %v7974
    %v8051 = vadd.f32 %v7595, %v7979
    %v8052 = vadd.f32 %v7596, %v7982
    %v8053 = vadd.f32 %v7597, %v7987
    %v8054 = vadd.f32 %v7598, %v7990
    %v8055 = vadd.f32 %v7599, %v7995
    %v8056 = vadd.f32 %v7600, %v7998
    %v8057 = vadd.f32 %v7601, %v8003
    %v8058 = vadd.f32 %v7602, %v8006
    %v8059 = vadd.f32 %v7603, %v8011
    %v8060 = vadd.f32 %v7604, %v8014
    %v8061 = vadd.f32 %v7605, %v8019
    %v8062 = vadd.f32 %v7606, %v8022
    %v8063 = vadd.f32 %v7607, %v8027
    %v8064 = vadd.f32 %v7608, %v8030
    %s8065 = scalar_lea.vmem %s1, 48
    %v8066 = vld [vmem:[%s8065] sm:$0xf]
    %v8067 = vld [vmem:[%s8065 + $0x4] sm:$0xf]
    %v8068 = vld [vmem:[%s8065 + $0x8] sm:$0xf]
    %v8069 = vld [vmem:[%s8065 + $0xc] sm:$0x1]
    %s8070 = sadd.s32 %s16, 3
    %s8071 = smul.u32 %s8070, 3
    %s8072 = smul.addr %s8071, 4
    %s8073 = scalar_lea.vmem %s0, %s8072
    %v8074 = vld [vmem:[%s8073] sm:$0xf]
    %v8075 = vld [vmem:[%s8073 + $0x4] sm:$0xf]
    %v8076 = vld [vmem:[%s8073 + $0xc] sm:$0xf]
    %v8077 = vld [vmem:[%s8073 + $0x10] sm:$0xf]
    %v8078 = vld [vmem:[%s8073 + $0x18] sm:$0xf]
    %v8079 = vld [vmem:[%s8073 + $0x1c] sm:$0xf]
    %v8080 = vld [vmem:[%s8073 + $0x24] sm:$0xf]
    %v8081 = vld [vmem:[%s8073 + $0x28] sm:$0xf]
    %v8082 = vld [vmem:[%s8073 + $0x30] sm:$0xf]
    %v8083 = vld [vmem:[%s8073 + $0x34] sm:$0xf]
    %v8084 = vld [vmem:[%s8073 + $0x3c] sm:$0xf]
    %v8085 = vld [vmem:[%s8073 + $0x40] sm:$0xf]
    %v8086 = vld [vmem:[%s8073 + $0x48] sm:$0xf]
    %v8087 = vld [vmem:[%s8073 + $0x4c] sm:$0xf]
    %v8088 = vld [vmem:[%s8073 + $0x54] sm:$0xf]
    %v8089 = vld [vmem:[%s8073 + $0x58] sm:$0xf]
    %v8090 = vld [vmem:[%s8073 + $0x60] sm:$0xf]
    %v8091 = vld [vmem:[%s8073 + $0x64] sm:$0xf]
    %v8092 = vld [vmem:[%s8073 + $0x6c] sm:$0xf]
    %v8093 = vld [vmem:[%s8073 + $0x70] sm:$0xf]
    %v8094 = vld [vmem:[%s8073 + $0x78] sm:$0xf]
    %v8095 = vld [vmem:[%s8073 + $0x7c] sm:$0xf]
    %v8096 = vld [vmem:[%s8073 + $0x84] sm:$0xf]
    %v8097 = vld [vmem:[%s8073 + $0x88] sm:$0xf]
    %v8098 = vld [vmem:[%s8073 + $0x90] sm:$0xf]
    %v8099 = vld [vmem:[%s8073 + $0x94] sm:$0xf]
    %v8100 = vld [vmem:[%s8073 + $0x9c] sm:$0xf]
    %v8101 = vld [vmem:[%s8073 + $0xa0] sm:$0xf]
    %v8102 = vld [vmem:[%s8073 + $0xa8] sm:$0xf]
    %v8103 = vld [vmem:[%s8073 + $0xac] sm:$0xf]
    %v8104 = vld [vmem:[%s8073 + $0xb4] sm:$0xf]
    %v8105 = vld [vmem:[%s8073 + $0xb8] sm:$0xf]
    %v8138 = vunpack.c.l.b16 %v8074
    %v8139 = vunpack.c.l.b16 %v8075
    %v8140 = vunpack.c.l.b16 %v8076
    %v8141 = vunpack.c.l.b16 %v8077
    %v8142 = vunpack.c.l.b16 %v8078
    %v8143 = vunpack.c.l.b16 %v8079
    %v8144 = vunpack.c.l.b16 %v8080
    %v8145 = vunpack.c.l.b16 %v8081
    %v8146 = vunpack.c.l.b16 %v8082
    %v8147 = vunpack.c.l.b16 %v8083
    %v8148 = vunpack.c.l.b16 %v8084
    %v8149 = vunpack.c.l.b16 %v8085
    %v8150 = vunpack.c.l.b16 %v8086
    %v8151 = vunpack.c.l.b16 %v8087
    %v8152 = vunpack.c.l.b16 %v8088
    %v8153 = vunpack.c.l.b16 %v8089
    %v8154 = vunpack.c.l.b16 %v8090
    %v8155 = vunpack.c.l.b16 %v8091
    %v8156 = vunpack.c.l.b16 %v8092
    %v8157 = vunpack.c.l.b16 %v8093
    %v8158 = vunpack.c.l.b16 %v8094
    %v8159 = vunpack.c.l.b16 %v8095
    %v8160 = vunpack.c.l.b16 %v8096
    %v8161 = vunpack.c.l.b16 %v8097
    %v8162 = vunpack.c.l.b16 %v8098
    %v8163 = vunpack.c.l.b16 %v8099
    %v8164 = vunpack.c.l.b16 %v8100
    %v8165 = vunpack.c.l.b16 %v8101
    %v8166 = vunpack.c.l.b16 %v8102
    %v8167 = vunpack.c.l.b16 %v8103
    %v8168 = vunpack.c.l.b16 %v8104
    %v8169 = vunpack.c.l.b16 %v8105
    %v8170 = vpack.c.b16 %v8139, %v8138
    %v8171 = vpack.c.b16 %v8141, %v8140
    %v8172 = vpack.c.b16 %v8143, %v8142
    %v8173 = vpack.c.b16 %v8145, %v8144
    %v8174 = vpack.c.b16 %v8147, %v8146
    %v8175 = vpack.c.b16 %v8149, %v8148
    %v8176 = vpack.c.b16 %v8151, %v8150
    %v8177 = vpack.c.b16 %v8153, %v8152
    %v8178 = vpack.c.b16 %v8155, %v8154
    %v8179 = vpack.c.b16 %v8157, %v8156
    %v8180 = vpack.c.b16 %v8159, %v8158
    %v8181 = vpack.c.b16 %v8161, %v8160
    %v8182 = vpack.c.b16 %v8163, %v8162
    %v8183 = vpack.c.b16 %v8165, %v8164
    %v8184 = vpack.c.b16 %v8167, %v8166
    %v8185 = vpack.c.b16 %v8169, %v8168
    %v8187 = vsel %vm520, %v8170, 0
    %v8190 = vsel %vm520, %v8171, 0
    %v8193 = vsel %vm520, %v8172, 0
    %v8196 = vsel %vm520, %v8173, 0
    %v8199 = vsel %vm520, %v8174, 0
    %v8202 = vsel %vm520, %v8175, 0
    %v8205 = vsel %vm520, %v8176, 0
    %v8208 = vsel %vm520, %v8177, 0
    %v8211 = vsel %vm520, %v8178, 0
    %v8214 = vsel %vm520, %v8179, 0
    %v8217 = vsel %vm520, %v8180, 0
    %v8220 = vsel %vm520, %v8181, 0
    %v8223 = vsel %vm520, %v8182, 0
    %v8226 = vsel %vm520, %v8183, 0
    %v8229 = vsel %vm520, %v8184, 0
    %v8232 = vsel %vm520, %v8185, 0
    %v8235 = vand.u32 %v8066, %v572
    %8237 = vmatprep.subr.bf16.mxu0 0
    %8238 = vmatpush1.bf16.msra.mxu0 0
    %8239 = vmatprep.subr.bf16.mxu0 0
    %8240 = vmatpush1.bf16.msra.mxu0 0
    %8241 = vmatprep.subr.bf16.mxu0 0
    %8242 = vmatpush1.bf16.msra.mxu0 0
    %8243 = vmatprep.subr.bf16.mxu0 0
    %8244 = vmatpush1.bf16.msra.mxu0 0
    %8245 = vmatprep.subr.bf16.mxu0 0
    %8246 = vmatpush1.bf16.msra.mxu0 0
    %8247 = vmatprep.subr.bf16.mxu0 0
    %8248 = vmatpush1.bf16.msra.mxu0 0
    %8249 = vmatprep.subr.bf16.mxu0 0
    %8250 = vmatpush1.bf16.msra.mxu0 0
    %8251 = vmatprep.subr.bf16.mxu0 0
    %8252 = vmatpush1.bf16.msra.mxu0 %v8235
    %8253 = vmatprep.subr.bf16.mxu0 0
    %8254 = vmatpush2.bf16.msra.mxu0 0
    %8255 = vmatprep.subr.bf16.mxu0 0
    %8256 = vmatpush2.bf16.msra.mxu0 0
    %8257 = vmatprep.subr.bf16.mxu0 0
    %8258 = vmatpush2.bf16.msra.mxu0 0
    %8259 = vmatprep.subr.bf16.mxu0 0
    %8260 = vmatpush2.bf16.msra.mxu0 0
    %8261 = vmatprep.subr.bf16.mxu0 0
    %8262 = vmatpush2.bf16.msra.mxu0 0
    %8263 = vmatprep.subr.bf16.mxu0 0
    %8264 = vmatpush2.bf16.msra.mxu0 0
    %8265 = vmatprep.subr.bf16.mxu0 0
    %8266 = vmatpush2.bf16.msra.mxu0 0
    %8267 = vmatprep.subr.bf16.mxu0 0
    %8268 = vmatpush2.bf16.msra.mxu0 0
    %8269 = vmatprep.mubr.bf16.mxu0 0
    %8270 = vmatmul.mubr.bf16.gmra.mxu0 %v8187
    %v8271 = vpop.f32.mrf.mxu0
    %v8272 = vadd.f32 0.0, %v8271
    %v8273 = vpop.f32.mrf.mxu0
    %v8274 = vpop.f32.mrf.mxu0
    %v8275 = vadd.f32 0.0, %v8274
    %v8276 = vpop.f32.mrf.mxu0
    %8277 = vmatprep.mubr.bf16.mxu0 0
    %8278 = vmatmul.mubr.bf16.gmra.mxu0 %v8190
    %v8279 = vpop.f32.mrf.mxu0
    %v8280 = vadd.f32 0.0, %v8279
    %v8281 = vpop.f32.mrf.mxu0
    %v8282 = vpop.f32.mrf.mxu0
    %v8283 = vadd.f32 0.0, %v8282
    %v8284 = vpop.f32.mrf.mxu0
    %8285 = vmatprep.mubr.bf16.mxu0 0
    %8286 = vmatmul.mubr.bf16.gmra.mxu0 %v8193
    %v8287 = vpop.f32.mrf.mxu0
    %v8288 = vadd.f32 0.0, %v8287
    %v8289 = vpop.f32.mrf.mxu0
    %v8290 = vpop.f32.mrf.mxu0
    %v8291 = vadd.f32 0.0, %v8290
    %v8292 = vpop.f32.mrf.mxu0
    %8293 = vmatprep.mubr.bf16.mxu0 0
    %8294 = vmatmul.mubr.bf16.gmra.mxu0 %v8196
    %v8295 = vpop.f32.mrf.mxu0
    %v8296 = vadd.f32 0.0, %v8295
    %v8297 = vpop.f32.mrf.mxu0
    %v8298 = vpop.f32.mrf.mxu0
    %v8299 = vadd.f32 0.0, %v8298
    %v8300 = vpop.f32.mrf.mxu0
    %8301 = vmatprep.mubr.bf16.mxu0 0
    %8302 = vmatmul.mubr.bf16.gmra.mxu0 %v8199
    %v8303 = vpop.f32.mrf.mxu0
    %v8304 = vadd.f32 0.0, %v8303
    %v8305 = vpop.f32.mrf.mxu0
    %v8306 = vpop.f32.mrf.mxu0
    %v8307 = vadd.f32 0.0, %v8306
    %v8308 = vpop.f32.mrf.mxu0
    %8309 = vmatprep.mubr.bf16.mxu0 0
    %8310 = vmatmul.mubr.bf16.gmra.mxu0 %v8202
    %v8311 = vpop.f32.mrf.mxu0
    %v8312 = vadd.f32 0.0, %v8311
    %v8313 = vpop.f32.mrf.mxu0
    %v8314 = vpop.f32.mrf.mxu0
    %v8315 = vadd.f32 0.0, %v8314
    %v8316 = vpop.f32.mrf.mxu0
    %8317 = vmatprep.mubr.bf16.mxu0 0
    %8318 = vmatmul.mubr.bf16.gmra.mxu0 %v8205
    %v8319 = vpop.f32.mrf.mxu0
    %v8320 = vadd.f32 0.0, %v8319
    %v8321 = vpop.f32.mrf.mxu0
    %v8322 = vpop.f32.mrf.mxu0
    %v8323 = vadd.f32 0.0, %v8322
    %v8324 = vpop.f32.mrf.mxu0
    %8325 = vmatprep.mubr.bf16.mxu0 0
    %8326 = vmatmul.mubr.bf16.gmra.mxu0 %v8208
    %v8327 = vpop.f32.mrf.mxu0
    %v8328 = vadd.f32 0.0, %v8327
    %v8329 = vpop.f32.mrf.mxu0
    %v8330 = vpop.f32.mrf.mxu0
    %v8331 = vadd.f32 0.0, %v8330
    %v8332 = vpop.f32.mrf.mxu0
    %8333 = vmatprep.mubr.bf16.mxu0 0
    %8334 = vmatmul.mubr.bf16.gmra.mxu0 %v8211
    %v8335 = vpop.f32.mrf.mxu0
    %v8336 = vadd.f32 0.0, %v8335
    %v8337 = vpop.f32.mrf.mxu0
    %v8338 = vpop.f32.mrf.mxu0
    %v8339 = vadd.f32 0.0, %v8338
    %v8340 = vpop.f32.mrf.mxu0
    %8341 = vmatprep.mubr.bf16.mxu0 0
    %8342 = vmatmul.mubr.bf16.gmra.mxu0 %v8214
    %v8343 = vpop.f32.mrf.mxu0
    %v8344 = vadd.f32 0.0, %v8343
    %v8345 = vpop.f32.mrf.mxu0
    %v8346 = vpop.f32.mrf.mxu0
    %v8347 = vadd.f32 0.0, %v8346
    %v8348 = vpop.f32.mrf.mxu0
    %8349 = vmatprep.mubr.bf16.mxu0 0
    %8350 = vmatmul.mubr.bf16.gmra.mxu0 %v8217
    %v8351 = vpop.f32.mrf.mxu0
    %v8352 = vadd.f32 0.0, %v8351
    %v8353 = vpop.f32.mrf.mxu0
    %v8354 = vpop.f32.mrf.mxu0
    %v8355 = vadd.f32 0.0, %v8354
    %v8356 = vpop.f32.mrf.mxu0
    %8357 = vmatprep.mubr.bf16.mxu0 0
    %8358 = vmatmul.mubr.bf16.gmra.mxu0 %v8220
    %v8359 = vpop.f32.mrf.mxu0
    %v8360 = vadd.f32 0.0, %v8359
    %v8361 = vpop.f32.mrf.mxu0
    %v8362 = vpop.f32.mrf.mxu0
    %v8363 = vadd.f32 0.0, %v8362
    %v8364 = vpop.f32.mrf.mxu0
    %8365 = vmatprep.mubr.bf16.mxu0 0
    %8366 = vmatmul.mubr.bf16.gmra.mxu0 %v8223
    %v8367 = vpop.f32.mrf.mxu0
    %v8368 = vadd.f32 0.0, %v8367
    %v8369 = vpop.f32.mrf.mxu0
    %v8370 = vpop.f32.mrf.mxu0
    %v8371 = vadd.f32 0.0, %v8370
    %v8372 = vpop.f32.mrf.mxu0
    %8373 = vmatprep.mubr.bf16.mxu0 0
    %8374 = vmatmul.mubr.bf16.gmra.mxu0 %v8226
    %v8375 = vpop.f32.mrf.mxu0
    %v8376 = vadd.f32 0.0, %v8375
    %v8377 = vpop.f32.mrf.mxu0
    %v8378 = vpop.f32.mrf.mxu0
    %v8379 = vadd.f32 0.0, %v8378
    %v8380 = vpop.f32.mrf.mxu0
    %8381 = vmatprep.mubr.bf16.mxu0 0
    %8382 = vmatmul.mubr.bf16.gmra.mxu0 %v8229
    %v8383 = vpop.f32.mrf.mxu0
    %v8384 = vadd.f32 0.0, %v8383
    %v8385 = vpop.f32.mrf.mxu0
    %v8386 = vpop.f32.mrf.mxu0
    %v8387 = vadd.f32 0.0, %v8386
    %v8388 = vpop.f32.mrf.mxu0
    %8389 = vmatprep.mubr.bf16.mxu0 0
    %8390 = vmatmul.mubr.bf16.gmra.mxu0 %v8232
    %v8391 = vpop.f32.mrf.mxu0
    %v8392 = vadd.f32 0.0, %v8391
    %v8393 = vpop.f32.mrf.mxu0
    %v8394 = vpop.f32.mrf.mxu0
    %v8395 = vadd.f32 0.0, %v8394
    %v8396 = vpop.f32.mrf.mxu0
    %8397 = vdwg.mxu0
    %v8398 = vadd.f32 %v8033, %v8272
    %v8399 = vadd.f32 %v8034, %v8275
    %v8400 = vadd.f32 %v8035, %v8280
    %v8401 = vadd.f32 %v8036, %v8283
    %v8402 = vadd.f32 %v8037, %v8288
    %v8403 = vadd.f32 %v8038, %v8291
    %v8404 = vadd.f32 %v8039, %v8296
    %v8405 = vadd.f32 %v8040, %v8299
    %v8406 = vadd.f32 %v8041, %v8304
    %v8407 = vadd.f32 %v8042, %v8307
    %v8408 = vadd.f32 %v8043, %v8312
    %v8409 = vadd.f32 %v8044, %v8315
    %v8410 = vadd.f32 %v8045, %v8320
    %v8411 = vadd.f32 %v8046, %v8323
    %v8412 = vadd.f32 %v8047, %v8328
    %v8413 = vadd.f32 %v8048, %v8331
    %v8414 = vadd.f32 %v8049, %v8336
    %v8415 = vadd.f32 %v8050, %v8339
    %v8416 = vadd.f32 %v8051, %v8344
    %v8417 = vadd.f32 %v8052, %v8347
    %v8418 = vadd.f32 %v8053, %v8352
    %v8419 = vadd.f32 %v8054, %v8355
    %v8420 = vadd.f32 %v8055, %v8360
    %v8421 = vadd.f32 %v8056, %v8363
    %v8422 = vadd.f32 %v8057, %v8368
    %v8423 = vadd.f32 %v8058, %v8371
    %v8424 = vadd.f32 %v8059, %v8376
    %v8425 = vadd.f32 %v8060, %v8379
    %v8426 = vadd.f32 %v8061, %v8384
    %v8427 = vadd.f32 %v8062, %v8387
    %v8428 = vadd.f32 %v8063, %v8392
    %v8429 = vadd.f32 %v8064, %v8395
    %v8430 = vld [vmem:[%s8073] sm:$0xf]
    %v8431 = vld [vmem:[%s8073 + $0x4] sm:$0xf]
    %v8432 = vld [vmem:[%s8073 + $0x8] sm:$0x1]
    %v8433 = vld [vmem:[%s8073 + $0xc] sm:$0xf]
    %v8434 = vld [vmem:[%s8073 + $0x10] sm:$0xf]
    %v8435 = vld [vmem:[%s8073 + $0x14] sm:$0x1]
    %v8436 = vld [vmem:[%s8073 + $0x18] sm:$0xf]
    %v8437 = vld [vmem:[%s8073 + $0x1c] sm:$0xf]
    %v8438 = vld [vmem:[%s8073 + $0x20] sm:$0x1]
    %v8439 = vld [vmem:[%s8073 + $0x24] sm:$0xf]
    %v8440 = vld [vmem:[%s8073 + $0x28] sm:$0xf]
    %v8441 = vld [vmem:[%s8073 + $0x2c] sm:$0x1]
    %v8442 = vld [vmem:[%s8073 + $0x30] sm:$0xf]
    %v8443 = vld [vmem:[%s8073 + $0x34] sm:$0xf]
    %v8444 = vld [vmem:[%s8073 + $0x38] sm:$0x1]
    %v8445 = vld [vmem:[%s8073 + $0x3c] sm:$0xf]
    %v8446 = vld [vmem:[%s8073 + $0x40] sm:$0xf]
    %v8447 = vld [vmem:[%s8073 + $0x44] sm:$0x1]
    %v8448 = vld [vmem:[%s8073 + $0x48] sm:$0xf]
    %v8449 = vld [vmem:[%s8073 + $0x4c] sm:$0xf]
    %v8450 = vld [vmem:[%s8073 + $0x50] sm:$0x1]
    %v8451 = vld [vmem:[%s8073 + $0x54] sm:$0xf]
    %v8452 = vld [vmem:[%s8073 + $0x58] sm:$0xf]
    %v8453 = vld [vmem:[%s8073 + $0x5c] sm:$0x1]
    %v8454 = vld [vmem:[%s8073 + $0x60] sm:$0xf]
    %v8455 = vld [vmem:[%s8073 + $0x64] sm:$0xf]
    %v8456 = vld [vmem:[%s8073 + $0x68] sm:$0x1]
    %v8457 = vld [vmem:[%s8073 + $0x6c] sm:$0xf]
    %v8458 = vld [vmem:[%s8073 + $0x70] sm:$0xf]
    %v8459 = vld [vmem:[%s8073 + $0x74] sm:$0x1]
    %v8460 = vld [vmem:[%s8073 + $0x78] sm:$0xf]
    %v8461 = vld [vmem:[%s8073 + $0x7c] sm:$0xf]
    %v8462 = vld [vmem:[%s8073 + $0x80] sm:$0x1]
    %v8463 = vld [vmem:[%s8073 + $0x84] sm:$0xf]
    %v8464 = vld [vmem:[%s8073 + $0x88] sm:$0xf]
    %v8465 = vld [vmem:[%s8073 + $0x8c] sm:$0x1]
    %v8466 = vld [vmem:[%s8073 + $0x90] sm:$0xf]
    %v8467 = vld [vmem:[%s8073 + $0x94] sm:$0xf]
    %v8468 = vld [vmem:[%s8073 + $0x98] sm:$0x1]
    %v8469 = vld [vmem:[%s8073 + $0x9c] sm:$0xf]
    %v8470 = vld [vmem:[%s8073 + $0xa0] sm:$0xf]
    %v8471 = vld [vmem:[%s8073 + $0xa4] sm:$0x1]
    %v8472 = vld [vmem:[%s8073 + $0xa8] sm:$0xf]
    %v8473 = vld [vmem:[%s8073 + $0xac] sm:$0xf]
    %v8474 = vld [vmem:[%s8073 + $0xb0] sm:$0x1]
    %v8475 = vld [vmem:[%s8073 + $0xb4] sm:$0xf]
    %v8476 = vld [vmem:[%s8073 + $0xb8] sm:$0xf]
    %v8477 = vld [vmem:[%s8073 + $0xbc] sm:$0x1]
    %v8479 = vshrl.u32 %v8430, 16
    %v8481 = vrot.slane %v8479, 4
    %v8482 = vshll.u32 %v8430, 16
    %v8484 = vrot.slane %v8482, 5
    %v8485 = vor.u32 %v8481, %v8484
    %v8486 = vrot.slane %v8485, 4
    %v8488 = vshll.u32 %v8431, 16
    %v8490 = vrot.slane %v8488, 5
    %v8491 = vsel %vm74, %v8486, %v8490
    %v8492 = vshrl.u32 %v8431, 16
    %v8494 = vrot.slane %v8492, 4
    %v8495 = vor.u32 %v8494, %v8490
    %v8496 = vrot.slane %v8495, 4
    %v8498 = vshll.u32 %v8432, 16
    %v8500 = vrot.slane %v8498, 5
    %v8501 = vsel %vm74, %v8496, %v8500
    %v8503 = vshrl.u32 %v8433, 16
    %v8505 = vrot.slane %v8503, 4
    %v8506 = vshll.u32 %v8433, 16
    %v8508 = vrot.slane %v8506, 5
    %v8509 = vor.u32 %v8505, %v8508
    %v8510 = vrot.slane %v8509, 4
    %v8512 = vshll.u32 %v8434, 16
    %v8514 = vrot.slane %v8512, 5
    %v8515 = vsel %vm74, %v8510, %v8514
    %v8516 = vshrl.u32 %v8434, 16
    %v8518 = vrot.slane %v8516, 4
    %v8519 = vor.u32 %v8518, %v8514
    %v8520 = vrot.slane %v8519, 4
    %v8522 = vshll.u32 %v8435, 16
    %v8524 = vrot.slane %v8522, 5
    %v8525 = vsel %vm74, %v8520, %v8524
    %v8527 = vshrl.u32 %v8436, 16
    %v8529 = vrot.slane %v8527, 4
    %v8530 = vshll.u32 %v8436, 16
    %v8532 = vrot.slane %v8530, 5
    %v8533 = vor.u32 %v8529, %v8532
    %v8534 = vrot.slane %v8533, 4
    %v8536 = vshll.u32 %v8437, 16
    %v8538 = vrot.slane %v8536, 5
    %v8539 = vsel %vm74, %v8534, %v8538
    %v8540 = vshrl.u32 %v8437, 16
    %v8542 = vrot.slane %v8540, 4
    %v8543 = vor.u32 %v8542, %v8538
    %v8544 = vrot.slane %v8543, 4
    %v8546 = vshll.u32 %v8438, 16
    %v8548 = vrot.slane %v8546, 5
    %v8549 = vsel %vm74, %v8544, %v8548
    %v8551 = vshrl.u32 %v8439, 16
    %v8553 = vrot.slane %v8551, 4
    %v8554 = vshll.u32 %v8439, 16
    %v8556 = vrot.slane %v8554, 5
    %v8557 = vor.u32 %v8553, %v8556
    %v8558 = vrot.slane %v8557, 4
    %v8560 = vshll.u32 %v8440, 16
    %v8562 = vrot.slane %v8560, 5
    %v8563 = vsel %vm74, %v8558, %v8562
    %v8564 = vshrl.u32 %v8440, 16
    %v8566 = vrot.slane %v8564, 4
    %v8567 = vor.u32 %v8566, %v8562
    %v8568 = vrot.slane %v8567, 4
    %v8570 = vshll.u32 %v8441, 16
    %v8572 = vrot.slane %v8570, 5
    %v8573 = vsel %vm74, %v8568, %v8572
    %v8575 = vshrl.u32 %v8442, 16
    %v8577 = vrot.slane %v8575, 4
    %v8578 = vshll.u32 %v8442, 16
    %v8580 = vrot.slane %v8578, 5
    %v8581 = vor.u32 %v8577, %v8580
    %v8582 = vrot.slane %v8581, 4
    %v8584 = vshll.u32 %v8443, 16
    %v8586 = vrot.slane %v8584, 5
    %v8587 = vsel %vm74, %v8582, %v8586
    %v8588 = vshrl.u32 %v8443, 16
    %v8590 = vrot.slane %v8588, 4
    %v8591 = vor.u32 %v8590, %v8586
    %v8592 = vrot.slane %v8591, 4
    %v8594 = vshll.u32 %v8444, 16
    %v8596 = vrot.slane %v8594, 5
    %v8597 = vsel %vm74, %v8592, %v8596
    %v8599 = vshrl.u32 %v8445, 16
    %v8601 = vrot.slane %v8599, 4
    %v8602 = vshll.u32 %v8445, 16
    %v8604 = vrot.slane %v8602, 5
    %v8605 = vor.u32 %v8601, %v8604
    %v8606 = vrot.slane %v8605, 4
    %v8608 = vshll.u32 %v8446, 16
    %v8610 = vrot.slane %v8608, 5
    %v8611 = vsel %vm74, %v8606, %v8610
    %v8612 = vshrl.u32 %v8446, 16
    %v8614 = vrot.slane %v8612, 4
    %v8615 = vor.u32 %v8614, %v8610
    %v8616 = vrot.slane %v8615, 4
    %v8618 = vshll.u32 %v8447, 16
    %v8620 = vrot.slane %v8618, 5
    %v8621 = vsel %vm74, %v8616, %v8620
    %v8623 = vshrl.u32 %v8448, 16
    %v8625 = vrot.slane %v8623, 4
    %v8626 = vshll.u32 %v8448, 16
    %v8628 = vrot.slane %v8626, 5
    %v8629 = vor.u32 %v8625, %v8628
    %v8630 = vrot.slane %v8629, 4
    %v8632 = vshll.u32 %v8449, 16
    %v8634 = vrot.slane %v8632, 5
    %v8635 = vsel %vm74, %v8630, %v8634
    %v8636 = vshrl.u32 %v8449, 16
    %v8638 = vrot.slane %v8636, 4
    %v8639 = vor.u32 %v8638, %v8634
    %v8640 = vrot.slane %v8639, 4
    %v8642 = vshll.u32 %v8450, 16
    %v8644 = vrot.slane %v8642, 5
    %v8645 = vsel %vm74, %v8640, %v8644
    %v8647 = vshrl.u32 %v8451, 16
    %v8649 = vrot.slane %v8647, 4
    %v8650 = vshll.u32 %v8451, 16
    %v8652 = vrot.slane %v8650, 5
    %v8653 = vor.u32 %v8649, %v8652
    %v8654 = vrot.slane %v8653, 4
    %v8656 = vshll.u32 %v8452, 16
    %v8658 = vrot.slane %v8656, 5
    %v8659 = vsel %vm74, %v8654, %v8658
    %v8660 = vshrl.u32 %v8452, 16
    %v8662 = vrot.slane %v8660, 4
    %v8663 = vor.u32 %v8662, %v8658
    %v8664 = vrot.slane %v8663, 4
    %v8666 = vshll.u32 %v8453, 16
    %v8668 = vrot.slane %v8666, 5
    %v8669 = vsel %vm74, %v8664, %v8668
    %v8671 = vshrl.u32 %v8454, 16
    %v8673 = vrot.slane %v8671, 4
    %v8674 = vshll.u32 %v8454, 16
    %v8676 = vrot.slane %v8674, 5
    %v8677 = vor.u32 %v8673, %v8676
    %v8678 = vrot.slane %v8677, 4
    %v8680 = vshll.u32 %v8455, 16
    %v8682 = vrot.slane %v8680, 5
    %v8683 = vsel %vm74, %v8678, %v8682
    %v8684 = vshrl.u32 %v8455, 16
    %v8686 = vrot.slane %v8684, 4
    %v8687 = vor.u32 %v8686, %v8682
    %v8688 = vrot.slane %v8687, 4
    %v8690 = vshll.u32 %v8456, 16
    %v8692 = vrot.slane %v8690, 5
    %v8693 = vsel %vm74, %v8688, %v8692
    %v8695 = vshrl.u32 %v8457, 16
    %v8697 = vrot.slane %v8695, 4
    %v8698 = vshll.u32 %v8457, 16
    %v8700 = vrot.slane %v8698, 5
    %v8701 = vor.u32 %v8697, %v8700
    %v8702 = vrot.slane %v8701, 4
    %v8704 = vshll.u32 %v8458, 16
    %v8706 = vrot.slane %v8704, 5
    %v8707 = vsel %vm74, %v8702, %v8706
    %v8708 = vshrl.u32 %v8458, 16
    %v8710 = vrot.slane %v8708, 4
    %v8711 = vor.u32 %v8710, %v8706
    %v8712 = vrot.slane %v8711, 4
    %v8714 = vshll.u32 %v8459, 16
    %v8716 = vrot.slane %v8714, 5
    %v8717 = vsel %vm74, %v8712, %v8716
    %v8719 = vshrl.u32 %v8460, 16
    %v8721 = vrot.slane %v8719, 4
    %v8722 = vshll.u32 %v8460, 16
    %v8724 = vrot.slane %v8722, 5
    %v8725 = vor.u32 %v8721, %v8724
    %v8726 = vrot.slane %v8725, 4
    %v8728 = vshll.u32 %v8461, 16
    %v8730 = vrot.slane %v8728, 5
    %v8731 = vsel %vm74, %v8726, %v8730
    %v8732 = vshrl.u32 %v8461, 16
    %v8734 = vrot.slane %v8732, 4
    %v8735 = vor.u32 %v8734, %v8730
    %v8736 = vrot.slane %v8735, 4
    %v8738 = vshll.u32 %v8462, 16
    %v8740 = vrot.slane %v8738, 5
    %v8741 = vsel %vm74, %v8736, %v8740
    %v8743 = vshrl.u32 %v8463, 16
    %v8745 = vrot.slane %v8743, 4
    %v8746 = vshll.u32 %v8463, 16
    %v8748 = vrot.slane %v8746, 5
    %v8749 = vor.u32 %v8745, %v8748
    %v8750 = vrot.slane %v8749, 4
    %v8752 = vshll.u32 %v8464, 16
    %v8754 = vrot.slane %v8752, 5
    %v8755 = vsel %vm74, %v8750, %v8754
    %v8756 = vshrl.u32 %v8464, 16
    %v8758 = vrot.slane %v8756, 4
    %v8759 = vor.u32 %v8758, %v8754
    %v8760 = vrot.slane %v8759, 4
    %v8762 = vshll.u32 %v8465, 16
    %v8764 = vrot.slane %v8762, 5
    %v8765 = vsel %vm74, %v8760, %v8764
    %v8767 = vshrl.u32 %v8466, 16
    %v8769 = vrot.slane %v8767, 4
    %v8770 = vshll.u32 %v8466, 16
    %v8772 = vrot.slane %v8770, 5
    %v8773 = vor.u32 %v8769, %v8772
    %v8774 = vrot.slane %v8773, 4
    %v8776 = vshll.u32 %v8467, 16
    %v8778 = vrot.slane %v8776, 5
    %v8779 = vsel %vm74, %v8774, %v8778
    %v8780 = vshrl.u32 %v8467, 16
    %v8782 = vrot.slane %v8780, 4
    %v8783 = vor.u32 %v8782, %v8778
    %v8784 = vrot.slane %v8783, 4
    %v8786 = vshll.u32 %v8468, 16
    %v8788 = vrot.slane %v8786, 5
    %v8789 = vsel %vm74, %v8784, %v8788
    %v8791 = vshrl.u32 %v8469, 16
    %v8793 = vrot.slane %v8791, 4
    %v8794 = vshll.u32 %v8469, 16
    %v8796 = vrot.slane %v8794, 5
    %v8797 = vor.u32 %v8793, %v8796
    %v8798 = vrot.slane %v8797, 4
    %v8800 = vshll.u32 %v8470, 16
    %v8802 = vrot.slane %v8800, 5
    %v8803 = vsel %vm74, %v8798, %v8802
    %v8804 = vshrl.u32 %v8470, 16
    %v8806 = vrot.slane %v8804, 4
    %v8807 = vor.u32 %v8806, %v8802
    %v8808 = vrot.slane %v8807, 4
    %v8810 = vshll.u32 %v8471, 16
    %v8812 = vrot.slane %v8810, 5
    %v8813 = vsel %vm74, %v8808, %v8812
    %v8815 = vshrl.u32 %v8472, 16
    %v8817 = vrot.slane %v8815, 4
    %v8818 = vshll.u32 %v8472, 16
    %v8820 = vrot.slane %v8818, 5
    %v8821 = vor.u32 %v8817, %v8820
    %v8822 = vrot.slane %v8821, 4
    %v8824 = vshll.u32 %v8473, 16
    %v8826 = vrot.slane %v8824, 5
    %v8827 = vsel %vm74, %v8822, %v8826
    %v8828 = vshrl.u32 %v8473, 16
    %v8830 = vrot.slane %v8828, 4
    %v8831 = vor.u32 %v8830, %v8826
    %v8832 = vrot.slane %v8831, 4
    %v8834 = vshll.u32 %v8474, 16
    %v8836 = vrot.slane %v8834, 5
    %v8837 = vsel %vm74, %v8832, %v8836
    %v8839 = vshrl.u32 %v8475, 16
    %v8841 = vrot.slane %v8839, 4
    %v8842 = vshll.u32 %v8475, 16
    %v8844 = vrot.slane %v8842, 5
    %v8845 = vor.u32 %v8841, %v8844
    %v8846 = vrot.slane %v8845, 4
    %v8848 = vshll.u32 %v8476, 16
    %v8850 = vrot.slane %v8848, 5
    %v8851 = vsel %vm74, %v8846, %v8850
    %v8852 = vshrl.u32 %v8476, 16
    %v8854 = vrot.slane %v8852, 4
    %v8855 = vor.u32 %v8854, %v8850
    %v8856 = vrot.slane %v8855, 4
    %v8858 = vshll.u32 %v8477, 16
    %v8860 = vrot.slane %v8858, 5
    %v8861 = vsel %vm74, %v8856, %v8860
    %v8862 = vunpack.c.l.b16 %v8491
    %v8863 = vunpack.c.l.b16 %v8501
    %v8864 = vunpack.c.l.b16 %v8515
    %v8865 = vunpack.c.l.b16 %v8525
    %v8866 = vunpack.c.l.b16 %v8539
    %v8867 = vunpack.c.l.b16 %v8549
    %v8868 = vunpack.c.l.b16 %v8563
    %v8869 = vunpack.c.l.b16 %v8573
    %v8870 = vunpack.c.l.b16 %v8587
    %v8871 = vunpack.c.l.b16 %v8597
    %v8872 = vunpack.c.l.b16 %v8611
    %v8873 = vunpack.c.l.b16 %v8621
    %v8874 = vunpack.c.l.b16 %v8635
    %v8875 = vunpack.c.l.b16 %v8645
    %v8876 = vunpack.c.l.b16 %v8659
    %v8877 = vunpack.c.l.b16 %v8669
    %v8878 = vunpack.c.l.b16 %v8683
    %v8879 = vunpack.c.l.b16 %v8693
    %v8880 = vunpack.c.l.b16 %v8707
    %v8881 = vunpack.c.l.b16 %v8717
    %v8882 = vunpack.c.l.b16 %v8731
    %v8883 = vunpack.c.l.b16 %v8741
    %v8884 = vunpack.c.l.b16 %v8755
    %v8885 = vunpack.c.l.b16 %v8765
    %v8886 = vunpack.c.l.b16 %v8779
    %v8887 = vunpack.c.l.b16 %v8789
    %v8888 = vunpack.c.l.b16 %v8803
    %v8889 = vunpack.c.l.b16 %v8813
    %v8890 = vunpack.c.l.b16 %v8827
    %v8891 = vunpack.c.l.b16 %v8837
    %v8892 = vunpack.c.l.b16 %v8851
    %v8893 = vunpack.c.l.b16 %v8861
    %v8894 = vpack.c.b16 %v8863, %v8862
    %v8895 = vpack.c.b16 %v8865, %v8864
    %v8896 = vpack.c.b16 %v8867, %v8866
    %v8897 = vpack.c.b16 %v8869, %v8868
    %v8898 = vpack.c.b16 %v8871, %v8870
    %v8899 = vpack.c.b16 %v8873, %v8872
    %v8900 = vpack.c.b16 %v8875, %v8874
    %v8901 = vpack.c.b16 %v8877, %v8876
    %v8902 = vpack.c.b16 %v8879, %v8878
    %v8903 = vpack.c.b16 %v8881, %v8880
    %v8904 = vpack.c.b16 %v8883, %v8882
    %v8905 = vpack.c.b16 %v8885, %v8884
    %v8906 = vpack.c.b16 %v8887, %v8886
    %v8907 = vpack.c.b16 %v8889, %v8888
    %v8908 = vpack.c.b16 %v8891, %v8890
    %v8909 = vpack.c.b16 %v8893, %v8892
    %v8912 = vunpack.c.l.b16 %v8066
    %v8913 = vunpack.c.l.b16 %v8067
    %v8914 = vpack.c.b16 %v8913, %v8912
    %v8916 = vshrl.u32 %v8914, 16
    %v8918 = vrot.slane %v8916, 2
    %v8919 = vshll.u32 %v8914, 16
    %v8921 = vrot.slane %v8919, 3
    %v8922 = vor.u32 %v8918, %v8921
    %v8924 = vsel %vm520, %v8894, 0
    %v8927 = vsel %vm520, %v8895, 0
    %v8930 = vsel %vm520, %v8896, 0
    %v8933 = vsel %vm520, %v8897, 0
    %v8936 = vsel %vm520, %v8898, 0
    %v8939 = vsel %vm520, %v8899, 0
    %v8942 = vsel %vm520, %v8900, 0
    %v8945 = vsel %vm520, %v8901, 0
    %v8948 = vsel %vm520, %v8902, 0
    %v8951 = vsel %vm520, %v8903, 0
    %v8954 = vsel %vm520, %v8904, 0
    %v8957 = vsel %vm520, %v8905, 0
    %v8960 = vsel %vm520, %v8906, 0
    %v8963 = vsel %vm520, %v8907, 0
    %v8966 = vsel %vm520, %v8908, 0
    %v8969 = vsel %vm520, %v8909, 0
    %v8972 = vand.u32 %v8922, %v572
    %8974 = vmatprep.subr.bf16.mxu0 0
    %8975 = vmatpush1.bf16.msra.mxu0 0
    %8976 = vmatprep.subr.bf16.mxu0 0
    %8977 = vmatpush1.bf16.msra.mxu0 0
    %8978 = vmatprep.subr.bf16.mxu0 0
    %8979 = vmatpush1.bf16.msra.mxu0 0
    %8980 = vmatprep.subr.bf16.mxu0 0
    %8981 = vmatpush1.bf16.msra.mxu0 0
    %8982 = vmatprep.subr.bf16.mxu0 0
    %8983 = vmatpush1.bf16.msra.mxu0 0
    %8984 = vmatprep.subr.bf16.mxu0 0
    %8985 = vmatpush1.bf16.msra.mxu0 0
    %8986 = vmatprep.subr.bf16.mxu0 0
    %8987 = vmatpush1.bf16.msra.mxu0 0
    %8988 = vmatprep.subr.bf16.mxu0 0
    %8989 = vmatpush1.bf16.msra.mxu0 %v8972
    %8990 = vmatprep.subr.bf16.mxu0 0
    %8991 = vmatpush2.bf16.msra.mxu0 0
    %8992 = vmatprep.subr.bf16.mxu0 0
    %8993 = vmatpush2.bf16.msra.mxu0 0
    %8994 = vmatprep.subr.bf16.mxu0 0
    %8995 = vmatpush2.bf16.msra.mxu0 0
    %8996 = vmatprep.subr.bf16.mxu0 0
    %8997 = vmatpush2.bf16.msra.mxu0 0
    %8998 = vmatprep.subr.bf16.mxu0 0
    %8999 = vmatpush2.bf16.msra.mxu0 0
    %9000 = vmatprep.subr.bf16.mxu0 0
    %9001 = vmatpush2.bf16.msra.mxu0 0
    %9002 = vmatprep.subr.bf16.mxu0 0
    %9003 = vmatpush2.bf16.msra.mxu0 0
    %9004 = vmatprep.subr.bf16.mxu0 0
    %9005 = vmatpush2.bf16.msra.mxu0 0
    %9006 = vmatprep.mubr.bf16.mxu0 0
    %9007 = vmatmul.mubr.bf16.gmra.mxu0 %v8924
    %v9008 = vpop.f32.mrf.mxu0
    %v9009 = vadd.f32 0.0, %v9008
    %v9010 = vpop.f32.mrf.mxu0
    %v9011 = vpop.f32.mrf.mxu0
    %v9012 = vadd.f32 0.0, %v9011
    %v9013 = vpop.f32.mrf.mxu0
    %9014 = vmatprep.mubr.bf16.mxu0 0
    %9015 = vmatmul.mubr.bf16.gmra.mxu0 %v8927
    %v9016 = vpop.f32.mrf.mxu0
    %v9017 = vadd.f32 0.0, %v9016
    %v9018 = vpop.f32.mrf.mxu0
    %v9019 = vpop.f32.mrf.mxu0
    %v9020 = vadd.f32 0.0, %v9019
    %v9021 = vpop.f32.mrf.mxu0
    %9022 = vmatprep.mubr.bf16.mxu0 0
    %9023 = vmatmul.mubr.bf16.gmra.mxu0 %v8930
    %v9024 = vpop.f32.mrf.mxu0
    %v9025 = vadd.f32 0.0, %v9024
    %v9026 = vpop.f32.mrf.mxu0
    %v9027 = vpop.f32.mrf.mxu0
    %v9028 = vadd.f32 0.0, %v9027
    %v9029 = vpop.f32.mrf.mxu0
    %9030 = vmatprep.mubr.bf16.mxu0 0
    %9031 = vmatmul.mubr.bf16.gmra.mxu0 %v8933
    %v9032 = vpop.f32.mrf.mxu0
    %v9033 = vadd.f32 0.0, %v9032
    %v9034 = vpop.f32.mrf.mxu0
    %v9035 = vpop.f32.mrf.mxu0
    %v9036 = vadd.f32 0.0, %v9035
    %v9037 = vpop.f32.mrf.mxu0
    %9038 = vmatprep.mubr.bf16.mxu0 0
    %9039 = vmatmul.mubr.bf16.gmra.mxu0 %v8936
    %v9040 = vpop.f32.mrf.mxu0
    %v9041 = vadd.f32 0.0, %v9040
    %v9042 = vpop.f32.mrf.mxu0
    %v9043 = vpop.f32.mrf.mxu0
    %v9044 = vadd.f32 0.0, %v9043
    %v9045 = vpop.f32.mrf.mxu0
    %9046 = vmatprep.mubr.bf16.mxu0 0
    %9047 = vmatmul.mubr.bf16.gmra.mxu0 %v8939
    %v9048 = vpop.f32.mrf.mxu0
    %v9049 = vadd.f32 0.0, %v9048
    %v9050 = vpop.f32.mrf.mxu0
    %v9051 = vpop.f32.mrf.mxu0
    %v9052 = vadd.f32 0.0, %v9051
    %v9053 = vpop.f32.mrf.mxu0
    %9054 = vmatprep.mubr.bf16.mxu0 0
    %9055 = vmatmul.mubr.bf16.gmra.mxu0 %v8942
    %v9056 = vpop.f32.mrf.mxu0
    %v9057 = vadd.f32 0.0, %v9056
    %v9058 = vpop.f32.mrf.mxu0
    %v9059 = vpop.f32.mrf.mxu0
    %v9060 = vadd.f32 0.0, %v9059
    %v9061 = vpop.f32.mrf.mxu0
    %9062 = vmatprep.mubr.bf16.mxu0 0
    %9063 = vmatmul.mubr.bf16.gmra.mxu0 %v8945
    %v9064 = vpop.f32.mrf.mxu0
    %v9065 = vadd.f32 0.0, %v9064
    %v9066 = vpop.f32.mrf.mxu0
    %v9067 = vpop.f32.mrf.mxu0
    %v9068 = vadd.f32 0.0, %v9067
    %v9069 = vpop.f32.mrf.mxu0
    %9070 = vmatprep.mubr.bf16.mxu0 0
    %9071 = vmatmul.mubr.bf16.gmra.mxu0 %v8948
    %v9072 = vpop.f32.mrf.mxu0
    %v9073 = vadd.f32 0.0, %v9072
    %v9074 = vpop.f32.mrf.mxu0
    %v9075 = vpop.f32.mrf.mxu0
    %v9076 = vadd.f32 0.0, %v9075
    %v9077 = vpop.f32.mrf.mxu0
    %9078 = vmatprep.mubr.bf16.mxu0 0
    %9079 = vmatmul.mubr.bf16.gmra.mxu0 %v8951
    %v9080 = vpop.f32.mrf.mxu0
    %v9081 = vadd.f32 0.0, %v9080
    %v9082 = vpop.f32.mrf.mxu0
    %v9083 = vpop.f32.mrf.mxu0
    %v9084 = vadd.f32 0.0, %v9083
    %v9085 = vpop.f32.mrf.mxu0
    %9086 = vmatprep.mubr.bf16.mxu0 0
    %9087 = vmatmul.mubr.bf16.gmra.mxu0 %v8954
    %v9088 = vpop.f32.mrf.mxu0
    %v9089 = vadd.f32 0.0, %v9088
    %v9090 = vpop.f32.mrf.mxu0
    %v9091 = vpop.f32.mrf.mxu0
    %v9092 = vadd.f32 0.0, %v9091
    %v9093 = vpop.f32.mrf.mxu0
    %9094 = vmatprep.mubr.bf16.mxu0 0
    %9095 = vmatmul.mubr.bf16.gmra.mxu0 %v8957
    %v9096 = vpop.f32.mrf.mxu0
    %v9097 = vadd.f32 0.0, %v9096
    %v9098 = vpop.f32.mrf.mxu0
    %v9099 = vpop.f32.mrf.mxu0
    %v9100 = vadd.f32 0.0, %v9099
    %v9101 = vpop.f32.mrf.mxu0
    %9102 = vmatprep.mubr.bf16.mxu0 0
    %9103 = vmatmul.mubr.bf16.gmra.mxu0 %v8960
    %v9104 = vpop.f32.mrf.mxu0
    %v9105 = vadd.f32 0.0, %v9104
    %v9106 = vpop.f32.mrf.mxu0
    %v9107 = vpop.f32.mrf.mxu0
    %v9108 = vadd.f32 0.0, %v9107
    %v9109 = vpop.f32.mrf.mxu0
    %9110 = vmatprep.mubr.bf16.mxu0 0
    %9111 = vmatmul.mubr.bf16.gmra.mxu0 %v8963
    %v9112 = vpop.f32.mrf.mxu0
    %v9113 = vadd.f32 0.0, %v9112
    %v9114 = vpop.f32.mrf.mxu0
    %v9115 = vpop.f32.mrf.mxu0
    %v9116 = vadd.f32 0.0, %v9115
    %v9117 = vpop.f32.mrf.mxu0
    %9118 = vmatprep.mubr.bf16.mxu0 0
    %9119 = vmatmul.mubr.bf16.gmra.mxu0 %v8966
    %v9120 = vpop.f32.mrf.mxu0
    %v9121 = vadd.f32 0.0, %v9120
    %v9122 = vpop.f32.mrf.mxu0
    %v9123 = vpop.f32.mrf.mxu0
    %v9124 = vadd.f32 0.0, %v9123
    %v9125 = vpop.f32.mrf.mxu0
    %9126 = vmatprep.mubr.bf16.mxu0 0
    %9127 = vmatmul.mubr.bf16.gmra.mxu0 %v8969
    %v9128 = vpop.f32.mrf.mxu0
    %v9129 = vadd.f32 0.0, %v9128
    %v9130 = vpop.f32.mrf.mxu0
    %v9131 = vpop.f32.mrf.mxu0
    %v9132 = vadd.f32 0.0, %v9131
    %v9133 = vpop.f32.mrf.mxu0
    %9134 = vdwg.mxu0
    %v9135 = vadd.f32 %v8398, %v9009
    %v9136 = vadd.f32 %v8399, %v9012
    %v9137 = vadd.f32 %v8400, %v9017
    %v9138 = vadd.f32 %v8401, %v9020
    %v9139 = vadd.f32 %v8402, %v9025
    %v9140 = vadd.f32 %v8403, %v9028
    %v9141 = vadd.f32 %v8404, %v9033
    %v9142 = vadd.f32 %v8405, %v9036
    %v9143 = vadd.f32 %v8406, %v9041
    %v9144 = vadd.f32 %v8407, %v9044
    %v9145 = vadd.f32 %v8408, %v9049
    %v9146 = vadd.f32 %v8409, %v9052
    %v9147 = vadd.f32 %v8410, %v9057
    %v9148 = vadd.f32 %v8411, %v9060
    %v9149 = vadd.f32 %v8412, %v9065
    %v9150 = vadd.f32 %v8413, %v9068
    %v9151 = vadd.f32 %v8414, %v9073
    %v9152 = vadd.f32 %v8415, %v9076
    %v9153 = vadd.f32 %v8416, %v9081
    %v9154 = vadd.f32 %v8417, %v9084
    %v9155 = vadd.f32 %v8418, %v9089
    %v9156 = vadd.f32 %v8419, %v9092
    %v9157 = vadd.f32 %v8420, %v9097
    %v9158 = vadd.f32 %v8421, %v9100
    %v9159 = vadd.f32 %v8422, %v9105
    %v9160 = vadd.f32 %v8423, %v9108
    %v9161 = vadd.f32 %v8424, %v9113
    %v9162 = vadd.f32 %v8425, %v9116
    %v9163 = vadd.f32 %v8426, %v9121
    %v9164 = vadd.f32 %v8427, %v9124
    %v9165 = vadd.f32 %v8428, %v9129
    %v9166 = vadd.f32 %v8429, %v9132
    %v9167 = vld [vmem:[%s8073] sm:$0xe]
    %v9168 = vld [vmem:[%s8073 + $0xc] sm:$0xe]
    %v9169 = vld [vmem:[%s8073 + $0x18] sm:$0xe]
    %v9170 = vld [vmem:[%s8073 + $0x24] sm:$0xe]
    %v9171 = vld [vmem:[%s8073 + $0x30] sm:$0xe]
    %v9172 = vld [vmem:[%s8073 + $0x3c] sm:$0xe]
    %v9173 = vld [vmem:[%s8073 + $0x48] sm:$0xe]
    %v9174 = vld [vmem:[%s8073 + $0x54] sm:$0xe]
    %v9175 = vld [vmem:[%s8073 + $0x60] sm:$0xe]
    %v9176 = vld [vmem:[%s8073 + $0x6c] sm:$0xe]
    %v9177 = vld [vmem:[%s8073 + $0x78] sm:$0xe]
    %v9178 = vld [vmem:[%s8073 + $0x84] sm:$0xe]
    %v9179 = vld [vmem:[%s8073 + $0x90] sm:$0xe]
    %v9180 = vld [vmem:[%s8073 + $0x9c] sm:$0xe]
    %v9181 = vld [vmem:[%s8073 + $0xa8] sm:$0xe]
    %v9182 = vld [vmem:[%s8073 + $0xb4] sm:$0xe]
    %v9231 = vrot.slane %v9167, 5
    %v9232 = vrot.slane %v9231, 4
    %v9233 = vrot.slane %v8431, 5
    %v9234 = vsel %vm1079, %v9232, %v9233
    %v9235 = vrot.slane %v9233, 4
    %v9236 = vrot.slane %v8432, 5
    %v9237 = vsel %vm1079, %v9235, %v9236
    %v9238 = vrot.slane %v9168, 5
    %v9239 = vrot.slane %v9238, 4
    %v9240 = vrot.slane %v8434, 5
    %v9241 = vsel %vm1079, %v9239, %v9240
    %v9242 = vrot.slane %v9240, 4
    %v9243 = vrot.slane %v8435, 5
    %v9244 = vsel %vm1079, %v9242, %v9243
    %v9245 = vrot.slane %v9169, 5
    %v9246 = vrot.slane %v9245, 4
    %v9247 = vrot.slane %v8437, 5
    %v9248 = vsel %vm1079, %v9246, %v9247
    %v9249 = vrot.slane %v9247, 4
    %v9250 = vrot.slane %v8438, 5
    %v9251 = vsel %vm1079, %v9249, %v9250
    %v9252 = vrot.slane %v9170, 5
    %v9253 = vrot.slane %v9252, 4
    %v9254 = vrot.slane %v8440, 5
    %v9255 = vsel %vm1079, %v9253, %v9254
    %v9256 = vrot.slane %v9254, 4
    %v9257 = vrot.slane %v8441, 5
    %v9258 = vsel %vm1079, %v9256, %v9257
    %v9259 = vrot.slane %v9171, 5
    %v9260 = vrot.slane %v9259, 4
    %v9261 = vrot.slane %v8443, 5
    %v9262 = vsel %vm1079, %v9260, %v9261
    %v9263 = vrot.slane %v9261, 4
    %v9264 = vrot.slane %v8444, 5
    %v9265 = vsel %vm1079, %v9263, %v9264
    %v9266 = vrot.slane %v9172, 5
    %v9267 = vrot.slane %v9266, 4
    %v9268 = vrot.slane %v8446, 5
    %v9269 = vsel %vm1079, %v9267, %v9268
    %v9270 = vrot.slane %v9268, 4
    %v9271 = vrot.slane %v8447, 5
    %v9272 = vsel %vm1079, %v9270, %v9271
    %v9273 = vrot.slane %v9173, 5
    %v9274 = vrot.slane %v9273, 4
    %v9275 = vrot.slane %v8449, 5
    %v9276 = vsel %vm1079, %v9274, %v9275
    %v9277 = vrot.slane %v9275, 4
    %v9278 = vrot.slane %v8450, 5
    %v9279 = vsel %vm1079, %v9277, %v9278
    %v9280 = vrot.slane %v9174, 5
    %v9281 = vrot.slane %v9280, 4
    %v9282 = vrot.slane %v8452, 5
    %v9283 = vsel %vm1079, %v9281, %v9282
    %v9284 = vrot.slane %v9282, 4
    %v9285 = vrot.slane %v8453, 5
    %v9286 = vsel %vm1079, %v9284, %v9285
    %v9287 = vrot.slane %v9175, 5
    %v9288 = vrot.slane %v9287, 4
    %v9289 = vrot.slane %v8455, 5
    %v9290 = vsel %vm1079, %v9288, %v9289
    %v9291 = vrot.slane %v9289, 4
    %v9292 = vrot.slane %v8456, 5
    %v9293 = vsel %vm1079, %v9291, %v9292
    %v9294 = vrot.slane %v9176, 5
    %v9295 = vrot.slane %v9294, 4
    %v9296 = vrot.slane %v8458, 5
    %v9297 = vsel %vm1079, %v9295, %v9296
    %v9298 = vrot.slane %v9296, 4
    %v9299 = vrot.slane %v8459, 5
    %v9300 = vsel %vm1079, %v9298, %v9299
    %v9301 = vrot.slane %v9177, 5
    %v9302 = vrot.slane %v9301, 4
    %v9303 = vrot.slane %v8461, 5
    %v9304 = vsel %vm1079, %v9302, %v9303
    %v9305 = vrot.slane %v9303, 4
    %v9306 = vrot.slane %v8462, 5
    %v9307 = vsel %vm1079, %v9305, %v9306
    %v9308 = vrot.slane %v9178, 5
    %v9309 = vrot.slane %v9308, 4
    %v9310 = vrot.slane %v8464, 5
    %v9311 = vsel %vm1079, %v9309, %v9310
    %v9312 = vrot.slane %v9310, 4
    %v9313 = vrot.slane %v8465, 5
    %v9314 = vsel %vm1079, %v9312, %v9313
    %v9315 = vrot.slane %v9179, 5
    %v9316 = vrot.slane %v9315, 4
    %v9317 = vrot.slane %v8467, 5
    %v9318 = vsel %vm1079, %v9316, %v9317
    %v9319 = vrot.slane %v9317, 4
    %v9320 = vrot.slane %v8468, 5
    %v9321 = vsel %vm1079, %v9319, %v9320
    %v9322 = vrot.slane %v9180, 5
    %v9323 = vrot.slane %v9322, 4
    %v9324 = vrot.slane %v8470, 5
    %v9325 = vsel %vm1079, %v9323, %v9324
    %v9326 = vrot.slane %v9324, 4
    %v9327 = vrot.slane %v8471, 5
    %v9328 = vsel %vm1079, %v9326, %v9327
    %v9329 = vrot.slane %v9181, 5
    %v9330 = vrot.slane %v9329, 4
    %v9331 = vrot.slane %v8473, 5
    %v9332 = vsel %vm1079, %v9330, %v9331
    %v9333 = vrot.slane %v9331, 4
    %v9334 = vrot.slane %v8474, 5
    %v9335 = vsel %vm1079, %v9333, %v9334
    %v9336 = vrot.slane %v9182, 5
    %v9337 = vrot.slane %v9336, 4
    %v9338 = vrot.slane %v8476, 5
    %v9339 = vsel %vm1079, %v9337, %v9338
    %v9340 = vrot.slane %v9338, 4
    %v9341 = vrot.slane %v8477, 5
    %v9342 = vsel %vm1079, %v9340, %v9341
    %v9343 = vunpack.c.l.b16 %v9234
    %v9344 = vunpack.c.l.b16 %v9237
    %v9345 = vunpack.c.l.b16 %v9241
    %v9346 = vunpack.c.l.b16 %v9244
    %v9347 = vunpack.c.l.b16 %v9248
    %v9348 = vunpack.c.l.b16 %v9251
    %v9349 = vunpack.c.l.b16 %v9255
    %v9350 = vunpack.c.l.b16 %v9258
    %v9351 = vunpack.c.l.b16 %v9262
    %v9352 = vunpack.c.l.b16 %v9265
    %v9353 = vunpack.c.l.b16 %v9269
    %v9354 = vunpack.c.l.b16 %v9272
    %v9355 = vunpack.c.l.b16 %v9276
    %v9356 = vunpack.c.l.b16 %v9279
    %v9357 = vunpack.c.l.b16 %v9283
    %v9358 = vunpack.c.l.b16 %v9286
    %v9359 = vunpack.c.l.b16 %v9290
    %v9360 = vunpack.c.l.b16 %v9293
    %v9361 = vunpack.c.l.b16 %v9297
    %v9362 = vunpack.c.l.b16 %v9300
    %v9363 = vunpack.c.l.b16 %v9304
    %v9364 = vunpack.c.l.b16 %v9307
    %v9365 = vunpack.c.l.b16 %v9311
    %v9366 = vunpack.c.l.b16 %v9314
    %v9367 = vunpack.c.l.b16 %v9318
    %v9368 = vunpack.c.l.b16 %v9321
    %v9369 = vunpack.c.l.b16 %v9325
    %v9370 = vunpack.c.l.b16 %v9328
    %v9371 = vunpack.c.l.b16 %v9332
    %v9372 = vunpack.c.l.b16 %v9335
    %v9373 = vunpack.c.l.b16 %v9339
    %v9374 = vunpack.c.l.b16 %v9342
    %v9375 = vpack.c.b16 %v9344, %v9343
    %v9376 = vpack.c.b16 %v9346, %v9345
    %v9377 = vpack.c.b16 %v9348, %v9347
    %v9378 = vpack.c.b16 %v9350, %v9349
    %v9379 = vpack.c.b16 %v9352, %v9351
    %v9380 = vpack.c.b16 %v9354, %v9353
    %v9381 = vpack.c.b16 %v9356, %v9355
    %v9382 = vpack.c.b16 %v9358, %v9357
    %v9383 = vpack.c.b16 %v9360, %v9359
    %v9384 = vpack.c.b16 %v9362, %v9361
    %v9385 = vpack.c.b16 %v9364, %v9363
    %v9386 = vpack.c.b16 %v9366, %v9365
    %v9387 = vpack.c.b16 %v9368, %v9367
    %v9388 = vpack.c.b16 %v9370, %v9369
    %v9389 = vpack.c.b16 %v9372, %v9371
    %v9390 = vpack.c.b16 %v9374, %v9373
    %v9391 = vpack.c.b16 %v8913, %v8913
    %v9392 = vrot.slane %v9391, 1
    %v9394 = vsel %vm520, %v9375, 0
    %v9397 = vsel %vm520, %v9376, 0
    %v9400 = vsel %vm520, %v9377, 0
    %v9403 = vsel %vm520, %v9378, 0
    %v9406 = vsel %vm520, %v9379, 0
    %v9409 = vsel %vm520, %v9380, 0
    %v9412 = vsel %vm520, %v9381, 0
    %v9415 = vsel %vm520, %v9382, 0
    %v9418 = vsel %vm520, %v9383, 0
    %v9421 = vsel %vm520, %v9384, 0
    %v9424 = vsel %vm520, %v9385, 0
    %v9427 = vsel %vm520, %v9386, 0
    %v9430 = vsel %vm520, %v9387, 0
    %v9433 = vsel %vm520, %v9388, 0
    %v9436 = vsel %vm520, %v9389, 0
    %v9439 = vsel %vm520, %v9390, 0
    %v9442 = vand.u32 %v9392, %v572
    %9444 = vmatprep.subr.bf16.mxu0 0
    %9445 = vmatpush1.bf16.msra.mxu0 0
    %9446 = vmatprep.subr.bf16.mxu0 0
    %9447 = vmatpush1.bf16.msra.mxu0 0
    %9448 = vmatprep.subr.bf16.mxu0 0
    %9449 = vmatpush1.bf16.msra.mxu0 0
    %9450 = vmatprep.subr.bf16.mxu0 0
    %9451 = vmatpush1.bf16.msra.mxu0 0
    %9452 = vmatprep.subr.bf16.mxu0 0
    %9453 = vmatpush1.bf16.msra.mxu0 0
    %9454 = vmatprep.subr.bf16.mxu0 0
    %9455 = vmatpush1.bf16.msra.mxu0 0
    %9456 = vmatprep.subr.bf16.mxu0 0
    %9457 = vmatpush1.bf16.msra.mxu0 0
    %9458 = vmatprep.subr.bf16.mxu0 0
    %9459 = vmatpush1.bf16.msra.mxu0 %v9442
    %9460 = vmatprep.subr.bf16.mxu0 0
    %9461 = vmatpush2.bf16.msra.mxu0 0
    %9462 = vmatprep.subr.bf16.mxu0 0
    %9463 = vmatpush2.bf16.msra.mxu0 0
    %9464 = vmatprep.subr.bf16.mxu0 0
    %9465 = vmatpush2.bf16.msra.mxu0 0
    %9466 = vmatprep.subr.bf16.mxu0 0
    %9467 = vmatpush2.bf16.msra.mxu0 0
    %9468 = vmatprep.subr.bf16.mxu0 0
    %9469 = vmatpush2.bf16.msra.mxu0 0
    %9470 = vmatprep.subr.bf16.mxu0 0
    %9471 = vmatpush2.bf16.msra.mxu0 0
    %9472 = vmatprep.subr.bf16.mxu0 0
    %9473 = vmatpush2.bf16.msra.mxu0 0
    %9474 = vmatprep.subr.bf16.mxu0 0
    %9475 = vmatpush2.bf16.msra.mxu0 0
    %9476 = vmatprep.mubr.bf16.mxu0 0
    %9477 = vmatmul.mubr.bf16.gmra.mxu0 %v9394
    %v9478 = vpop.f32.mrf.mxu0
    %v9479 = vadd.f32 0.0, %v9478
    %v9480 = vpop.f32.mrf.mxu0
    %v9481 = vpop.f32.mrf.mxu0
    %v9482 = vadd.f32 0.0, %v9481
    %v9483 = vpop.f32.mrf.mxu0
    %9484 = vmatprep.mubr.bf16.mxu0 0
    %9485 = vmatmul.mubr.bf16.gmra.mxu0 %v9397
    %v9486 = vpop.f32.mrf.mxu0
    %v9487 = vadd.f32 0.0, %v9486
    %v9488 = vpop.f32.mrf.mxu0
    %v9489 = vpop.f32.mrf.mxu0
    %v9490 = vadd.f32 0.0, %v9489
    %v9491 = vpop.f32.mrf.mxu0
    %9492 = vmatprep.mubr.bf16.mxu0 0
    %9493 = vmatmul.mubr.bf16.gmra.mxu0 %v9400
    %v9494 = vpop.f32.mrf.mxu0
    %v9495 = vadd.f32 0.0, %v9494
    %v9496 = vpop.f32.mrf.mxu0
    %v9497 = vpop.f32.mrf.mxu0
    %v9498 = vadd.f32 0.0, %v9497
    %v9499 = vpop.f32.mrf.mxu0
    %9500 = vmatprep.mubr.bf16.mxu0 0
    %9501 = vmatmul.mubr.bf16.gmra.mxu0 %v9403
    %v9502 = vpop.f32.mrf.mxu0
    %v9503 = vadd.f32 0.0, %v9502
    %v9504 = vpop.f32.mrf.mxu0
    %v9505 = vpop.f32.mrf.mxu0
    %v9506 = vadd.f32 0.0, %v9505
    %v9507 = vpop.f32.mrf.mxu0
    %9508 = vmatprep.mubr.bf16.mxu0 0
    %9509 = vmatmul.mubr.bf16.gmra.mxu0 %v9406
    %v9510 = vpop.f32.mrf.mxu0
    %v9511 = vadd.f32 0.0, %v9510
    %v9512 = vpop.f32.mrf.mxu0
    %v9513 = vpop.f32.mrf.mxu0
    %v9514 = vadd.f32 0.0, %v9513
    %v9515 = vpop.f32.mrf.mxu0
    %9516 = vmatprep.mubr.bf16.mxu0 0
    %9517 = vmatmul.mubr.bf16.gmra.mxu0 %v9409
    %v9518 = vpop.f32.mrf.mxu0
    %v9519 = vadd.f32 0.0, %v9518
    %v9520 = vpop.f32.mrf.mxu0
    %v9521 = vpop.f32.mrf.mxu0
    %v9522 = vadd.f32 0.0, %v9521
    %v9523 = vpop.f32.mrf.mxu0
    %9524 = vmatprep.mubr.bf16.mxu0 0
    %9525 = vmatmul.mubr.bf16.gmra.mxu0 %v9412
    %v9526 = vpop.f32.mrf.mxu0
    %v9527 = vadd.f32 0.0, %v9526
    %v9528 = vpop.f32.mrf.mxu0
    %v9529 = vpop.f32.mrf.mxu0
    %v9530 = vadd.f32 0.0, %v9529
    %v9531 = vpop.f32.mrf.mxu0
    %9532 = vmatprep.mubr.bf16.mxu0 0
    %9533 = vmatmul.mubr.bf16.gmra.mxu0 %v9415
    %v9534 = vpop.f32.mrf.mxu0
    %v9535 = vadd.f32 0.0, %v9534
    %v9536 = vpop.f32.mrf.mxu0
    %v9537 = vpop.f32.mrf.mxu0
    %v9538 = vadd.f32 0.0, %v9537
    %v9539 = vpop.f32.mrf.mxu0
    %9540 = vmatprep.mubr.bf16.mxu0 0
    %9541 = vmatmul.mubr.bf16.gmra.mxu0 %v9418
    %v9542 = vpop.f32.mrf.mxu0
    %v9543 = vadd.f32 0.0, %v9542
    %v9544 = vpop.f32.mrf.mxu0
    %v9545 = vpop.f32.mrf.mxu0
    %v9546 = vadd.f32 0.0, %v9545
    %v9547 = vpop.f32.mrf.mxu0
    %9548 = vmatprep.mubr.bf16.mxu0 0
    %9549 = vmatmul.mubr.bf16.gmra.mxu0 %v9421
    %v9550 = vpop.f32.mrf.mxu0
    %v9551 = vadd.f32 0.0, %v9550
    %v9552 = vpop.f32.mrf.mxu0
    %v9553 = vpop.f32.mrf.mxu0
    %v9554 = vadd.f32 0.0, %v9553
    %v9555 = vpop.f32.mrf.mxu0
    %9556 = vmatprep.mubr.bf16.mxu0 0
    %9557 = vmatmul.mubr.bf16.gmra.mxu0 %v9424
    %v9558 = vpop.f32.mrf.mxu0
    %v9559 = vadd.f32 0.0, %v9558
    %v9560 = vpop.f32.mrf.mxu0
    %v9561 = vpop.f32.mrf.mxu0
    %v9562 = vadd.f32 0.0, %v9561
    %v9563 = vpop.f32.mrf.mxu0
    %9564 = vmatprep.mubr.bf16.mxu0 0
    %9565 = vmatmul.mubr.bf16.gmra.mxu0 %v9427
    %v9566 = vpop.f32.mrf.mxu0
    %v9567 = vadd.f32 0.0, %v9566
    %v9568 = vpop.f32.mrf.mxu0
    %v9569 = vpop.f32.mrf.mxu0
    %v9570 = vadd.f32 0.0, %v9569
    %v9571 = vpop.f32.mrf.mxu0
    %9572 = vmatprep.mubr.bf16.mxu0 0
    %9573 = vmatmul.mubr.bf16.gmra.mxu0 %v9430
    %v9574 = vpop.f32.mrf.mxu0
    %v9575 = vadd.f32 0.0, %v9574
    %v9576 = vpop.f32.mrf.mxu0
    %v9577 = vpop.f32.mrf.mxu0
    %v9578 = vadd.f32 0.0, %v9577
    %v9579 = vpop.f32.mrf.mxu0
    %9580 = vmatprep.mubr.bf16.mxu0 0
    %9581 = vmatmul.mubr.bf16.gmra.mxu0 %v9433
    %v9582 = vpop.f32.mrf.mxu0
    %v9583 = vadd.f32 0.0, %v9582
    %v9584 = vpop.f32.mrf.mxu0
    %v9585 = vpop.f32.mrf.mxu0
    %v9586 = vadd.f32 0.0, %v9585
    %v9587 = vpop.f32.mrf.mxu0
    %9588 = vmatprep.mubr.bf16.mxu0 0
    %9589 = vmatmul.mubr.bf16.gmra.mxu0 %v9436
    %v9590 = vpop.f32.mrf.mxu0
    %v9591 = vadd.f32 0.0, %v9590
    %v9592 = vpop.f32.mrf.mxu0
    %v9593 = vpop.f32.mrf.mxu0
    %v9594 = vadd.f32 0.0, %v9593
    %v9595 = vpop.f32.mrf.mxu0
    %9596 = vmatprep.mubr.bf16.mxu0 0
    %9597 = vmatmul.mubr.bf16.gmra.mxu0 %v9439
    %v9598 = vpop.f32.mrf.mxu0
    %v9599 = vadd.f32 0.0, %v9598
    %v9600 = vpop.f32.mrf.mxu0
    %v9601 = vpop.f32.mrf.mxu0
    %v9602 = vadd.f32 0.0, %v9601
    %v9603 = vpop.f32.mrf.mxu0
    %9604 = vdwg.mxu0
    %v9605 = vadd.f32 %v9135, %v9479
    %v9606 = vadd.f32 %v9136, %v9482
    %v9607 = vadd.f32 %v9137, %v9487
    %v9608 = vadd.f32 %v9138, %v9490
    %v9609 = vadd.f32 %v9139, %v9495
    %v9610 = vadd.f32 %v9140, %v9498
    %v9611 = vadd.f32 %v9141, %v9503
    %v9612 = vadd.f32 %v9142, %v9506
    %v9613 = vadd.f32 %v9143, %v9511
    %v9614 = vadd.f32 %v9144, %v9514
    %v9615 = vadd.f32 %v9145, %v9519
    %v9616 = vadd.f32 %v9146, %v9522
    %v9617 = vadd.f32 %v9147, %v9527
    %v9618 = vadd.f32 %v9148, %v9530
    %v9619 = vadd.f32 %v9149, %v9535
    %v9620 = vadd.f32 %v9150, %v9538
    %v9621 = vadd.f32 %v9151, %v9543
    %v9622 = vadd.f32 %v9152, %v9546
    %v9623 = vadd.f32 %v9153, %v9551
    %v9624 = vadd.f32 %v9154, %v9554
    %v9625 = vadd.f32 %v9155, %v9559
    %v9626 = vadd.f32 %v9156, %v9562
    %v9627 = vadd.f32 %v9157, %v9567
    %v9628 = vadd.f32 %v9158, %v9570
    %v9629 = vadd.f32 %v9159, %v9575
    %v9630 = vadd.f32 %v9160, %v9578
    %v9631 = vadd.f32 %v9161, %v9583
    %v9632 = vadd.f32 %v9162, %v9586
    %v9633 = vadd.f32 %v9163, %v9591
    %v9634 = vadd.f32 %v9164, %v9594
    %v9635 = vadd.f32 %v9165, %v9599
    %v9636 = vadd.f32 %v9166, %v9602
    %v9637 = vld [vmem:[%s8073 + $0x8] sm:$0x3]
    %v9638 = vld [vmem:[%s8073 + $0x14] sm:$0x3]
    %v9639 = vld [vmem:[%s8073 + $0x20] sm:$0x3]
    %v9640 = vld [vmem:[%s8073 + $0x2c] sm:$0x3]
    %v9641 = vld [vmem:[%s8073 + $0x38] sm:$0x3]
    %v9642 = vld [vmem:[%s8073 + $0x44] sm:$0x3]
    %v9643 = vld [vmem:[%s8073 + $0x50] sm:$0x3]
    %v9644 = vld [vmem:[%s8073 + $0x5c] sm:$0x3]
    %v9645 = vld [vmem:[%s8073 + $0x68] sm:$0x3]
    %v9646 = vld [vmem:[%s8073 + $0x74] sm:$0x3]
    %v9647 = vld [vmem:[%s8073 + $0x80] sm:$0x3]
    %v9648 = vld [vmem:[%s8073 + $0x8c] sm:$0x3]
    %v9649 = vld [vmem:[%s8073 + $0x98] sm:$0x3]
    %v9650 = vld [vmem:[%s8073 + $0xa4] sm:$0x3]
    %v9651 = vld [vmem:[%s8073 + $0xb0] sm:$0x3]
    %v9652 = vld [vmem:[%s8073 + $0xbc] sm:$0x3]
    %v9654 = vshrl.u32 %v9167, 16
    %v9656 = vrot.slane %v9654, 5
    %v9657 = vshll.u32 %v9167, 16
    %v9659 = vrot.slane %v9657, 6
    %v9660 = vor.u32 %v9656, %v9659
    %v9661 = vrot.slane %v9660, 4
    %v9662 = vrot.slane %v8492, 5
    %v9663 = vrot.slane %v8488, 6
    %v9664 = vor.u32 %v9662, %v9663
    %v9665 = vsel %vm1504, %v9661, %v9664
    %v9666 = vrot.slane %v9664, 4
    %v9668 = vshrl.u32 %v9637, 16
    %v9670 = vrot.slane %v9668, 5
    %v9671 = vshll.u32 %v9637, 16
    %v9673 = vrot.slane %v9671, 6
    %v9674 = vor.u32 %v9670, %v9673
    %v9675 = vsel %vm1504, %v9666, %v9674
    %v9677 = vshrl.u32 %v9168, 16
    %v9679 = vrot.slane %v9677, 5
    %v9680 = vshll.u32 %v9168, 16
    %v9682 = vrot.slane %v9680, 6
    %v9683 = vor.u32 %v9679, %v9682
    %v9684 = vrot.slane %v9683, 4
    %v9685 = vrot.slane %v8516, 5
    %v9686 = vrot.slane %v8512, 6
    %v9687 = vor.u32 %v9685, %v9686
    %v9688 = vsel %vm1504, %v9684, %v9687
    %v9689 = vrot.slane %v9687, 4
    %v9691 = vshrl.u32 %v9638, 16
    %v9693 = vrot.slane %v9691, 5
    %v9694 = vshll.u32 %v9638, 16
    %v9696 = vrot.slane %v9694, 6
    %v9697 = vor.u32 %v9693, %v9696
    %v9698 = vsel %vm1504, %v9689, %v9697
    %v9700 = vshrl.u32 %v9169, 16
    %v9702 = vrot.slane %v9700, 5
    %v9703 = vshll.u32 %v9169, 16
    %v9705 = vrot.slane %v9703, 6
    %v9706 = vor.u32 %v9702, %v9705
    %v9707 = vrot.slane %v9706, 4
    %v9708 = vrot.slane %v8540, 5
    %v9709 = vrot.slane %v8536, 6
    %v9710 = vor.u32 %v9708, %v9709
    %v9711 = vsel %vm1504, %v9707, %v9710
    %v9712 = vrot.slane %v9710, 4
    %v9714 = vshrl.u32 %v9639, 16
    %v9716 = vrot.slane %v9714, 5
    %v9717 = vshll.u32 %v9639, 16
    %v9719 = vrot.slane %v9717, 6
    %v9720 = vor.u32 %v9716, %v9719
    %v9721 = vsel %vm1504, %v9712, %v9720
    %v9723 = vshrl.u32 %v9170, 16
    %v9725 = vrot.slane %v9723, 5
    %v9726 = vshll.u32 %v9170, 16
    %v9728 = vrot.slane %v9726, 6
    %v9729 = vor.u32 %v9725, %v9728
    %v9730 = vrot.slane %v9729, 4
    %v9731 = vrot.slane %v8564, 5
    %v9732 = vrot.slane %v8560, 6
    %v9733 = vor.u32 %v9731, %v9732
    %v9734 = vsel %vm1504, %v9730, %v9733
    %v9735 = vrot.slane %v9733, 4
    %v9737 = vshrl.u32 %v9640, 16
    %v9739 = vrot.slane %v9737, 5
    %v9740 = vshll.u32 %v9640, 16
    %v9742 = vrot.slane %v9740, 6
    %v9743 = vor.u32 %v9739, %v9742
    %v9744 = vsel %vm1504, %v9735, %v9743
    %v9746 = vshrl.u32 %v9171, 16
    %v9748 = vrot.slane %v9746, 5
    %v9749 = vshll.u32 %v9171, 16
    %v9751 = vrot.slane %v9749, 6
    %v9752 = vor.u32 %v9748, %v9751
    %v9753 = vrot.slane %v9752, 4
    %v9754 = vrot.slane %v8588, 5
    %v9755 = vrot.slane %v8584, 6
    %v9756 = vor.u32 %v9754, %v9755
    %v9757 = vsel %vm1504, %v9753, %v9756
    %v9758 = vrot.slane %v9756, 4
    %v9760 = vshrl.u32 %v9641, 16
    %v9762 = vrot.slane %v9760, 5
    %v9763 = vshll.u32 %v9641, 16
    %v9765 = vrot.slane %v9763, 6
    %v9766 = vor.u32 %v9762, %v9765
    %v9767 = vsel %vm1504, %v9758, %v9766
    %v9769 = vshrl.u32 %v9172, 16
    %v9771 = vrot.slane %v9769, 5
    %v9772 = vshll.u32 %v9172, 16
    %v9774 = vrot.slane %v9772, 6
    %v9775 = vor.u32 %v9771, %v9774
    %v9776 = vrot.slane %v9775, 4
    %v9777 = vrot.slane %v8612, 5
    %v9778 = vrot.slane %v8608, 6
    %v9779 = vor.u32 %v9777, %v9778
    %v9780 = vsel %vm1504, %v9776, %v9779
    %v9781 = vrot.slane %v9779, 4
    %v9783 = vshrl.u32 %v9642, 16
    %v9785 = vrot.slane %v9783, 5
    %v9786 = vshll.u32 %v9642, 16
    %v9788 = vrot.slane %v9786, 6
    %v9789 = vor.u32 %v9785, %v9788
    %v9790 = vsel %vm1504, %v9781, %v9789
    %v9792 = vshrl.u32 %v9173, 16
    %v9794 = vrot.slane %v9792, 5
    %v9795 = vshll.u32 %v9173, 16
    %v9797 = vrot.slane %v9795, 6
    %v9798 = vor.u32 %v9794, %v9797
    %v9799 = vrot.slane %v9798, 4
    %v9800 = vrot.slane %v8636, 5
    %v9801 = vrot.slane %v8632, 6
    %v9802 = vor.u32 %v9800, %v9801
    %v9803 = vsel %vm1504, %v9799, %v9802
    %v9804 = vrot.slane %v9802, 4
    %v9806 = vshrl.u32 %v9643, 16
    %v9808 = vrot.slane %v9806, 5
    %v9809 = vshll.u32 %v9643, 16
    %v9811 = vrot.slane %v9809, 6
    %v9812 = vor.u32 %v9808, %v9811
    %v9813 = vsel %vm1504, %v9804, %v9812
    %v9815 = vshrl.u32 %v9174, 16
    %v9817 = vrot.slane %v9815, 5
    %v9818 = vshll.u32 %v9174, 16
    %v9820 = vrot.slane %v9818, 6
    %v9821 = vor.u32 %v9817, %v9820
    %v9822 = vrot.slane %v9821, 4
    %v9823 = vrot.slane %v8660, 5
    %v9824 = vrot.slane %v8656, 6
    %v9825 = vor.u32 %v9823, %v9824
    %v9826 = vsel %vm1504, %v9822, %v9825
    %v9827 = vrot.slane %v9825, 4
    %v9829 = vshrl.u32 %v9644, 16
    %v9831 = vrot.slane %v9829, 5
    %v9832 = vshll.u32 %v9644, 16
    %v9834 = vrot.slane %v9832, 6
    %v9835 = vor.u32 %v9831, %v9834
    %v9836 = vsel %vm1504, %v9827, %v9835
    %v9838 = vshrl.u32 %v9175, 16
    %v9840 = vrot.slane %v9838, 5
    %v9841 = vshll.u32 %v9175, 16
    %v9843 = vrot.slane %v9841, 6
    %v9844 = vor.u32 %v9840, %v9843
    %v9845 = vrot.slane %v9844, 4
    %v9846 = vrot.slane %v8684, 5
    %v9847 = vrot.slane %v8680, 6
    %v9848 = vor.u32 %v9846, %v9847
    %v9849 = vsel %vm1504, %v9845, %v9848
    %v9850 = vrot.slane %v9848, 4
    %v9852 = vshrl.u32 %v9645, 16
    %v9854 = vrot.slane %v9852, 5
    %v9855 = vshll.u32 %v9645, 16
    %v9857 = vrot.slane %v9855, 6
    %v9858 = vor.u32 %v9854, %v9857
    %v9859 = vsel %vm1504, %v9850, %v9858
    %v9861 = vshrl.u32 %v9176, 16
    %v9863 = vrot.slane %v9861, 5
    %v9864 = vshll.u32 %v9176, 16
    %v9866 = vrot.slane %v9864, 6
    %v9867 = vor.u32 %v9863, %v9866
    %v9868 = vrot.slane %v9867, 4
    %v9869 = vrot.slane %v8708, 5
    %v9870 = vrot.slane %v8704, 6
    %v9871 = vor.u32 %v9869, %v9870
    %v9872 = vsel %vm1504, %v9868, %v9871
    %v9873 = vrot.slane %v9871, 4
    %v9875 = vshrl.u32 %v9646, 16
    %v9877 = vrot.slane %v9875, 5
    %v9878 = vshll.u32 %v9646, 16
    %v9880 = vrot.slane %v9878, 6
    %v9881 = vor.u32 %v9877, %v9880
    %v9882 = vsel %vm1504, %v9873, %v9881
    %v9884 = vshrl.u32 %v9177, 16
    %v9886 = vrot.slane %v9884, 5
    %v9887 = vshll.u32 %v9177, 16
    %v9889 = vrot.slane %v9887, 6
    %v9890 = vor.u32 %v9886, %v9889
    %v9891 = vrot.slane %v9890, 4
    %v9892 = vrot.slane %v8732, 5
    %v9893 = vrot.slane %v8728, 6
    %v9894 = vor.u32 %v9892, %v9893
    %v9895 = vsel %vm1504, %v9891, %v9894
    %v9896 = vrot.slane %v9894, 4
    %v9898 = vshrl.u32 %v9647, 16
    %v9900 = vrot.slane %v9898, 5
    %v9901 = vshll.u32 %v9647, 16
    %v9903 = vrot.slane %v9901, 6
    %v9904 = vor.u32 %v9900, %v9903
    %v9905 = vsel %vm1504, %v9896, %v9904
    %v9907 = vshrl.u32 %v9178, 16
    %v9909 = vrot.slane %v9907, 5
    %v9910 = vshll.u32 %v9178, 16
    %v9912 = vrot.slane %v9910, 6
    %v9913 = vor.u32 %v9909, %v9912
    %v9914 = vrot.slane %v9913, 4
    %v9915 = vrot.slane %v8756, 5
    %v9916 = vrot.slane %v8752, 6
    %v9917 = vor.u32 %v9915, %v9916
    %v9918 = vsel %vm1504, %v9914, %v9917
    %v9919 = vrot.slane %v9917, 4
    %v9921 = vshrl.u32 %v9648, 16
    %v9923 = vrot.slane %v9921, 5
    %v9924 = vshll.u32 %v9648, 16
    %v9926 = vrot.slane %v9924, 6
    %v9927 = vor.u32 %v9923, %v9926
    %v9928 = vsel %vm1504, %v9919, %v9927
    %v9930 = vshrl.u32 %v9179, 16
    %v9932 = vrot.slane %v9930, 5
    %v9933 = vshll.u32 %v9179, 16
    %v9935 = vrot.slane %v9933, 6
    %v9936 = vor.u32 %v9932, %v9935
    %v9937 = vrot.slane %v9936, 4
    %v9938 = vrot.slane %v8780, 5
    %v9939 = vrot.slane %v8776, 6
    %v9940 = vor.u32 %v9938, %v9939
    %v9941 = vsel %vm1504, %v9937, %v9940
    %v9942 = vrot.slane %v9940, 4
    %v9944 = vshrl.u32 %v9649, 16
    %v9946 = vrot.slane %v9944, 5
    %v9947 = vshll.u32 %v9649, 16
    %v9949 = vrot.slane %v9947, 6
    %v9950 = vor.u32 %v9946, %v9949
    %v9951 = vsel %vm1504, %v9942, %v9950
    %v9953 = vshrl.u32 %v9180, 16
    %v9955 = vrot.slane %v9953, 5
    %v9956 = vshll.u32 %v9180, 16
    %v9958 = vrot.slane %v9956, 6
    %v9959 = vor.u32 %v9955, %v9958
    %v9960 = vrot.slane %v9959, 4
    %v9961 = vrot.slane %v8804, 5
    %v9962 = vrot.slane %v8800, 6
    %v9963 = vor.u32 %v9961, %v9962
    %v9964 = vsel %vm1504, %v9960, %v9963
    %v9965 = vrot.slane %v9963, 4
    %v9967 = vshrl.u32 %v9650, 16
    %v9969 = vrot.slane %v9967, 5
    %v9970 = vshll.u32 %v9650, 16
    %v9972 = vrot.slane %v9970, 6
    %v9973 = vor.u32 %v9969, %v9972
    %v9974 = vsel %vm1504, %v9965, %v9973
    %v9976 = vshrl.u32 %v9181, 16
    %v9978 = vrot.slane %v9976, 5
    %v9979 = vshll.u32 %v9181, 16
    %v9981 = vrot.slane %v9979, 6
    %v9982 = vor.u32 %v9978, %v9981
    %v9983 = vrot.slane %v9982, 4
    %v9984 = vrot.slane %v8828, 5
    %v9985 = vrot.slane %v8824, 6
    %v9986 = vor.u32 %v9984, %v9985
    %v9987 = vsel %vm1504, %v9983, %v9986
    %v9988 = vrot.slane %v9986, 4
    %v9990 = vshrl.u32 %v9651, 16
    %v9992 = vrot.slane %v9990, 5
    %v9993 = vshll.u32 %v9651, 16
    %v9995 = vrot.slane %v9993, 6
    %v9996 = vor.u32 %v9992, %v9995
    %v9997 = vsel %vm1504, %v9988, %v9996
    %v9999 = vshrl.u32 %v9182, 16
    %v10001 = vrot.slane %v9999, 5
    %v10002 = vshll.u32 %v9182, 16
    %v10004 = vrot.slane %v10002, 6
    %v10005 = vor.u32 %v10001, %v10004
    %v10006 = vrot.slane %v10005, 4
    %v10007 = vrot.slane %v8852, 5
    %v10008 = vrot.slane %v8848, 6
    %v10009 = vor.u32 %v10007, %v10008
    %v10010 = vsel %vm1504, %v10006, %v10009
    %v10011 = vrot.slane %v10009, 4
    %v10013 = vshrl.u32 %v9652, 16
    %v10015 = vrot.slane %v10013, 5
    %v10016 = vshll.u32 %v9652, 16
    %v10018 = vrot.slane %v10016, 6
    %v10019 = vor.u32 %v10015, %v10018
    %v10020 = vsel %vm1504, %v10011, %v10019
    %v10021 = vunpack.c.l.b16 %v9665
    %v10022 = vunpack.c.l.b16 %v9675
    %v10023 = vunpack.c.l.b16 %v9688
    %v10024 = vunpack.c.l.b16 %v9698
    %v10025 = vunpack.c.l.b16 %v9711
    %v10026 = vunpack.c.l.b16 %v9721
    %v10027 = vunpack.c.l.b16 %v9734
    %v10028 = vunpack.c.l.b16 %v9744
    %v10029 = vunpack.c.l.b16 %v9757
    %v10030 = vunpack.c.l.b16 %v9767
    %v10031 = vunpack.c.l.b16 %v9780
    %v10032 = vunpack.c.l.b16 %v9790
    %v10033 = vunpack.c.l.b16 %v9803
    %v10034 = vunpack.c.l.b16 %v9813
    %v10035 = vunpack.c.l.b16 %v9826
    %v10036 = vunpack.c.l.b16 %v9836
    %v10037 = vunpack.c.l.b16 %v9849
    %v10038 = vunpack.c.l.b16 %v9859
    %v10039 = vunpack.c.l.b16 %v9872
    %v10040 = vunpack.c.l.b16 %v9882
    %v10041 = vunpack.c.l.b16 %v9895
    %v10042 = vunpack.c.l.b16 %v9905
    %v10043 = vunpack.c.l.b16 %v9918
    %v10044 = vunpack.c.l.b16 %v9928
    %v10045 = vunpack.c.l.b16 %v9941
    %v10046 = vunpack.c.l.b16 %v9951
    %v10047 = vunpack.c.l.b16 %v9964
    %v10048 = vunpack.c.l.b16 %v9974
    %v10049 = vunpack.c.l.b16 %v9987
    %v10050 = vunpack.c.l.b16 %v9997
    %v10051 = vunpack.c.l.b16 %v10010
    %v10052 = vunpack.c.l.b16 %v10020
    %v10053 = vpack.c.b16 %v10022, %v10021
    %v10054 = vpack.c.b16 %v10024, %v10023
    %v10055 = vpack.c.b16 %v10026, %v10025
    %v10056 = vpack.c.b16 %v10028, %v10027
    %v10057 = vpack.c.b16 %v10030, %v10029
    %v10058 = vpack.c.b16 %v10032, %v10031
    %v10059 = vpack.c.b16 %v10034, %v10033
    %v10060 = vpack.c.b16 %v10036, %v10035
    %v10061 = vpack.c.b16 %v10038, %v10037
    %v10062 = vpack.c.b16 %v10040, %v10039
    %v10063 = vpack.c.b16 %v10042, %v10041
    %v10064 = vpack.c.b16 %v10044, %v10043
    %v10065 = vpack.c.b16 %v10046, %v10045
    %v10066 = vpack.c.b16 %v10048, %v10047
    %v10067 = vpack.c.b16 %v10050, %v10049
    %v10068 = vpack.c.b16 %v10052, %v10051
    %v10070 = vunpack.c.l.b16 %v8068
    %v10071 = vpack.c.b16 %v10070, %v8913
    %v10073 = vshrl.u32 %v10071, 16
    %v10075 = vrot.slane %v10073, 3
    %v10076 = vshll.u32 %v10071, 16
    %v10078 = vrot.slane %v10076, 4
    %v10079 = vor.u32 %v10075, %v10078
    %v10081 = vsel %vm520, %v10053, 0
    %v10084 = vsel %vm520, %v10054, 0
    %v10087 = vsel %vm520, %v10055, 0
    %v10090 = vsel %vm520, %v10056, 0
    %v10093 = vsel %vm520, %v10057, 0
    %v10096 = vsel %vm520, %v10058, 0
    %v10099 = vsel %vm520, %v10059, 0
    %v10102 = vsel %vm520, %v10060, 0
    %v10105 = vsel %vm520, %v10061, 0
    %v10108 = vsel %vm520, %v10062, 0
    %v10111 = vsel %vm520, %v10063, 0
    %v10114 = vsel %vm520, %v10064, 0
    %v10117 = vsel %vm520, %v10065, 0
    %v10120 = vsel %vm520, %v10066, 0
    %v10123 = vsel %vm520, %v10067, 0
    %v10126 = vsel %vm520, %v10068, 0
    %v10129 = vand.u32 %v10079, %v572
    %10131 = vmatprep.subr.bf16.mxu0 0
    %10132 = vmatpush1.bf16.msra.mxu0 0
    %10133 = vmatprep.subr.bf16.mxu0 0
    %10134 = vmatpush1.bf16.msra.mxu0 0
    %10135 = vmatprep.subr.bf16.mxu0 0
    %10136 = vmatpush1.bf16.msra.mxu0 0
    %10137 = vmatprep.subr.bf16.mxu0 0
    %10138 = vmatpush1.bf16.msra.mxu0 0
    %10139 = vmatprep.subr.bf16.mxu0 0
    %10140 = vmatpush1.bf16.msra.mxu0 0
    %10141 = vmatprep.subr.bf16.mxu0 0
    %10142 = vmatpush1.bf16.msra.mxu0 0
    %10143 = vmatprep.subr.bf16.mxu0 0
    %10144 = vmatpush1.bf16.msra.mxu0 0
    %10145 = vmatprep.subr.bf16.mxu0 0
    %10146 = vmatpush1.bf16.msra.mxu0 %v10129
    %10147 = vmatprep.subr.bf16.mxu0 0
    %10148 = vmatpush2.bf16.msra.mxu0 0
    %10149 = vmatprep.subr.bf16.mxu0 0
    %10150 = vmatpush2.bf16.msra.mxu0 0
    %10151 = vmatprep.subr.bf16.mxu0 0
    %10152 = vmatpush2.bf16.msra.mxu0 0
    %10153 = vmatprep.subr.bf16.mxu0 0
    %10154 = vmatpush2.bf16.msra.mxu0 0
    %10155 = vmatprep.subr.bf16.mxu0 0
    %10156 = vmatpush2.bf16.msra.mxu0 0
    %10157 = vmatprep.subr.bf16.mxu0 0
    %10158 = vmatpush2.bf16.msra.mxu0 0
    %10159 = vmatprep.subr.bf16.mxu0 0
    %10160 = vmatpush2.bf16.msra.mxu0 0
    %10161 = vmatprep.subr.bf16.mxu0 0
    %10162 = vmatpush2.bf16.msra.mxu0 0
    %10163 = vmatprep.mubr.bf16.mxu0 0
    %10164 = vmatmul.mubr.bf16.gmra.mxu0 %v10081
    %v10165 = vpop.f32.mrf.mxu0
    %v10166 = vadd.f32 0.0, %v10165
    %v10167 = vpop.f32.mrf.mxu0
    %v10168 = vpop.f32.mrf.mxu0
    %v10169 = vadd.f32 0.0, %v10168
    %v10170 = vpop.f32.mrf.mxu0
    %10171 = vmatprep.mubr.bf16.mxu0 0
    %10172 = vmatmul.mubr.bf16.gmra.mxu0 %v10084
    %v10173 = vpop.f32.mrf.mxu0
    %v10174 = vadd.f32 0.0, %v10173
    %v10175 = vpop.f32.mrf.mxu0
    %v10176 = vpop.f32.mrf.mxu0
    %v10177 = vadd.f32 0.0, %v10176
    %v10178 = vpop.f32.mrf.mxu0
    %10179 = vmatprep.mubr.bf16.mxu0 0
    %10180 = vmatmul.mubr.bf16.gmra.mxu0 %v10087
    %v10181 = vpop.f32.mrf.mxu0
    %v10182 = vadd.f32 0.0, %v10181
    %v10183 = vpop.f32.mrf.mxu0
    %v10184 = vpop.f32.mrf.mxu0
    %v10185 = vadd.f32 0.0, %v10184
    %v10186 = vpop.f32.mrf.mxu0
    %10187 = vmatprep.mubr.bf16.mxu0 0
    %10188 = vmatmul.mubr.bf16.gmra.mxu0 %v10090
    %v10189 = vpop.f32.mrf.mxu0
    %v10190 = vadd.f32 0.0, %v10189
    %v10191 = vpop.f32.mrf.mxu0
    %v10192 = vpop.f32.mrf.mxu0
    %v10193 = vadd.f32 0.0, %v10192
    %v10194 = vpop.f32.mrf.mxu0
    %10195 = vmatprep.mubr.bf16.mxu0 0
    %10196 = vmatmul.mubr.bf16.gmra.mxu0 %v10093
    %v10197 = vpop.f32.mrf.mxu0
    %v10198 = vadd.f32 0.0, %v10197
    %v10199 = vpop.f32.mrf.mxu0
    %v10200 = vpop.f32.mrf.mxu0
    %v10201 = vadd.f32 0.0, %v10200
    %v10202 = vpop.f32.mrf.mxu0
    %10203 = vmatprep.mubr.bf16.mxu0 0
    %10204 = vmatmul.mubr.bf16.gmra.mxu0 %v10096
    %v10205 = vpop.f32.mrf.mxu0
    %v10206 = vadd.f32 0.0, %v10205
    %v10207 = vpop.f32.mrf.mxu0
    %v10208 = vpop.f32.mrf.mxu0
    %v10209 = vadd.f32 0.0, %v10208
    %v10210 = vpop.f32.mrf.mxu0
    %10211 = vmatprep.mubr.bf16.mxu0 0
    %10212 = vmatmul.mubr.bf16.gmra.mxu0 %v10099
    %v10213 = vpop.f32.mrf.mxu0
    %v10214 = vadd.f32 0.0, %v10213
    %v10215 = vpop.f32.mrf.mxu0
    %v10216 = vpop.f32.mrf.mxu0
    %v10217 = vadd.f32 0.0, %v10216
    %v10218 = vpop.f32.mrf.mxu0
    %10219 = vmatprep.mubr.bf16.mxu0 0
    %10220 = vmatmul.mubr.bf16.gmra.mxu0 %v10102
    %v10221 = vpop.f32.mrf.mxu0
    %v10222 = vadd.f32 0.0, %v10221
    %v10223 = vpop.f32.mrf.mxu0
    %v10224 = vpop.f32.mrf.mxu0
    %v10225 = vadd.f32 0.0, %v10224
    %v10226 = vpop.f32.mrf.mxu0
    %10227 = vmatprep.mubr.bf16.mxu0 0
    %10228 = vmatmul.mubr.bf16.gmra.mxu0 %v10105
    %v10229 = vpop.f32.mrf.mxu0
    %v10230 = vadd.f32 0.0, %v10229
    %v10231 = vpop.f32.mrf.mxu0
    %v10232 = vpop.f32.mrf.mxu0
    %v10233 = vadd.f32 0.0, %v10232
    %v10234 = vpop.f32.mrf.mxu0
    %10235 = vmatprep.mubr.bf16.mxu0 0
    %10236 = vmatmul.mubr.bf16.gmra.mxu0 %v10108
    %v10237 = vpop.f32.mrf.mxu0
    %v10238 = vadd.f32 0.0, %v10237
    %v10239 = vpop.f32.mrf.mxu0
    %v10240 = vpop.f32.mrf.mxu0
    %v10241 = vadd.f32 0.0, %v10240
    %v10242 = vpop.f32.mrf.mxu0
    %10243 = vmatprep.mubr.bf16.mxu0 0
    %10244 = vmatmul.mubr.bf16.gmra.mxu0 %v10111
    %v10245 = vpop.f32.mrf.mxu0
    %v10246 = vadd.f32 0.0, %v10245
    %v10247 = vpop.f32.mrf.mxu0
    %v10248 = vpop.f32.mrf.mxu0
    %v10249 = vadd.f32 0.0, %v10248
    %v10250 = vpop.f32.mrf.mxu0
    %10251 = vmatprep.mubr.bf16.mxu0 0
    %10252 = vmatmul.mubr.bf16.gmra.mxu0 %v10114
    %v10253 = vpop.f32.mrf.mxu0
    %v10254 = vadd.f32 0.0, %v10253
    %v10255 = vpop.f32.mrf.mxu0
    %v10256 = vpop.f32.mrf.mxu0
    %v10257 = vadd.f32 0.0, %v10256
    %v10258 = vpop.f32.mrf.mxu0
    %10259 = vmatprep.mubr.bf16.mxu0 0
    %10260 = vmatmul.mubr.bf16.gmra.mxu0 %v10117
    %v10261 = vpop.f32.mrf.mxu0
    %v10262 = vadd.f32 0.0, %v10261
    %v10263 = vpop.f32.mrf.mxu0
    %v10264 = vpop.f32.mrf.mxu0
    %v10265 = vadd.f32 0.0, %v10264
    %v10266 = vpop.f32.mrf.mxu0
    %10267 = vmatprep.mubr.bf16.mxu0 0
    %10268 = vmatmul.mubr.bf16.gmra.mxu0 %v10120
    %v10269 = vpop.f32.mrf.mxu0
    %v10270 = vadd.f32 0.0, %v10269
    %v10271 = vpop.f32.mrf.mxu0
    %v10272 = vpop.f32.mrf.mxu0
    %v10273 = vadd.f32 0.0, %v10272
    %v10274 = vpop.f32.mrf.mxu0
    %10275 = vmatprep.mubr.bf16.mxu0 0
    %10276 = vmatmul.mubr.bf16.gmra.mxu0 %v10123
    %v10277 = vpop.f32.mrf.mxu0
    %v10278 = vadd.f32 0.0, %v10277
    %v10279 = vpop.f32.mrf.mxu0
    %v10280 = vpop.f32.mrf.mxu0
    %v10281 = vadd.f32 0.0, %v10280
    %v10282 = vpop.f32.mrf.mxu0
    %10283 = vmatprep.mubr.bf16.mxu0 0
    %10284 = vmatmul.mubr.bf16.gmra.mxu0 %v10126
    %v10285 = vpop.f32.mrf.mxu0
    %v10286 = vadd.f32 0.0, %v10285
    %v10287 = vpop.f32.mrf.mxu0
    %v10288 = vpop.f32.mrf.mxu0
    %v10289 = vadd.f32 0.0, %v10288
    %v10290 = vpop.f32.mrf.mxu0
    %10291 = vdwg.mxu0
    %v10292 = vadd.f32 %v9605, %v10166
    %v10293 = vadd.f32 %v9606, %v10169
    %v10294 = vadd.f32 %v9607, %v10174
    %v10295 = vadd.f32 %v9608, %v10177
    %v10296 = vadd.f32 %v9609, %v10182
    %v10297 = vadd.f32 %v9610, %v10185
    %v10298 = vadd.f32 %v9611, %v10190
    %v10299 = vadd.f32 %v9612, %v10193
    %v10300 = vadd.f32 %v9613, %v10198
    %v10301 = vadd.f32 %v9614, %v10201
    %v10302 = vadd.f32 %v9615, %v10206
    %v10303 = vadd.f32 %v9616, %v10209
    %v10304 = vadd.f32 %v9617, %v10214
    %v10305 = vadd.f32 %v9618, %v10217
    %v10306 = vadd.f32 %v9619, %v10222
    %v10307 = vadd.f32 %v9620, %v10225
    %v10308 = vadd.f32 %v9621, %v10230
    %v10309 = vadd.f32 %v9622, %v10233
    %v10310 = vadd.f32 %v9623, %v10238
    %v10311 = vadd.f32 %v9624, %v10241
    %v10312 = vadd.f32 %v9625, %v10246
    %v10313 = vadd.f32 %v9626, %v10249
    %v10314 = vadd.f32 %v9627, %v10254
    %v10315 = vadd.f32 %v9628, %v10257
    %v10316 = vadd.f32 %v9629, %v10262
    %v10317 = vadd.f32 %v9630, %v10265
    %v10318 = vadd.f32 %v9631, %v10270
    %v10319 = vadd.f32 %v9632, %v10273
    %v10320 = vadd.f32 %v9633, %v10278
    %v10321 = vadd.f32 %v9634, %v10281
    %v10322 = vadd.f32 %v9635, %v10286
    %v10323 = vadd.f32 %v9636, %v10289
    %v10324 = vld [vmem:[%s8073] sm:$0xc]
    %v10325 = vld [vmem:[%s8073 + $0xc] sm:$0xc]
    %v10326 = vld [vmem:[%s8073 + $0x18] sm:$0xc]
    %v10327 = vld [vmem:[%s8073 + $0x24] sm:$0xc]
    %v10328 = vld [vmem:[%s8073 + $0x30] sm:$0xc]
    %v10329 = vld [vmem:[%s8073 + $0x3c] sm:$0xc]
    %v10330 = vld [vmem:[%s8073 + $0x48] sm:$0xc]
    %v10331 = vld [vmem:[%s8073 + $0x54] sm:$0xc]
    %v10332 = vld [vmem:[%s8073 + $0x60] sm:$0xc]
    %v10333 = vld [vmem:[%s8073 + $0x6c] sm:$0xc]
    %v10334 = vld [vmem:[%s8073 + $0x78] sm:$0xc]
    %v10335 = vld [vmem:[%s8073 + $0x84] sm:$0xc]
    %v10336 = vld [vmem:[%s8073 + $0x90] sm:$0xc]
    %v10337 = vld [vmem:[%s8073 + $0x9c] sm:$0xc]
    %v10338 = vld [vmem:[%s8073 + $0xa8] sm:$0xc]
    %v10339 = vld [vmem:[%s8073 + $0xb4] sm:$0xc]
    %v10372 = vrot.slane %v10324, 6
    %v10373 = vrot.slane %v10372, 4
    %v10374 = vrot.slane %v8431, 6
    %v10375 = vsel %vm2226, %v10373, %v10374
    %v10376 = vrot.slane %v10374, 4
    %v10377 = vrot.slane %v9637, 6
    %v10378 = vsel %vm2226, %v10376, %v10377
    %v10379 = vrot.slane %v10325, 6
    %v10380 = vrot.slane %v10379, 4
    %v10381 = vrot.slane %v8434, 6
    %v10382 = vsel %vm2226, %v10380, %v10381
    %v10383 = vrot.slane %v10381, 4
    %v10384 = vrot.slane %v9638, 6
    %v10385 = vsel %vm2226, %v10383, %v10384
    %v10386 = vrot.slane %v10326, 6
    %v10387 = vrot.slane %v10386, 4
    %v10388 = vrot.slane %v8437, 6
    %v10389 = vsel %vm2226, %v10387, %v10388
    %v10390 = vrot.slane %v10388, 4
    %v10391 = vrot.slane %v9639, 6
    %v10392 = vsel %vm2226, %v10390, %v10391
    %v10393 = vrot.slane %v10327, 6
    %v10394 = vrot.slane %v10393, 4
    %v10395 = vrot.slane %v8440, 6
    %v10396 = vsel %vm2226, %v10394, %v10395
    %v10397 = vrot.slane %v10395, 4
    %v10398 = vrot.slane %v9640, 6
    %v10399 = vsel %vm2226, %v10397, %v10398
    %v10400 = vrot.slane %v10328, 6
    %v10401 = vrot.slane %v10400, 4
    %v10402 = vrot.slane %v8443, 6
    %v10403 = vsel %vm2226, %v10401, %v10402
    %v10404 = vrot.slane %v10402, 4
    %v10405 = vrot.slane %v9641, 6
    %v10406 = vsel %vm2226, %v10404, %v10405
    %v10407 = vrot.slane %v10329, 6
    %v10408 = vrot.slane %v10407, 4
    %v10409 = vrot.slane %v8446, 6
    %v10410 = vsel %vm2226, %v10408, %v10409
    %v10411 = vrot.slane %v10409, 4
    %v10412 = vrot.slane %v9642, 6
    %v10413 = vsel %vm2226, %v10411, %v10412
    %v10414 = vrot.slane %v10330, 6
    %v10415 = vrot.slane %v10414, 4
    %v10416 = vrot.slane %v8449, 6
    %v10417 = vsel %vm2226, %v10415, %v10416
    %v10418 = vrot.slane %v10416, 4
    %v10419 = vrot.slane %v9643, 6
    %v10420 = vsel %vm2226, %v10418, %v10419
    %v10421 = vrot.slane %v10331, 6
    %v10422 = vrot.slane %v10421, 4
    %v10423 = vrot.slane %v8452, 6
    %v10424 = vsel %vm2226, %v10422, %v10423
    %v10425 = vrot.slane %v10423, 4
    %v10426 = vrot.slane %v9644, 6
    %v10427 = vsel %vm2226, %v10425, %v10426
    %v10428 = vrot.slane %v10332, 6
    %v10429 = vrot.slane %v10428, 4
    %v10430 = vrot.slane %v8455, 6
    %v10431 = vsel %vm2226, %v10429, %v10430
    %v10432 = vrot.slane %v10430, 4
    %v10433 = vrot.slane %v9645, 6
    %v10434 = vsel %vm2226, %v10432, %v10433
    %v10435 = vrot.slane %v10333, 6
    %v10436 = vrot.slane %v10435, 4
    %v10437 = vrot.slane %v8458, 6
    %v10438 = vsel %vm2226, %v10436, %v10437
    %v10439 = vrot.slane %v10437, 4
    %v10440 = vrot.slane %v9646, 6
    %v10441 = vsel %vm2226, %v10439, %v10440
    %v10442 = vrot.slane %v10334, 6
    %v10443 = vrot.slane %v10442, 4
    %v10444 = vrot.slane %v8461, 6
    %v10445 = vsel %vm2226, %v10443, %v10444
    %v10446 = vrot.slane %v10444, 4
    %v10447 = vrot.slane %v9647, 6
    %v10448 = vsel %vm2226, %v10446, %v10447
    %v10449 = vrot.slane %v10335, 6
    %v10450 = vrot.slane %v10449, 4
    %v10451 = vrot.slane %v8464, 6
    %v10452 = vsel %vm2226, %v10450, %v10451
    %v10453 = vrot.slane %v10451, 4
    %v10454 = vrot.slane %v9648, 6
    %v10455 = vsel %vm2226, %v10453, %v10454
    %v10456 = vrot.slane %v10336, 6
    %v10457 = vrot.slane %v10456, 4
    %v10458 = vrot.slane %v8467, 6
    %v10459 = vsel %vm2226, %v10457, %v10458
    %v10460 = vrot.slane %v10458, 4
    %v10461 = vrot.slane %v9649, 6
    %v10462 = vsel %vm2226, %v10460, %v10461
    %v10463 = vrot.slane %v10337, 6
    %v10464 = vrot.slane %v10463, 4
    %v10465 = vrot.slane %v8470, 6
    %v10466 = vsel %vm2226, %v10464, %v10465
    %v10467 = vrot.slane %v10465, 4
    %v10468 = vrot.slane %v9650, 6
    %v10469 = vsel %vm2226, %v10467, %v10468
    %v10470 = vrot.slane %v10338, 6
    %v10471 = vrot.slane %v10470, 4
    %v10472 = vrot.slane %v8473, 6
    %v10473 = vsel %vm2226, %v10471, %v10472
    %v10474 = vrot.slane %v10472, 4
    %v10475 = vrot.slane %v9651, 6
    %v10476 = vsel %vm2226, %v10474, %v10475
    %v10477 = vrot.slane %v10339, 6
    %v10478 = vrot.slane %v10477, 4
    %v10479 = vrot.slane %v8476, 6
    %v10480 = vsel %vm2226, %v10478, %v10479
    %v10481 = vrot.slane %v10479, 4
    %v10482 = vrot.slane %v9652, 6
    %v10483 = vsel %vm2226, %v10481, %v10482
    %v10484 = vunpack.c.l.b16 %v10375
    %v10485 = vunpack.c.l.b16 %v10378
    %v10486 = vunpack.c.l.b16 %v10382
    %v10487 = vunpack.c.l.b16 %v10385
    %v10488 = vunpack.c.l.b16 %v10389
    %v10489 = vunpack.c.l.b16 %v10392
    %v10490 = vunpack.c.l.b16 %v10396
    %v10491 = vunpack.c.l.b16 %v10399
    %v10492 = vunpack.c.l.b16 %v10403
    %v10493 = vunpack.c.l.b16 %v10406
    %v10494 = vunpack.c.l.b16 %v10410
    %v10495 = vunpack.c.l.b16 %v10413
    %v10496 = vunpack.c.l.b16 %v10417
    %v10497 = vunpack.c.l.b16 %v10420
    %v10498 = vunpack.c.l.b16 %v10424
    %v10499 = vunpack.c.l.b16 %v10427
    %v10500 = vunpack.c.l.b16 %v10431
    %v10501 = vunpack.c.l.b16 %v10434
    %v10502 = vunpack.c.l.b16 %v10438
    %v10503 = vunpack.c.l.b16 %v10441
    %v10504 = vunpack.c.l.b16 %v10445
    %v10505 = vunpack.c.l.b16 %v10448
    %v10506 = vunpack.c.l.b16 %v10452
    %v10507 = vunpack.c.l.b16 %v10455
    %v10508 = vunpack.c.l.b16 %v10459
    %v10509 = vunpack.c.l.b16 %v10462
    %v10510 = vunpack.c.l.b16 %v10466
    %v10511 = vunpack.c.l.b16 %v10469
    %v10512 = vunpack.c.l.b16 %v10473
    %v10513 = vunpack.c.l.b16 %v10476
    %v10514 = vunpack.c.l.b16 %v10480
    %v10515 = vunpack.c.l.b16 %v10483
    %v10516 = vpack.c.b16 %v10485, %v10484
    %v10517 = vpack.c.b16 %v10487, %v10486
    %v10518 = vpack.c.b16 %v10489, %v10488
    %v10519 = vpack.c.b16 %v10491, %v10490
    %v10520 = vpack.c.b16 %v10493, %v10492
    %v10521 = vpack.c.b16 %v10495, %v10494
    %v10522 = vpack.c.b16 %v10497, %v10496
    %v10523 = vpack.c.b16 %v10499, %v10498
    %v10524 = vpack.c.b16 %v10501, %v10500
    %v10525 = vpack.c.b16 %v10503, %v10502
    %v10526 = vpack.c.b16 %v10505, %v10504
    %v10527 = vpack.c.b16 %v10507, %v10506
    %v10528 = vpack.c.b16 %v10509, %v10508
    %v10529 = vpack.c.b16 %v10511, %v10510
    %v10530 = vpack.c.b16 %v10513, %v10512
    %v10531 = vpack.c.b16 %v10515, %v10514
    %v10533 = vunpack.c.l.b16 %v8069
    %v10534 = vpack.c.b16 %v10533, %v10070
    %v10535 = vrot.slane %v10534, 2
    %v10537 = vsel %vm520, %v10516, 0
    %v10540 = vsel %vm520, %v10517, 0
    %v10543 = vsel %vm520, %v10518, 0
    %v10546 = vsel %vm520, %v10519, 0
    %v10549 = vsel %vm520, %v10520, 0
    %v10552 = vsel %vm520, %v10521, 0
    %v10555 = vsel %vm520, %v10522, 0
    %v10558 = vsel %vm520, %v10523, 0
    %v10561 = vsel %vm520, %v10524, 0
    %v10564 = vsel %vm520, %v10525, 0
    %v10567 = vsel %vm520, %v10526, 0
    %v10570 = vsel %vm520, %v10527, 0
    %v10573 = vsel %vm520, %v10528, 0
    %v10576 = vsel %vm520, %v10529, 0
    %v10579 = vsel %vm520, %v10530, 0
    %v10582 = vsel %vm520, %v10531, 0
    %v10585 = vand.u32 %v10535, %v572
    %10587 = vmatprep.subr.bf16.mxu0 0
    %10588 = vmatpush1.bf16.msra.mxu0 0
    %10589 = vmatprep.subr.bf16.mxu0 0
    %10590 = vmatpush1.bf16.msra.mxu0 0
    %10591 = vmatprep.subr.bf16.mxu0 0
    %10592 = vmatpush1.bf16.msra.mxu0 0
    %10593 = vmatprep.subr.bf16.mxu0 0
    %10594 = vmatpush1.bf16.msra.mxu0 0
    %10595 = vmatprep.subr.bf16.mxu0 0
    %10596 = vmatpush1.bf16.msra.mxu0 0
    %10597 = vmatprep.subr.bf16.mxu0 0
    %10598 = vmatpush1.bf16.msra.mxu0 0
    %10599 = vmatprep.subr.bf16.mxu0 0
    %10600 = vmatpush1.bf16.msra.mxu0 0
    %10601 = vmatprep.subr.bf16.mxu0 0
    %10602 = vmatpush1.bf16.msra.mxu0 %v10585
    %10603 = vmatprep.subr.bf16.mxu0 0
    %10604 = vmatpush2.bf16.msra.mxu0 0
    %10605 = vmatprep.subr.bf16.mxu0 0
    %10606 = vmatpush2.bf16.msra.mxu0 0
    %10607 = vmatprep.subr.bf16.mxu0 0
    %10608 = vmatpush2.bf16.msra.mxu0 0
    %10609 = vmatprep.subr.bf16.mxu0 0
    %10610 = vmatpush2.bf16.msra.mxu0 0
    %10611 = vmatprep.subr.bf16.mxu0 0
    %10612 = vmatpush2.bf16.msra.mxu0 0
    %10613 = vmatprep.subr.bf16.mxu0 0
    %10614 = vmatpush2.bf16.msra.mxu0 0
    %10615 = vmatprep.subr.bf16.mxu0 0
    %10616 = vmatpush2.bf16.msra.mxu0 0
    %10617 = vmatprep.subr.bf16.mxu0 0
    %10618 = vmatpush2.bf16.msra.mxu0 0
    %10619 = vmatprep.mubr.bf16.mxu0 0
    %10620 = vmatmul.mubr.bf16.gmra.mxu0 %v10537
    %v10621 = vpop.f32.mrf.mxu0
    %v10622 = vadd.f32 0.0, %v10621
    %v10623 = vpop.f32.mrf.mxu0
    %v10624 = vpop.f32.mrf.mxu0
    %v10625 = vadd.f32 0.0, %v10624
    %v10626 = vpop.f32.mrf.mxu0
    %10627 = vmatprep.mubr.bf16.mxu0 0
    %10628 = vmatmul.mubr.bf16.gmra.mxu0 %v10540
    %v10629 = vpop.f32.mrf.mxu0
    %v10630 = vadd.f32 0.0, %v10629
    %v10631 = vpop.f32.mrf.mxu0
    %v10632 = vpop.f32.mrf.mxu0
    %v10633 = vadd.f32 0.0, %v10632
    %v10634 = vpop.f32.mrf.mxu0
    %10635 = vmatprep.mubr.bf16.mxu0 0
    %10636 = vmatmul.mubr.bf16.gmra.mxu0 %v10543
    %v10637 = vpop.f32.mrf.mxu0
    %v10638 = vadd.f32 0.0, %v10637
    %v10639 = vpop.f32.mrf.mxu0
    %v10640 = vpop.f32.mrf.mxu0
    %v10641 = vadd.f32 0.0, %v10640
    %v10642 = vpop.f32.mrf.mxu0
    %10643 = vmatprep.mubr.bf16.mxu0 0
    %10644 = vmatmul.mubr.bf16.gmra.mxu0 %v10546
    %v10645 = vpop.f32.mrf.mxu0
    %v10646 = vadd.f32 0.0, %v10645
    %v10647 = vpop.f32.mrf.mxu0
    %v10648 = vpop.f32.mrf.mxu0
    %v10649 = vadd.f32 0.0, %v10648
    %v10650 = vpop.f32.mrf.mxu0
    %10651 = vmatprep.mubr.bf16.mxu0 0
    %10652 = vmatmul.mubr.bf16.gmra.mxu0 %v10549
    %v10653 = vpop.f32.mrf.mxu0
    %v10654 = vadd.f32 0.0, %v10653
    %v10655 = vpop.f32.mrf.mxu0
    %v10656 = vpop.f32.mrf.mxu0
    %v10657 = vadd.f32 0.0, %v10656
    %v10658 = vpop.f32.mrf.mxu0
    %10659 = vmatprep.mubr.bf16.mxu0 0
    %10660 = vmatmul.mubr.bf16.gmra.mxu0 %v10552
    %v10661 = vpop.f32.mrf.mxu0
    %v10662 = vadd.f32 0.0, %v10661
    %v10663 = vpop.f32.mrf.mxu0
    %v10664 = vpop.f32.mrf.mxu0
    %v10665 = vadd.f32 0.0, %v10664
    %v10666 = vpop.f32.mrf.mxu0
    %10667 = vmatprep.mubr.bf16.mxu0 0
    %10668 = vmatmul.mubr.bf16.gmra.mxu0 %v10555
    %v10669 = vpop.f32.mrf.mxu0
    %v10670 = vadd.f32 0.0, %v10669
    %v10671 = vpop.f32.mrf.mxu0
    %v10672 = vpop.f32.mrf.mxu0
    %v10673 = vadd.f32 0.0, %v10672
    %v10674 = vpop.f32.mrf.mxu0
    %10675 = vmatprep.mubr.bf16.mxu0 0
    %10676 = vmatmul.mubr.bf16.gmra.mxu0 %v10558
    %v10677 = vpop.f32.mrf.mxu0
    %v10678 = vadd.f32 0.0, %v10677
    %v10679 = vpop.f32.mrf.mxu0
    %v10680 = vpop.f32.mrf.mxu0
    %v10681 = vadd.f32 0.0, %v10680
    %v10682 = vpop.f32.mrf.mxu0
    %10683 = vmatprep.mubr.bf16.mxu0 0
    %10684 = vmatmul.mubr.bf16.gmra.mxu0 %v10561
    %v10685 = vpop.f32.mrf.mxu0
    %v10686 = vadd.f32 0.0, %v10685
    %v10687 = vpop.f32.mrf.mxu0
    %v10688 = vpop.f32.mrf.mxu0
    %v10689 = vadd.f32 0.0, %v10688
    %v10690 = vpop.f32.mrf.mxu0
    %10691 = vmatprep.mubr.bf16.mxu0 0
    %10692 = vmatmul.mubr.bf16.gmra.mxu0 %v10564
    %v10693 = vpop.f32.mrf.mxu0
    %v10694 = vadd.f32 0.0, %v10693
    %v10695 = vpop.f32.mrf.mxu0
    %v10696 = vpop.f32.mrf.mxu0
    %v10697 = vadd.f32 0.0, %v10696
    %v10698 = vpop.f32.mrf.mxu0
    %10699 = vmatprep.mubr.bf16.mxu0 0
    %10700 = vmatmul.mubr.bf16.gmra.mxu0 %v10567
    %v10701 = vpop.f32.mrf.mxu0
    %v10702 = vadd.f32 0.0, %v10701
    %v10703 = vpop.f32.mrf.mxu0
    %v10704 = vpop.f32.mrf.mxu0
    %v10705 = vadd.f32 0.0, %v10704
    %v10706 = vpop.f32.mrf.mxu0
    %10707 = vmatprep.mubr.bf16.mxu0 0
    %10708 = vmatmul.mubr.bf16.gmra.mxu0 %v10570
    %v10709 = vpop.f32.mrf.mxu0
    %v10710 = vadd.f32 0.0, %v10709
    %v10711 = vpop.f32.mrf.mxu0
    %v10712 = vpop.f32.mrf.mxu0
    %v10713 = vadd.f32 0.0, %v10712
    %v10714 = vpop.f32.mrf.mxu0
    %10715 = vmatprep.mubr.bf16.mxu0 0
    %10716 = vmatmul.mubr.bf16.gmra.mxu0 %v10573
    %v10717 = vpop.f32.mrf.mxu0
    %v10718 = vadd.f32 0.0, %v10717
    %v10719 = vpop.f32.mrf.mxu0
    %v10720 = vpop.f32.mrf.mxu0
    %v10721 = vadd.f32 0.0, %v10720
    %v10722 = vpop.f32.mrf.mxu0
    %10723 = vmatprep.mubr.bf16.mxu0 0
    %10724 = vmatmul.mubr.bf16.gmra.mxu0 %v10576
    %v10725 = vpop.f32.mrf.mxu0
    %v10726 = vadd.f32 0.0, %v10725
    %v10727 = vpop.f32.mrf.mxu0
    %v10728 = vpop.f32.mrf.mxu0
    %v10729 = vadd.f32 0.0, %v10728
    %v10730 = vpop.f32.mrf.mxu0
    %10731 = vmatprep.mubr.bf16.mxu0 0
    %10732 = vmatmul.mubr.bf16.gmra.mxu0 %v10579
    %v10733 = vpop.f32.mrf.mxu0
    %v10734 = vadd.f32 0.0, %v10733
    %v10735 = vpop.f32.mrf.mxu0
    %v10736 = vpop.f32.mrf.mxu0
    %v10737 = vadd.f32 0.0, %v10736
    %v10738 = vpop.f32.mrf.mxu0
    %10739 = vmatprep.mubr.bf16.mxu0 0
    %10740 = vmatmul.mubr.bf16.gmra.mxu0 %v10582
    %v10741 = vpop.f32.mrf.mxu0
    %v10742 = vadd.f32 0.0, %v10741
    %v10743 = vpop.f32.mrf.mxu0
    %v10744 = vpop.f32.mrf.mxu0
    %v10745 = vadd.f32 0.0, %v10744
    %v10746 = vpop.f32.mrf.mxu0
    %10747 = vdwg.mxu0
    %v10748 = vadd.f32 %v10292, %v10622
    %v10749 = vadd.f32 %v10293, %v10625
    %v10750 = vadd.f32 %v10294, %v10630
    %v10751 = vadd.f32 %v10295, %v10633
    %v10752 = vadd.f32 %v10296, %v10638
    %v10753 = vadd.f32 %v10297, %v10641
    %v10754 = vadd.f32 %v10298, %v10646
    %v10755 = vadd.f32 %v10299, %v10649
    %v10756 = vadd.f32 %v10300, %v10654
    %v10757 = vadd.f32 %v10301, %v10657
    %v10758 = vadd.f32 %v10302, %v10662
    %v10759 = vadd.f32 %v10303, %v10665
    %v10760 = vadd.f32 %v10304, %v10670
    %v10761 = vadd.f32 %v10305, %v10673
    %v10762 = vadd.f32 %v10306, %v10678
    %v10763 = vadd.f32 %v10307, %v10681
    %v10764 = vadd.f32 %v10308, %v10686
    %v10765 = vadd.f32 %v10309, %v10689
    %v10766 = vadd.f32 %v10310, %v10694
    %v10767 = vadd.f32 %v10311, %v10697
    %v10768 = vadd.f32 %v10312, %v10702
    %v10769 = vadd.f32 %v10313, %v10705
    %v10770 = vadd.f32 %v10314, %v10710
    %v10771 = vadd.f32 %v10315, %v10713
    %v10772 = vadd.f32 %v10316, %v10718
    %v10773 = vadd.f32 %v10317, %v10721
    %v10774 = vadd.f32 %v10318, %v10726
    %v10775 = vadd.f32 %v10319, %v10729
    %v10776 = vadd.f32 %v10320, %v10734
    %v10777 = vadd.f32 %v10321, %v10737
    %v10778 = vadd.f32 %v10322, %v10742
    %v10779 = vadd.f32 %v10323, %v10745
    %s10780 = scalar_lea.vmem %s1, 64
    %v10781 = vld [vmem:[%s10780] sm:$0xf]
    %v10782 = vld [vmem:[%s10780 + $0x4] sm:$0xf]
    %v10783 = vld [vmem:[%s10780 + $0x8] sm:$0xf]
    %v10784 = vld [vmem:[%s10780 + $0xc] sm:$0x1]
    %s10785 = sadd.s32 %s16, 4
    %s10786 = smul.u32 %s10785, 3
    %s10787 = smul.addr %s10786, 4
    %s10788 = scalar_lea.vmem %s0, %s10787
    %v10789 = vld [vmem:[%s10788] sm:$0xf]
    %v10790 = vld [vmem:[%s10788 + $0x4] sm:$0xf]
    %v10791 = vld [vmem:[%s10788 + $0xc] sm:$0xf]
    %v10792 = vld [vmem:[%s10788 + $0x10] sm:$0xf]
    %v10793 = vld [vmem:[%s10788 + $0x18] sm:$0xf]
    %v10794 = vld [vmem:[%s10788 + $0x1c] sm:$0xf]
    %v10795 = vld [vmem:[%s10788 + $0x24] sm:$0xf]
    %v10796 = vld [vmem:[%s10788 + $0x28] sm:$0xf]
    %v10797 = vld [vmem:[%s10788 + $0x30] sm:$0xf]
    %v10798 = vld [vmem:[%s10788 + $0x34] sm:$0xf]
    %v10799 = vld [vmem:[%s10788 + $0x3c] sm:$0xf]
    %v10800 = vld [vmem:[%s10788 + $0x40] sm:$0xf]
    %v10801 = vld [vmem:[%s10788 + $0x48] sm:$0xf]
    %v10802 = vld [vmem:[%s10788 + $0x4c] sm:$0xf]
    %v10803 = vld [vmem:[%s10788 + $0x54] sm:$0xf]
    %v10804 = vld [vmem:[%s10788 + $0x58] sm:$0xf]
    %v10805 = vld [vmem:[%s10788 + $0x60] sm:$0xf]
    %v10806 = vld [vmem:[%s10788 + $0x64] sm:$0xf]
    %v10807 = vld [vmem:[%s10788 + $0x6c] sm:$0xf]
    %v10808 = vld [vmem:[%s10788 + $0x70] sm:$0xf]
    %v10809 = vld [vmem:[%s10788 + $0x78] sm:$0xf]
    %v10810 = vld [vmem:[%s10788 + $0x7c] sm:$0xf]
    %v10811 = vld [vmem:[%s10788 + $0x84] sm:$0xf]
    %v10812 = vld [vmem:[%s10788 + $0x88] sm:$0xf]
    %v10813 = vld [vmem:[%s10788 + $0x90] sm:$0xf]
    %v10814 = vld [vmem:[%s10788 + $0x94] sm:$0xf]
    %v10815 = vld [vmem:[%s10788 + $0x9c] sm:$0xf]
    %v10816 = vld [vmem:[%s10788 + $0xa0] sm:$0xf]
    %v10817 = vld [vmem:[%s10788 + $0xa8] sm:$0xf]
    %v10818 = vld [vmem:[%s10788 + $0xac] sm:$0xf]
    %v10819 = vld [vmem:[%s10788 + $0xb4] sm:$0xf]
    %v10820 = vld [vmem:[%s10788 + $0xb8] sm:$0xf]
    %v10853 = vunpack.c.l.b16 %v10789
    %v10854 = vunpack.c.l.b16 %v10790
    %v10855 = vunpack.c.l.b16 %v10791
    %v10856 = vunpack.c.l.b16 %v10792
    %v10857 = vunpack.c.l.b16 %v10793
    %v10858 = vunpack.c.l.b16 %v10794
    %v10859 = vunpack.c.l.b16 %v10795
    %v10860 = vunpack.c.l.b16 %v10796
    %v10861 = vunpack.c.l.b16 %v10797
    %v10862 = vunpack.c.l.b16 %v10798
    %v10863 = vunpack.c.l.b16 %v10799
    %v10864 = vunpack.c.l.b16 %v10800
    %v10865 = vunpack.c.l.b16 %v10801
    %v10866 = vunpack.c.l.b16 %v10802
    %v10867 = vunpack.c.l.b16 %v10803
    %v10868 = vunpack.c.l.b16 %v10804
    %v10869 = vunpack.c.l.b16 %v10805
    %v10870 = vunpack.c.l.b16 %v10806
    %v10871 = vunpack.c.l.b16 %v10807
    %v10872 = vunpack.c.l.b16 %v10808
    %v10873 = vunpack.c.l.b16 %v10809
    %v10874 = vunpack.c.l.b16 %v10810
    %v10875 = vunpack.c.l.b16 %v10811
    %v10876 = vunpack.c.l.b16 %v10812
    %v10877 = vunpack.c.l.b16 %v10813
    %v10878 = vunpack.c.l.b16 %v10814
    %v10879 = vunpack.c.l.b16 %v10815
    %v10880 = vunpack.c.l.b16 %v10816
    %v10881 = vunpack.c.l.b16 %v10817
    %v10882 = vunpack.c.l.b16 %v10818
    %v10883 = vunpack.c.l.b16 %v10819
    %v10884 = vunpack.c.l.b16 %v10820
    %v10885 = vpack.c.b16 %v10854, %v10853
    %v10886 = vpack.c.b16 %v10856, %v10855
    %v10887 = vpack.c.b16 %v10858, %v10857
    %v10888 = vpack.c.b16 %v10860, %v10859
    %v10889 = vpack.c.b16 %v10862, %v10861
    %v10890 = vpack.c.b16 %v10864, %v10863
    %v10891 = vpack.c.b16 %v10866, %v10865
    %v10892 = vpack.c.b16 %v10868, %v10867
    %v10893 = vpack.c.b16 %v10870, %v10869
    %v10894 = vpack.c.b16 %v10872, %v10871
    %v10895 = vpack.c.b16 %v10874, %v10873
    %v10896 = vpack.c.b16 %v10876, %v10875
    %v10897 = vpack.c.b16 %v10878, %v10877
    %v10898 = vpack.c.b16 %v10880, %v10879
    %v10899 = vpack.c.b16 %v10882, %v10881
    %v10900 = vpack.c.b16 %v10884, %v10883
    %v10902 = vsel %vm520, %v10885, 0
    %v10905 = vsel %vm520, %v10886, 0
    %v10908 = vsel %vm520, %v10887, 0
    %v10911 = vsel %vm520, %v10888, 0
    %v10914 = vsel %vm520, %v10889, 0
    %v10917 = vsel %vm520, %v10890, 0
    %v10920 = vsel %vm520, %v10891, 0
    %v10923 = vsel %vm520, %v10892, 0
    %v10926 = vsel %vm520, %v10893, 0
    %v10929 = vsel %vm520, %v10894, 0
    %v10932 = vsel %vm520, %v10895, 0
    %v10935 = vsel %vm520, %v10896, 0
    %v10938 = vsel %vm520, %v10897, 0
    %v10941 = vsel %vm520, %v10898, 0
    %v10944 = vsel %vm520, %v10899, 0
    %v10947 = vsel %vm520, %v10900, 0
    %v10950 = vand.u32 %v10781, %v572
    %10952 = vmatprep.subr.bf16.mxu0 0
    %10953 = vmatpush1.bf16.msra.mxu0 0
    %10954 = vmatprep.subr.bf16.mxu0 0
    %10955 = vmatpush1.bf16.msra.mxu0 0
    %10956 = vmatprep.subr.bf16.mxu0 0
    %10957 = vmatpush1.bf16.msra.mxu0 0
    %10958 = vmatprep.subr.bf16.mxu0 0
    %10959 = vmatpush1.bf16.msra.mxu0 0
    %10960 = vmatprep.subr.bf16.mxu0 0
    %10961 = vmatpush1.bf16.msra.mxu0 0
    %10962 = vmatprep.subr.bf16.mxu0 0
    %10963 = vmatpush1.bf16.msra.mxu0 0
    %10964 = vmatprep.subr.bf16.mxu0 0
    %10965 = vmatpush1.bf16.msra.mxu0 0
    %10966 = vmatprep.subr.bf16.mxu0 0
    %10967 = vmatpush1.bf16.msra.mxu0 %v10950
    %10968 = vmatprep.subr.bf16.mxu0 0
    %10969 = vmatpush2.bf16.msra.mxu0 0
    %10970 = vmatprep.subr.bf16.mxu0 0
    %10971 = vmatpush2.bf16.msra.mxu0 0
    %10972 = vmatprep.subr.bf16.mxu0 0
    %10973 = vmatpush2.bf16.msra.mxu0 0
    %10974 = vmatprep.subr.bf16.mxu0 0
    %10975 = vmatpush2.bf16.msra.mxu0 0
    %10976 = vmatprep.subr.bf16.mxu0 0
    %10977 = vmatpush2.bf16.msra.mxu0 0
    %10978 = vmatprep.subr.bf16.mxu0 0
    %10979 = vmatpush2.bf16.msra.mxu0 0
    %10980 = vmatprep.subr.bf16.mxu0 0
    %10981 = vmatpush2.bf16.msra.mxu0 0
    %10982 = vmatprep.subr.bf16.mxu0 0
    %10983 = vmatpush2.bf16.msra.mxu0 0
    %10984 = vmatprep.mubr.bf16.mxu0 0
    %10985 = vmatmul.mubr.bf16.gmra.mxu0 %v10902
    %v10986 = vpop.f32.mrf.mxu0
    %v10987 = vadd.f32 0.0, %v10986
    %v10988 = vpop.f32.mrf.mxu0
    %v10989 = vpop.f32.mrf.mxu0
    %v10990 = vadd.f32 0.0, %v10989
    %v10991 = vpop.f32.mrf.mxu0
    %10992 = vmatprep.mubr.bf16.mxu0 0
    %10993 = vmatmul.mubr.bf16.gmra.mxu0 %v10905
    %v10994 = vpop.f32.mrf.mxu0
    %v10995 = vadd.f32 0.0, %v10994
    %v10996 = vpop.f32.mrf.mxu0
    %v10997 = vpop.f32.mrf.mxu0
    %v10998 = vadd.f32 0.0, %v10997
    %v10999 = vpop.f32.mrf.mxu0
    %11000 = vmatprep.mubr.bf16.mxu0 0
    %11001 = vmatmul.mubr.bf16.gmra.mxu0 %v10908
    %v11002 = vpop.f32.mrf.mxu0
    %v11003 = vadd.f32 0.0, %v11002
    %v11004 = vpop.f32.mrf.mxu0
    %v11005 = vpop.f32.mrf.mxu0
    %v11006 = vadd.f32 0.0, %v11005
    %v11007 = vpop.f32.mrf.mxu0
    %11008 = vmatprep.mubr.bf16.mxu0 0
    %11009 = vmatmul.mubr.bf16.gmra.mxu0 %v10911
    %v11010 = vpop.f32.mrf.mxu0
    %v11011 = vadd.f32 0.0, %v11010
    %v11012 = vpop.f32.mrf.mxu0
    %v11013 = vpop.f32.mrf.mxu0
    %v11014 = vadd.f32 0.0, %v11013
    %v11015 = vpop.f32.mrf.mxu0
    %11016 = vmatprep.mubr.bf16.mxu0 0
    %11017 = vmatmul.mubr.bf16.gmra.mxu0 %v10914
    %v11018 = vpop.f32.mrf.mxu0
    %v11019 = vadd.f32 0.0, %v11018
    %v11020 = vpop.f32.mrf.mxu0
    %v11021 = vpop.f32.mrf.mxu0
    %v11022 = vadd.f32 0.0, %v11021
    %v11023 = vpop.f32.mrf.mxu0
    %11024 = vmatprep.mubr.bf16.mxu0 0
    %11025 = vmatmul.mubr.bf16.gmra.mxu0 %v10917
    %v11026 = vpop.f32.mrf.mxu0
    %v11027 = vadd.f32 0.0, %v11026
    %v11028 = vpop.f32.mrf.mxu0
    %v11029 = vpop.f32.mrf.mxu0
    %v11030 = vadd.f32 0.0, %v11029
    %v11031 = vpop.f32.mrf.mxu0
    %11032 = vmatprep.mubr.bf16.mxu0 0
    %11033 = vmatmul.mubr.bf16.gmra.mxu0 %v10920
    %v11034 = vpop.f32.mrf.mxu0
    %v11035 = vadd.f32 0.0, %v11034
    %v11036 = vpop.f32.mrf.mxu0
    %v11037 = vpop.f32.mrf.mxu0
    %v11038 = vadd.f32 0.0, %v11037
    %v11039 = vpop.f32.mrf.mxu0
    %11040 = vmatprep.mubr.bf16.mxu0 0
    %11041 = vmatmul.mubr.bf16.gmra.mxu0 %v10923
    %v11042 = vpop.f32.mrf.mxu0
    %v11043 = vadd.f32 0.0, %v11042
    %v11044 = vpop.f32.mrf.mxu0
    %v11045 = vpop.f32.mrf.mxu0
    %v11046 = vadd.f32 0.0, %v11045
    %v11047 = vpop.f32.mrf.mxu0
    %11048 = vmatprep.mubr.bf16.mxu0 0
    %11049 = vmatmul.mubr.bf16.gmra.mxu0 %v10926
    %v11050 = vpop.f32.mrf.mxu0
    %v11051 = vadd.f32 0.0, %v11050
    %v11052 = vpop.f32.mrf.mxu0
    %v11053 = vpop.f32.mrf.mxu0
    %v11054 = vadd.f32 0.0, %v11053
    %v11055 = vpop.f32.mrf.mxu0
    %11056 = vmatprep.mubr.bf16.mxu0 0
    %11057 = vmatmul.mubr.bf16.gmra.mxu0 %v10929
    %v11058 = vpop.f32.mrf.mxu0
    %v11059 = vadd.f32 0.0, %v11058
    %v11060 = vpop.f32.mrf.mxu0
    %v11061 = vpop.f32.mrf.mxu0
    %v11062 = vadd.f32 0.0, %v11061
    %v11063 = vpop.f32.mrf.mxu0
    %11064 = vmatprep.mubr.bf16.mxu0 0
    %11065 = vmatmul.mubr.bf16.gmra.mxu0 %v10932
    %v11066 = vpop.f32.mrf.mxu0
    %v11067 = vadd.f32 0.0, %v11066
    %v11068 = vpop.f32.mrf.mxu0
    %v11069 = vpop.f32.mrf.mxu0
    %v11070 = vadd.f32 0.0, %v11069
    %v11071 = vpop.f32.mrf.mxu0
    %11072 = vmatprep.mubr.bf16.mxu0 0
    %11073 = vmatmul.mubr.bf16.gmra.mxu0 %v10935
    %v11074 = vpop.f32.mrf.mxu0
    %v11075 = vadd.f32 0.0, %v11074
    %v11076 = vpop.f32.mrf.mxu0
    %v11077 = vpop.f32.mrf.mxu0
    %v11078 = vadd.f32 0.0, %v11077
    %v11079 = vpop.f32.mrf.mxu0
    %11080 = vmatprep.mubr.bf16.mxu0 0
    %11081 = vmatmul.mubr.bf16.gmra.mxu0 %v10938
    %v11082 = vpop.f32.mrf.mxu0
    %v11083 = vadd.f32 0.0, %v11082
    %v11084 = vpop.f32.mrf.mxu0
    %v11085 = vpop.f32.mrf.mxu0
    %v11086 = vadd.f32 0.0, %v11085
    %v11087 = vpop.f32.mrf.mxu0
    %11088 = vmatprep.mubr.bf16.mxu0 0
    %11089 = vmatmul.mubr.bf16.gmra.mxu0 %v10941
    %v11090 = vpop.f32.mrf.mxu0
    %v11091 = vadd.f32 0.0, %v11090
    %v11092 = vpop.f32.mrf.mxu0
    %v11093 = vpop.f32.mrf.mxu0
    %v11094 = vadd.f32 0.0, %v11093
    %v11095 = vpop.f32.mrf.mxu0
    %11096 = vmatprep.mubr.bf16.mxu0 0
    %11097 = vmatmul.mubr.bf16.gmra.mxu0 %v10944
    %v11098 = vpop.f32.mrf.mxu0
    %v11099 = vadd.f32 0.0, %v11098
    %v11100 = vpop.f32.mrf.mxu0
    %v11101 = vpop.f32.mrf.mxu0
    %v11102 = vadd.f32 0.0, %v11101
    %v11103 = vpop.f32.mrf.mxu0
    %11104 = vmatprep.mubr.bf16.mxu0 0
    %11105 = vmatmul.mubr.bf16.gmra.mxu0 %v10947
    %v11106 = vpop.f32.mrf.mxu0
    %v11107 = vadd.f32 0.0, %v11106
    %v11108 = vpop.f32.mrf.mxu0
    %v11109 = vpop.f32.mrf.mxu0
    %v11110 = vadd.f32 0.0, %v11109
    %v11111 = vpop.f32.mrf.mxu0
    %11112 = vdwg.mxu0
    %v11113 = vadd.f32 %v10748, %v10987
    %v11114 = vadd.f32 %v10749, %v10990
    %v11115 = vadd.f32 %v10750, %v10995
    %v11116 = vadd.f32 %v10751, %v10998
    %v11117 = vadd.f32 %v10752, %v11003
    %v11118 = vadd.f32 %v10753, %v11006
    %v11119 = vadd.f32 %v10754, %v11011
    %v11120 = vadd.f32 %v10755, %v11014
    %v11121 = vadd.f32 %v10756, %v11019
    %v11122 = vadd.f32 %v10757, %v11022
    %v11123 = vadd.f32 %v10758, %v11027
    %v11124 = vadd.f32 %v10759, %v11030
    %v11125 = vadd.f32 %v10760, %v11035
    %v11126 = vadd.f32 %v10761, %v11038
    %v11127 = vadd.f32 %v10762, %v11043
    %v11128 = vadd.f32 %v10763, %v11046
    %v11129 = vadd.f32 %v10764, %v11051
    %v11130 = vadd.f32 %v10765, %v11054
    %v11131 = vadd.f32 %v10766, %v11059
    %v11132 = vadd.f32 %v10767, %v11062
    %v11133 = vadd.f32 %v10768, %v11067
    %v11134 = vadd.f32 %v10769, %v11070
    %v11135 = vadd.f32 %v10770, %v11075
    %v11136 = vadd.f32 %v10771, %v11078
    %v11137 = vadd.f32 %v10772, %v11083
    %v11138 = vadd.f32 %v10773, %v11086
    %v11139 = vadd.f32 %v10774, %v11091
    %v11140 = vadd.f32 %v10775, %v11094
    %v11141 = vadd.f32 %v10776, %v11099
    %v11142 = vadd.f32 %v10777, %v11102
    %v11143 = vadd.f32 %v10778, %v11107
    %v11144 = vadd.f32 %v10779, %v11110
    %v11145 = vld [vmem:[%s10788] sm:$0xf]
    %v11146 = vld [vmem:[%s10788 + $0x4] sm:$0xf]
    %v11147 = vld [vmem:[%s10788 + $0x8] sm:$0x1]
    %v11148 = vld [vmem:[%s10788 + $0xc] sm:$0xf]
    %v11149 = vld [vmem:[%s10788 + $0x10] sm:$0xf]
    %v11150 = vld [vmem:[%s10788 + $0x14] sm:$0x1]
    %v11151 = vld [vmem:[%s10788 + $0x18] sm:$0xf]
    %v11152 = vld [vmem:[%s10788 + $0x1c] sm:$0xf]
    %v11153 = vld [vmem:[%s10788 + $0x20] sm:$0x1]
    %v11154 = vld [vmem:[%s10788 + $0x24] sm:$0xf]
    %v11155 = vld [vmem:[%s10788 + $0x28] sm:$0xf]
    %v11156 = vld [vmem:[%s10788 + $0x2c] sm:$0x1]
    %v11157 = vld [vmem:[%s10788 + $0x30] sm:$0xf]
    %v11158 = vld [vmem:[%s10788 + $0x34] sm:$0xf]
    %v11159 = vld [vmem:[%s10788 + $0x38] sm:$0x1]
    %v11160 = vld [vmem:[%s10788 + $0x3c] sm:$0xf]
    %v11161 = vld [vmem:[%s10788 + $0x40] sm:$0xf]
    %v11162 = vld [vmem:[%s10788 + $0x44] sm:$0x1]
    %v11163 = vld [vmem:[%s10788 + $0x48] sm:$0xf]
    %v11164 = vld [vmem:[%s10788 + $0x4c] sm:$0xf]
    %v11165 = vld [vmem:[%s10788 + $0x50] sm:$0x1]
    %v11166 = vld [vmem:[%s10788 + $0x54] sm:$0xf]
    %v11167 = vld [vmem:[%s10788 + $0x58] sm:$0xf]
    %v11168 = vld [vmem:[%s10788 + $0x5c] sm:$0x1]
    %v11169 = vld [vmem:[%s10788 + $0x60] sm:$0xf]
    %v11170 = vld [vmem:[%s10788 + $0x64] sm:$0xf]
    %v11171 = vld [vmem:[%s10788 + $0x68] sm:$0x1]
    %v11172 = vld [vmem:[%s10788 + $0x6c] sm:$0xf]
    %v11173 = vld [vmem:[%s10788 + $0x70] sm:$0xf]
    %v11174 = vld [vmem:[%s10788 + $0x74] sm:$0x1]
    %v11175 = vld [vmem:[%s10788 + $0x78] sm:$0xf]
    %v11176 = vld [vmem:[%s10788 + $0x7c] sm:$0xf]
    %v11177 = vld [vmem:[%s10788 + $0x80] sm:$0x1]
    %v11178 = vld [vmem:[%s10788 + $0x84] sm:$0xf]
    %v11179 = vld [vmem:[%s10788 + $0x88] sm:$0xf]
    %v11180 = vld [vmem:[%s10788 + $0x8c] sm:$0x1]
    %v11181 = vld [vmem:[%s10788 + $0x90] sm:$0xf]
    %v11182 = vld [vmem:[%s10788 + $0x94] sm:$0xf]
    %v11183 = vld [vmem:[%s10788 + $0x98] sm:$0x1]
    %v11184 = vld [vmem:[%s10788 + $0x9c] sm:$0xf]
    %v11185 = vld [vmem:[%s10788 + $0xa0] sm:$0xf]
    %v11186 = vld [vmem:[%s10788 + $0xa4] sm:$0x1]
    %v11187 = vld [vmem:[%s10788 + $0xa8] sm:$0xf]
    %v11188 = vld [vmem:[%s10788 + $0xac] sm:$0xf]
    %v11189 = vld [vmem:[%s10788 + $0xb0] sm:$0x1]
    %v11190 = vld [vmem:[%s10788 + $0xb4] sm:$0xf]
    %v11191 = vld [vmem:[%s10788 + $0xb8] sm:$0xf]
    %v11192 = vld [vmem:[%s10788 + $0xbc] sm:$0x1]
    %v11194 = vshrl.u32 %v11145, 16
    %v11196 = vrot.slane %v11194, 4
    %v11197 = vshll.u32 %v11145, 16
    %v11199 = vrot.slane %v11197, 5
    %v11200 = vor.u32 %v11196, %v11199
    %v11201 = vrot.slane %v11200, 4
    %v11203 = vshll.u32 %v11146, 16
    %v11205 = vrot.slane %v11203, 5
    %v11206 = vsel %vm74, %v11201, %v11205
    %v11207 = vshrl.u32 %v11146, 16
    %v11209 = vrot.slane %v11207, 4
    %v11210 = vor.u32 %v11209, %v11205
    %v11211 = vrot.slane %v11210, 4
    %v11213 = vshll.u32 %v11147, 16
    %v11215 = vrot.slane %v11213, 5
    %v11216 = vsel %vm74, %v11211, %v11215
    %v11218 = vshrl.u32 %v11148, 16
    %v11220 = vrot.slane %v11218, 4
    %v11221 = vshll.u32 %v11148, 16
    %v11223 = vrot.slane %v11221, 5
    %v11224 = vor.u32 %v11220, %v11223
    %v11225 = vrot.slane %v11224, 4
    %v11227 = vshll.u32 %v11149, 16
    %v11229 = vrot.slane %v11227, 5
    %v11230 = vsel %vm74, %v11225, %v11229
    %v11231 = vshrl.u32 %v11149, 16
    %v11233 = vrot.slane %v11231, 4
    %v11234 = vor.u32 %v11233, %v11229
    %v11235 = vrot.slane %v11234, 4
    %v11237 = vshll.u32 %v11150, 16
    %v11239 = vrot.slane %v11237, 5
    %v11240 = vsel %vm74, %v11235, %v11239
    %v11242 = vshrl.u32 %v11151, 16
    %v11244 = vrot.slane %v11242, 4
    %v11245 = vshll.u32 %v11151, 16
    %v11247 = vrot.slane %v11245, 5
    %v11248 = vor.u32 %v11244, %v11247
    %v11249 = vrot.slane %v11248, 4
    %v11251 = vshll.u32 %v11152, 16
    %v11253 = vrot.slane %v11251, 5
    %v11254 = vsel %vm74, %v11249, %v11253
    %v11255 = vshrl.u32 %v11152, 16
    %v11257 = vrot.slane %v11255, 4
    %v11258 = vor.u32 %v11257, %v11253
    %v11259 = vrot.slane %v11258, 4
    %v11261 = vshll.u32 %v11153, 16
    %v11263 = vrot.slane %v11261, 5
    %v11264 = vsel %vm74, %v11259, %v11263
    %v11266 = vshrl.u32 %v11154, 16
    %v11268 = vrot.slane %v11266, 4
    %v11269 = vshll.u32 %v11154, 16
    %v11271 = vrot.slane %v11269, 5
    %v11272 = vor.u32 %v11268, %v11271
    %v11273 = vrot.slane %v11272, 4
    %v11275 = vshll.u32 %v11155, 16
    %v11277 = vrot.slane %v11275, 5
    %v11278 = vsel %vm74, %v11273, %v11277
    %v11279 = vshrl.u32 %v11155, 16
    %v11281 = vrot.slane %v11279, 4
    %v11282 = vor.u32 %v11281, %v11277
    %v11283 = vrot.slane %v11282, 4
    %v11285 = vshll.u32 %v11156, 16
    %v11287 = vrot.slane %v11285, 5
    %v11288 = vsel %vm74, %v11283, %v11287
    %v11290 = vshrl.u32 %v11157, 16
    %v11292 = vrot.slane %v11290, 4
    %v11293 = vshll.u32 %v11157, 16
    %v11295 = vrot.slane %v11293, 5
    %v11296 = vor.u32 %v11292, %v11295
    %v11297 = vrot.slane %v11296, 4
    %v11299 = vshll.u32 %v11158, 16
    %v11301 = vrot.slane %v11299, 5
    %v11302 = vsel %vm74, %v11297, %v11301
    %v11303 = vshrl.u32 %v11158, 16
    %v11305 = vrot.slane %v11303, 4
    %v11306 = vor.u32 %v11305, %v11301
    %v11307 = vrot.slane %v11306, 4
    %v11309 = vshll.u32 %v11159, 16
    %v11311 = vrot.slane %v11309, 5
    %v11312 = vsel %vm74, %v11307, %v11311
    %v11314 = vshrl.u32 %v11160, 16
    %v11316 = vrot.slane %v11314, 4
    %v11317 = vshll.u32 %v11160, 16
    %v11319 = vrot.slane %v11317, 5
    %v11320 = vor.u32 %v11316, %v11319
    %v11321 = vrot.slane %v11320, 4
    %v11323 = vshll.u32 %v11161, 16
    %v11325 = vrot.slane %v11323, 5
    %v11326 = vsel %vm74, %v11321, %v11325
    %v11327 = vshrl.u32 %v11161, 16
    %v11329 = vrot.slane %v11327, 4
    %v11330 = vor.u32 %v11329, %v11325
    %v11331 = vrot.slane %v11330, 4
    %v11333 = vshll.u32 %v11162, 16
    %v11335 = vrot.slane %v11333, 5
    %v11336 = vsel %vm74, %v11331, %v11335
    %v11338 = vshrl.u32 %v11163, 16
    %v11340 = vrot.slane %v11338, 4
    %v11341 = vshll.u32 %v11163, 16
    %v11343 = vrot.slane %v11341, 5
    %v11344 = vor.u32 %v11340, %v11343
    %v11345 = vrot.slane %v11344, 4
    %v11347 = vshll.u32 %v11164, 16
    %v11349 = vrot.slane %v11347, 5
    %v11350 = vsel %vm74, %v11345, %v11349
    %v11351 = vshrl.u32 %v11164, 16
    %v11353 = vrot.slane %v11351, 4
    %v11354 = vor.u32 %v11353, %v11349
    %v11355 = vrot.slane %v11354, 4
    %v11357 = vshll.u32 %v11165, 16
    %v11359 = vrot.slane %v11357, 5
    %v11360 = vsel %vm74, %v11355, %v11359
    %v11362 = vshrl.u32 %v11166, 16
    %v11364 = vrot.slane %v11362, 4
    %v11365 = vshll.u32 %v11166, 16
    %v11367 = vrot.slane %v11365, 5
    %v11368 = vor.u32 %v11364, %v11367
    %v11369 = vrot.slane %v11368, 4
    %v11371 = vshll.u32 %v11167, 16
    %v11373 = vrot.slane %v11371, 5
    %v11374 = vsel %vm74, %v11369, %v11373
    %v11375 = vshrl.u32 %v11167, 16
    %v11377 = vrot.slane %v11375, 4
    %v11378 = vor.u32 %v11377, %v11373
    %v11379 = vrot.slane %v11378, 4
    %v11381 = vshll.u32 %v11168, 16
    %v11383 = vrot.slane %v11381, 5
    %v11384 = vsel %vm74, %v11379, %v11383
    %v11386 = vshrl.u32 %v11169, 16
    %v11388 = vrot.slane %v11386, 4
    %v11389 = vshll.u32 %v11169, 16
    %v11391 = vrot.slane %v11389, 5
    %v11392 = vor.u32 %v11388, %v11391
    %v11393 = vrot.slane %v11392, 4
    %v11395 = vshll.u32 %v11170, 16
    %v11397 = vrot.slane %v11395, 5
    %v11398 = vsel %vm74, %v11393, %v11397
    %v11399 = vshrl.u32 %v11170, 16
    %v11401 = vrot.slane %v11399, 4
    %v11402 = vor.u32 %v11401, %v11397
    %v11403 = vrot.slane %v11402, 4
    %v11405 = vshll.u32 %v11171, 16
    %v11407 = vrot.slane %v11405, 5
    %v11408 = vsel %vm74, %v11403, %v11407
    %v11410 = vshrl.u32 %v11172, 16
    %v11412 = vrot.slane %v11410, 4
    %v11413 = vshll.u32 %v11172, 16
    %v11415 = vrot.slane %v11413, 5
    %v11416 = vor.u32 %v11412, %v11415
    %v11417 = vrot.slane %v11416, 4
    %v11419 = vshll.u32 %v11173, 16
    %v11421 = vrot.slane %v11419, 5
    %v11422 = vsel %vm74, %v11417, %v11421
    %v11423 = vshrl.u32 %v11173, 16
    %v11425 = vrot.slane %v11423, 4
    %v11426 = vor.u32 %v11425, %v11421
    %v11427 = vrot.slane %v11426, 4
    %v11429 = vshll.u32 %v11174, 16
    %v11431 = vrot.slane %v11429, 5
    %v11432 = vsel %vm74, %v11427, %v11431
    %v11434 = vshrl.u32 %v11175, 16
    %v11436 = vrot.slane %v11434, 4
    %v11437 = vshll.u32 %v11175, 16
    %v11439 = vrot.slane %v11437, 5
    %v11440 = vor.u32 %v11436, %v11439
    %v11441 = vrot.slane %v11440, 4
    %v11443 = vshll.u32 %v11176, 16
    %v11445 = vrot.slane %v11443, 5
    %v11446 = vsel %vm74, %v11441, %v11445
    %v11447 = vshrl.u32 %v11176, 16
    %v11449 = vrot.slane %v11447, 4
    %v11450 = vor.u32 %v11449, %v11445
    %v11451 = vrot.slane %v11450, 4
    %v11453 = vshll.u32 %v11177, 16
    %v11455 = vrot.slane %v11453, 5
    %v11456 = vsel %vm74, %v11451, %v11455
    %v11458 = vshrl.u32 %v11178, 16
    %v11460 = vrot.slane %v11458, 4
    %v11461 = vshll.u32 %v11178, 16
    %v11463 = vrot.slane %v11461, 5
    %v11464 = vor.u32 %v11460, %v11463
    %v11465 = vrot.slane %v11464, 4
    %v11467 = vshll.u32 %v11179, 16
    %v11469 = vrot.slane %v11467, 5
    %v11470 = vsel %vm74, %v11465, %v11469
    %v11471 = vshrl.u32 %v11179, 16
    %v11473 = vrot.slane %v11471, 4
    %v11474 = vor.u32 %v11473, %v11469
    %v11475 = vrot.slane %v11474, 4
    %v11477 = vshll.u32 %v11180, 16
    %v11479 = vrot.slane %v11477, 5
    %v11480 = vsel %vm74, %v11475, %v11479
    %v11482 = vshrl.u32 %v11181, 16
    %v11484 = vrot.slane %v11482, 4
    %v11485 = vshll.u32 %v11181, 16
    %v11487 = vrot.slane %v11485, 5
    %v11488 = vor.u32 %v11484, %v11487
    %v11489 = vrot.slane %v11488, 4
    %v11491 = vshll.u32 %v11182, 16
    %v11493 = vrot.slane %v11491, 5
    %v11494 = vsel %vm74, %v11489, %v11493
    %v11495 = vshrl.u32 %v11182, 16
    %v11497 = vrot.slane %v11495, 4
    %v11498 = vor.u32 %v11497, %v11493
    %v11499 = vrot.slane %v11498, 4
    %v11501 = vshll.u32 %v11183, 16
    %v11503 = vrot.slane %v11501, 5
    %v11504 = vsel %vm74, %v11499, %v11503
    %v11506 = vshrl.u32 %v11184, 16
    %v11508 = vrot.slane %v11506, 4
    %v11509 = vshll.u32 %v11184, 16
    %v11511 = vrot.slane %v11509, 5
    %v11512 = vor.u32 %v11508, %v11511
    %v11513 = vrot.slane %v11512, 4
    %v11515 = vshll.u32 %v11185, 16
    %v11517 = vrot.slane %v11515, 5
    %v11518 = vsel %vm74, %v11513, %v11517
    %v11519 = vshrl.u32 %v11185, 16
    %v11521 = vrot.slane %v11519, 4
    %v11522 = vor.u32 %v11521, %v11517
    %v11523 = vrot.slane %v11522, 4
    %v11525 = vshll.u32 %v11186, 16
    %v11527 = vrot.slane %v11525, 5
    %v11528 = vsel %vm74, %v11523, %v11527
    %v11530 = vshrl.u32 %v11187, 16
    %v11532 = vrot.slane %v11530, 4
    %v11533 = vshll.u32 %v11187, 16
    %v11535 = vrot.slane %v11533, 5
    %v11536 = vor.u32 %v11532, %v11535
    %v11537 = vrot.slane %v11536, 4
    %v11539 = vshll.u32 %v11188, 16
    %v11541 = vrot.slane %v11539, 5
    %v11542 = vsel %vm74, %v11537, %v11541
    %v11543 = vshrl.u32 %v11188, 16
    %v11545 = vrot.slane %v11543, 4
    %v11546 = vor.u32 %v11545, %v11541
    %v11547 = vrot.slane %v11546, 4
    %v11549 = vshll.u32 %v11189, 16
    %v11551 = vrot.slane %v11549, 5
    %v11552 = vsel %vm74, %v11547, %v11551
    %v11554 = vshrl.u32 %v11190, 16
    %v11556 = vrot.slane %v11554, 4
    %v11557 = vshll.u32 %v11190, 16
    %v11559 = vrot.slane %v11557, 5
    %v11560 = vor.u32 %v11556, %v11559
    %v11561 = vrot.slane %v11560, 4
    %v11563 = vshll.u32 %v11191, 16
    %v11565 = vrot.slane %v11563, 5
    %v11566 = vsel %vm74, %v11561, %v11565
    %v11567 = vshrl.u32 %v11191, 16
    %v11569 = vrot.slane %v11567, 4
    %v11570 = vor.u32 %v11569, %v11565
    %v11571 = vrot.slane %v11570, 4
    %v11573 = vshll.u32 %v11192, 16
    %v11575 = vrot.slane %v11573, 5
    %v11576 = vsel %vm74, %v11571, %v11575
    %v11577 = vunpack.c.l.b16 %v11206
    %v11578 = vunpack.c.l.b16 %v11216
    %v11579 = vunpack.c.l.b16 %v11230
    %v11580 = vunpack.c.l.b16 %v11240
    %v11581 = vunpack.c.l.b16 %v11254
    %v11582 = vunpack.c.l.b16 %v11264
    %v11583 = vunpack.c.l.b16 %v11278
    %v11584 = vunpack.c.l.b16 %v11288
    %v11585 = vunpack.c.l.b16 %v11302
    %v11586 = vunpack.c.l.b16 %v11312
    %v11587 = vunpack.c.l.b16 %v11326
    %v11588 = vunpack.c.l.b16 %v11336
    %v11589 = vunpack.c.l.b16 %v11350
    %v11590 = vunpack.c.l.b16 %v11360
    %v11591 = vunpack.c.l.b16 %v11374
    %v11592 = vunpack.c.l.b16 %v11384
    %v11593 = vunpack.c.l.b16 %v11398
    %v11594 = vunpack.c.l.b16 %v11408
    %v11595 = vunpack.c.l.b16 %v11422
    %v11596 = vunpack.c.l.b16 %v11432
    %v11597 = vunpack.c.l.b16 %v11446
    %v11598 = vunpack.c.l.b16 %v11456
    %v11599 = vunpack.c.l.b16 %v11470
    %v11600 = vunpack.c.l.b16 %v11480
    %v11601 = vunpack.c.l.b16 %v11494
    %v11602 = vunpack.c.l.b16 %v11504
    %v11603 = vunpack.c.l.b16 %v11518
    %v11604 = vunpack.c.l.b16 %v11528
    %v11605 = vunpack.c.l.b16 %v11542
    %v11606 = vunpack.c.l.b16 %v11552
    %v11607 = vunpack.c.l.b16 %v11566
    %v11608 = vunpack.c.l.b16 %v11576
    %v11609 = vpack.c.b16 %v11578, %v11577
    %v11610 = vpack.c.b16 %v11580, %v11579
    %v11611 = vpack.c.b16 %v11582, %v11581
    %v11612 = vpack.c.b16 %v11584, %v11583
    %v11613 = vpack.c.b16 %v11586, %v11585
    %v11614 = vpack.c.b16 %v11588, %v11587
    %v11615 = vpack.c.b16 %v11590, %v11589
    %v11616 = vpack.c.b16 %v11592, %v11591
    %v11617 = vpack.c.b16 %v11594, %v11593
    %v11618 = vpack.c.b16 %v11596, %v11595
    %v11619 = vpack.c.b16 %v11598, %v11597
    %v11620 = vpack.c.b16 %v11600, %v11599
    %v11621 = vpack.c.b16 %v11602, %v11601
    %v11622 = vpack.c.b16 %v11604, %v11603
    %v11623 = vpack.c.b16 %v11606, %v11605
    %v11624 = vpack.c.b16 %v11608, %v11607
    %v11627 = vunpack.c.l.b16 %v10781
    %v11628 = vunpack.c.l.b16 %v10782
    %v11629 = vpack.c.b16 %v11628, %v11627
    %v11631 = vshrl.u32 %v11629, 16
    %v11633 = vrot.slane %v11631, 2
    %v11634 = vshll.u32 %v11629, 16
    %v11636 = vrot.slane %v11634, 3
    %v11637 = vor.u32 %v11633, %v11636
    %v11639 = vsel %vm520, %v11609, 0
    %v11642 = vsel %vm520, %v11610, 0
    %v11645 = vsel %vm520, %v11611, 0
    %v11648 = vsel %vm520, %v11612, 0
    %v11651 = vsel %vm520, %v11613, 0
    %v11654 = vsel %vm520, %v11614, 0
    %v11657 = vsel %vm520, %v11615, 0
    %v11660 = vsel %vm520, %v11616, 0
    %v11663 = vsel %vm520, %v11617, 0
    %v11666 = vsel %vm520, %v11618, 0
    %v11669 = vsel %vm520, %v11619, 0
    %v11672 = vsel %vm520, %v11620, 0
    %v11675 = vsel %vm520, %v11621, 0
    %v11678 = vsel %vm520, %v11622, 0
    %v11681 = vsel %vm520, %v11623, 0
    %v11684 = vsel %vm520, %v11624, 0
    %v11687 = vand.u32 %v11637, %v572
    %11689 = vmatprep.subr.bf16.mxu0 0
    %11690 = vmatpush1.bf16.msra.mxu0 0
    %11691 = vmatprep.subr.bf16.mxu0 0
    %11692 = vmatpush1.bf16.msra.mxu0 0
    %11693 = vmatprep.subr.bf16.mxu0 0
    %11694 = vmatpush1.bf16.msra.mxu0 0
    %11695 = vmatprep.subr.bf16.mxu0 0
    %11696 = vmatpush1.bf16.msra.mxu0 0
    %11697 = vmatprep.subr.bf16.mxu0 0
    %11698 = vmatpush1.bf16.msra.mxu0 0
    %11699 = vmatprep.subr.bf16.mxu0 0
    %11700 = vmatpush1.bf16.msra.mxu0 0
    %11701 = vmatprep.subr.bf16.mxu0 0
    %11702 = vmatpush1.bf16.msra.mxu0 0
    %11703 = vmatprep.subr.bf16.mxu0 0
    %11704 = vmatpush1.bf16.msra.mxu0 %v11687
    %11705 = vmatprep.subr.bf16.mxu0 0
    %11706 = vmatpush2.bf16.msra.mxu0 0
    %11707 = vmatprep.subr.bf16.mxu0 0
    %11708 = vmatpush2.bf16.msra.mxu0 0
    %11709 = vmatprep.subr.bf16.mxu0 0
    %11710 = vmatpush2.bf16.msra.mxu0 0
    %11711 = vmatprep.subr.bf16.mxu0 0
    %11712 = vmatpush2.bf16.msra.mxu0 0
    %11713 = vmatprep.subr.bf16.mxu0 0
    %11714 = vmatpush2.bf16.msra.mxu0 0
    %11715 = vmatprep.subr.bf16.mxu0 0
    %11716 = vmatpush2.bf16.msra.mxu0 0
    %11717 = vmatprep.subr.bf16.mxu0 0
    %11718 = vmatpush2.bf16.msra.mxu0 0
    %11719 = vmatprep.subr.bf16.mxu0 0
    %11720 = vmatpush2.bf16.msra.mxu0 0
    %11721 = vmatprep.mubr.bf16.mxu0 0
    %11722 = vmatmul.mubr.bf16.gmra.mxu0 %v11639
    %v11723 = vpop.f32.mrf.mxu0
    %v11724 = vadd.f32 0.0, %v11723
    %v11725 = vpop.f32.mrf.mxu0
    %v11726 = vpop.f32.mrf.mxu0
    %v11727 = vadd.f32 0.0, %v11726
    %v11728 = vpop.f32.mrf.mxu0
    %11729 = vmatprep.mubr.bf16.mxu0 0
    %11730 = vmatmul.mubr.bf16.gmra.mxu0 %v11642
    %v11731 = vpop.f32.mrf.mxu0
    %v11732 = vadd.f32 0.0, %v11731
    %v11733 = vpop.f32.mrf.mxu0
    %v11734 = vpop.f32.mrf.mxu0
    %v11735 = vadd.f32 0.0, %v11734
    %v11736 = vpop.f32.mrf.mxu0
    %11737 = vmatprep.mubr.bf16.mxu0 0
    %11738 = vmatmul.mubr.bf16.gmra.mxu0 %v11645
    %v11739 = vpop.f32.mrf.mxu0
    %v11740 = vadd.f32 0.0, %v11739
    %v11741 = vpop.f32.mrf.mxu0
    %v11742 = vpop.f32.mrf.mxu0
    %v11743 = vadd.f32 0.0, %v11742
    %v11744 = vpop.f32.mrf.mxu0
    %11745 = vmatprep.mubr.bf16.mxu0 0
    %11746 = vmatmul.mubr.bf16.gmra.mxu0 %v11648
    %v11747 = vpop.f32.mrf.mxu0
    %v11748 = vadd.f32 0.0, %v11747
    %v11749 = vpop.f32.mrf.mxu0
    %v11750 = vpop.f32.mrf.mxu0
    %v11751 = vadd.f32 0.0, %v11750
    %v11752 = vpop.f32.mrf.mxu0
    %11753 = vmatprep.mubr.bf16.mxu0 0
    %11754 = vmatmul.mubr.bf16.gmra.mxu0 %v11651
    %v11755 = vpop.f32.mrf.mxu0
    %v11756 = vadd.f32 0.0, %v11755
    %v11757 = vpop.f32.mrf.mxu0
    %v11758 = vpop.f32.mrf.mxu0
    %v11759 = vadd.f32 0.0, %v11758
    %v11760 = vpop.f32.mrf.mxu0
    %11761 = vmatprep.mubr.bf16.mxu0 0
    %11762 = vmatmul.mubr.bf16.gmra.mxu0 %v11654
    %v11763 = vpop.f32.mrf.mxu0
    %v11764 = vadd.f32 0.0, %v11763
    %v11765 = vpop.f32.mrf.mxu0
    %v11766 = vpop.f32.mrf.mxu0
    %v11767 = vadd.f32 0.0, %v11766
    %v11768 = vpop.f32.mrf.mxu0
    %11769 = vmatprep.mubr.bf16.mxu0 0
    %11770 = vmatmul.mubr.bf16.gmra.mxu0 %v11657
    %v11771 = vpop.f32.mrf.mxu0
    %v11772 = vadd.f32 0.0, %v11771
    %v11773 = vpop.f32.mrf.mxu0
    %v11774 = vpop.f32.mrf.mxu0
    %v11775 = vadd.f32 0.0, %v11774
    %v11776 = vpop.f32.mrf.mxu0
    %11777 = vmatprep.mubr.bf16.mxu0 0
    %11778 = vmatmul.mubr.bf16.gmra.mxu0 %v11660
    %v11779 = vpop.f32.mrf.mxu0
    %v11780 = vadd.f32 0.0, %v11779
    %v11781 = vpop.f32.mrf.mxu0
    %v11782 = vpop.f32.mrf.mxu0
    %v11783 = vadd.f32 0.0, %v11782
    %v11784 = vpop.f32.mrf.mxu0
    %11785 = vmatprep.mubr.bf16.mxu0 0
    %11786 = vmatmul.mubr.bf16.gmra.mxu0 %v11663
    %v11787 = vpop.f32.mrf.mxu0
    %v11788 = vadd.f32 0.0, %v11787
    %v11789 = vpop.f32.mrf.mxu0
    %v11790 = vpop.f32.mrf.mxu0
    %v11791 = vadd.f32 0.0, %v11790
    %v11792 = vpop.f32.mrf.mxu0
    %11793 = vmatprep.mubr.bf16.mxu0 0
    %11794 = vmatmul.mubr.bf16.gmra.mxu0 %v11666
    %v11795 = vpop.f32.mrf.mxu0
    %v11796 = vadd.f32 0.0, %v11795
    %v11797 = vpop.f32.mrf.mxu0
    %v11798 = vpop.f32.mrf.mxu0
    %v11799 = vadd.f32 0.0, %v11798
    %v11800 = vpop.f32.mrf.mxu0
    %11801 = vmatprep.mubr.bf16.mxu0 0
    %11802 = vmatmul.mubr.bf16.gmra.mxu0 %v11669
    %v11803 = vpop.f32.mrf.mxu0
    %v11804 = vadd.f32 0.0, %v11803
    %v11805 = vpop.f32.mrf.mxu0
    %v11806 = vpop.f32.mrf.mxu0
    %v11807 = vadd.f32 0.0, %v11806
    %v11808 = vpop.f32.mrf.mxu0
    %11809 = vmatprep.mubr.bf16.mxu0 0
    %11810 = vmatmul.mubr.bf16.gmra.mxu0 %v11672
    %v11811 = vpop.f32.mrf.mxu0
    %v11812 = vadd.f32 0.0, %v11811
    %v11813 = vpop.f32.mrf.mxu0
    %v11814 = vpop.f32.mrf.mxu0
    %v11815 = vadd.f32 0.0, %v11814
    %v11816 = vpop.f32.mrf.mxu0
    %11817 = vmatprep.mubr.bf16.mxu0 0
    %11818 = vmatmul.mubr.bf16.gmra.mxu0 %v11675
    %v11819 = vpop.f32.mrf.mxu0
    %v11820 = vadd.f32 0.0, %v11819
    %v11821 = vpop.f32.mrf.mxu0
    %v11822 = vpop.f32.mrf.mxu0
    %v11823 = vadd.f32 0.0, %v11822
    %v11824 = vpop.f32.mrf.mxu0
    %11825 = vmatprep.mubr.bf16.mxu0 0
    %11826 = vmatmul.mubr.bf16.gmra.mxu0 %v11678
    %v11827 = vpop.f32.mrf.mxu0
    %v11828 = vadd.f32 0.0, %v11827
    %v11829 = vpop.f32.mrf.mxu0
    %v11830 = vpop.f32.mrf.mxu0
    %v11831 = vadd.f32 0.0, %v11830
    %v11832 = vpop.f32.mrf.mxu0
    %11833 = vmatprep.mubr.bf16.mxu0 0
    %11834 = vmatmul.mubr.bf16.gmra.mxu0 %v11681
    %v11835 = vpop.f32.mrf.mxu0
    %v11836 = vadd.f32 0.0, %v11835
    %v11837 = vpop.f32.mrf.mxu0
    %v11838 = vpop.f32.mrf.mxu0
    %v11839 = vadd.f32 0.0, %v11838
    %v11840 = vpop.f32.mrf.mxu0
    %11841 = vmatprep.mubr.bf16.mxu0 0
    %11842 = vmatmul.mubr.bf16.gmra.mxu0 %v11684
    %v11843 = vpop.f32.mrf.mxu0
    %v11844 = vadd.f32 0.0, %v11843
    %v11845 = vpop.f32.mrf.mxu0
    %v11846 = vpop.f32.mrf.mxu0
    %v11847 = vadd.f32 0.0, %v11846
    %v11848 = vpop.f32.mrf.mxu0
    %11849 = vdwg.mxu0
    %v11850 = vadd.f32 %v11113, %v11724
    %v11851 = vadd.f32 %v11114, %v11727
    %v11852 = vadd.f32 %v11115, %v11732
    %v11853 = vadd.f32 %v11116, %v11735
    %v11854 = vadd.f32 %v11117, %v11740
    %v11855 = vadd.f32 %v11118, %v11743
    %v11856 = vadd.f32 %v11119, %v11748
    %v11857 = vadd.f32 %v11120, %v11751
    %v11858 = vadd.f32 %v11121, %v11756
    %v11859 = vadd.f32 %v11122, %v11759
    %v11860 = vadd.f32 %v11123, %v11764
    %v11861 = vadd.f32 %v11124, %v11767
    %v11862 = vadd.f32 %v11125, %v11772
    %v11863 = vadd.f32 %v11126, %v11775
    %v11864 = vadd.f32 %v11127, %v11780
    %v11865 = vadd.f32 %v11128, %v11783
    %v11866 = vadd.f32 %v11129, %v11788
    %v11867 = vadd.f32 %v11130, %v11791
    %v11868 = vadd.f32 %v11131, %v11796
    %v11869 = vadd.f32 %v11132, %v11799
    %v11870 = vadd.f32 %v11133, %v11804
    %v11871 = vadd.f32 %v11134, %v11807
    %v11872 = vadd.f32 %v11135, %v11812
    %v11873 = vadd.f32 %v11136, %v11815
    %v11874 = vadd.f32 %v11137, %v11820
    %v11875 = vadd.f32 %v11138, %v11823
    %v11876 = vadd.f32 %v11139, %v11828
    %v11877 = vadd.f32 %v11140, %v11831
    %v11878 = vadd.f32 %v11141, %v11836
    %v11879 = vadd.f32 %v11142, %v11839
    %v11880 = vadd.f32 %v11143, %v11844
    %v11881 = vadd.f32 %v11144, %v11847
    %v11882 = vld [vmem:[%s10788] sm:$0xe]
    %v11883 = vld [vmem:[%s10788 + $0xc] sm:$0xe]
    %v11884 = vld [vmem:[%s10788 + $0x18] sm:$0xe]
    %v11885 = vld [vmem:[%s10788 + $0x24] sm:$0xe]
    %v11886 = vld [vmem:[%s10788 + $0x30] sm:$0xe]
    %v11887 = vld [vmem:[%s10788 + $0x3c] sm:$0xe]
    %v11888 = vld [vmem:[%s10788 + $0x48] sm:$0xe]
    %v11889 = vld [vmem:[%s10788 + $0x54] sm:$0xe]
    %v11890 = vld [vmem:[%s10788 + $0x60] sm:$0xe]
    %v11891 = vld [vmem:[%s10788 + $0x6c] sm:$0xe]
    %v11892 = vld [vmem:[%s10788 + $0x78] sm:$0xe]
    %v11893 = vld [vmem:[%s10788 + $0x84] sm:$0xe]
    %v11894 = vld [vmem:[%s10788 + $0x90] sm:$0xe]
    %v11895 = vld [vmem:[%s10788 + $0x9c] sm:$0xe]
    %v11896 = vld [vmem:[%s10788 + $0xa8] sm:$0xe]
    %v11897 = vld [vmem:[%s10788 + $0xb4] sm:$0xe]
    %v11946 = vrot.slane %v11882, 5
    %v11947 = vrot.slane %v11946, 4
    %v11948 = vrot.slane %v11146, 5
    %v11949 = vsel %vm1079, %v11947, %v11948
    %v11950 = vrot.slane %v11948, 4
    %v11951 = vrot.slane %v11147, 5
    %v11952 = vsel %vm1079, %v11950, %v11951
    %v11953 = vrot.slane %v11883, 5
    %v11954 = vrot.slane %v11953, 4
    %v11955 = vrot.slane %v11149, 5
    %v11956 = vsel %vm1079, %v11954, %v11955
    %v11957 = vrot.slane %v11955, 4
    %v11958 = vrot.slane %v11150, 5
    %v11959 = vsel %vm1079, %v11957, %v11958
    %v11960 = vrot.slane %v11884, 5
    %v11961 = vrot.slane %v11960, 4
    %v11962 = vrot.slane %v11152, 5
    %v11963 = vsel %vm1079, %v11961, %v11962
    %v11964 = vrot.slane %v11962, 4
    %v11965 = vrot.slane %v11153, 5
    %v11966 = vsel %vm1079, %v11964, %v11965
    %v11967 = vrot.slane %v11885, 5
    %v11968 = vrot.slane %v11967, 4
    %v11969 = vrot.slane %v11155, 5
    %v11970 = vsel %vm1079, %v11968, %v11969
    %v11971 = vrot.slane %v11969, 4
    %v11972 = vrot.slane %v11156, 5
    %v11973 = vsel %vm1079, %v11971, %v11972
    %v11974 = vrot.slane %v11886, 5
    %v11975 = vrot.slane %v11974, 4
    %v11976 = vrot.slane %v11158, 5
    %v11977 = vsel %vm1079, %v11975, %v11976
    %v11978 = vrot.slane %v11976, 4
    %v11979 = vrot.slane %v11159, 5
    %v11980 = vsel %vm1079, %v11978, %v11979
    %v11981 = vrot.slane %v11887, 5
    %v11982 = vrot.slane %v11981, 4
    %v11983 = vrot.slane %v11161, 5
    %v11984 = vsel %vm1079, %v11982, %v11983
    %v11985 = vrot.slane %v11983, 4
    %v11986 = vrot.slane %v11162, 5
    %v11987 = vsel %vm1079, %v11985, %v11986
    %v11988 = vrot.slane %v11888, 5
    %v11989 = vrot.slane %v11988, 4
    %v11990 = vrot.slane %v11164, 5
    %v11991 = vsel %vm1079, %v11989, %v11990
    %v11992 = vrot.slane %v11990, 4
    %v11993 = vrot.slane %v11165, 5
    %v11994 = vsel %vm1079, %v11992, %v11993
    %v11995 = vrot.slane %v11889, 5
    %v11996 = vrot.slane %v11995, 4
    %v11997 = vrot.slane %v11167, 5
    %v11998 = vsel %vm1079, %v11996, %v11997
    %v11999 = vrot.slane %v11997, 4
    %v12000 = vrot.slane %v11168, 5
    %v12001 = vsel %vm1079, %v11999, %v12000
    %v12002 = vrot.slane %v11890, 5
    %v12003 = vrot.slane %v12002, 4
    %v12004 = vrot.slane %v11170, 5
    %v12005 = vsel %vm1079, %v12003, %v12004
    %v12006 = vrot.slane %v12004, 4
    %v12007 = vrot.slane %v11171, 5
    %v12008 = vsel %vm1079, %v12006, %v12007
    %v12009 = vrot.slane %v11891, 5
    %v12010 = vrot.slane %v12009, 4
    %v12011 = vrot.slane %v11173, 5
    %v12012 = vsel %vm1079, %v12010, %v12011
    %v12013 = vrot.slane %v12011, 4
    %v12014 = vrot.slane %v11174, 5
    %v12015 = vsel %vm1079, %v12013, %v12014
    %v12016 = vrot.slane %v11892, 5
    %v12017 = vrot.slane %v12016, 4
    %v12018 = vrot.slane %v11176, 5
    %v12019 = vsel %vm1079, %v12017, %v12018
    %v12020 = vrot.slane %v12018, 4
    %v12021 = vrot.slane %v11177, 5
    %v12022 = vsel %vm1079, %v12020, %v12021
    %v12023 = vrot.slane %v11893, 5
    %v12024 = vrot.slane %v12023, 4
    %v12025 = vrot.slane %v11179, 5
    %v12026 = vsel %vm1079, %v12024, %v12025
    %v12027 = vrot.slane %v12025, 4
    %v12028 = vrot.slane %v11180, 5
    %v12029 = vsel %vm1079, %v12027, %v12028
    %v12030 = vrot.slane %v11894, 5
    %v12031 = vrot.slane %v12030, 4
    %v12032 = vrot.slane %v11182, 5
    %v12033 = vsel %vm1079, %v12031, %v12032
    %v12034 = vrot.slane %v12032, 4
    %v12035 = vrot.slane %v11183, 5
    %v12036 = vsel %vm1079, %v12034, %v12035
    %v12037 = vrot.slane %v11895, 5
    %v12038 = vrot.slane %v12037, 4
    %v12039 = vrot.slane %v11185, 5
    %v12040 = vsel %vm1079, %v12038, %v12039
    %v12041 = vrot.slane %v12039, 4
    %v12042 = vrot.slane %v11186, 5
    %v12043 = vsel %vm1079, %v12041, %v12042
    %v12044 = vrot.slane %v11896, 5
    %v12045 = vrot.slane %v12044, 4
    %v12046 = vrot.slane %v11188, 5
    %v12047 = vsel %vm1079, %v12045, %v12046
    %v12048 = vrot.slane %v12046, 4
    %v12049 = vrot.slane %v11189, 5
    %v12050 = vsel %vm1079, %v12048, %v12049
    %v12051 = vrot.slane %v11897, 5
    %v12052 = vrot.slane %v12051, 4
    %v12053 = vrot.slane %v11191, 5
    %v12054 = vsel %vm1079, %v12052, %v12053
    %v12055 = vrot.slane %v12053, 4
    %v12056 = vrot.slane %v11192, 5
    %v12057 = vsel %vm1079, %v12055, %v12056
    %v12058 = vunpack.c.l.b16 %v11949
    %v12059 = vunpack.c.l.b16 %v11952
    %v12060 = vunpack.c.l.b16 %v11956
    %v12061 = vunpack.c.l.b16 %v11959
    %v12062 = vunpack.c.l.b16 %v11963
    %v12063 = vunpack.c.l.b16 %v11966
    %v12064 = vunpack.c.l.b16 %v11970
    %v12065 = vunpack.c.l.b16 %v11973
    %v12066 = vunpack.c.l.b16 %v11977
    %v12067 = vunpack.c.l.b16 %v11980
    %v12068 = vunpack.c.l.b16 %v11984
    %v12069 = vunpack.c.l.b16 %v11987
    %v12070 = vunpack.c.l.b16 %v11991
    %v12071 = vunpack.c.l.b16 %v11994
    %v12072 = vunpack.c.l.b16 %v11998
    %v12073 = vunpack.c.l.b16 %v12001
    %v12074 = vunpack.c.l.b16 %v12005
    %v12075 = vunpack.c.l.b16 %v12008
    %v12076 = vunpack.c.l.b16 %v12012
    %v12077 = vunpack.c.l.b16 %v12015
    %v12078 = vunpack.c.l.b16 %v12019
    %v12079 = vunpack.c.l.b16 %v12022
    %v12080 = vunpack.c.l.b16 %v12026
    %v12081 = vunpack.c.l.b16 %v12029
    %v12082 = vunpack.c.l.b16 %v12033
    %v12083 = vunpack.c.l.b16 %v12036
    %v12084 = vunpack.c.l.b16 %v12040
    %v12085 = vunpack.c.l.b16 %v12043
    %v12086 = vunpack.c.l.b16 %v12047
    %v12087 = vunpack.c.l.b16 %v12050
    %v12088 = vunpack.c.l.b16 %v12054
    %v12089 = vunpack.c.l.b16 %v12057
    %v12090 = vpack.c.b16 %v12059, %v12058
    %v12091 = vpack.c.b16 %v12061, %v12060
    %v12092 = vpack.c.b16 %v12063, %v12062
    %v12093 = vpack.c.b16 %v12065, %v12064
    %v12094 = vpack.c.b16 %v12067, %v12066
    %v12095 = vpack.c.b16 %v12069, %v12068
    %v12096 = vpack.c.b16 %v12071, %v12070
    %v12097 = vpack.c.b16 %v12073, %v12072
    %v12098 = vpack.c.b16 %v12075, %v12074
    %v12099 = vpack.c.b16 %v12077, %v12076
    %v12100 = vpack.c.b16 %v12079, %v12078
    %v12101 = vpack.c.b16 %v12081, %v12080
    %v12102 = vpack.c.b16 %v12083, %v12082
    %v12103 = vpack.c.b16 %v12085, %v12084
    %v12104 = vpack.c.b16 %v12087, %v12086
    %v12105 = vpack.c.b16 %v12089, %v12088
    %v12106 = vpack.c.b16 %v11628, %v11628
    %v12107 = vrot.slane %v12106, 1
    %v12109 = vsel %vm520, %v12090, 0
    %v12112 = vsel %vm520, %v12091, 0
    %v12115 = vsel %vm520, %v12092, 0
    %v12118 = vsel %vm520, %v12093, 0
    %v12121 = vsel %vm520, %v12094, 0
    %v12124 = vsel %vm520, %v12095, 0
    %v12127 = vsel %vm520, %v12096, 0
    %v12130 = vsel %vm520, %v12097, 0
    %v12133 = vsel %vm520, %v12098, 0
    %v12136 = vsel %vm520, %v12099, 0
    %v12139 = vsel %vm520, %v12100, 0
    %v12142 = vsel %vm520, %v12101, 0
    %v12145 = vsel %vm520, %v12102, 0
    %v12148 = vsel %vm520, %v12103, 0
    %v12151 = vsel %vm520, %v12104, 0
    %v12154 = vsel %vm520, %v12105, 0
    %v12157 = vand.u32 %v12107, %v572
    %12159 = vmatprep.subr.bf16.mxu0 0
    %12160 = vmatpush1.bf16.msra.mxu0 0
    %12161 = vmatprep.subr.bf16.mxu0 0
    %12162 = vmatpush1.bf16.msra.mxu0 0
    %12163 = vmatprep.subr.bf16.mxu0 0
    %12164 = vmatpush1.bf16.msra.mxu0 0
    %12165 = vmatprep.subr.bf16.mxu0 0
    %12166 = vmatpush1.bf16.msra.mxu0 0
    %12167 = vmatprep.subr.bf16.mxu0 0
    %12168 = vmatpush1.bf16.msra.mxu0 0
    %12169 = vmatprep.subr.bf16.mxu0 0
    %12170 = vmatpush1.bf16.msra.mxu0 0
    %12171 = vmatprep.subr.bf16.mxu0 0
    %12172 = vmatpush1.bf16.msra.mxu0 0
    %12173 = vmatprep.subr.bf16.mxu0 0
    %12174 = vmatpush1.bf16.msra.mxu0 %v12157
    %12175 = vmatprep.subr.bf16.mxu0 0
    %12176 = vmatpush2.bf16.msra.mxu0 0
    %12177 = vmatprep.subr.bf16.mxu0 0
    %12178 = vmatpush2.bf16.msra.mxu0 0
    %12179 = vmatprep.subr.bf16.mxu0 0
    %12180 = vmatpush2.bf16.msra.mxu0 0
    %12181 = vmatprep.subr.bf16.mxu0 0
    %12182 = vmatpush2.bf16.msra.mxu0 0
    %12183 = vmatprep.subr.bf16.mxu0 0
    %12184 = vmatpush2.bf16.msra.mxu0 0
    %12185 = vmatprep.subr.bf16.mxu0 0
    %12186 = vmatpush2.bf16.msra.mxu0 0
    %12187 = vmatprep.subr.bf16.mxu0 0
    %12188 = vmatpush2.bf16.msra.mxu0 0
    %12189 = vmatprep.subr.bf16.mxu0 0
    %12190 = vmatpush2.bf16.msra.mxu0 0
    %12191 = vmatprep.mubr.bf16.mxu0 0
    %12192 = vmatmul.mubr.bf16.gmra.mxu0 %v12109
    %v12193 = vpop.f32.mrf.mxu0
    %v12194 = vadd.f32 0.0, %v12193
    %v12195 = vpop.f32.mrf.mxu0
    %v12196 = vpop.f32.mrf.mxu0
    %v12197 = vadd.f32 0.0, %v12196
    %v12198 = vpop.f32.mrf.mxu0
    %12199 = vmatprep.mubr.bf16.mxu0 0
    %12200 = vmatmul.mubr.bf16.gmra.mxu0 %v12112
    %v12201 = vpop.f32.mrf.mxu0
    %v12202 = vadd.f32 0.0, %v12201
    %v12203 = vpop.f32.mrf.mxu0
    %v12204 = vpop.f32.mrf.mxu0
    %v12205 = vadd.f32 0.0, %v12204
    %v12206 = vpop.f32.mrf.mxu0
    %12207 = vmatprep.mubr.bf16.mxu0 0
    %12208 = vmatmul.mubr.bf16.gmra.mxu0 %v12115
    %v12209 = vpop.f32.mrf.mxu0
    %v12210 = vadd.f32 0.0, %v12209
    %v12211 = vpop.f32.mrf.mxu0
    %v12212 = vpop.f32.mrf.mxu0
    %v12213 = vadd.f32 0.0, %v12212
    %v12214 = vpop.f32.mrf.mxu0
    %12215 = vmatprep.mubr.bf16.mxu0 0
    %12216 = vmatmul.mubr.bf16.gmra.mxu0 %v12118
    %v12217 = vpop.f32.mrf.mxu0
    %v12218 = vadd.f32 0.0, %v12217
    %v12219 = vpop.f32.mrf.mxu0
    %v12220 = vpop.f32.mrf.mxu0
    %v12221 = vadd.f32 0.0, %v12220
    %v12222 = vpop.f32.mrf.mxu0
    %12223 = vmatprep.mubr.bf16.mxu0 0
    %12224 = vmatmul.mubr.bf16.gmra.mxu0 %v12121
    %v12225 = vpop.f32.mrf.mxu0
    %v12226 = vadd.f32 0.0, %v12225
    %v12227 = vpop.f32.mrf.mxu0
    %v12228 = vpop.f32.mrf.mxu0
    %v12229 = vadd.f32 0.0, %v12228
    %v12230 = vpop.f32.mrf.mxu0
    %12231 = vmatprep.mubr.bf16.mxu0 0
    %12232 = vmatmul.mubr.bf16.gmra.mxu0 %v12124
    %v12233 = vpop.f32.mrf.mxu0
    %v12234 = vadd.f32 0.0, %v12233
    %v12235 = vpop.f32.mrf.mxu0
    %v12236 = vpop.f32.mrf.mxu0
    %v12237 = vadd.f32 0.0, %v12236
    %v12238 = vpop.f32.mrf.mxu0
    %12239 = vmatprep.mubr.bf16.mxu0 0
    %12240 = vmatmul.mubr.bf16.gmra.mxu0 %v12127
    %v12241 = vpop.f32.mrf.mxu0
    %v12242 = vadd.f32 0.0, %v12241
    %v12243 = vpop.f32.mrf.mxu0
    %v12244 = vpop.f32.mrf.mxu0
    %v12245 = vadd.f32 0.0, %v12244
    %v12246 = vpop.f32.mrf.mxu0
    %12247 = vmatprep.mubr.bf16.mxu0 0
    %12248 = vmatmul.mubr.bf16.gmra.mxu0 %v12130
    %v12249 = vpop.f32.mrf.mxu0
    %v12250 = vadd.f32 0.0, %v12249
    %v12251 = vpop.f32.mrf.mxu0
    %v12252 = vpop.f32.mrf.mxu0
    %v12253 = vadd.f32 0.0, %v12252
    %v12254 = vpop.f32.mrf.mxu0
    %12255 = vmatprep.mubr.bf16.mxu0 0
    %12256 = vmatmul.mubr.bf16.gmra.mxu0 %v12133
    %v12257 = vpop.f32.mrf.mxu0
    %v12258 = vadd.f32 0.0, %v12257
    %v12259 = vpop.f32.mrf.mxu0
    %v12260 = vpop.f32.mrf.mxu0
    %v12261 = vadd.f32 0.0, %v12260
    %v12262 = vpop.f32.mrf.mxu0
    %12263 = vmatprep.mubr.bf16.mxu0 0
    %12264 = vmatmul.mubr.bf16.gmra.mxu0 %v12136
    %v12265 = vpop.f32.mrf.mxu0
    %v12266 = vadd.f32 0.0, %v12265
    %v12267 = vpop.f32.mrf.mxu0
    %v12268 = vpop.f32.mrf.mxu0
    %v12269 = vadd.f32 0.0, %v12268
    %v12270 = vpop.f32.mrf.mxu0
    %12271 = vmatprep.mubr.bf16.mxu0 0
    %12272 = vmatmul.mubr.bf16.gmra.mxu0 %v12139
    %v12273 = vpop.f32.mrf.mxu0
    %v12274 = vadd.f32 0.0, %v12273
    %v12275 = vpop.f32.mrf.mxu0
    %v12276 = vpop.f32.mrf.mxu0
    %v12277 = vadd.f32 0.0, %v12276
    %v12278 = vpop.f32.mrf.mxu0
    %12279 = vmatprep.mubr.bf16.mxu0 0
    %12280 = vmatmul.mubr.bf16.gmra.mxu0 %v12142
    %v12281 = vpop.f32.mrf.mxu0
    %v12282 = vadd.f32 0.0, %v12281
    %v12283 = vpop.f32.mrf.mxu0
    %v12284 = vpop.f32.mrf.mxu0
    %v12285 = vadd.f32 0.0, %v12284
    %v12286 = vpop.f32.mrf.mxu0
    %12287 = vmatprep.mubr.bf16.mxu0 0
    %12288 = vmatmul.mubr.bf16.gmra.mxu0 %v12145
    %v12289 = vpop.f32.mrf.mxu0
    %v12290 = vadd.f32 0.0, %v12289
    %v12291 = vpop.f32.mrf.mxu0
    %v12292 = vpop.f32.mrf.mxu0
    %v12293 = vadd.f32 0.0, %v12292
    %v12294 = vpop.f32.mrf.mxu0
    %12295 = vmatprep.mubr.bf16.mxu0 0
    %12296 = vmatmul.mubr.bf16.gmra.mxu0 %v12148
    %v12297 = vpop.f32.mrf.mxu0
    %v12298 = vadd.f32 0.0, %v12297
    %v12299 = vpop.f32.mrf.mxu0
    %v12300 = vpop.f32.mrf.mxu0
    %v12301 = vadd.f32 0.0, %v12300
    %v12302 = vpop.f32.mrf.mxu0
    %12303 = vmatprep.mubr.bf16.mxu0 0
    %12304 = vmatmul.mubr.bf16.gmra.mxu0 %v12151
    %v12305 = vpop.f32.mrf.mxu0
    %v12306 = vadd.f32 0.0, %v12305
    %v12307 = vpop.f32.mrf.mxu0
    %v12308 = vpop.f32.mrf.mxu0
    %v12309 = vadd.f32 0.0, %v12308
    %v12310 = vpop.f32.mrf.mxu0
    %12311 = vmatprep.mubr.bf16.mxu0 0
    %12312 = vmatmul.mubr.bf16.gmra.mxu0 %v12154
    %v12313 = vpop.f32.mrf.mxu0
    %v12314 = vadd.f32 0.0, %v12313
    %v12315 = vpop.f32.mrf.mxu0
    %v12316 = vpop.f32.mrf.mxu0
    %v12317 = vadd.f32 0.0, %v12316
    %v12318 = vpop.f32.mrf.mxu0
    %12319 = vdwg.mxu0
    %v12320 = vadd.f32 %v11850, %v12194
    %v12321 = vadd.f32 %v11851, %v12197
    %v12322 = vadd.f32 %v11852, %v12202
    %v12323 = vadd.f32 %v11853, %v12205
    %v12324 = vadd.f32 %v11854, %v12210
    %v12325 = vadd.f32 %v11855, %v12213
    %v12326 = vadd.f32 %v11856, %v12218
    %v12327 = vadd.f32 %v11857, %v12221
    %v12328 = vadd.f32 %v11858, %v12226
    %v12329 = vadd.f32 %v11859, %v12229
    %v12330 = vadd.f32 %v11860, %v12234
    %v12331 = vadd.f32 %v11861, %v12237
    %v12332 = vadd.f32 %v11862, %v12242
    %v12333 = vadd.f32 %v11863, %v12245
    %v12334 = vadd.f32 %v11864, %v12250
    %v12335 = vadd.f32 %v11865, %v12253
    %v12336 = vadd.f32 %v11866, %v12258
    %v12337 = vadd.f32 %v11867, %v12261
    %v12338 = vadd.f32 %v11868, %v12266
    %v12339 = vadd.f32 %v11869, %v12269
    %v12340 = vadd.f32 %v11870, %v12274
    %v12341 = vadd.f32 %v11871, %v12277
    %v12342 = vadd.f32 %v11872, %v12282
    %v12343 = vadd.f32 %v11873, %v12285
    %v12344 = vadd.f32 %v11874, %v12290
    %v12345 = vadd.f32 %v11875, %v12293
    %v12346 = vadd.f32 %v11876, %v12298
    %v12347 = vadd.f32 %v11877, %v12301
    %v12348 = vadd.f32 %v11878, %v12306
    %v12349 = vadd.f32 %v11879, %v12309
    %v12350 = vadd.f32 %v11880, %v12314
    %v12351 = vadd.f32 %v11881, %v12317
    %v12352 = vld [vmem:[%s10788 + $0x8] sm:$0x3]
    %v12353 = vld [vmem:[%s10788 + $0x14] sm:$0x3]
    %v12354 = vld [vmem:[%s10788 + $0x20] sm:$0x3]
    %v12355 = vld [vmem:[%s10788 + $0x2c] sm:$0x3]
    %v12356 = vld [vmem:[%s10788 + $0x38] sm:$0x3]
    %v12357 = vld [vmem:[%s10788 + $0x44] sm:$0x3]
    %v12358 = vld [vmem:[%s10788 + $0x50] sm:$0x3]
    %v12359 = vld [vmem:[%s10788 + $0x5c] sm:$0x3]
    %v12360 = vld [vmem:[%s10788 + $0x68] sm:$0x3]
    %v12361 = vld [vmem:[%s10788 + $0x74] sm:$0x3]
    %v12362 = vld [vmem:[%s10788 + $0x80] sm:$0x3]
    %v12363 = vld [vmem:[%s10788 + $0x8c] sm:$0x3]
    %v12364 = vld [vmem:[%s10788 + $0x98] sm:$0x3]
    %v12365 = vld [vmem:[%s10788 + $0xa4] sm:$0x3]
    %v12366 = vld [vmem:[%s10788 + $0xb0] sm:$0x3]
    %v12367 = vld [vmem:[%s10788 + $0xbc] sm:$0x3]
    %v12369 = vshrl.u32 %v11882, 16
    %v12371 = vrot.slane %v12369, 5
    %v12372 = vshll.u32 %v11882, 16
    %v12374 = vrot.slane %v12372, 6
    %v12375 = vor.u32 %v12371, %v12374
    %v12376 = vrot.slane %v12375, 4
    %v12377 = vrot.slane %v11207, 5
    %v12378 = vrot.slane %v11203, 6
    %v12379 = vor.u32 %v12377, %v12378
    %v12380 = vsel %vm1504, %v12376, %v12379
    %v12381 = vrot.slane %v12379, 4
    %v12383 = vshrl.u32 %v12352, 16
    %v12385 = vrot.slane %v12383, 5
    %v12386 = vshll.u32 %v12352, 16
    %v12388 = vrot.slane %v12386, 6
    %v12389 = vor.u32 %v12385, %v12388
    %v12390 = vsel %vm1504, %v12381, %v12389
    %v12392 = vshrl.u32 %v11883, 16
    %v12394 = vrot.slane %v12392, 5
    %v12395 = vshll.u32 %v11883, 16
    %v12397 = vrot.slane %v12395, 6
    %v12398 = vor.u32 %v12394, %v12397
    %v12399 = vrot.slane %v12398, 4
    %v12400 = vrot.slane %v11231, 5
    %v12401 = vrot.slane %v11227, 6
    %v12402 = vor.u32 %v12400, %v12401
    %v12403 = vsel %vm1504, %v12399, %v12402
    %v12404 = vrot.slane %v12402, 4
    %v12406 = vshrl.u32 %v12353, 16
    %v12408 = vrot.slane %v12406, 5
    %v12409 = vshll.u32 %v12353, 16
    %v12411 = vrot.slane %v12409, 6
    %v12412 = vor.u32 %v12408, %v12411
    %v12413 = vsel %vm1504, %v12404, %v12412
    %v12415 = vshrl.u32 %v11884, 16
    %v12417 = vrot.slane %v12415, 5
    %v12418 = vshll.u32 %v11884, 16
    %v12420 = vrot.slane %v12418, 6
    %v12421 = vor.u32 %v12417, %v12420
    %v12422 = vrot.slane %v12421, 4
    %v12423 = vrot.slane %v11255, 5
    %v12424 = vrot.slane %v11251, 6
    %v12425 = vor.u32 %v12423, %v12424
    %v12426 = vsel %vm1504, %v12422, %v12425
    %v12427 = vrot.slane %v12425, 4
    %v12429 = vshrl.u32 %v12354, 16
    %v12431 = vrot.slane %v12429, 5
    %v12432 = vshll.u32 %v12354, 16
    %v12434 = vrot.slane %v12432, 6
    %v12435 = vor.u32 %v12431, %v12434
    %v12436 = vsel %vm1504, %v12427, %v12435
    %v12438 = vshrl.u32 %v11885, 16
    %v12440 = vrot.slane %v12438, 5
    %v12441 = vshll.u32 %v11885, 16
    %v12443 = vrot.slane %v12441, 6
    %v12444 = vor.u32 %v12440, %v12443
    %v12445 = vrot.slane %v12444, 4
    %v12446 = vrot.slane %v11279, 5
    %v12447 = vrot.slane %v11275, 6
    %v12448 = vor.u32 %v12446, %v12447
    %v12449 = vsel %vm1504, %v12445, %v12448
    %v12450 = vrot.slane %v12448, 4
    %v12452 = vshrl.u32 %v12355, 16
    %v12454 = vrot.slane %v12452, 5
    %v12455 = vshll.u32 %v12355, 16
    %v12457 = vrot.slane %v12455, 6
    %v12458 = vor.u32 %v12454, %v12457
    %v12459 = vsel %vm1504, %v12450, %v12458
    %v12461 = vshrl.u32 %v11886, 16
    %v12463 = vrot.slane %v12461, 5
    %v12464 = vshll.u32 %v11886, 16
    %v12466 = vrot.slane %v12464, 6
    %v12467 = vor.u32 %v12463, %v12466
    %v12468 = vrot.slane %v12467, 4
    %v12469 = vrot.slane %v11303, 5
    %v12470 = vrot.slane %v11299, 6
    %v12471 = vor.u32 %v12469, %v12470
    %v12472 = vsel %vm1504, %v12468, %v12471
    %v12473 = vrot.slane %v12471, 4
    %v12475 = vshrl.u32 %v12356, 16
    %v12477 = vrot.slane %v12475, 5
    %v12478 = vshll.u32 %v12356, 16
    %v12480 = vrot.slane %v12478, 6
    %v12481 = vor.u32 %v12477, %v12480
    %v12482 = vsel %vm1504, %v12473, %v12481
    %v12484 = vshrl.u32 %v11887, 16
    %v12486 = vrot.slane %v12484, 5
    %v12487 = vshll.u32 %v11887, 16
    %v12489 = vrot.slane %v12487, 6
    %v12490 = vor.u32 %v12486, %v12489
    %v12491 = vrot.slane %v12490, 4
    %v12492 = vrot.slane %v11327, 5
    %v12493 = vrot.slane %v11323, 6
    %v12494 = vor.u32 %v12492, %v12493
    %v12495 = vsel %vm1504, %v12491, %v12494
    %v12496 = vrot.slane %v12494, 4
    %v12498 = vshrl.u32 %v12357, 16
    %v12500 = vrot.slane %v12498, 5
    %v12501 = vshll.u32 %v12357, 16
    %v12503 = vrot.slane %v12501, 6
    %v12504 = vor.u32 %v12500, %v12503
    %v12505 = vsel %vm1504, %v12496, %v12504
    %v12507 = vshrl.u32 %v11888, 16
    %v12509 = vrot.slane %v12507, 5
    %v12510 = vshll.u32 %v11888, 16
    %v12512 = vrot.slane %v12510, 6
    %v12513 = vor.u32 %v12509, %v12512
    %v12514 = vrot.slane %v12513, 4
    %v12515 = vrot.slane %v11351, 5
    %v12516 = vrot.slane %v11347, 6
    %v12517 = vor.u32 %v12515, %v12516
    %v12518 = vsel %vm1504, %v12514, %v12517
    %v12519 = vrot.slane %v12517, 4
    %v12521 = vshrl.u32 %v12358, 16
    %v12523 = vrot.slane %v12521, 5
    %v12524 = vshll.u32 %v12358, 16
    %v12526 = vrot.slane %v12524, 6
    %v12527 = vor.u32 %v12523, %v12526
    %v12528 = vsel %vm1504, %v12519, %v12527
    %v12530 = vshrl.u32 %v11889, 16
    %v12532 = vrot.slane %v12530, 5
    %v12533 = vshll.u32 %v11889, 16
    %v12535 = vrot.slane %v12533, 6
    %v12536 = vor.u32 %v12532, %v12535
    %v12537 = vrot.slane %v12536, 4
    %v12538 = vrot.slane %v11375, 5
    %v12539 = vrot.slane %v11371, 6
    %v12540 = vor.u32 %v12538, %v12539
    %v12541 = vsel %vm1504, %v12537, %v12540
    %v12542 = vrot.slane %v12540, 4
    %v12544 = vshrl.u32 %v12359, 16
    %v12546 = vrot.slane %v12544, 5
    %v12547 = vshll.u32 %v12359, 16
    %v12549 = vrot.slane %v12547, 6
    %v12550 = vor.u32 %v12546, %v12549
    %v12551 = vsel %vm1504, %v12542, %v12550
    %v12553 = vshrl.u32 %v11890, 16
    %v12555 = vrot.slane %v12553, 5
    %v12556 = vshll.u32 %v11890, 16
    %v12558 = vrot.slane %v12556, 6
    %v12559 = vor.u32 %v12555, %v12558
    %v12560 = vrot.slane %v12559, 4
    %v12561 = vrot.slane %v11399, 5
    %v12562 = vrot.slane %v11395, 6
    %v12563 = vor.u32 %v12561, %v12562
    %v12564 = vsel %vm1504, %v12560, %v12563
    %v12565 = vrot.slane %v12563, 4
    %v12567 = vshrl.u32 %v12360, 16
    %v12569 = vrot.slane %v12567, 5
    %v12570 = vshll.u32 %v12360, 16
    %v12572 = vrot.slane %v12570, 6
    %v12573 = vor.u32 %v12569, %v12572
    %v12574 = vsel %vm1504, %v12565, %v12573
    %v12576 = vshrl.u32 %v11891, 16
    %v12578 = vrot.slane %v12576, 5
    %v12579 = vshll.u32 %v11891, 16
    %v12581 = vrot.slane %v12579, 6
    %v12582 = vor.u32 %v12578, %v12581
    %v12583 = vrot.slane %v12582, 4
    %v12584 = vrot.slane %v11423, 5
    %v12585 = vrot.slane %v11419, 6
    %v12586 = vor.u32 %v12584, %v12585
    %v12587 = vsel %vm1504, %v12583, %v12586
    %v12588 = vrot.slane %v12586, 4
    %v12590 = vshrl.u32 %v12361, 16
    %v12592 = vrot.slane %v12590, 5
    %v12593 = vshll.u32 %v12361, 16
    %v12595 = vrot.slane %v12593, 6
    %v12596 = vor.u32 %v12592, %v12595
    %v12597 = vsel %vm1504, %v12588, %v12596
    %v12599 = vshrl.u32 %v11892, 16
    %v12601 = vrot.slane %v12599, 5
    %v12602 = vshll.u32 %v11892, 16
    %v12604 = vrot.slane %v12602, 6
    %v12605 = vor.u32 %v12601, %v12604
    %v12606 = vrot.slane %v12605, 4
    %v12607 = vrot.slane %v11447, 5
    %v12608 = vrot.slane %v11443, 6
    %v12609 = vor.u32 %v12607, %v12608
    %v12610 = vsel %vm1504, %v12606, %v12609
    %v12611 = vrot.slane %v12609, 4
    %v12613 = vshrl.u32 %v12362, 16
    %v12615 = vrot.slane %v12613, 5
    %v12616 = vshll.u32 %v12362, 16
    %v12618 = vrot.slane %v12616, 6
    %v12619 = vor.u32 %v12615, %v12618
    %v12620 = vsel %vm1504, %v12611, %v12619
    %v12622 = vshrl.u32 %v11893, 16
    %v12624 = vrot.slane %v12622, 5
    %v12625 = vshll.u32 %v11893, 16
    %v12627 = vrot.slane %v12625, 6
    %v12628 = vor.u32 %v12624, %v12627
    %v12629 = vrot.slane %v12628, 4
    %v12630 = vrot.slane %v11471, 5
    %v12631 = vrot.slane %v11467, 6
    %v12632 = vor.u32 %v12630, %v12631
    %v12633 = vsel %vm1504, %v12629, %v12632
    %v12634 = vrot.slane %v12632, 4
    %v12636 = vshrl.u32 %v12363, 16
    %v12638 = vrot.slane %v12636, 5
    %v12639 = vshll.u32 %v12363, 16
    %v12641 = vrot.slane %v12639, 6
    %v12642 = vor.u32 %v12638, %v12641
    %v12643 = vsel %vm1504, %v12634, %v12642
    %v12645 = vshrl.u32 %v11894, 16
    %v12647 = vrot.slane %v12645, 5
    %v12648 = vshll.u32 %v11894, 16
    %v12650 = vrot.slane %v12648, 6
    %v12651 = vor.u32 %v12647, %v12650
    %v12652 = vrot.slane %v12651, 4
    %v12653 = vrot.slane %v11495, 5
    %v12654 = vrot.slane %v11491, 6
    %v12655 = vor.u32 %v12653, %v12654
    %v12656 = vsel %vm1504, %v12652, %v12655
    %v12657 = vrot.slane %v12655, 4
    %v12659 = vshrl.u32 %v12364, 16
    %v12661 = vrot.slane %v12659, 5
    %v12662 = vshll.u32 %v12364, 16
    %v12664 = vrot.slane %v12662, 6
    %v12665 = vor.u32 %v12661, %v12664
    %v12666 = vsel %vm1504, %v12657, %v12665
    %v12668 = vshrl.u32 %v11895, 16
    %v12670 = vrot.slane %v12668, 5
    %v12671 = vshll.u32 %v11895, 16
    %v12673 = vrot.slane %v12671, 6
    %v12674 = vor.u32 %v12670, %v12673
    %v12675 = vrot.slane %v12674, 4
    %v12676 = vrot.slane %v11519, 5
    %v12677 = vrot.slane %v11515, 6
    %v12678 = vor.u32 %v12676, %v12677
    %v12679 = vsel %vm1504, %v12675, %v12678
    %v12680 = vrot.slane %v12678, 4
    %v12682 = vshrl.u32 %v12365, 16
    %v12684 = vrot.slane %v12682, 5
    %v12685 = vshll.u32 %v12365, 16
    %v12687 = vrot.slane %v12685, 6
    %v12688 = vor.u32 %v12684, %v12687
    %v12689 = vsel %vm1504, %v12680, %v12688
    %v12691 = vshrl.u32 %v11896, 16
    %v12693 = vrot.slane %v12691, 5
    %v12694 = vshll.u32 %v11896, 16
    %v12696 = vrot.slane %v12694, 6
    %v12697 = vor.u32 %v12693, %v12696
    %v12698 = vrot.slane %v12697, 4
    %v12699 = vrot.slane %v11543, 5
    %v12700 = vrot.slane %v11539, 6
    %v12701 = vor.u32 %v12699, %v12700
    %v12702 = vsel %vm1504, %v12698, %v12701
    %v12703 = vrot.slane %v12701, 4
    %v12705 = vshrl.u32 %v12366, 16
    %v12707 = vrot.slane %v12705, 5
    %v12708 = vshll.u32 %v12366, 16
    %v12710 = vrot.slane %v12708, 6
    %v12711 = vor.u32 %v12707, %v12710
    %v12712 = vsel %vm1504, %v12703, %v12711
    %v12714 = vshrl.u32 %v11897, 16
    %v12716 = vrot.slane %v12714, 5
    %v12717 = vshll.u32 %v11897, 16
    %v12719 = vrot.slane %v12717, 6
    %v12720 = vor.u32 %v12716, %v12719
    %v12721 = vrot.slane %v12720, 4
    %v12722 = vrot.slane %v11567, 5
    %v12723 = vrot.slane %v11563, 6
    %v12724 = vor.u32 %v12722, %v12723
    %v12725 = vsel %vm1504, %v12721, %v12724
    %v12726 = vrot.slane %v12724, 4
    %v12728 = vshrl.u32 %v12367, 16
    %v12730 = vrot.slane %v12728, 5
    %v12731 = vshll.u32 %v12367, 16
    %v12733 = vrot.slane %v12731, 6
    %v12734 = vor.u32 %v12730, %v12733
    %v12735 = vsel %vm1504, %v12726, %v12734
    %v12736 = vunpack.c.l.b16 %v12380
    %v12737 = vunpack.c.l.b16 %v12390
    %v12738 = vunpack.c.l.b16 %v12403
    %v12739 = vunpack.c.l.b16 %v12413
    %v12740 = vunpack.c.l.b16 %v12426
    %v12741 = vunpack.c.l.b16 %v12436
    %v12742 = vunpack.c.l.b16 %v12449
    %v12743 = vunpack.c.l.b16 %v12459
    %v12744 = vunpack.c.l.b16 %v12472
    %v12745 = vunpack.c.l.b16 %v12482
    %v12746 = vunpack.c.l.b16 %v12495
    %v12747 = vunpack.c.l.b16 %v12505
    %v12748 = vunpack.c.l.b16 %v12518
    %v12749 = vunpack.c.l.b16 %v12528
    %v12750 = vunpack.c.l.b16 %v12541
    %v12751 = vunpack.c.l.b16 %v12551
    %v12752 = vunpack.c.l.b16 %v12564
    %v12753 = vunpack.c.l.b16 %v12574
    %v12754 = vunpack.c.l.b16 %v12587
    %v12755 = vunpack.c.l.b16 %v12597
    %v12756 = vunpack.c.l.b16 %v12610
    %v12757 = vunpack.c.l.b16 %v12620
    %v12758 = vunpack.c.l.b16 %v12633
    %v12759 = vunpack.c.l.b16 %v12643
    %v12760 = vunpack.c.l.b16 %v12656
    %v12761 = vunpack.c.l.b16 %v12666
    %v12762 = vunpack.c.l.b16 %v12679
    %v12763 = vunpack.c.l.b16 %v12689
    %v12764 = vunpack.c.l.b16 %v12702
    %v12765 = vunpack.c.l.b16 %v12712
    %v12766 = vunpack.c.l.b16 %v12725
    %v12767 = vunpack.c.l.b16 %v12735
    %v12768 = vpack.c.b16 %v12737, %v12736
    %v12769 = vpack.c.b16 %v12739, %v12738
    %v12770 = vpack.c.b16 %v12741, %v12740
    %v12771 = vpack.c.b16 %v12743, %v12742
    %v12772 = vpack.c.b16 %v12745, %v12744
    %v12773 = vpack.c.b16 %v12747, %v12746
    %v12774 = vpack.c.b16 %v12749, %v12748
    %v12775 = vpack.c.b16 %v12751, %v12750
    %v12776 = vpack.c.b16 %v12753, %v12752
    %v12777 = vpack.c.b16 %v12755, %v12754
    %v12778 = vpack.c.b16 %v12757, %v12756
    %v12779 = vpack.c.b16 %v12759, %v12758
    %v12780 = vpack.c.b16 %v12761, %v12760
    %v12781 = vpack.c.b16 %v12763, %v12762
    %v12782 = vpack.c.b16 %v12765, %v12764
    %v12783 = vpack.c.b16 %v12767, %v12766
    %v12785 = vunpack.c.l.b16 %v10783
    %v12786 = vpack.c.b16 %v12785, %v11628
    %v12788 = vshrl.u32 %v12786, 16
    %v12790 = vrot.slane %v12788, 3
    %v12791 = vshll.u32 %v12786, 16
    %v12793 = vrot.slane %v12791, 4
    %v12794 = vor.u32 %v12790, %v12793
    %v12796 = vsel %vm520, %v12768, 0
    %v12799 = vsel %vm520, %v12769, 0
    %v12802 = vsel %vm520, %v12770, 0
    %v12805 = vsel %vm520, %v12771, 0
    %v12808 = vsel %vm520, %v12772, 0
    %v12811 = vsel %vm520, %v12773, 0
    %v12814 = vsel %vm520, %v12774, 0
    %v12817 = vsel %vm520, %v12775, 0
    %v12820 = vsel %vm520, %v12776, 0
    %v12823 = vsel %vm520, %v12777, 0
    %v12826 = vsel %vm520, %v12778, 0
    %v12829 = vsel %vm520, %v12779, 0
    %v12832 = vsel %vm520, %v12780, 0
    %v12835 = vsel %vm520, %v12781, 0
    %v12838 = vsel %vm520, %v12782, 0
    %v12841 = vsel %vm520, %v12783, 0
    %v12844 = vand.u32 %v12794, %v572
    %12846 = vmatprep.subr.bf16.mxu0 0
    %12847 = vmatpush1.bf16.msra.mxu0 0
    %12848 = vmatprep.subr.bf16.mxu0 0
    %12849 = vmatpush1.bf16.msra.mxu0 0
    %12850 = vmatprep.subr.bf16.mxu0 0
    %12851 = vmatpush1.bf16.msra.mxu0 0
    %12852 = vmatprep.subr.bf16.mxu0 0
    %12853 = vmatpush1.bf16.msra.mxu0 0
    %12854 = vmatprep.subr.bf16.mxu0 0
    %12855 = vmatpush1.bf16.msra.mxu0 0
    %12856 = vmatprep.subr.bf16.mxu0 0
    %12857 = vmatpush1.bf16.msra.mxu0 0
    %12858 = vmatprep.subr.bf16.mxu0 0
    %12859 = vmatpush1.bf16.msra.mxu0 0
    %12860 = vmatprep.subr.bf16.mxu0 0
    %12861 = vmatpush1.bf16.msra.mxu0 %v12844
    %12862 = vmatprep.subr.bf16.mxu0 0
    %12863 = vmatpush2.bf16.msra.mxu0 0
    %12864 = vmatprep.subr.bf16.mxu0 0
    %12865 = vmatpush2.bf16.msra.mxu0 0
    %12866 = vmatprep.subr.bf16.mxu0 0
    %12867 = vmatpush2.bf16.msra.mxu0 0
    %12868 = vmatprep.subr.bf16.mxu0 0
    %12869 = vmatpush2.bf16.msra.mxu0 0
    %12870 = vmatprep.subr.bf16.mxu0 0
    %12871 = vmatpush2.bf16.msra.mxu0 0
    %12872 = vmatprep.subr.bf16.mxu0 0
    %12873 = vmatpush2.bf16.msra.mxu0 0
    %12874 = vmatprep.subr.bf16.mxu0 0
    %12875 = vmatpush2.bf16.msra.mxu0 0
    %12876 = vmatprep.subr.bf16.mxu0 0
    %12877 = vmatpush2.bf16.msra.mxu0 0
    %12878 = vmatprep.mubr.bf16.mxu0 0
    %12879 = vmatmul.mubr.bf16.gmra.mxu0 %v12796
    %v12880 = vpop.f32.mrf.mxu0
    %v12881 = vadd.f32 0.0, %v12880
    %v12882 = vpop.f32.mrf.mxu0
    %v12883 = vpop.f32.mrf.mxu0
    %v12884 = vadd.f32 0.0, %v12883
    %v12885 = vpop.f32.mrf.mxu0
    %12886 = vmatprep.mubr.bf16.mxu0 0
    %12887 = vmatmul.mubr.bf16.gmra.mxu0 %v12799
    %v12888 = vpop.f32.mrf.mxu0
    %v12889 = vadd.f32 0.0, %v12888
    %v12890 = vpop.f32.mrf.mxu0
    %v12891 = vpop.f32.mrf.mxu0
    %v12892 = vadd.f32 0.0, %v12891
    %v12893 = vpop.f32.mrf.mxu0
    %12894 = vmatprep.mubr.bf16.mxu0 0
    %12895 = vmatmul.mubr.bf16.gmra.mxu0 %v12802
    %v12896 = vpop.f32.mrf.mxu0
    %v12897 = vadd.f32 0.0, %v12896
    %v12898 = vpop.f32.mrf.mxu0
    %v12899 = vpop.f32.mrf.mxu0
    %v12900 = vadd.f32 0.0, %v12899
    %v12901 = vpop.f32.mrf.mxu0
    %12902 = vmatprep.mubr.bf16.mxu0 0
    %12903 = vmatmul.mubr.bf16.gmra.mxu0 %v12805
    %v12904 = vpop.f32.mrf.mxu0
    %v12905 = vadd.f32 0.0, %v12904
    %v12906 = vpop.f32.mrf.mxu0
    %v12907 = vpop.f32.mrf.mxu0
    %v12908 = vadd.f32 0.0, %v12907
    %v12909 = vpop.f32.mrf.mxu0
    %12910 = vmatprep.mubr.bf16.mxu0 0
    %12911 = vmatmul.mubr.bf16.gmra.mxu0 %v12808
    %v12912 = vpop.f32.mrf.mxu0
    %v12913 = vadd.f32 0.0, %v12912
    %v12914 = vpop.f32.mrf.mxu0
    %v12915 = vpop.f32.mrf.mxu0
    %v12916 = vadd.f32 0.0, %v12915
    %v12917 = vpop.f32.mrf.mxu0
    %12918 = vmatprep.mubr.bf16.mxu0 0
    %12919 = vmatmul.mubr.bf16.gmra.mxu0 %v12811
    %v12920 = vpop.f32.mrf.mxu0
    %v12921 = vadd.f32 0.0, %v12920
    %v12922 = vpop.f32.mrf.mxu0
    %v12923 = vpop.f32.mrf.mxu0
    %v12924 = vadd.f32 0.0, %v12923
    %v12925 = vpop.f32.mrf.mxu0
    %12926 = vmatprep.mubr.bf16.mxu0 0
    %12927 = vmatmul.mubr.bf16.gmra.mxu0 %v12814
    %v12928 = vpop.f32.mrf.mxu0
    %v12929 = vadd.f32 0.0, %v12928
    %v12930 = vpop.f32.mrf.mxu0
    %v12931 = vpop.f32.mrf.mxu0
    %v12932 = vadd.f32 0.0, %v12931
    %v12933 = vpop.f32.mrf.mxu0
    %12934 = vmatprep.mubr.bf16.mxu0 0
    %12935 = vmatmul.mubr.bf16.gmra.mxu0 %v12817
    %v12936 = vpop.f32.mrf.mxu0
    %v12937 = vadd.f32 0.0, %v12936
    %v12938 = vpop.f32.mrf.mxu0
    %v12939 = vpop.f32.mrf.mxu0
    %v12940 = vadd.f32 0.0, %v12939
    %v12941 = vpop.f32.mrf.mxu0
    %12942 = vmatprep.mubr.bf16.mxu0 0
    %12943 = vmatmul.mubr.bf16.gmra.mxu0 %v12820
    %v12944 = vpop.f32.mrf.mxu0
    %v12945 = vadd.f32 0.0, %v12944
    %v12946 = vpop.f32.mrf.mxu0
    %v12947 = vpop.f32.mrf.mxu0
    %v12948 = vadd.f32 0.0, %v12947
    %v12949 = vpop.f32.mrf.mxu0
    %12950 = vmatprep.mubr.bf16.mxu0 0
    %12951 = vmatmul.mubr.bf16.gmra.mxu0 %v12823
    %v12952 = vpop.f32.mrf.mxu0
    %v12953 = vadd.f32 0.0, %v12952
    %v12954 = vpop.f32.mrf.mxu0
    %v12955 = vpop.f32.mrf.mxu0
    %v12956 = vadd.f32 0.0, %v12955
    %v12957 = vpop.f32.mrf.mxu0
    %12958 = vmatprep.mubr.bf16.mxu0 0
    %12959 = vmatmul.mubr.bf16.gmra.mxu0 %v12826
    %v12960 = vpop.f32.mrf.mxu0
    %v12961 = vadd.f32 0.0, %v12960
    %v12962 = vpop.f32.mrf.mxu0
    %v12963 = vpop.f32.mrf.mxu0
    %v12964 = vadd.f32 0.0, %v12963
    %v12965 = vpop.f32.mrf.mxu0
    %12966 = vmatprep.mubr.bf16.mxu0 0
    %12967 = vmatmul.mubr.bf16.gmra.mxu0 %v12829
    %v12968 = vpop.f32.mrf.mxu0
    %v12969 = vadd.f32 0.0, %v12968
    %v12970 = vpop.f32.mrf.mxu0
    %v12971 = vpop.f32.mrf.mxu0
    %v12972 = vadd.f32 0.0, %v12971
    %v12973 = vpop.f32.mrf.mxu0
    %12974 = vmatprep.mubr.bf16.mxu0 0
    %12975 = vmatmul.mubr.bf16.gmra.mxu0 %v12832
    %v12976 = vpop.f32.mrf.mxu0
    %v12977 = vadd.f32 0.0, %v12976
    %v12978 = vpop.f32.mrf.mxu0
    %v12979 = vpop.f32.mrf.mxu0
    %v12980 = vadd.f32 0.0, %v12979
    %v12981 = vpop.f32.mrf.mxu0
    %12982 = vmatprep.mubr.bf16.mxu0 0
    %12983 = vmatmul.mubr.bf16.gmra.mxu0 %v12835
    %v12984 = vpop.f32.mrf.mxu0
    %v12985 = vadd.f32 0.0, %v12984
    %v12986 = vpop.f32.mrf.mxu0
    %v12987 = vpop.f32.mrf.mxu0
    %v12988 = vadd.f32 0.0, %v12987
    %v12989 = vpop.f32.mrf.mxu0
    %12990 = vmatprep.mubr.bf16.mxu0 0
    %12991 = vmatmul.mubr.bf16.gmra.mxu0 %v12838
    %v12992 = vpop.f32.mrf.mxu0
    %v12993 = vadd.f32 0.0, %v12992
    %v12994 = vpop.f32.mrf.mxu0
    %v12995 = vpop.f32.mrf.mxu0
    %v12996 = vadd.f32 0.0, %v12995
    %v12997 = vpop.f32.mrf.mxu0
    %12998 = vmatprep.mubr.bf16.mxu0 0
    %12999 = vmatmul.mubr.bf16.gmra.mxu0 %v12841
    %v13000 = vpop.f32.mrf.mxu0
    %v13001 = vadd.f32 0.0, %v13000
    %v13002 = vpop.f32.mrf.mxu0
    %v13003 = vpop.f32.mrf.mxu0
    %v13004 = vadd.f32 0.0, %v13003
    %v13005 = vpop.f32.mrf.mxu0
    %13006 = vdwg.mxu0
    %v13007 = vadd.f32 %v12320, %v12881
    %v13008 = vadd.f32 %v12321, %v12884
    %v13009 = vadd.f32 %v12322, %v12889
    %v13010 = vadd.f32 %v12323, %v12892
    %v13011 = vadd.f32 %v12324, %v12897
    %v13012 = vadd.f32 %v12325, %v12900
    %v13013 = vadd.f32 %v12326, %v12905
    %v13014 = vadd.f32 %v12327, %v12908
    %v13015 = vadd.f32 %v12328, %v12913
    %v13016 = vadd.f32 %v12329, %v12916
    %v13017 = vadd.f32 %v12330, %v12921
    %v13018 = vadd.f32 %v12331, %v12924
    %v13019 = vadd.f32 %v12332, %v12929
    %v13020 = vadd.f32 %v12333, %v12932
    %v13021 = vadd.f32 %v12334, %v12937
    %v13022 = vadd.f32 %v12335, %v12940
    %v13023 = vadd.f32 %v12336, %v12945
    %v13024 = vadd.f32 %v12337, %v12948
    %v13025 = vadd.f32 %v12338, %v12953
    %v13026 = vadd.f32 %v12339, %v12956
    %v13027 = vadd.f32 %v12340, %v12961
    %v13028 = vadd.f32 %v12341, %v12964
    %v13029 = vadd.f32 %v12342, %v12969
    %v13030 = vadd.f32 %v12343, %v12972
    %v13031 = vadd.f32 %v12344, %v12977
    %v13032 = vadd.f32 %v12345, %v12980
    %v13033 = vadd.f32 %v12346, %v12985
    %v13034 = vadd.f32 %v12347, %v12988
    %v13035 = vadd.f32 %v12348, %v12993
    %v13036 = vadd.f32 %v12349, %v12996
    %v13037 = vadd.f32 %v12350, %v13001
    %v13038 = vadd.f32 %v12351, %v13004
    %v13039 = vld [vmem:[%s10788] sm:$0xc]
    %v13040 = vld [vmem:[%s10788 + $0xc] sm:$0xc]
    %v13041 = vld [vmem:[%s10788 + $0x18] sm:$0xc]
    %v13042 = vld [vmem:[%s10788 + $0x24] sm:$0xc]
    %v13043 = vld [vmem:[%s10788 + $0x30] sm:$0xc]
    %v13044 = vld [vmem:[%s10788 + $0x3c] sm:$0xc]
    %v13045 = vld [vmem:[%s10788 + $0x48] sm:$0xc]
    %v13046 = vld [vmem:[%s10788 + $0x54] sm:$0xc]
    %v13047 = vld [vmem:[%s10788 + $0x60] sm:$0xc]
    %v13048 = vld [vmem:[%s10788 + $0x6c] sm:$0xc]
    %v13049 = vld [vmem:[%s10788 + $0x78] sm:$0xc]
    %v13050 = vld [vmem:[%s10788 + $0x84] sm:$0xc]
    %v13051 = vld [vmem:[%s10788 + $0x90] sm:$0xc]
    %v13052 = vld [vmem:[%s10788 + $0x9c] sm:$0xc]
    %v13053 = vld [vmem:[%s10788 + $0xa8] sm:$0xc]
    %v13054 = vld [vmem:[%s10788 + $0xb4] sm:$0xc]
    %v13087 = vrot.slane %v13039, 6
    %v13088 = vrot.slane %v13087, 4
    %v13089 = vrot.slane %v11146, 6
    %v13090 = vsel %vm2226, %v13088, %v13089
    %v13091 = vrot.slane %v13089, 4
    %v13092 = vrot.slane %v12352, 6
    %v13093 = vsel %vm2226, %v13091, %v13092
    %v13094 = vrot.slane %v13040, 6
    %v13095 = vrot.slane %v13094, 4
    %v13096 = vrot.slane %v11149, 6
    %v13097 = vsel %vm2226, %v13095, %v13096
    %v13098 = vrot.slane %v13096, 4
    %v13099 = vrot.slane %v12353, 6
    %v13100 = vsel %vm2226, %v13098, %v13099
    %v13101 = vrot.slane %v13041, 6
    %v13102 = vrot.slane %v13101, 4
    %v13103 = vrot.slane %v11152, 6
    %v13104 = vsel %vm2226, %v13102, %v13103
    %v13105 = vrot.slane %v13103, 4
    %v13106 = vrot.slane %v12354, 6
    %v13107 = vsel %vm2226, %v13105, %v13106
    %v13108 = vrot.slane %v13042, 6
    %v13109 = vrot.slane %v13108, 4
    %v13110 = vrot.slane %v11155, 6
    %v13111 = vsel %vm2226, %v13109, %v13110
    %v13112 = vrot.slane %v13110, 4
    %v13113 = vrot.slane %v12355, 6
    %v13114 = vsel %vm2226, %v13112, %v13113
    %v13115 = vrot.slane %v13043, 6
    %v13116 = vrot.slane %v13115, 4
    %v13117 = vrot.slane %v11158, 6
    %v13118 = vsel %vm2226, %v13116, %v13117
    %v13119 = vrot.slane %v13117, 4
    %v13120 = vrot.slane %v12356, 6
    %v13121 = vsel %vm2226, %v13119, %v13120
    %v13122 = vrot.slane %v13044, 6
    %v13123 = vrot.slane %v13122, 4
    %v13124 = vrot.slane %v11161, 6
    %v13125 = vsel %vm2226, %v13123, %v13124
    %v13126 = vrot.slane %v13124, 4
    %v13127 = vrot.slane %v12357, 6
    %v13128 = vsel %vm2226, %v13126, %v13127
    %v13129 = vrot.slane %v13045, 6
    %v13130 = vrot.slane %v13129, 4
    %v13131 = vrot.slane %v11164, 6
    %v13132 = vsel %vm2226, %v13130, %v13131
    %v13133 = vrot.slane %v13131, 4
    %v13134 = vrot.slane %v12358, 6
    %v13135 = vsel %vm2226, %v13133, %v13134
    %v13136 = vrot.slane %v13046, 6
    %v13137 = vrot.slane %v13136, 4
    %v13138 = vrot.slane %v11167, 6
    %v13139 = vsel %vm2226, %v13137, %v13138
    %v13140 = vrot.slane %v13138, 4
    %v13141 = vrot.slane %v12359, 6
    %v13142 = vsel %vm2226, %v13140, %v13141
    %v13143 = vrot.slane %v13047, 6
    %v13144 = vrot.slane %v13143, 4
    %v13145 = vrot.slane %v11170, 6
    %v13146 = vsel %vm2226, %v13144, %v13145
    %v13147 = vrot.slane %v13145, 4
    %v13148 = vrot.slane %v12360, 6
    %v13149 = vsel %vm2226, %v13147, %v13148
    %v13150 = vrot.slane %v13048, 6
    %v13151 = vrot.slane %v13150, 4
    %v13152 = vrot.slane %v11173, 6
    %v13153 = vsel %vm2226, %v13151, %v13152
    %v13154 = vrot.slane %v13152, 4
    %v13155 = vrot.slane %v12361, 6
    %v13156 = vsel %vm2226, %v13154, %v13155
    %v13157 = vrot.slane %v13049, 6
    %v13158 = vrot.slane %v13157, 4
    %v13159 = vrot.slane %v11176, 6
    %v13160 = vsel %vm2226, %v13158, %v13159
    %v13161 = vrot.slane %v13159, 4
    %v13162 = vrot.slane %v12362, 6
    %v13163 = vsel %vm2226, %v13161, %v13162
    %v13164 = vrot.slane %v13050, 6
    %v13165 = vrot.slane %v13164, 4
    %v13166 = vrot.slane %v11179, 6
    %v13167 = vsel %vm2226, %v13165, %v13166
    %v13168 = vrot.slane %v13166, 4
    %v13169 = vrot.slane %v12363, 6
    %v13170 = vsel %vm2226, %v13168, %v13169
    %v13171 = vrot.slane %v13051, 6
    %v13172 = vrot.slane %v13171, 4
    %v13173 = vrot.slane %v11182, 6
    %v13174 = vsel %vm2226, %v13172, %v13173
    %v13175 = vrot.slane %v13173, 4
    %v13176 = vrot.slane %v12364, 6
    %v13177 = vsel %vm2226, %v13175, %v13176
    %v13178 = vrot.slane %v13052, 6
    %v13179 = vrot.slane %v13178, 4
    %v13180 = vrot.slane %v11185, 6
    %v13181 = vsel %vm2226, %v13179, %v13180
    %v13182 = vrot.slane %v13180, 4
    %v13183 = vrot.slane %v12365, 6
    %v13184 = vsel %vm2226, %v13182, %v13183
    %v13185 = vrot.slane %v13053, 6
    %v13186 = vrot.slane %v13185, 4
    %v13187 = vrot.slane %v11188, 6
    %v13188 = vsel %vm2226, %v13186, %v13187
    %v13189 = vrot.slane %v13187, 4
    %v13190 = vrot.slane %v12366, 6
    %v13191 = vsel %vm2226, %v13189, %v13190
    %v13192 = vrot.slane %v13054, 6
    %v13193 = vrot.slane %v13192, 4
    %v13194 = vrot.slane %v11191, 6
    %v13195 = vsel %vm2226, %v13193, %v13194
    %v13196 = vrot.slane %v13194, 4
    %v13197 = vrot.slane %v12367, 6
    %v13198 = vsel %vm2226, %v13196, %v13197
    %v13199 = vunpack.c.l.b16 %v13090
    %v13200 = vunpack.c.l.b16 %v13093
    %v13201 = vunpack.c.l.b16 %v13097
    %v13202 = vunpack.c.l.b16 %v13100
    %v13203 = vunpack.c.l.b16 %v13104
    %v13204 = vunpack.c.l.b16 %v13107
    %v13205 = vunpack.c.l.b16 %v13111
    %v13206 = vunpack.c.l.b16 %v13114
    %v13207 = vunpack.c.l.b16 %v13118
    %v13208 = vunpack.c.l.b16 %v13121
    %v13209 = vunpack.c.l.b16 %v13125
    %v13210 = vunpack.c.l.b16 %v13128
    %v13211 = vunpack.c.l.b16 %v13132
    %v13212 = vunpack.c.l.b16 %v13135
    %v13213 = vunpack.c.l.b16 %v13139
    %v13214 = vunpack.c.l.b16 %v13142
    %v13215 = vunpack.c.l.b16 %v13146
    %v13216 = vunpack.c.l.b16 %v13149
    %v13217 = vunpack.c.l.b16 %v13153
    %v13218 = vunpack.c.l.b16 %v13156
    %v13219 = vunpack.c.l.b16 %v13160
    %v13220 = vunpack.c.l.b16 %v13163
    %v13221 = vunpack.c.l.b16 %v13167
    %v13222 = vunpack.c.l.b16 %v13170
    %v13223 = vunpack.c.l.b16 %v13174
    %v13224 = vunpack.c.l.b16 %v13177
    %v13225 = vunpack.c.l.b16 %v13181
    %v13226 = vunpack.c.l.b16 %v13184
    %v13227 = vunpack.c.l.b16 %v13188
    %v13228 = vunpack.c.l.b16 %v13191
    %v13229 = vunpack.c.l.b16 %v13195
    %v13230 = vunpack.c.l.b16 %v13198
    %v13231 = vpack.c.b16 %v13200, %v13199
    %v13232 = vpack.c.b16 %v13202, %v13201
    %v13233 = vpack.c.b16 %v13204, %v13203
    %v13234 = vpack.c.b16 %v13206, %v13205
    %v13235 = vpack.c.b16 %v13208, %v13207
    %v13236 = vpack.c.b16 %v13210, %v13209
    %v13237 = vpack.c.b16 %v13212, %v13211
    %v13238 = vpack.c.b16 %v13214, %v13213
    %v13239 = vpack.c.b16 %v13216, %v13215
    %v13240 = vpack.c.b16 %v13218, %v13217
    %v13241 = vpack.c.b16 %v13220, %v13219
    %v13242 = vpack.c.b16 %v13222, %v13221
    %v13243 = vpack.c.b16 %v13224, %v13223
    %v13244 = vpack.c.b16 %v13226, %v13225
    %v13245 = vpack.c.b16 %v13228, %v13227
    %v13246 = vpack.c.b16 %v13230, %v13229
    %v13248 = vunpack.c.l.b16 %v10784
    %v13249 = vpack.c.b16 %v13248, %v12785
    %v13250 = vrot.slane %v13249, 2
    %v13252 = vsel %vm520, %v13231, 0
    %v13255 = vsel %vm520, %v13232, 0
    %v13258 = vsel %vm520, %v13233, 0
    %v13261 = vsel %vm520, %v13234, 0
    %v13264 = vsel %vm520, %v13235, 0
    %v13267 = vsel %vm520, %v13236, 0
    %v13270 = vsel %vm520, %v13237, 0
    %v13273 = vsel %vm520, %v13238, 0
    %v13276 = vsel %vm520, %v13239, 0
    %v13279 = vsel %vm520, %v13240, 0
    %v13282 = vsel %vm520, %v13241, 0
    %v13285 = vsel %vm520, %v13242, 0
    %v13288 = vsel %vm520, %v13243, 0
    %v13291 = vsel %vm520, %v13244, 0
    %v13294 = vsel %vm520, %v13245, 0
    %v13297 = vsel %vm520, %v13246, 0
    %v13300 = vand.u32 %v13250, %v572
    %13302 = vmatprep.subr.bf16.mxu0 0
    %13303 = vmatpush1.bf16.msra.mxu0 0
    %13304 = vmatprep.subr.bf16.mxu0 0
    %13305 = vmatpush1.bf16.msra.mxu0 0
    %13306 = vmatprep.subr.bf16.mxu0 0
    %13307 = vmatpush1.bf16.msra.mxu0 0
    %13308 = vmatprep.subr.bf16.mxu0 0
    %13309 = vmatpush1.bf16.msra.mxu0 0
    %13310 = vmatprep.subr.bf16.mxu0 0
    %13311 = vmatpush1.bf16.msra.mxu0 0
    %13312 = vmatprep.subr.bf16.mxu0 0
    %13313 = vmatpush1.bf16.msra.mxu0 0
    %13314 = vmatprep.subr.bf16.mxu0 0
    %13315 = vmatpush1.bf16.msra.mxu0 0
    %13316 = vmatprep.subr.bf16.mxu0 0
    %13317 = vmatpush1.bf16.msra.mxu0 %v13300
    %13318 = vmatprep.subr.bf16.mxu0 0
    %13319 = vmatpush2.bf16.msra.mxu0 0
    %13320 = vmatprep.subr.bf16.mxu0 0
    %13321 = vmatpush2.bf16.msra.mxu0 0
    %13322 = vmatprep.subr.bf16.mxu0 0
    %13323 = vmatpush2.bf16.msra.mxu0 0
    %13324 = vmatprep.subr.bf16.mxu0 0
    %13325 = vmatpush2.bf16.msra.mxu0 0
    %13326 = vmatprep.subr.bf16.mxu0 0
    %13327 = vmatpush2.bf16.msra.mxu0 0
    %13328 = vmatprep.subr.bf16.mxu0 0
    %13329 = vmatpush2.bf16.msra.mxu0 0
    %13330 = vmatprep.subr.bf16.mxu0 0
    %13331 = vmatpush2.bf16.msra.mxu0 0
    %13332 = vmatprep.subr.bf16.mxu0 0
    %13333 = vmatpush2.bf16.msra.mxu0 0
    %13334 = vmatprep.mubr.bf16.mxu0 0
    %13335 = vmatmul.mubr.bf16.gmra.mxu0 %v13252
    %v13336 = vpop.f32.mrf.mxu0
    %v13337 = vadd.f32 0.0, %v13336
    %v13338 = vpop.f32.mrf.mxu0
    %v13339 = vpop.f32.mrf.mxu0
    %v13340 = vadd.f32 0.0, %v13339
    %v13341 = vpop.f32.mrf.mxu0
    %13342 = vmatprep.mubr.bf16.mxu0 0
    %13343 = vmatmul.mubr.bf16.gmra.mxu0 %v13255
    %v13344 = vpop.f32.mrf.mxu0
    %v13345 = vadd.f32 0.0, %v13344
    %v13346 = vpop.f32.mrf.mxu0
    %v13347 = vpop.f32.mrf.mxu0
    %v13348 = vadd.f32 0.0, %v13347
    %v13349 = vpop.f32.mrf.mxu0
    %13350 = vmatprep.mubr.bf16.mxu0 0
    %13351 = vmatmul.mubr.bf16.gmra.mxu0 %v13258
    %v13352 = vpop.f32.mrf.mxu0
    %v13353 = vadd.f32 0.0, %v13352
    %v13354 = vpop.f32.mrf.mxu0
    %v13355 = vpop.f32.mrf.mxu0
    %v13356 = vadd.f32 0.0, %v13355
    %v13357 = vpop.f32.mrf.mxu0
    %13358 = vmatprep.mubr.bf16.mxu0 0
    %13359 = vmatmul.mubr.bf16.gmra.mxu0 %v13261
    %v13360 = vpop.f32.mrf.mxu0
    %v13361 = vadd.f32 0.0, %v13360
    %v13362 = vpop.f32.mrf.mxu0
    %v13363 = vpop.f32.mrf.mxu0
    %v13364 = vadd.f32 0.0, %v13363
    %v13365 = vpop.f32.mrf.mxu0
    %13366 = vmatprep.mubr.bf16.mxu0 0
    %13367 = vmatmul.mubr.bf16.gmra.mxu0 %v13264
    %v13368 = vpop.f32.mrf.mxu0
    %v13369 = vadd.f32 0.0, %v13368
    %v13370 = vpop.f32.mrf.mxu0
    %v13371 = vpop.f32.mrf.mxu0
    %v13372 = vadd.f32 0.0, %v13371
    %v13373 = vpop.f32.mrf.mxu0
    %13374 = vmatprep.mubr.bf16.mxu0 0
    %13375 = vmatmul.mubr.bf16.gmra.mxu0 %v13267
    %v13376 = vpop.f32.mrf.mxu0
    %v13377 = vadd.f32 0.0, %v13376
    %v13378 = vpop.f32.mrf.mxu0
    %v13379 = vpop.f32.mrf.mxu0
    %v13380 = vadd.f32 0.0, %v13379
    %v13381 = vpop.f32.mrf.mxu0
    %13382 = vmatprep.mubr.bf16.mxu0 0
    %13383 = vmatmul.mubr.bf16.gmra.mxu0 %v13270
    %v13384 = vpop.f32.mrf.mxu0
    %v13385 = vadd.f32 0.0, %v13384
    %v13386 = vpop.f32.mrf.mxu0
    %v13387 = vpop.f32.mrf.mxu0
    %v13388 = vadd.f32 0.0, %v13387
    %v13389 = vpop.f32.mrf.mxu0
    %13390 = vmatprep.mubr.bf16.mxu0 0
    %13391 = vmatmul.mubr.bf16.gmra.mxu0 %v13273
    %v13392 = vpop.f32.mrf.mxu0
    %v13393 = vadd.f32 0.0, %v13392
    %v13394 = vpop.f32.mrf.mxu0
    %v13395 = vpop.f32.mrf.mxu0
    %v13396 = vadd.f32 0.0, %v13395
    %v13397 = vpop.f32.mrf.mxu0
    %13398 = vmatprep.mubr.bf16.mxu0 0
    %13399 = vmatmul.mubr.bf16.gmra.mxu0 %v13276
    %v13400 = vpop.f32.mrf.mxu0
    %v13401 = vadd.f32 0.0, %v13400
    %v13402 = vpop.f32.mrf.mxu0
    %v13403 = vpop.f32.mrf.mxu0
    %v13404 = vadd.f32 0.0, %v13403
    %v13405 = vpop.f32.mrf.mxu0
    %13406 = vmatprep.mubr.bf16.mxu0 0
    %13407 = vmatmul.mubr.bf16.gmra.mxu0 %v13279
    %v13408 = vpop.f32.mrf.mxu0
    %v13409 = vadd.f32 0.0, %v13408
    %v13410 = vpop.f32.mrf.mxu0
    %v13411 = vpop.f32.mrf.mxu0
    %v13412 = vadd.f32 0.0, %v13411
    %v13413 = vpop.f32.mrf.mxu0
    %13414 = vmatprep.mubr.bf16.mxu0 0
    %13415 = vmatmul.mubr.bf16.gmra.mxu0 %v13282
    %v13416 = vpop.f32.mrf.mxu0
    %v13417 = vadd.f32 0.0, %v13416
    %v13418 = vpop.f32.mrf.mxu0
    %v13419 = vpop.f32.mrf.mxu0
    %v13420 = vadd.f32 0.0, %v13419
    %v13421 = vpop.f32.mrf.mxu0
    %13422 = vmatprep.mubr.bf16.mxu0 0
    %13423 = vmatmul.mubr.bf16.gmra.mxu0 %v13285
    %v13424 = vpop.f32.mrf.mxu0
    %v13425 = vadd.f32 0.0, %v13424
    %v13426 = vpop.f32.mrf.mxu0
    %v13427 = vpop.f32.mrf.mxu0
    %v13428 = vadd.f32 0.0, %v13427
    %v13429 = vpop.f32.mrf.mxu0
    %13430 = vmatprep.mubr.bf16.mxu0 0
    %13431 = vmatmul.mubr.bf16.gmra.mxu0 %v13288
    %v13432 = vpop.f32.mrf.mxu0
    %v13433 = vadd.f32 0.0, %v13432
    %v13434 = vpop.f32.mrf.mxu0
    %v13435 = vpop.f32.mrf.mxu0
    %v13436 = vadd.f32 0.0, %v13435
    %v13437 = vpop.f32.mrf.mxu0
    %13438 = vmatprep.mubr.bf16.mxu0 0
    %13439 = vmatmul.mubr.bf16.gmra.mxu0 %v13291
    %v13440 = vpop.f32.mrf.mxu0
    %v13441 = vadd.f32 0.0, %v13440
    %v13442 = vpop.f32.mrf.mxu0
    %v13443 = vpop.f32.mrf.mxu0
    %v13444 = vadd.f32 0.0, %v13443
    %v13445 = vpop.f32.mrf.mxu0
    %13446 = vmatprep.mubr.bf16.mxu0 0
    %13447 = vmatmul.mubr.bf16.gmra.mxu0 %v13294
    %v13448 = vpop.f32.mrf.mxu0
    %v13449 = vadd.f32 0.0, %v13448
    %v13450 = vpop.f32.mrf.mxu0
    %v13451 = vpop.f32.mrf.mxu0
    %v13452 = vadd.f32 0.0, %v13451
    %v13453 = vpop.f32.mrf.mxu0
    %13454 = vmatprep.mubr.bf16.mxu0 0
    %13455 = vmatmul.mubr.bf16.gmra.mxu0 %v13297
    %v13456 = vpop.f32.mrf.mxu0
    %v13457 = vadd.f32 0.0, %v13456
    %v13458 = vpop.f32.mrf.mxu0
    %v13459 = vpop.f32.mrf.mxu0
    %v13460 = vadd.f32 0.0, %v13459
    %v13461 = vpop.f32.mrf.mxu0
    %13462 = vdwg.mxu0
    %v13463 = vadd.f32 %v13007, %v13337
    %v13464 = vadd.f32 %v13008, %v13340
    %v13465 = vadd.f32 %v13009, %v13345
    %v13466 = vadd.f32 %v13010, %v13348
    %v13467 = vadd.f32 %v13011, %v13353
    %v13468 = vadd.f32 %v13012, %v13356
    %v13469 = vadd.f32 %v13013, %v13361
    %v13470 = vadd.f32 %v13014, %v13364
    %v13471 = vadd.f32 %v13015, %v13369
    %v13472 = vadd.f32 %v13016, %v13372
    %v13473 = vadd.f32 %v13017, %v13377
    %v13474 = vadd.f32 %v13018, %v13380
    %v13475 = vadd.f32 %v13019, %v13385
    %v13476 = vadd.f32 %v13020, %v13388
    %v13477 = vadd.f32 %v13021, %v13393
    %v13478 = vadd.f32 %v13022, %v13396
    %v13479 = vadd.f32 %v13023, %v13401
    %v13480 = vadd.f32 %v13024, %v13404
    %v13481 = vadd.f32 %v13025, %v13409
    %v13482 = vadd.f32 %v13026, %v13412
    %v13483 = vadd.f32 %v13027, %v13417
    %v13484 = vadd.f32 %v13028, %v13420
    %v13485 = vadd.f32 %v13029, %v13425
    %v13486 = vadd.f32 %v13030, %v13428
    %v13487 = vadd.f32 %v13031, %v13433
    %v13488 = vadd.f32 %v13032, %v13436
    %v13489 = vadd.f32 %v13033, %v13441
    %v13490 = vadd.f32 %v13034, %v13444
    %v13491 = vadd.f32 %v13035, %v13449
    %v13492 = vadd.f32 %v13036, %v13452
    %v13493 = vadd.f32 %v13037, %v13457
    %v13494 = vadd.f32 %v13038, %v13460
    %v13495 = vld [vmem:[%s2] sm:$0x1]
    %v13497 = vlaneseq
    %v13498 = vshrl.u32 %v13497, 7
    %v13499 = vsub.s32 0, %v13498
    %v13500 = vrot.slane %v13495, %v13499
    %v13502 = vadd.f32 %v13463, %v13500
    %v13503 = vadd.f32 %v13464, %v13500
    %v13504 = vadd.f32 %v13465, %v13500
    %v13505 = vadd.f32 %v13466, %v13500
    %v13506 = vadd.f32 %v13467, %v13500
    %v13507 = vadd.f32 %v13468, %v13500
    %v13508 = vadd.f32 %v13469, %v13500
    %v13509 = vadd.f32 %v13470, %v13500
    %v13510 = vadd.f32 %v13471, %v13500
    %v13511 = vadd.f32 %v13472, %v13500
    %v13512 = vadd.f32 %v13473, %v13500
    %v13513 = vadd.f32 %v13474, %v13500
    %v13514 = vadd.f32 %v13475, %v13500
    %v13515 = vadd.f32 %v13476, %v13500
    %v13516 = vadd.f32 %v13477, %v13500
    %v13517 = vadd.f32 %v13478, %v13500
    %v13518 = vadd.f32 %v13479, %v13500
    %v13519 = vadd.f32 %v13480, %v13500
    %v13520 = vadd.f32 %v13481, %v13500
    %v13521 = vadd.f32 %v13482, %v13500
    %v13522 = vadd.f32 %v13483, %v13500
    %v13523 = vadd.f32 %v13484, %v13500
    %v13524 = vadd.f32 %v13485, %v13500
    %v13525 = vadd.f32 %v13486, %v13500
    %v13526 = vadd.f32 %v13487, %v13500
    %v13527 = vadd.f32 %v13488, %v13500
    %v13528 = vadd.f32 %v13489, %v13500
    %v13529 = vadd.f32 %v13490, %v13500
    %v13530 = vadd.f32 %v13491, %v13500
    %v13531 = vadd.f32 %v13492, %v13500
    %v13532 = vadd.f32 %v13493, %v13500
    %v13533 = vadd.f32 %v13494, %v13500
    %vm13534 = vcmp.gt.f32.partialorder %v13502, 0.0
    %vm13535 = vcmp.gt.f32.partialorder %v13503, 0.0
    %vm13536 = vcmp.gt.f32.partialorder %v13504, 0.0
    %vm13537 = vcmp.gt.f32.partialorder %v13505, 0.0
    %vm13538 = vcmp.gt.f32.partialorder %v13506, 0.0
    %vm13539 = vcmp.gt.f32.partialorder %v13507, 0.0
    %vm13540 = vcmp.gt.f32.partialorder %v13508, 0.0
    %vm13541 = vcmp.gt.f32.partialorder %v13509, 0.0
    %vm13542 = vcmp.gt.f32.partialorder %v13510, 0.0
    %vm13543 = vcmp.gt.f32.partialorder %v13511, 0.0
    %vm13544 = vcmp.gt.f32.partialorder %v13512, 0.0
    %vm13545 = vcmp.gt.f32.partialorder %v13513, 0.0
    %vm13546 = vcmp.gt.f32.partialorder %v13514, 0.0
    %vm13547 = vcmp.gt.f32.partialorder %v13515, 0.0
    %vm13548 = vcmp.gt.f32.partialorder %v13516, 0.0
    %vm13549 = vcmp.gt.f32.partialorder %v13517, 0.0
    %vm13550 = vcmp.gt.f32.partialorder %v13518, 0.0
    %vm13551 = vcmp.gt.f32.partialorder %v13519, 0.0
    %vm13552 = vcmp.gt.f32.partialorder %v13520, 0.0
    %vm13553 = vcmp.gt.f32.partialorder %v13521, 0.0
    %vm13554 = vcmp.gt.f32.partialorder %v13522, 0.0
    %vm13555 = vcmp.gt.f32.partialorder %v13523, 0.0
    %vm13556 = vcmp.gt.f32.partialorder %v13524, 0.0
    %vm13557 = vcmp.gt.f32.partialorder %v13525, 0.0
    %vm13558 = vcmp.gt.f32.partialorder %v13526, 0.0
    %vm13559 = vcmp.gt.f32.partialorder %v13527, 0.0
    %vm13560 = vcmp.gt.f32.partialorder %v13528, 0.0
    %vm13561 = vcmp.gt.f32.partialorder %v13529, 0.0
    %vm13562 = vcmp.gt.f32.partialorder %v13530, 0.0
    %vm13563 = vcmp.gt.f32.partialorder %v13531, 0.0
    %vm13564 = vcmp.gt.f32.partialorder %v13532, 0.0
    %vm13565 = vcmp.gt.f32.partialorder %v13533, 0.0
    %v13566 = vmul.f32 %v13502, 1.442695
    %v13567 = vpow.pop %v13566
    %v13568 = vmul.f32 %v13503, 1.442695
    %v13569 = vpow.pop %v13568
    %v13570 = vmul.f32 %v13504, 1.442695
    %v13571 = vpow.pop %v13570
    %v13572 = vmul.f32 %v13505, 1.442695
    %v13573 = vpow.pop %v13572
    %v13574 = vmul.f32 %v13506, 1.442695
    %v13575 = vpow.pop %v13574
    %v13576 = vmul.f32 %v13507, 1.442695
    %v13577 = vpow.pop %v13576
    %v13578 = vmul.f32 %v13508, 1.442695
    %v13579 = vpow.pop %v13578
    %v13580 = vmul.f32 %v13509, 1.442695
    %v13581 = vpow.pop %v13580
    %v13582 = vmul.f32 %v13510, 1.442695
    %v13583 = vpow.pop %v13582
    %v13584 = vmul.f32 %v13511, 1.442695
    %v13585 = vpow.pop %v13584
    %v13586 = vmul.f32 %v13512, 1.442695
    %v13587 = vpow.pop %v13586
    %v13588 = vmul.f32 %v13513, 1.442695
    %v13589 = vpow.pop %v13588
    %v13590 = vmul.f32 %v13514, 1.442695
    %v13591 = vpow.pop %v13590
    %v13592 = vmul.f32 %v13515, 1.442695
    %v13593 = vpow.pop %v13592
    %v13594 = vmul.f32 %v13516, 1.442695
    %v13595 = vpow.pop %v13594
    %v13596 = vmul.f32 %v13517, 1.442695
    %v13597 = vpow.pop %v13596
    %v13598 = vmul.f32 %v13518, 1.442695
    %v13599 = vpow.pop %v13598
    %v13600 = vmul.f32 %v13519, 1.442695
    %v13601 = vpow.pop %v13600
    %v13602 = vmul.f32 %v13520, 1.442695
    %v13603 = vpow.pop %v13602
    %v13604 = vmul.f32 %v13521, 1.442695
    %v13605 = vpow.pop %v13604
    %v13606 = vmul.f32 %v13522, 1.442695
    %v13607 = vpow.pop %v13606
    %v13608 = vmul.f32 %v13523, 1.442695
    %v13609 = vpow.pop %v13608
    %v13610 = vmul.f32 %v13524, 1.442695
    %v13611 = vpow.pop %v13610
    %v13612 = vmul.f32 %v13525, 1.442695
    %v13613 = vpow.pop %v13612
    %v13614 = vmul.f32 %v13526, 1.442695
    %v13615 = vpow.pop %v13614
    %v13616 = vmul.f32 %v13527, 1.442695
    %v13617 = vpow.pop %v13616
    %v13618 = vmul.f32 %v13528, 1.442695
    %v13619 = vpow.pop %v13618
    %v13620 = vmul.f32 %v13529, 1.442695
    %v13621 = vpow.pop %v13620
    %v13622 = vmul.f32 %v13530, 1.442695
    %v13623 = vpow.pop %v13622
    %v13624 = vmul.f32 %v13531, 1.442695
    %v13625 = vpow.pop %v13624
    %v13626 = vmul.f32 %v13532, 1.442695
    %v13627 = vpow.pop %v13626
    %v13628 = vmul.f32 %v13533, 1.442695
    %v13629 = vpow.pop %v13628
    %v13630 = vsub.f32 %v13567, 1.0
    %v13631 = vsub.f32 %v13569, 1.0
    %v13632 = vsub.f32 %v13571, 1.0
    %v13633 = vsub.f32 %v13573, 1.0
    %v13634 = vsub.f32 %v13575, 1.0
    %v13635 = vsub.f32 %v13577, 1.0
    %v13636 = vsub.f32 %v13579, 1.0
    %v13637 = vsub.f32 %v13581, 1.0
    %v13638 = vsub.f32 %v13583, 1.0
    %v13639 = vsub.f32 %v13585, 1.0
    %v13640 = vsub.f32 %v13587, 1.0
    %v13641 = vsub.f32 %v13589, 1.0
    %v13642 = vsub.f32 %v13591, 1.0
    %v13643 = vsub.f32 %v13593, 1.0
    %v13644 = vsub.f32 %v13595, 1.0
    %v13645 = vsub.f32 %v13597, 1.0
    %v13646 = vsub.f32 %v13599, 1.0
    %v13647 = vsub.f32 %v13601, 1.0
    %v13648 = vsub.f32 %v13603, 1.0
    %v13649 = vsub.f32 %v13605, 1.0
    %v13650 = vsub.f32 %v13607, 1.0
    %v13651 = vsub.f32 %v13609, 1.0
    %v13652 = vsub.f32 %v13611, 1.0
    %v13653 = vsub.f32 %v13613, 1.0
    %v13654 = vsub.f32 %v13615, 1.0
    %v13655 = vsub.f32 %v13617, 1.0
    %v13656 = vsub.f32 %v13619, 1.0
    %v13657 = vsub.f32 %v13621, 1.0
    %v13658 = vsub.f32 %v13623, 1.0
    %v13659 = vsub.f32 %v13625, 1.0
    %v13660 = vsub.f32 %v13627, 1.0
    %v13661 = vsub.f32 %v13629, 1.0
    %v13662 = vsel %vm13534, %v13502, %v13630
    %v13663 = vsel %vm13535, %v13503, %v13631
    %v13664 = vsel %vm13536, %v13504, %v13632
    %v13665 = vsel %vm13537, %v13505, %v13633
    %v13666 = vsel %vm13538, %v13506, %v13634
    %v13667 = vsel %vm13539, %v13507, %v13635
    %v13668 = vsel %vm13540, %v13508, %v13636
    %v13669 = vsel %vm13541, %v13509, %v13637
    %v13670 = vsel %vm13542, %v13510, %v13638
    %v13671 = vsel %vm13543, %v13511, %v13639
    %v13672 = vsel %vm13544, %v13512, %v13640
    %v13673 = vsel %vm13545, %v13513, %v13641
    %v13674 = vsel %vm13546, %v13514, %v13642
    %v13675 = vsel %vm13547, %v13515, %v13643
    %v13676 = vsel %vm13548, %v13516, %v13644
    %v13677 = vsel %vm13549, %v13517, %v13645
    %v13678 = vsel %vm13550, %v13518, %v13646
    %v13679 = vsel %vm13551, %v13519, %v13647
    %v13680 = vsel %vm13552, %v13520, %v13648
    %v13681 = vsel %vm13553, %v13521, %v13649
    %v13682 = vsel %vm13554, %v13522, %v13650
    %v13683 = vsel %vm13555, %v13523, %v13651
    %v13684 = vsel %vm13556, %v13524, %v13652
    %v13685 = vsel %vm13557, %v13525, %v13653
    %v13686 = vsel %vm13558, %v13526, %v13654
    %v13687 = vsel %vm13559, %v13527, %v13655
    %v13688 = vsel %vm13560, %v13528, %v13656
    %v13689 = vsel %vm13561, %v13529, %v13657
    %v13690 = vsel %vm13562, %v13530, %v13658
    %v13691 = vsel %vm13563, %v13531, %v13659
    %v13692 = vsel %vm13564, %v13532, %v13660
    %v13693 = vsel %vm13565, %v13533, %v13661
    %v13694 = vpack.c.bf16 %v13663, %v13662
    %v13695 = vpack.c.bf16 %v13665, %v13664
    %v13696 = vpack.c.bf16 %v13667, %v13666
    %v13697 = vpack.c.bf16 %v13669, %v13668
    %v13698 = vpack.c.bf16 %v13671, %v13670
    %v13699 = vpack.c.bf16 %v13673, %v13672
    %v13700 = vpack.c.bf16 %v13675, %v13674
    %v13701 = vpack.c.bf16 %v13677, %v13676
    %v13702 = vpack.c.bf16 %v13679, %v13678
    %v13703 = vpack.c.bf16 %v13681, %v13680
    %v13704 = vpack.c.bf16 %v13683, %v13682
    %v13705 = vpack.c.bf16 %v13685, %v13684
    %v13706 = vpack.c.bf16 %v13687, %v13686
    %v13707 = vpack.c.bf16 %v13689, %v13688
    %v13708 = vpack.c.bf16 %v13691, %v13690
    %v13709 = vpack.c.bf16 %v13693, %v13692
    %v13726 = vunpack.c.l.b16 %v13694
    %v13727 = vunpack.c.h.b16 %v13694
    %v13728 = vunpack.c.l.b16 %v13695
    %v13729 = vunpack.c.h.b16 %v13695
    %v13730 = vunpack.c.l.b16 %v13696
    %v13731 = vunpack.c.h.b16 %v13696
    %v13732 = vunpack.c.l.b16 %v13697
    %v13733 = vunpack.c.h.b16 %v13697
    %v13734 = vunpack.c.l.b16 %v13698
    %v13735 = vunpack.c.h.b16 %v13698
    %v13736 = vunpack.c.l.b16 %v13699
    %v13737 = vunpack.c.h.b16 %v13699
    %v13738 = vunpack.c.l.b16 %v13700
    %v13739 = vunpack.c.h.b16 %v13700
    %v13740 = vunpack.c.l.b16 %v13701
    %v13741 = vunpack.c.h.b16 %v13701
    %v13742 = vunpack.c.l.b16 %v13702
    %v13743 = vunpack.c.h.b16 %v13702
    %v13744 = vunpack.c.l.b16 %v13703
    %v13745 = vunpack.c.h.b16 %v13703
    %v13746 = vunpack.c.l.b16 %v13704
    %v13747 = vunpack.c.h.b16 %v13704
    %v13748 = vunpack.c.l.b16 %v13705
    %v13749 = vunpack.c.h.b16 %v13705
    %v13750 = vunpack.c.l.b16 %v13706
    %v13751 = vunpack.c.h.b16 %v13706
    %v13752 = vunpack.c.l.b16 %v13707
    %v13753 = vunpack.c.h.b16 %v13707
    %v13754 = vunpack.c.l.b16 %v13708
    %v13755 = vunpack.c.h.b16 %v13708
    %v13756 = vunpack.c.l.b16 %v13709
    %v13757 = vunpack.c.h.b16 %v13709
    %v13758 = vpack.c.b16 %v13726, %v13726
    %v13759 = vpack.c.b16 %v13727, %v13727
    %v13760 = vpack.c.b16 %v13728, %v13728
    %v13761 = vpack.c.b16 %v13729, %v13729
    %v13762 = vpack.c.b16 %v13730, %v13730
    %v13763 = vpack.c.b16 %v13731, %v13731
    %v13764 = vpack.c.b16 %v13732, %v13732
    %v13765 = vpack.c.b16 %v13733, %v13733
    %v13766 = vpack.c.b16 %v13734, %v13734
    %v13767 = vpack.c.b16 %v13735, %v13735
    %v13768 = vpack.c.b16 %v13736, %v13736
    %v13769 = vpack.c.b16 %v13737, %v13737
    %v13770 = vpack.c.b16 %v13738, %v13738
    %v13771 = vpack.c.b16 %v13739, %v13739
    %v13772 = vpack.c.b16 %v13740, %v13740
    %v13773 = vpack.c.b16 %v13741, %v13741
    %v13774 = vpack.c.b16 %v13742, %v13742
    %v13775 = vpack.c.b16 %v13743, %v13743
    %v13776 = vpack.c.b16 %v13744, %v13744
    %v13777 = vpack.c.b16 %v13745, %v13745
    %v13778 = vpack.c.b16 %v13746, %v13746
    %v13779 = vpack.c.b16 %v13747, %v13747
    %v13780 = vpack.c.b16 %v13748, %v13748
    %v13781 = vpack.c.b16 %v13749, %v13749
    %v13782 = vpack.c.b16 %v13750, %v13750
    %v13783 = vpack.c.b16 %v13751, %v13751
    %v13784 = vpack.c.b16 %v13752, %v13752
    %v13785 = vpack.c.b16 %v13753, %v13753
    %v13786 = vpack.c.b16 %v13754, %v13754
    %v13787 = vpack.c.b16 %v13755, %v13755
    %v13788 = vpack.c.b16 %v13756, %v13756
    %v13789 = vpack.c.b16 %v13757, %v13757
    %13822 = vst [vmem:[#allocation2] sm:$0xf] %v13758
    %13823 = vst [vmem:[#allocation2 + $0x4] sm:$0xf] %v13759
    %13824 = vst [vmem:[#allocation2 + $0x8] sm:$0xf] %v13760
    %13825 = vst [vmem:[#allocation2 + $0xc] sm:$0xf] %v13761
    %13826 = vst [vmem:[#allocation2 + $0x10] sm:$0xf] %v13762
    %13827 = vst [vmem:[#allocation2 + $0x14] sm:$0xf] %v13763
    %13828 = vst [vmem:[#allocation2 + $0x18] sm:$0xf] %v13764
    %13829 = vst [vmem:[#allocation2 + $0x1c] sm:$0xf] %v13765
    %13830 = vst [vmem:[#allocation2 + $0x20] sm:$0xf] %v13766
    %13831 = vst [vmem:[#allocation2 + $0x24] sm:$0xf] %v13767
    %13832 = vst [vmem:[#allocation2 + $0x28] sm:$0xf] %v13768
    %13833 = vst [vmem:[#allocation2 + $0x2c] sm:$0xf] %v13769
    %13834 = vst [vmem:[#allocation2 + $0x30] sm:$0xf] %v13770
    %13835 = vst [vmem:[#allocation2 + $0x34] sm:$0xf] %v13771
    %13836 = vst [vmem:[#allocation2 + $0x38] sm:$0xf] %v13772
    %13837 = vst [vmem:[#allocation2 + $0x3c] sm:$0xf] %v13773
    %13838 = vst [vmem:[#allocation2 + $0x40] sm:$0xf] %v13774
    %13839 = vst [vmem:[#allocation2 + $0x44] sm:$0xf] %v13775
    %13840 = vst [vmem:[#allocation2 + $0x48] sm:$0xf] %v13776
    %13841 = vst [vmem:[#allocation2 + $0x4c] sm:$0xf] %v13777
    %13842 = vst [vmem:[#allocation2 + $0x50] sm:$0xf] %v13778
    %13843 = vst [vmem:[#allocation2 + $0x54] sm:$0xf] %v13779
    %13844 = vst [vmem:[#allocation2 + $0x58] sm:$0xf] %v13780
    %13845 = vst [vmem:[#allocation2 + $0x5c] sm:$0xf] %v13781
    %13846 = vst [vmem:[#allocation2 + $0x60] sm:$0xf] %v13782
    %13847 = vst [vmem:[#allocation2 + $0x64] sm:$0xf] %v13783
    %13848 = vst [vmem:[#allocation2 + $0x68] sm:$0xf] %v13784
    %13849 = vst [vmem:[#allocation2 + $0x6c] sm:$0xf] %v13785
    %13850 = vst [vmem:[#allocation2 + $0x70] sm:$0xf] %v13786
    %13851 = vst [vmem:[#allocation2 + $0x74] sm:$0xf] %v13787
    %13852 = vst [vmem:[#allocation2 + $0x78] sm:$0xf] %v13788
    %13853 = vst [vmem:[#allocation2 + $0x7c] sm:$0xf] %v13789
    // Predicated region
    $region14: #{tpu_custom_call.1} parent=1 // pred_check
      _
    $region15: #{tpu_custom_call.1} parent=1 // pred_check_branch
      %13855 = sbr.rel (0) target = $region17
    $region16: #{tpu_custom_call.1} parent=1 // pred_region
      %s13857 = ssub.s32 2048, 2048
      %13858 = vsyncadd [#allocation3], %s13857
      %s13859 = sshll.u32 [#allocation2], 4
      %s13860 = int_to_ptr.vmem [resolvable:$true] %s13859
      %13865 = dma.vmem_to_hbm [thread:$0]  %s13860, 2048, %s3, [#allocation3], 64, 64, 4
    $region17: #{tpu_custom_call.1} parent=1 // pred_fallthru
      _
    // Predicated region
    $region18: #{tpu_custom_call.1} parent=1 // pred_check
      _
    $region19: #{tpu_custom_call.1} parent=1 // pred_check_branch
      %13867 = sbr.rel (0) target = $region21
    $region20: #{tpu_custom_call.1} parent=1 // pred_region
      %13868 = dma.done [#allocation3], 2048
    $region21: #{tpu_custom_call.1} parent=1 // pred_fallthru
      _
    %13869 = vsyncpa [#allocation3], 1

</llo_original>
